<compile_context>
chip_gen: v5e
topology: v5e:2x2
jax: 0.10.0
libtpu: 0.0.40
codegen_flags: <defaults>
</compile_context>

<pallas_src>
import functools

import jax
import jax.numpy as jnp
from jax.experimental import pallas as pl
from jax.experimental.pallas import tpu as pltpu


def _round_up(x, m):
    return ((x + m - 1) // m) * m


# ---------------------------------------------------------------------------
# Pallas GEMM kernels: bf16 operands on the MXU, f32 accumulation
# ---------------------------------------------------------------------------
def _matmul_kernel_single(a_ref, b_ref, o_ref):
    # Single K step: no accumulator scratch, write the result directly.
    o_ref[...] = jnp.dot(
        a_ref[...], b_ref[...], preferred_element_type=jnp.float32
    ).astype(o_ref.dtype)


def _matmul_kernel_multi(a_ref, b_ref, o_ref, acc_ref):
    @pl.when(pl.program_id(2) == 0)
    def _():
        acc_ref[...] = jnp.zeros_like(acc_ref)

    acc_ref[...] += jnp.dot(
        a_ref[...], b_ref[...], preferred_element_type=jnp.float32
    )

    @pl.when(pl.program_id(2) == pl.num_programs(2) - 1)
    def _():
        o_ref[...] = acc_ref[...].astype(o_ref.dtype)


def pallas_matmul(a, b):
    """C = A @ B, f32 output; operands cast to bf16 for the MXU fast path.

    K < 128 is NOT padded (a (tm,K)/(K,tn) block with full-dim K is legal);
    M/N are padded to (8/128-aligned) tile multiples so output tiles are
    lane-dense.  When K fits one tile the single-step kernel (no scratch,
    2-D grid) is used.
    """
    M, K = a.shape
    K2, N = b.shape
    assert K == K2
    a = a.astype(jnp.bfloat16)   # no-op if already bf16
    b = b.astype(jnp.bfloat16)

    tm = min(256, _round_up(M, 8))
    tn = min(512, _round_up(N, 128))
    if K <= 512:
        tk, Kp = K, K            # full-dim K block: exempt from (8,128) rule
    else:
        tk = 512
        Kp = _round_up(K, tk)
    Mp, Np = _round_up(M, tm), _round_up(N, tn)

    if (Mp, Kp) != (M, K):
        a = jnp.pad(a, ((0, Mp - M), (0, Kp - K)))
    if (Kp, Np) != (K, N):
        b = jnp.pad(b, ((0, Kp - K), (0, Np - N)))

    if Kp == tk:
        out = pl.pallas_call(
            _matmul_kernel_single,
            out_shape=jax.ShapeDtypeStruct((Mp, Np), jnp.float32),
            grid_spec=pltpu.PrefetchScalarGridSpec(
                num_scalar_prefetch=0,
                grid=(Mp // tm, Np // tn),
                in_specs=[
                    pl.BlockSpec((tm, tk), lambda i, j: (i, 0)),
                    pl.BlockSpec((tk, tn), lambda i, j: (0, j)),
                ],
                out_specs=pl.BlockSpec((tm, tn), lambda i, j: (i, j)),
            ),
            compiler_params=pltpu.CompilerParams(
                dimension_semantics=("parallel", "parallel")
            ),
        )(a, b)
    else:
        out = pl.pallas_call(
            _matmul_kernel_multi,
            out_shape=jax.ShapeDtypeStruct((Mp, Np), jnp.float32),
            grid_spec=pltpu.PrefetchScalarGridSpec(
                num_scalar_prefetch=0,
                grid=(Mp // tm, Np // tn, Kp // tk),
                in_specs=[
                    pl.BlockSpec((tm, tk), lambda i, j, k: (i, k)),
                    pl.BlockSpec((tk, tn), lambda i, j, k: (k, j)),
                ],
                out_specs=pl.BlockSpec((tm, tn), lambda i, j, k: (i, j)),
                scratch_shapes=[pltpu.VMEM((tm, tn), jnp.float32)],
            ),
            compiler_params=pltpu.CompilerParams(
                dimension_semantics=("parallel", "parallel", "arbitrary")
            ),
        )(a, b)

    if (Mp, Np) != (M, N):
        out = out[:M, :N]
    return out


# ---------------------------------------------------------------------------
# Pallas elementwise kernels (lane-dense)
# ---------------------------------------------------------------------------
def _affine_act_kernel(x_ref, scale_ref, shift_ref, o_ref, *, act):
    y = x_ref[...] * scale_ref[...] + shift_ref[...]
    if act == "relu":
        y = jnp.maximum(y, 0.0)
    elif act == "tanh":
        y = jnp.tanh(y)
    o_ref[...] = y.astype(o_ref.dtype)


def _tanh_kernel(x_ref, o_ref):
    o_ref[...] = jnp.tanh(x_ref[...]).astype(o_ref.dtype)


def _pick_row_tile(m, cap=512):
    """Row tile: multiple of 8, divides m, and <= ceil(m/2) so the grid has
    >= 2 blocks (both v7x TensorCores get work).  Falls back to full m."""
    if m <= 8:
        return m
    target = min(cap, _round_up(-(-m // 2), 8))
    t = (target // 8) * 8
    while t >= 8:
        if m % t == 0:
            return t
        t -= 8
    return m


def pallas_affine_act(x2, scale_row, shift_row, act, out_dtype):
    """y = act(x2 * scale + shift).  x2: (M, C); scale/shift: (1, C)."""
    M, C = x2.shape
    tm = _pick_row_tile(M)
    kern = functools.partial(_affine_act_kernel, act=act)
    return pl.pallas_call(
        kern,
        out_shape=jax.ShapeDtypeStruct((M, C), out_dtype),
        grid_spec=pltpu.PrefetchScalarGridSpec(
            num_scalar_prefetch=0,
            grid=(M // tm,),
            in_specs=[
                pl.BlockSpec((tm, C), lambda i: (i, 0)),
                pl.BlockSpec((1, C), lambda i: (0, 0)),
                pl.BlockSpec((1, C), lambda i: (0, 0)),
            ],
            out_specs=pl.BlockSpec((tm, C), lambda i: (i, 0)),
        ),
        compiler_params=pltpu.CompilerParams(dimension_semantics=("parallel",)),
    )(x2, scale_row, shift_row)


def pallas_tanh_image(x_nhwc):
    """Elementwise tanh over the final activation, always lane-dense."""
    shape = x_nhwc.shape
    total = x_nhwc.size
    xf = x_nhwc.reshape(-1).astype(jnp.float32)
    totp = _round_up(total, 128)
    if totp != total:
        xf = jnp.pad(xf, (0, totp - total))
    x2 = xf.reshape(totp // 128, 128)
    M, C = x2.shape
    tm = _pick_row_tile(M)
    y = pl.pallas_call(
        _tanh_kernel,
        out_shape=jax.ShapeDtypeStruct((M, C), jnp.float32),
        grid_spec=pltpu.PrefetchScalarGridSpec(
            num_scalar_prefetch=0,
            grid=(M // tm,),
            in_specs=[pl.BlockSpec((tm, C), lambda i: (i, 0))],
            out_specs=pl.BlockSpec((tm, C), lambda i: (i, 0)),
        ),
        compiler_params=pltpu.CompilerParams(dimension_semantics=("parallel",)),
    )(x2)
    y = y.reshape(-1)
    if totp != total:
        y = y[:total]
    return y.reshape(shape)


# ---------------------------------------------------------------------------
# ConvTranspose2d (PyTorch semantics, bias=False): one GEMM + stride-phase
# col2im overlap-add (dense adds + one interleave, no strided scatter).
# ---------------------------------------------------------------------------
def _col2im(v, stride, padding):
    """v: (N, H, W, K, K, Cout) contributions; scatter-add with
    out_pad[n, s*iy+kh, s*ix+kw, c] += v[n, iy, ix, kh, kw, c], then crop.

    Implemented via the stride-phase decomposition: kh = s*a + p, so output
    phase p only receives taps {p, p+s, ...}; each phase is a dense overlap-add
    of A = K//s shifted slabs, then phases are interleaved with one
    transpose+reshape.  # TODO(synk): stays as XLA glue (cheap dense ops).
    """
    N, H, W, K, _, C = v.shape
    s = stride
    if s == 1 and H == 1 and W == 1:                 # layer 1: pure reshape
        out = v.reshape(N, K, K, C)
        if padding:
            out = out[:, padding:K - padding, padding:K - padding, :]
        return out

    assert K % s == 0, "stride-phase col2im needs K % stride == 0"
    A = K // s
    # split kernel axes: kh -> (a, p) with kh = s*a + p; kw -> (b, q)
    vr = v.reshape(N, H, W, A, s, A, s, C)
    acc = None
    for a in range(A):
        for b in range(A):
            part = vr[:, :, :, a, :, b, :, :]                    # (N,H,W,s,s,C)
            part = jnp.pad(
                part,
                ((0, 0), (a, A - 1 - a), (b, A - 1 - b), (0, 0), (0, 0), (0, 0)),
            )
            acc = part if acc is None else acc + part
    # acc: (N, H+A-1, W+A-1, s, s, C) indexed (n, m, l, p, q, c)
    BH, BW = s * (H + A - 1), s * (W + A - 1)
    out = jnp.transpose(acc, (0, 1, 3, 2, 4, 5)).reshape(N, BH, BW, C)
    OH = s * (H - 1) + K - 2 * padding
    OW = s * (W - 1) + K - 2 * padding
    return out[:, padding:padding + OH, padding:padding + OW, :]


def conv_transpose2d(x_nhwc, w_mat, cout, K, stride, padding):
    """x_nhwc: (N,H,W,Cin); w_mat: pre-packed bf16 (Cin, round_up(K*K*Cout,128))."""
    N, H, W, Cin = x_nhwc.shape
    a = x_nhwc.reshape(N * H * W, Cin)
    v = pallas_matmul(a, w_mat)                       # (N*H*W, padded), f32
    v = v[:, :K * K * cout].reshape(N, H, W, K, K, cout)
    return _col2im(v, stride, padding)


def batchnorm_relu(x_nhwc, gamma, beta, eps=1e-5):
    """Training-mode BatchNorm2d (biased batch variance, like PyTorch) + ReLU.

    Stats are one-pass (sum / sum-of-squares); the affine+ReLU runs in a
    lane-dense Pallas kernel and emits bf16 (it only feeds the next GEMM).
    """
    N, H, W, C = x_nhwc.shape
    M = N * H * W
    x2 = x_nhwc.reshape(M, C).astype(jnp.float32)
    # TODO(synk): per-channel reduction stays in XLA; fusing it into the GEMM
    # epilogue is blocked by the col2im overlap-add in between.
    s1 = jnp.sum(x2, axis=0)
    s2 = jnp.sum(x2 * x2, axis=0)
    mean = s1 / M
    var = jnp.maximum(s2 / M - mean * mean, 0.0)      # guard f32 cancellation
    scale = gamma / jnp.sqrt(var + eps)
    shift = beta - mean * scale

    # Fold rows into lanes so the channel axis is lane-dense (e.g. C=64 -> 128).
    if C % 128 != 0 and 128 % C == 0 and M % (128 // C) == 0:
        r = 128 // C
        x2 = x2.reshape(M // r, r * C)
        scale = jnp.tile(scale, r)
        shift = jnp.tile(shift, r)
    y = pallas_affine_act(x2, scale[None, :], shift[None, :], act="relu",
                          out_dtype=jnp.bfloat16)
    return y.reshape(N, H, W, C)


# ---------------------------------------------------------------------------
# Generator forward (mirrors the PyTorch nn.Sequential)
# ---------------------------------------------------------------------------
def generator_forward(z, params):
    """z: (N, z_dim) -> images (N, out_channels, 64, 64), values in (-1, 1)."""
    x = z[:, None, None, :]                           # NHWC (N, 1, 1, z_dim)
    n_layers = len(params["convs"])
    for idx, (w, w_mat, stride, padding) in enumerate(params["convs"]):
        _, cout, K, _ = w.shape
        x = conv_transpose2d(x, w_mat, cout, K, stride, padding)
        if idx < n_layers - 1:
            gamma, beta = params["bns"][idx]
            x = batchnorm_relu(x, gamma, beta)
        else:
            x = pallas_tanh_image(x)                  # final layer: Tanh only
    return jnp.transpose(x, (0, 3, 1, 2))             # NHWC -> NCHW


def init_params(key, z_dim, out_channels=3, ngf=64):
    """Synthetic parameters matching the module; conv weights are also stored
    pre-packed for the Pallas GEMM: (Cin, round_up(K*K*Cout,128)) bf16."""
    chans = [z_dim, ngf * 8, ngf * 4, ngf * 2, ngf, out_channels]
    strides = [1, 2, 2, 2, 2]
    pads = [0, 1, 1, 1, 1]
    K = 4
    convs, bns = [], []
    for i in range(5):
        key, kw = jax.random.split(key)
        # ConvTranspose2d weight layout: (Cin, Cout, K, K), bias=False
        w = 0.02 * jax.random.normal(kw, (chans[i], chans[i + 1], K, K), jnp.float32)
        w_mat = jnp.transpose(w, (0, 2, 3, 1)).reshape(chans[i], K * K * chans[i + 1])
        cols = w_mat.shape[1]
        cols_p = _round_up(cols, 128)
        if cols_p != cols:
            w_mat = jnp.pad(w_mat, ((0, 0), (0, cols_p - cols)))
        w_mat = w_mat.astype(jnp.bfloat16)
        convs.append((w, w_mat, strides[i], pads[i]))
        if i < 4:
            key, kg = jax.random.split(key)
            gamma = 1.0 + 0.02 * jax.random.normal(kg, (chans[i + 1],), jnp.float32)
            beta = jnp.zeros((chans[i + 1],), jnp.float32)
            bns.append((gamma, beta))
    return {"convs": convs, "bns": bns}


# ---------------------------------------------------------------------------
# Pure-JAX f32 reference (dilate + pad + flipped-kernel correlation)
# ---------------------------------------------------------------------------
def _conv_transpose2d_ref(x_nhwc, w_t, stride, padding):
    N, H, W, Cin = x_nhwc.shape
    _, Cout, K, _ = w_t.shape
    if stride > 1:
        Hd, Wd = (H - 1) * stride + 1, (W - 1) * stride + 1
        xd = jnp.zeros((N, Hd, Wd, Cin), x_nhwc.dtype)
        xd = xd.at[:, ::stride, ::stride, :].set(x_nhwc)
    else:
        Hd, Wd, xd = H, W, x_nhwc
    pad = K - 1 - padding
    xp = jnp.pad(xd, ((0, 0), (pad, pad), (pad, pad), (0, 0)))
    OH = Hd + 2 * pad - K + 1
    OW = Wd + 2 * pad - K + 1
    wk = jnp.transpose(w_t[:, :, ::-1, ::-1], (2, 3, 0, 1))   # (K, K, Cin, Cout)
    out = jnp.zeros((N, OH, OW, Cout), jnp.float32)
    for kh in range(K):
        for kw in range(K):
            out = out + jnp.einsum(
                "nhwc,cd->nhwd", xp[:, kh:kh + OH, kw:kw + OW, :], wk[kh, kw],
                precision=jax.lax.Precision.HIGHEST)
    return out


def _generator_forward_ref(z, params, eps=1e-5):
    x = z[:, None, None, :]
    n_layers = len(params["convs"])
    for idx, (w, _w_mat, stride, padding) in enumerate(params["convs"]):
        x = _conv_transpose2d_ref(x, w, stride, padding)
        if idx < n_layers - 1:
            gamma, beta = params["bns"][idx]
            mean = jnp.mean(x, axis=(0, 1, 2))
            var = jnp.mean((x - mean) ** 2, axis=(0, 1, 2))
            x = (x - mean) / jnp.sqrt(var + eps) * gamma + beta
            x = jnp.maximum(x, 0.0)
        else:
            x = jnp.tanh(x)
    return jnp.transpose(x, (0, 3, 1, 2))


if __name__ == "__main__":
    z_dim = 16
    batch = 2

    key = jax.random.PRNGKey(0)
    kp, kz = jax.random.split(key)
    params = init_params(kp, z_dim)
    z = jax.random.normal(kz, (batch, z_dim), jnp.float32)

    fwd = jax.jit(lambda zz: generator_forward(zz, params))
    out = jax.block_until_ready(fwd(z))

    assert out.shape == (batch, 3, 64, 64), out.shape
    assert bool(jnp.all(jnp.isfinite(out)))
    assert bool(jnp.all(jnp.abs(out) <= 1.0))          # tanh output range

    # numerical check against a pure-JAX f32 reference (loose tolerance for
    # the bf16 MXU operands / bf16 stored activations; structural bugs would
    # be O(0.1-1)).
    ref = jax.block_until_ready(
        jax.jit(lambda zz: _generator_forward_ref(zz, params))(z))
    max_err = float(jnp.max(jnp.abs(out - ref)))
    assert max_err < 6e-2, f"max abs err vs reference = {max_err}"

    print("KERNEL_OK")
</pallas_src>

<mosaic_0001>
module attributes {stable_mosaic.version = 11 : i64} {
  func.func @_matmul_kernel_single(%arg0: i32, %arg1: i32, %arg2: memref<8x16xbf16, #tpu.memory_space<vmem>>, %arg3: memref<16x512xbf16, #tpu.memory_space<vmem>>, %arg4: memref<8x512xf32, #tpu.memory_space<vmem>>) attributes {dimension_semantics = [#tpu.dimension_semantics<parallel>, #tpu.dimension_semantics<parallel>], iteration_bounds = array<i64: 1, 16>, scalar_prefetch = 0 : i64, scratch_operands = 0 : i64, tpu.core_type = #tpu.core_type<tc>, window_params = [{transform_indices = @transform_0, window_bounds = array<i64: 8, 16>}, {transform_indices = @transform_1, window_bounds = array<i64: 16, 512>}, {transform_indices = @transform_2, window_bounds = array<i64: 8, 512>}]} {
    %c0 = arith.constant 0 : index
    %c0_0 = arith.constant 0 : index
    %0 = vector.load %arg2[%c0, %c0_0] : memref<8x16xbf16, #tpu.memory_space<vmem>>, vector<8x16xbf16>
    %c0_1 = arith.constant 0 : index
    %c0_2 = arith.constant 0 : index
    %1 = vector.load %arg3[%c0_1, %c0_2] : memref<16x512xbf16, #tpu.memory_space<vmem>>, vector<16x512xbf16>
    %cst = arith.constant dense<0.000000e+00> : vector<8x512xf32>
    %2 = tpu.matmul %0, %1, %cst {dimension_numbers = #tpu.dot_dimension_numbers<[1], [0], [0], [1], [0, 0, 1, 1], [], []>} : vector<8x16xbf16>, vector<16x512xbf16>, vector<8x512xf32> -> vector<8x512xf32>
    %c0_3 = arith.constant 0 : index
    %c0_4 = arith.constant 0 : index
    %3 = vector.load %arg4[%c0_3, %c0_4] : memref<8x512xf32, #tpu.memory_space<vmem>>, vector<8x512xf32>
    tpu.vector_store %arg4[%c0_3, %c0_4], %2 {strides = array<i32>} : memref<8x512xf32, #tpu.memory_space<vmem>>, vector<8x512xf32>,
    return
  }
  func.func @transform_0(%arg0: i32, %arg1: i32) -> (i32, i32) {
    %c0_i32 = arith.constant 0 : i32
    %c0_i32_0 = arith.constant 0 : i32
    return %arg0, %c0_i32 : i32, i32
  }
  func.func @transform_1(%arg0: i32, %arg1: i32) -> (i32, i32) {
    %c0_i32 = arith.constant 0 : i32
    %c0_i32_0 = arith.constant 0 : i32
    return %c0_i32, %arg1 : i32, i32
  }
  func.func @transform_2(%arg0: i32, %arg1: i32) -> (i32, i32) {
    %c0_i32 = arith.constant 0 : i32
    return %arg0, %arg1 : i32, i32
  }
}

module attributes {stable_mosaic.version = 11 : i64} {
  func.func @_affine_act_kernel(%arg0: i32, %arg1: memref<16x512xf32, #tpu.memory_space<vmem>>, %arg2: memref<1x512xf32, #tpu.memory_space<vmem>>, %arg3: memref<1x512xf32, #tpu.memory_space<vmem>>, %arg4: memref<16x512xbf16, #tpu.memory_space<vmem>>) attributes {dimension_semantics = [#tpu.dimension_semantics<parallel>], iteration_bounds = array<i64: 2>, scalar_prefetch = 0 : i64, scratch_operands = 0 : i64, tpu.core_type = #tpu.core_type<tc>, window_params = [{transform_indices = @transform_0, window_bounds = array<i64: 16, 512>}, {pipeline_mode = #tpu.pipeline_mode<synchronous>, transform_indices = @transform_1, window_bounds = array<i64: 1, 512>}, {pipeline_mode = #tpu.pipeline_mode<synchronous>, transform_indices = @transform_2, window_bounds = array<i64: 1, 512>}, {transform_indices = @transform_3, window_bounds = array<i64: 16, 512>}]} {
    %c0 = arith.constant 0 : index
    %c0_0 = arith.constant 0 : index
    %0 = vector.load %arg1[%c0, %c0_0] : memref<16x512xf32, #tpu.memory_space<vmem>>, vector<16x512xf32>
    %c0_1 = arith.constant 0 : index
    %c0_2 = arith.constant 0 : index
    %1 = vector.load %arg2[%c0_1, %c0_2] : memref<1x512xf32, #tpu.memory_space<vmem>>, vector<1x512xf32>
    %2 = vector.broadcast %1 : vector<1x512xf32> to vector<16x512xf32>
    %3 = arith.mulf %0, %2 : vector<16x512xf32>
    %c0_3 = arith.constant 0 : index
    %c0_4 = arith.constant 0 : index
    %4 = vector.load %arg3[%c0_3, %c0_4] : memref<1x512xf32, #tpu.memory_space<vmem>>, vector<1x512xf32>
    %5 = vector.broadcast %4 : vector<1x512xf32> to vector<16x512xf32>
    %6 = arith.addf %3, %5 : vector<16x512xf32>
    %cst = arith.constant 0.000000e+00 : f32
    %7 = vector.broadcast %cst : f32 to vector<16x512xf32>
    %8 = arith.maximumf %6, %7 : vector<16x512xf32>
    %9 = arith.truncf %8 : vector<16x512xf32> to vector<16x512xbf16>
    %c0_5 = arith.constant 0 : index
    %c0_6 = arith.constant 0 : index
    %10 = vector.load %arg4[%c0_5, %c0_6] : memref<16x512xbf16, #tpu.memory_space<vmem>>, vector<16x512xbf16>
    tpu.vector_store %arg4[%c0_5, %c0_6], %9 {strides = array<i32>} : memref<16x512xbf16, #tpu.memory_space<vmem>>, vector<16x512xbf16>,
    return
  }
  func.func @transform_0(%arg0: i32) -> (i32, i32) {
    %c0_i32 = arith.constant 0 : i32
    %c0_i32_0 = arith.constant 0 : i32
    return %arg0, %c0_i32 : i32, i32
  }
  func.func @transform_1(%arg0: i32) -> (i32, i32) {
    %c0_i32 = arith.constant 0 : i32
    %c0_i32_0 = arith.constant 0 : i32
    %c0_i32_1 = arith.constant 0 : i32
    return %c0_i32, %c0_i32_0 : i32, i32
  }
  func.func @transform_2(%arg0: i32) -> (i32, i32) {
    %c0_i32 = arith.constant 0 : i32
    %c0_i32_0 = arith.constant 0 : i32
    %c0_i32_1 = arith.constant 0 : i32
    return %c0_i32, %c0_i32_0 : i32, i32
  }
  func.func @transform_3(%arg0: i32) -> (i32, i32) {
    %c0_i32 = arith.constant 0 : i32
    %c0_i32_0 = arith.constant 0 : i32
    return %arg0, %c0_i32 : i32, i32
  }
}

module attributes {stable_mosaic.version = 11 : i64} {
  func.func @_matmul_kernel_single(%arg0: i32, %arg1: i32, %arg2: memref<32x512xbf16, #tpu.memory_space<vmem>>, %arg3: memref<512x512xbf16, #tpu.memory_space<vmem>>, %arg4: memref<32x512xf32, #tpu.memory_space<vmem>>) attributes {dimension_semantics = [#tpu.dimension_semantics<parallel>, #tpu.dimension_semantics<parallel>], iteration_bounds = array<i64: 1, 8>, scalar_prefetch = 0 : i64, scratch_operands = 0 : i64, tpu.core_type = #tpu.core_type<tc>, window_params = [{transform_indices = @transform_0, window_bounds = array<i64: 32, 512>}, {transform_indices = @transform_1, window_bounds = array<i64: 512, 512>}, {transform_indices = @transform_2, window_bounds = array<i64: 32, 512>}]} {
    %c0 = arith.constant 0 : index
    %c0_0 = arith.constant 0 : index
    %0 = vector.load %arg2[%c0, %c0_0] : memref<32x512xbf16, #tpu.memory_space<vmem>>, vector<32x512xbf16>
    %c0_1 = arith.constant 0 : index
    %c0_2 = arith.constant 0 : index
    %1 = vector.load %arg3[%c0_1, %c0_2] : memref<512x512xbf16, #tpu.memory_space<vmem>>, vector<512x512xbf16>
    %cst = arith.constant dense<0.000000e+00> : vector<32x512xf32>
    %2 = tpu.matmul %0, %1, %cst {dimension_numbers = #tpu.dot_dimension_numbers<[1], [0], [0], [1], [0, 0, 1, 1], [], []>} : vector<32x512xbf16>, vector<512x512xbf16>, vector<32x512xf32> -> vector<32x512xf32>
    %c0_3 = arith.constant 0 : index
    %c0_4 = arith.constant 0 : index
    %3 = vector.load %arg4[%c0_3, %c0_4] : memref<32x512xf32, #tpu.memory_space<vmem>>, vector<32x512xf32>
    tpu.vector_store %arg4[%c0_3, %c0_4], %2 {strides = array<i32>} : memref<32x512xf32, #tpu.memory_space<vmem>>, vector<32x512xf32>,
    return
  }
  func.func @transform_0(%arg0: i32, %arg1: i32) -> (i32, i32) {
    %c0_i32 = arith.constant 0 : i32
    %c0_i32_0 = arith.constant 0 : i32
    return %arg0, %c0_i32 : i32, i32
  }
  func.func @transform_1(%arg0: i32, %arg1: i32) -> (i32, i32) {
    %c0_i32 = arith.constant 0 : i32
    %c0_i32_0 = arith.constant 0 : i32
    return %c0_i32, %arg1 : i32, i32
  }
  func.func @transform_2(%arg0: i32, %arg1: i32) -> (i32, i32) {
    %c0_i32 = arith.constant 0 : i32
    return %arg0, %arg1 : i32, i32
  }
}

module attributes {stable_mosaic.version = 11 : i64} {
  func.func @_affine_act_kernel(%arg0: i32, %arg1: memref<64x256xf32, #tpu.memory_space<vmem>>, %arg2: memref<1x256xf32, #tpu.memory_space<vmem>>, %arg3: memref<1x256xf32, #tpu.memory_space<vmem>>, %arg4: memref<64x256xbf16, #tpu.memory_space<vmem>>) attributes {dimension_semantics = [#tpu.dimension_semantics<parallel>], iteration_bounds = array<i64: 2>, scalar_prefetch = 0 : i64, scratch_operands = 0 : i64, tpu.core_type = #tpu.core_type<tc>, window_params = [{transform_indices = @transform_0, window_bounds = array<i64: 64, 256>}, {pipeline_mode = #tpu.pipeline_mode<synchronous>, transform_indices = @transform_1, window_bounds = array<i64: 1, 256>}, {pipeline_mode = #tpu.pipeline_mode<synchronous>, transform_indices = @transform_2, window_bounds = array<i64: 1, 256>}, {transform_indices = @transform_3, window_bounds = array<i64: 64, 256>}]} {
    %c0 = arith.constant 0 : index
    %c0_0 = arith.constant 0 : index
    %0 = vector.load %arg1[%c0, %c0_0] : memref<64x256xf32, #tpu.memory_space<vmem>>, vector<64x256xf32>
    %c0_1 = arith.constant 0 : index
    %c0_2 = arith.constant 0 : index
    %1 = vector.load %arg2[%c0_1, %c0_2] : memref<1x256xf32, #tpu.memory_space<vmem>>, vector<1x256xf32>
    %2 = vector.broadcast %1 : vector<1x256xf32> to vector<64x256xf32>
    %3 = arith.mulf %0, %2 : vector<64x256xf32>
    %c0_3 = arith.constant 0 : index
    %c0_4 = arith.constant 0 : index
    %4 = vector.load %arg3[%c0_3, %c0_4] : memref<1x256xf32, #tpu.memory_space<vmem>>, vector<1x256xf32>
    %5 = vector.broadcast %4 : vector<1x256xf32> to vector<64x256xf32>
    %6 = arith.addf %3, %5 : vector<64x256xf32>
    %cst = arith.constant 0.000000e+00 : f32
    %7 = vector.broadcast %cst : f32 to vector<64x256xf32>
    %8 = arith.maximumf %6, %7 : vector<64x256xf32>
    %9 = arith.truncf %8 : vector<64x256xf32> to vector<64x256xbf16>
    %c0_5 = arith.constant 0 : index
    %c0_6 = arith.constant 0 : index
    %10 = vector.load %arg4[%c0_5, %c0_6] : memref<64x256xbf16, #tpu.memory_space<vmem>>, vector<64x256xbf16>
    tpu.vector_store %arg4[%c0_5, %c0_6], %9 {strides = array<i32>} : memref<64x256xbf16, #tpu.memory_space<vmem>>, vector<64x256xbf16>,
    return
  }
  func.func @transform_0(%arg0: i32) -> (i32, i32) {
    %c0_i32 = arith.constant 0 : i32
    %c0_i32_0 = arith.constant 0 : i32
    return %arg0, %c0_i32 : i32, i32
  }
  func.func @transform_1(%arg0: i32) -> (i32, i32) {
    %c0_i32 = arith.constant 0 : i32
    %c0_i32_0 = arith.constant 0 : i32
    %c0_i32_1 = arith.constant 0 : i32
    return %c0_i32, %c0_i32_0 : i32, i32
  }
  func.func @transform_2(%arg0: i32) -> (i32, i32) {
    %c0_i32 = arith.constant 0 : i32
    %c0_i32_0 = arith.constant 0 : i32
    %c0_i32_1 = arith.constant 0 : i32
    return %c0_i32, %c0_i32_0 : i32, i32
  }
  func.func @transform_3(%arg0: i32) -> (i32, i32) {
    %c0_i32 = arith.constant 0 : i32
    %c0_i32_0 = arith.constant 0 : i32
    return %arg0, %c0_i32 : i32, i32
  }
}

module attributes {stable_mosaic.version = 11 : i64} {
  func.func @_matmul_kernel_single(%arg0: i32, %arg1: i32, %arg2: memref<128x256xbf16, #tpu.memory_space<vmem>>, %arg3: memref<256x512xbf16, #tpu.memory_space<vmem>>, %arg4: memref<128x512xf32, #tpu.memory_space<vmem>>) attributes {dimension_semantics = [#tpu.dimension_semantics<parallel>, #tpu.dimension_semantics<parallel>], iteration_bounds = array<i64: 1, 4>, scalar_prefetch = 0 : i64, scratch_operands = 0 : i64, tpu.core_type = #tpu.core_type<tc>, window_params = [{transform_indices = @transform_0, window_bounds = array<i64: 128, 256>}, {transform_indices = @transform_1, window_bounds = array<i64: 256, 512>}, {transform_indices = @transform_2, window_bounds = array<i64: 128, 512>}]} {
    %c0 = arith.constant 0 : index
    %c0_0 = arith.constant 0 : index
    %0 = vector.load %arg2[%c0, %c0_0] : memref<128x256xbf16, #tpu.memory_space<vmem>>, vector<128x256xbf16>
    %c0_1 = arith.constant 0 : index
    %c0_2 = arith.constant 0 : index
    %1 = vector.load %arg3[%c0_1, %c0_2] : memref<256x512xbf16, #tpu.memory_space<vmem>>, vector<256x512xbf16>
    %cst = arith.constant dense<0.000000e+00> : vector<128x512xf32>
    %2 = tpu.matmul %0, %1, %cst {dimension_numbers = #tpu.dot_dimension_numbers<[1], [0], [0], [1], [0, 0, 1, 1], [], []>} : vector<128x256xbf16>, vector<256x512xbf16>, vector<128x512xf32> -> vector<128x512xf32>
    %c0_3 = arith.constant 0 : index
    %c0_4 = arith.constant 0 : index
    %3 = vector.load %arg4[%c0_3, %c0_4] : memref<128x512xf32, #tpu.memory_space<vmem>>, vector<128x512xf32>
    tpu.vector_store %arg4[%c0_3, %c0_4], %2 {strides = array<i32>} : memref<128x512xf32, #tpu.memory_space<vmem>>, vector<128x512xf32>,
    return
  }
  func.func @transform_0(%arg0: i32, %arg1: i32) -> (i32, i32) {
    %c0_i32 = arith.constant 0 : i32
    %c0_i32_0 = arith.constant 0 : i32
    return %arg0, %c0_i32 : i32, i32
  }
  func.func @transform_1(%arg0: i32, %arg1: i32) -> (i32, i32) {
    %c0_i32 = arith.constant 0 : i32
    %c0_i32_0 = arith.constant 0 : i32
    return %c0_i32, %arg1 : i32, i32
  }
  func.func @transform_2(%arg0: i32, %arg1: i32) -> (i32, i32) {
    %c0_i32 = arith.constant 0 : i32
    return %arg0, %arg1 : i32, i32
  }
}

module attributes {stable_mosaic.version = 11 : i64} {
  func.func @_affine_act_kernel(%arg0: i32, %arg1: memref<256x128xf32, #tpu.memory_space<vmem>>, %arg2: memref<1x128xf32, #tpu.memory_space<vmem>>, %arg3: memref<1x128xf32, #tpu.memory_space<vmem>>, %arg4: memref<256x128xbf16, #tpu.memory_space<vmem>>) attributes {dimension_semantics = [#tpu.dimension_semantics<parallel>], iteration_bounds = array<i64: 2>, scalar_prefetch = 0 : i64, scratch_operands = 0 : i64, tpu.core_type = #tpu.core_type<tc>, window_params = [{transform_indices = @transform_0, window_bounds = array<i64: 256, 128>}, {pipeline_mode = #tpu.pipeline_mode<synchronous>, transform_indices = @transform_1, window_bounds = array<i64: 1, 128>}, {pipeline_mode = #tpu.pipeline_mode<synchronous>, transform_indices = @transform_2, window_bounds = array<i64: 1, 128>}, {transform_indices = @transform_3, window_bounds = array<i64: 256, 128>}]} {
    %c0 = arith.constant 0 : index
    %c0_0 = arith.constant 0 : index
    %0 = vector.load %arg1[%c0, %c0_0] : memref<256x128xf32, #tpu.memory_space<vmem>>, vector<256x128xf32>
    %c0_1 = arith.constant 0 : index
    %c0_2 = arith.constant 0 : index
    %1 = vector.load %arg2[%c0_1, %c0_2] : memref<1x128xf32, #tpu.memory_space<vmem>>, vector<1x128xf32>
    %2 = vector.broadcast %1 : vector<1x128xf32> to vector<256x128xf32>
    %3 = arith.mulf %0, %2 : vector<256x128xf32>
    %c0_3 = arith.constant 0 : index
    %c0_4 = arith.constant 0 : index
    %4 = vector.load %arg3[%c0_3, %c0_4] : memref<1x128xf32, #tpu.memory_space<vmem>>, vector<1x128xf32>
    %5 = vector.broadcast %4 : vector<1x128xf32> to vector<256x128xf32>
    %6 = arith.addf %3, %5 : vector<256x128xf32>
    %cst = arith.constant 0.000000e+00 : f32
    %7 = vector.broadcast %cst : f32 to vector<256x128xf32>
    %8 = arith.maximumf %6, %7 : vector<256x128xf32>
    %9 = arith.truncf %8 : vector<256x128xf32> to vector<256x128xbf16>
    %c0_5 = arith.constant 0 : index
    %c0_6 = arith.constant 0 : index
    %10 = vector.load %arg4[%c0_5, %c0_6] : memref<256x128xbf16, #tpu.memory_space<vmem>>, vector<256x128xbf16>
    tpu.vector_store %arg4[%c0_5, %c0_6], %9 {strides = array<i32>} : memref<256x128xbf16, #tpu.memory_space<vmem>>, vector<256x128xbf16>,
    return
  }
  func.func @transform_0(%arg0: i32) -> (i32, i32) {
    %c0_i32 = arith.constant 0 : i32
    %c0_i32_0 = arith.constant 0 : i32
    return %arg0, %c0_i32 : i32, i32
  }
  func.func @transform_1(%arg0: i32) -> (i32, i32) {
    %c0_i32 = arith.constant 0 : i32
    %c0_i32_0 = arith.constant 0 : i32
    %c0_i32_1 = arith.constant 0 : i32
    return %c0_i32, %c0_i32_0 : i32, i32
  }
  func.func @transform_2(%arg0: i32) -> (i32, i32) {
    %c0_i32 = arith.constant 0 : i32
    %c0_i32_0 = arith.constant 0 : i32
    %c0_i32_1 = arith.constant 0 : i32
    return %c0_i32, %c0_i32_0 : i32, i32
  }
  func.func @transform_3(%arg0: i32) -> (i32, i32) {
    %c0_i32 = arith.constant 0 : i32
    %c0_i32_0 = arith.constant 0 : i32
    return %arg0, %c0_i32 : i32, i32
  }
}

module attributes {stable_mosaic.version = 11 : i64} {
  func.func @_matmul_kernel_single(%arg0: i32, %arg1: i32, %arg2: memref<256x128xbf16, #tpu.memory_space<vmem>>, %arg3: memref<128x512xbf16, #tpu.memory_space<vmem>>, %arg4: memref<256x512xf32, #tpu.memory_space<vmem>>) attributes {dimension_semantics = [#tpu.dimension_semantics<parallel>, #tpu.dimension_semantics<parallel>], iteration_bounds = array<i64: 2, 2>, scalar_prefetch = 0 : i64, scratch_operands = 0 : i64, tpu.core_type = #tpu.core_type<tc>, window_params = [{transform_indices = @transform_0, window_bounds = array<i64: 256, 128>}, {transform_indices = @transform_1, window_bounds = array<i64: 128, 512>}, {transform_indices = @transform_2, window_bounds = array<i64: 256, 512>}]} {
    %c0 = arith.constant 0 : index
    %c0_0 = arith.constant 0 : index
    %0 = vector.load %arg2[%c0, %c0_0] : memref<256x128xbf16, #tpu.memory_space<vmem>>, vector<256x128xbf16>
    %c0_1 = arith.constant 0 : index
    %c0_2 = arith.constant 0 : index
    %1 = vector.load %arg3[%c0_1, %c0_2] : memref<128x512xbf16, #tpu.memory_space<vmem>>, vector<128x512xbf16>
    %cst = arith.constant dense<0.000000e+00> : vector<256x512xf32>
    %2 = tpu.matmul %0, %1, %cst {dimension_numbers = #tpu.dot_dimension_numbers<[1], [0], [0], [1], [0, 0, 1, 1], [], []>} : vector<256x128xbf16>, vector<128x512xbf16>, vector<256x512xf32> -> vector<256x512xf32>
    %c0_3 = arith.constant 0 : index
    %c0_4 = arith.constant 0 : index
    %3 = vector.load %arg4[%c0_3, %c0_4] : memref<256x512xf32, #tpu.memory_space<vmem>>, vector<256x512xf32>
    tpu.vector_store %arg4[%c0_3, %c0_4], %2 {strides = array<i32>} : memref<256x512xf32, #tpu.memory_space<vmem>>, vector<256x512xf32>,
    return
  }
  func.func @transform_0(%arg0: i32, %arg1: i32) -> (i32, i32) {
    %c0_i32 = arith.constant 0 : i32
    %c0_i32_0 = arith.constant 0 : i32
    return %arg0, %c0_i32 : i32, i32
  }
  func.func @transform_1(%arg0: i32, %arg1: i32) -> (i32, i32) {
    %c0_i32 = arith.constant 0 : i32
    %c0_i32_0 = arith.constant 0 : i32
    return %c0_i32, %arg1 : i32, i32
  }
  func.func @transform_2(%arg0: i32, %arg1: i32) -> (i32, i32) {
    %c0_i32 = arith.constant 0 : i32
    return %arg0, %arg1 : i32, i32
  }
}

module attributes {stable_mosaic.version = 11 : i64} {
  func.func @_affine_act_kernel(%arg0: i32, %arg1: memref<512x128xf32, #tpu.memory_space<vmem>>, %arg2: memref<1x128xf32, #tpu.memory_space<vmem>>, %arg3: memref<1x128xf32, #tpu.memory_space<vmem>>, %arg4: memref<512x128xbf16, #tpu.memory_space<vmem>>) attributes {dimension_semantics = [#tpu.dimension_semantics<parallel>], iteration_bounds = array<i64: 2>, scalar_prefetch = 0 : i64, scratch_operands = 0 : i64, tpu.core_type = #tpu.core_type<tc>, window_params = [{transform_indices = @transform_0, window_bounds = array<i64: 512, 128>}, {pipeline_mode = #tpu.pipeline_mode<synchronous>, transform_indices = @transform_1, window_bounds = array<i64: 1, 128>}, {pipeline_mode = #tpu.pipeline_mode<synchronous>, transform_indices = @transform_2, window_bounds = array<i64: 1, 128>}, {transform_indices = @transform_3, window_bounds = array<i64: 512, 128>}]} {
    %c0 = arith.constant 0 : index
    %c0_0 = arith.constant 0 : index
    %0 = vector.load %arg1[%c0, %c0_0] : memref<512x128xf32, #tpu.memory_space<vmem>>, vector<512x128xf32>
    %c0_1 = arith.constant 0 : index
    %c0_2 = arith.constant 0 : index
    %1 = vector.load %arg2[%c0_1, %c0_2] : memref<1x128xf32, #tpu.memory_space<vmem>>, vector<1x128xf32>
    %2 = vector.broadcast %1 : vector<1x128xf32> to vector<512x128xf32>
    %3 = arith.mulf %0, %2 : vector<512x128xf32>
    %c0_3 = arith.constant 0 : index
    %c0_4 = arith.constant 0 : index
    %4 = vector.load %arg3[%c0_3, %c0_4] : memref<1x128xf32, #tpu.memory_space<vmem>>, vector<1x128xf32>
    %5 = vector.broadcast %4 : vector<1x128xf32> to vector<512x128xf32>
    %6 = arith.addf %3, %5 : vector<512x128xf32>
    %cst = arith.constant 0.000000e+00 : f32
    %7 = vector.broadcast %cst : f32 to vector<512x128xf32>
    %8 = arith.maximumf %6, %7 : vector<512x128xf32>
    %9 = arith.truncf %8 : vector<512x128xf32> to vector<512x128xbf16>
    %c0_5 = arith.constant 0 : index
    %c0_6 = arith.constant 0 : index
    %10 = vector.load %arg4[%c0_5, %c0_6] : memref<512x128xbf16, #tpu.memory_space<vmem>>, vector<512x128xbf16>
    tpu.vector_store %arg4[%c0_5, %c0_6], %9 {strides = array<i32>} : memref<512x128xbf16, #tpu.memory_space<vmem>>, vector<512x128xbf16>,
    return
  }
  func.func @transform_0(%arg0: i32) -> (i32, i32) {
    %c0_i32 = arith.constant 0 : i32
    %c0_i32_0 = arith.constant 0 : i32
    return %arg0, %c0_i32 : i32, i32
  }
  func.func @transform_1(%arg0: i32) -> (i32, i32) {
    %c0_i32 = arith.constant 0 : i32
    %c0_i32_0 = arith.constant 0 : i32
    %c0_i32_1 = arith.constant 0 : i32
    return %c0_i32, %c0_i32_0 : i32, i32
  }
  func.func @transform_2(%arg0: i32) -> (i32, i32) {
    %c0_i32 = arith.constant 0 : i32
    %c0_i32_0 = arith.constant 0 : i32
    %c0_i32_1 = arith.constant 0 : i32
    return %c0_i32, %c0_i32_0 : i32, i32
  }
  func.func @transform_3(%arg0: i32) -> (i32, i32) {
    %c0_i32 = arith.constant 0 : i32
    %c0_i32_0 = arith.constant 0 : i32
    return %arg0, %c0_i32 : i32, i32
  }
}

module attributes {stable_mosaic.version = 11 : i64} {
  func.func @_matmul_kernel_single(%arg0: i32, %arg1: i32, %arg2: memref<256x64xbf16, #tpu.memory_space<vmem>>, %arg3: memref<64x128xbf16, #tpu.memory_space<vmem>>, %arg4: memref<256x128xf32, #tpu.memory_space<vmem>>) attributes {dimension_semantics = [#tpu.dimension_semantics<parallel>, #tpu.dimension_semantics<parallel>], iteration_bounds = array<i64: 8, 1>, scalar_prefetch = 0 : i64, scratch_operands = 0 : i64, tpu.core_type = #tpu.core_type<tc>, window_params = [{transform_indices = @transform_0, window_bounds = array<i64: 256, 64>}, {transform_indices = @transform_1, window_bounds = array<i64: 64, 128>}, {transform_indices = @transform_2, window_bounds = array<i64: 256, 128>}]} {
    %c0 = arith.constant 0 : index
    %c0_0 = arith.constant 0 : index
    %0 = vector.load %arg2[%c0, %c0_0] : memref<256x64xbf16, #tpu.memory_space<vmem>>, vector<256x64xbf16>
    %c0_1 = arith.constant 0 : index
    %c0_2 = arith.constant 0 : index
    %1 = vector.load %arg3[%c0_1, %c0_2] : memref<64x128xbf16, #tpu.memory_space<vmem>>, vector<64x128xbf16>
    %cst = arith.constant dense<0.000000e+00> : vector<256x128xf32>
    %2 = tpu.matmul %0, %1, %cst {dimension_numbers = #tpu.dot_dimension_numbers<[1], [0], [0], [1], [0, 0, 1, 1], [], []>} : vector<256x64xbf16>, vector<64x128xbf16>, vector<256x128xf32> -> vector<256x128xf32>
    %c0_3 = arith.constant 0 : index
    %c0_4 = arith.constant 0 : index
    %3 = vector.load %arg4[%c0_3, %c0_4] : memref<256x128xf32, #tpu.memory_space<vmem>>, vector<256x128xf32>
    tpu.vector_store %arg4[%c0_3, %c0_4], %2 {strides = array<i32>} : memref<256x128xf32, #tpu.memory_space<vmem>>, vector<256x128xf32>,
    return
  }
  func.func @transform_0(%arg0: i32, %arg1: i32) -> (i32, i32) {
    %c0_i32 = arith.constant 0 : i32
    %c0_i32_0 = arith.constant 0 : i32
    return %arg0, %c0_i32 : i32, i32
  }
  func.func @transform_1(%arg0: i32, %arg1: i32) -> (i32, i32) {
    %c0_i32 = arith.constant 0 : i32
    %c0_i32_0 = arith.constant 0 : i32
    return %c0_i32, %arg1 : i32, i32
  }
  func.func @transform_2(%arg0: i32, %arg1: i32) -> (i32, i32) {
    %c0_i32 = arith.constant 0 : i32
    return %arg0, %arg1 : i32, i32
  }
}

module attributes {stable_mosaic.version = 11 : i64} {
  func.func @_tanh_kernel(%arg0: i32, %arg1: memref<96x128xf32, #tpu.memory_space<vmem>>, %arg2: memref<96x128xf32, #tpu.memory_space<vmem>>) attributes {dimension_semantics = [#tpu.dimension_semantics<parallel>], iteration_bounds = array<i64: 2>, scalar_prefetch = 0 : i64, scratch_operands = 0 : i64, tpu.core_type = #tpu.core_type<tc>, window_params = [{transform_indices = @transform_0, window_bounds = array<i64: 96, 128>}, {transform_indices = @transform_1, window_bounds = array<i64: 96, 128>}]} {
    %c0 = arith.constant 0 : index
    %c0_0 = arith.constant 0 : index
    %0 = vector.load %arg1[%c0, %c0_0] : memref<96x128xf32, #tpu.memory_space<vmem>>, vector<96x128xf32>
    %1 = math.tanh %0 : vector<96x128xf32>
    %c0_1 = arith.constant 0 : index
    %c0_2 = arith.constant 0 : index
    %2 = vector.load %arg2[%c0_1, %c0_2] : memref<96x128xf32, #tpu.memory_space<vmem>>, vector<96x128xf32>
    tpu.vector_store %arg2[%c0_1, %c0_2], %1 {strides = array<i32>} : memref<96x128xf32, #tpu.memory_space<vmem>>, vector<96x128xf32>,
    return
  }
  func.func @transform_0(%arg0: i32) -> (i32, i32) {
    %c0_i32 = arith.constant 0 : i32
    %c0_i32_0 = arith.constant 0 : i32
    return %arg0, %c0_i32 : i32, i32
  }
  func.func @transform_1(%arg0: i32) -> (i32, i32) {
    %c0_i32 = arith.constant 0 : i32
    %c0_i32_0 = arith.constant 0 : i32
    return %arg0, %c0_i32 : i32, i32
  }
}

</mosaic_0001>

<llo_original>
// kernel: _lambda_.10
$region0: #{_lambda_.10}
  #allocation0 [shape = 'u32[]', space=smem, size = 0x4, offset = 0x4, fixed_abs, tag = 'smem constant byte address 0x4 - core index']
  #allocation1 [shape = 'u32[72,128]{1,0:T(1,128)}', space=vmem, size = 0x9000, scoped, tag = 'internal scratch']
  %s0 = inlined_call_operand.vmem [shape: bf16[8,16], index: 0, kind: input, shape index: {}]
  %s1 = inlined_call_operand.hbm [shape: bf16[16,8192], index: 1, kind: input, shape index: {}]
  %s2 = inlined_call_operand.vmem [shape: f32[8,8192], index: 2, kind: output, shape index: {}]
  %s3 = sld [smem:[#allocation0]]
  $region45: #{_lambda_.10} parent=0
    _
  %s5 = ssub.s32 1, %s3
  %s6 = scalar_select 0, %s5, %s3
  $region1: #{_lambda_.10} parent=0
    #allocation2 [shape = 'u8[32768]{0}', space=vmem, size = 0x8000, scoped, tag = 'input window, operand 1']
    #allocation3 [shape = 's32[2]{0}', space=sflag, size = 0x8, scoped, tag = 'scoped memory for _lambda_.10']
    %7 = vsyncpa [#allocation3], 0
    %s8 = scalar_lea.sflag [#allocation3], 1
    %9 = vsyncpa %s8, 0
    loop: start=0, step=1, limit=18
    $region2: #{_lambda_.10} parent=1 // loop_pre_header
      _
    $region3: #{_lambda_.10} parent=1 // loop_header
      %s11 = sphi 0, %s15
      %p12 = scmp.ge.s32.totalorder %s11, 18
      %s18 = sphi 0, %s30
      %s19 = sphi 0, %s26
      %s20 = sphi 0, %s18
      %s21 = sphi 0, %s19
      %s22 = sphi 0, %s20
      %s23 = sphi 0, %s21
      %s33 = sphi 0, %s35
      %s36 = sphi 0, %s33
      %s37 = sphi 0, %s36
      %s53 = sphi 0, %s37
      %s59 = sphi 0, %s61
      %s62 = sphi 0, %s59
      %s63 = sphi 0, %s62
      %s79 = sphi 0, %s63
      %s87 = sphi 0, %s89
      %s90 = sphi 0, %s87
      %s91 = sphi 0, %s90
      %s107 = sphi 0, %s91
    $region4: #{_lambda_.10} parent=1 // loop_header_branch
      %14 = sbr.rel (%p12) target = $region8
    $region5: #{_lambda_.10} parent=1 // loop_body
      %s16 = ssub.s32 %s11, 1
      %s17 = ssub.s32 %s11, 2
      %s24 = sadd.s32 1, %s19
      %p25 = scmp.ge.s32.totalorder %s24, 16
      %s26 = scalar_select %p25, 0, %s24
      %s27 = sadd.s32 1, %s18
      %s28 = scalar_select %p25, %s27, %s18
      %p29 = scmp.ge.s32.totalorder %s28, 1
      %s30 = scalar_select %p29, 0, %s28
      %s31 = ssub.s32 %s18, %s30
      %p32 = scmp.eq.s32.totalorder %s31, 0
      %s34 = sadd.s32 %s33, 1
      %s35 = scalar_select %p32, %s33, %s34
      %p38 = pneg %p32
      %p39 = scmp.eq.s32.totalorder %s11, 15
      %p40 = por %p38, %p39
      %p41 = scmp.ne.s32.totalorder %s33, %s36
      %p42 = scmp.eq.s32.totalorder %s11, 0
      %p43 = por %p41, %p42
      %p44 = scmp.ne.s32.totalorder %s33, %s36
      %p45 = scmp.eq.s32.totalorder %s16, 15
      %p46 = por %p44, %p45
      %p47 = scmp.ne.s32.totalorder %s36, %s37
      %p48 = scmp.eq.s32.totalorder %s16, 0
      %p49 = por %p47, %p48
      %p50 = scmp.ne.s32.totalorder %s36, %s37
      %p51 = scmp.eq.s32.totalorder %s17, 15
      %p52 = por %p50, %p51
      %p54 = scmp.ne.s32.totalorder %s37, %s53
      %p55 = scmp.eq.s32.totalorder %s17, 0
      %p56 = por %p54, %p55
      %s57 = ssub.s32 %s19, %s26
      %p58 = scmp.eq.s32.totalorder %s57, 0
      %s60 = sadd.s32 %s59, 1
      %s61 = scalar_select %p58, %s59, %s60
      %p64 = pneg %p58
      %p65 = scmp.eq.s32.totalorder %s11, 15
      %p66 = por %p64, %p65
      %p67 = scmp.ne.s32.totalorder %s59, %s62
      %p68 = scmp.eq.s32.totalorder %s11, 0
      %p69 = por %p67, %p68
      %p70 = scmp.ne.s32.totalorder %s59, %s62
      %p71 = scmp.eq.s32.totalorder %s16, 15
      %p72 = por %p70, %p71
      %p73 = scmp.ne.s32.totalorder %s62, %s63
      %p74 = scmp.eq.s32.totalorder %s16, 0
      %p75 = por %p73, %p74
      %p76 = scmp.ne.s32.totalorder %s62, %s63
      %p77 = scmp.eq.s32.totalorder %s17, 15
      %p78 = por %p76, %p77
      %p80 = scmp.ne.s32.totalorder %s63, %s79
      %p81 = scmp.eq.s32.totalorder %s17, 0
      %p82 = por %p80, %p81
      %s83 = ssub.s32 %s18, %s30
      %s84 = ssub.s32 %s19, %s26
      %s85 = sor.u32 %s83, %s84
      %p86 = scmp.eq.s32.totalorder %s85, 0
      %s88 = sadd.s32 %s87, 1
      %s89 = scalar_select %p86, %s87, %s88
      %p92 = pneg %p86
      %p93 = scmp.eq.s32.totalorder %s11, 15
      %p94 = por %p92, %p93
      %p95 = scmp.ne.s32.totalorder %s87, %s90
      %p96 = scmp.eq.s32.totalorder %s11, 0
      %p97 = por %p95, %p96
      %p98 = scmp.ne.s32.totalorder %s87, %s90
      %p99 = scmp.eq.s32.totalorder %s16, 15
      %p100 = por %p98, %p99
      %p101 = scmp.ne.s32.totalorder %s90, %s91
      %p102 = scmp.eq.s32.totalorder %s16, 0
      %p103 = por %p101, %p102
      %p104 = scmp.ne.s32.totalorder %s90, %s91
      %p105 = scmp.eq.s32.totalorder %s17, 15
      %p106 = por %p104, %p105
      %p108 = scmp.ne.s32.totalorder %s91, %s107
      %p109 = scmp.eq.s32.totalorder %s17, 0
      %p110 = por %p108, %p109
      %p111 = scmp.le.s32.totalorder 1, %s11
      %p112 = scmp.lt.s32.totalorder %s11, 17
      %p113 = pnand %p111, %p112
      %p114 = pneg %p113
      // Predicated region
      $region9: #{_lambda_.10} parent=5 // pred_check
        _
      $region10: #{_lambda_.10} parent=5 // pred_check_branch
        %116 = sbr.rel (%p113) target = $region12
      $region11: #{_lambda_.10} parent=5 // pred_region
        %s117 = ssub.s32 %s11, 1
        // Predicated region
        $region13: #{_lambda_.10} parent=11 // pred_check
          %p118 = pneg %p49
        $region14: #{_lambda_.10} parent=11 // pred_check_branch
          %120 = sbr.rel (%p118) target = $region16
        $region15: #{_lambda_.10} parent=11 // pred_region
          %p121 = scmp.lt.s32.totalorder %s20, 0
          %s122 = scalar_select %p121, %s20, 0
          %s123 = smul.addr %s122, 4
          %s124 = scalar_lea.vmem %s0, %s123
        $region16: #{_lambda_.10} parent=11 // pred_fallthru
          _
      $region12: #{_lambda_.10} parent=5 // pred_fallthru
        _
      %p125 = scmp.lt.s32.totalorder %s11, 16
      // Predicated region
      $region17: #{_lambda_.10} parent=5 // pred_check
        %p126 = pneg %p125
      $region18: #{_lambda_.10} parent=5 // pred_check_branch
        %128 = sbr.rel (%p126) target = $region20
      $region19: #{_lambda_.10} parent=5 // pred_region
        // Predicated region
        $region21: #{_lambda_.10} parent=19 // pred_check
          %p129 = pneg %p69
        $region22: #{_lambda_.10} parent=19 // pred_check_branch
          %131 = sbr.rel (%p129) target = $region24
        $region23: #{_lambda_.10} parent=19 // pred_region
          %s132 = sand.u32 %s59, 1
          %s133 = scalar_lea.sflag [#allocation3], %s132
          %s134 = sand.u32 %s59, 1
          %s135 = smul.addr %s134, 32
          %s136 = scalar_lea.vmem [#allocation2], %s135
          %s137 = smul.u32 4, %s19
          %139 = vsyncadd %s133, 0
          %s140 = smul.addr %s137, 4
          %s141 = scalar_lea.hbm %s1, %s140
          %s142 = sshll.u32 %s141, 4
          %s143 = int_to_ptr.hbm [resolvable:$true] %s142
          %s144 = sshll.u32 %s136, 4
          %s145 = int_to_ptr.vmem [resolvable:$true] %s144
          %150 = dma.hbm_to_vmem [thread:$0]  %s143, 512, %s145, %s133, 4096, 256, 16
        $region24: #{_lambda_.10} parent=19 // pred_fallthru
          _
      $region20: #{_lambda_.10} parent=5 // pred_fallthru
        _
      %p151 = scmp.le.s32.totalorder 1, %s11
      %p152 = scmp.lt.s32.totalorder %s11, 17
      %p153 = pnand %p151, %p152
      %p154 = pneg %p153
      // Predicated region
      $region25: #{_lambda_.10} parent=5 // pred_check
        _
      $region26: #{_lambda_.10} parent=5 // pred_check_branch
        %156 = sbr.rel (%p153) target = $region28
      $region27: #{_lambda_.10} parent=5 // pred_region
        %s157 = ssub.s32 %s11, 1
        %s158 = sand.u32 %s62, 1
        %s159 = scalar_lea.sflag [#allocation3], %s158
        %s160 = sand.u32 %s62, 1
        %s161 = smul.addr %s160, 32
        %s162 = scalar_lea.vmem [#allocation2], %s161
        // Predicated region
        $region29: #{_lambda_.10} parent=27 // pred_check
          %p163 = pneg %p75
        $region30: #{_lambda_.10} parent=27 // pred_check_branch
          %165 = sbr.rel (%p163) target = $region32
        $region31: #{_lambda_.10} parent=27 // pred_region
          %167 = dma.done %s159, 512
        $region32: #{_lambda_.10} parent=27 // pred_fallthru
          _
        %p168 = scmp.lt.s32.totalorder %s20, 0
        %s169 = scalar_select %p168, %s20, 0
        %s170 = smul.addr %s169, 4
        %s171 = scalar_lea.vmem %s0, %s170
        %p172 = pneg %p49
        %p173 = pneg %p46
        %s174 = sand.u32 %s62, 1
        %s175 = scalar_lea.sflag [#allocation3], %s174
        %s176 = sand.u32 %s62, 1
        %s177 = smul.addr %s176, 32
        %s178 = scalar_lea.vmem [#allocation2], %s177
        %p179 = pneg %p75
        %p180 = pneg %p72
        %p181 = pneg %p103
        %p182 = pneg %p100
        %s183 = smul.u32 4, %s21
        %p184 = scmp.lt.s32.totalorder %s20, 0
        %s185 = scalar_select %p184, %s20, 0
        %p186 = scmp.lt.s32.totalorder %s183, 63
        %s187 = scalar_select %p186, %s183, 63
        %s188 = smul.addr %s185, 64
        %s189 = sadd.s32 %s187, %s188
        %s190 = smul.addr %s189, 8
        %s191 = scalar_lea.vmem %s2, %s190
        %p192 = scmp.lt.s32.totalorder %s20, 0
        %s193 = scalar_select %p192, %s20, 0
        %s194 = smul.addr %s193, 4
        %s195 = scalar_lea.vmem %s0, %s194
        %s196 = smul.u32 4, %s21
        %s197 = smul.u32 4, %s21
        %p198 = scmp.lt.s32.totalorder %s20, 0
        %s199 = scalar_select %p198, %s20, 0
        %p200 = scmp.lt.s32.totalorder %s197, 63
        %s201 = scalar_select %p200, %s197, 63
        %s202 = smul.addr %s199, 64
        %s203 = sadd.s32 %s201, %s202
        %s204 = smul.addr %s203, 8
        %s205 = scalar_lea.vmem %s2, %s204
        %s206 = smul.u32 4, %s21
        %v208 = vld [vmem:[%s195] sm:$0xf]
        %v209 = vld [vmem:[%s162] sm:$0xff]
        %v210 = vld [vmem:[%s162 + $0x8] sm:$0xff]
        %v211 = vld [vmem:[%s162 + $0x10] sm:$0xff]
        %v212 = vld [vmem:[%s162 + $0x18] sm:$0xff]
        %v217 = vunpack.c.l.b16 %v209
        %v218 = vunpack.c.h.b16 %v209
        %v219 = vunpack.c.l.b16 %v210
        %v220 = vunpack.c.h.b16 %v210
        %v221 = vunpack.c.l.b16 %v211
        %v222 = vunpack.c.h.b16 %v211
        %v223 = vunpack.c.l.b16 %v212
        %v224 = vunpack.c.h.b16 %v212
        %v225 = vpack.c.b16 %v221, %v217
        %v226 = vpack.c.b16 %v222, %v218
        %v227 = vpack.c.b16 %v223, %v219
        %v228 = vpack.c.b16 %v224, %v220
        %vm233 = vcmask 130048
        %v235 = vsel %vm233, %v208, 0
        %237 = vmatpush.bf16.msra.mxu0 0
        %238 = vmatpush.bf16.msra.mxu0 0
        %239 = vmatpush.bf16.msra.mxu0 0
        %240 = vmatpush.bf16.msra.mxu0 0
        %241 = vmatpush.bf16.msra.mxu0 0
        %242 = vmatpush.bf16.msra.mxu0 0
        %243 = vmatpush.bf16.msra.mxu0 0
        %244 = vmatpush.bf16.msra.mxu0 %v225
        %245 = vmatmul.bf16.gmra.mxu0 %v235
        %v246 = vpop.f32.mrf.mxu0
        %v247 = vadd.f32 0.0, %v246
        %v248 = vpop.f32.mrf.mxu0
        %249 = vdwg.mxu0
        %250 = vmatpush.bf16.msra.mxu0 0
        %251 = vmatpush.bf16.msra.mxu0 0
        %252 = vmatpush.bf16.msra.mxu0 0
        %253 = vmatpush.bf16.msra.mxu0 0
        %254 = vmatpush.bf16.msra.mxu0 0
        %255 = vmatpush.bf16.msra.mxu0 0
        %256 = vmatpush.bf16.msra.mxu0 0
        %257 = vmatpush.bf16.msra.mxu0 %v226
        %258 = vmatmul.bf16.gmra.mxu0 %v235
        %v259 = vpop.f32.mrf.mxu0
        %v260 = vadd.f32 0.0, %v259
        %v261 = vpop.f32.mrf.mxu0
        %262 = vdwg.mxu0
        %263 = vmatpush.bf16.msra.mxu0 0
        %264 = vmatpush.bf16.msra.mxu0 0
        %265 = vmatpush.bf16.msra.mxu0 0
        %266 = vmatpush.bf16.msra.mxu0 0
        %267 = vmatpush.bf16.msra.mxu0 0
        %268 = vmatpush.bf16.msra.mxu0 0
        %269 = vmatpush.bf16.msra.mxu0 0
        %270 = vmatpush.bf16.msra.mxu0 %v227
        %271 = vmatmul.bf16.gmra.mxu0 %v235
        %v272 = vpop.f32.mrf.mxu0
        %v273 = vadd.f32 0.0, %v272
        %v274 = vpop.f32.mrf.mxu0
        %275 = vdwg.mxu0
        %276 = vmatpush.bf16.msra.mxu0 0
        %277 = vmatpush.bf16.msra.mxu0 0
        %278 = vmatpush.bf16.msra.mxu0 0
        %279 = vmatpush.bf16.msra.mxu0 0
        %280 = vmatpush.bf16.msra.mxu0 0
        %281 = vmatpush.bf16.msra.mxu0 0
        %282 = vmatpush.bf16.msra.mxu0 0
        %283 = vmatpush.bf16.msra.mxu0 %v228
        %284 = vmatmul.bf16.gmra.mxu0 %v235
        %v285 = vpop.f32.mrf.mxu0
        %v286 = vadd.f32 0.0, %v285
        %v287 = vpop.f32.mrf.mxu0
        %288 = vdwg.mxu0
        %289 = vst [vmem:[%s205] sm:$0xff] %v247
        %290 = vst [vmem:[%s205 + $0x8] sm:$0xff] %v260
        %291 = vst [vmem:[%s205 + $0x10] sm:$0xff] %v273
        %292 = vst [vmem:[%s205 + $0x18] sm:$0xff] %v286
        %s293 = smul.u32 4, %s21
        %p294 = scmp.lt.s32.totalorder %s20, 0
        %s295 = scalar_select %p294, %s20, 0
        %p296 = scmp.lt.s32.totalorder %s293, 63
        %s297 = scalar_select %p296, %s293, 63
        %s298 = smul.addr %s295, 64
        %s299 = sadd.s32 %s297, %s298
        %s300 = smul.addr %s299, 8
        %s301 = scalar_lea.vmem %s2, %s300
        // Predicated region
        $region33: #{_lambda_.10} parent=27 // pred_check
          %p302 = pneg %p100
        $region34: #{_lambda_.10} parent=27 // pred_check_branch
          %304 = sbr.rel (%p302) target = $region36
        $region35: #{_lambda_.10} parent=27 // pred_region
          %s305 = smul.u32 4, %s21
        $region36: #{_lambda_.10} parent=27 // pred_fallthru
          _
      $region28: #{_lambda_.10} parent=5 // pred_fallthru
        _
      %p306 = scmp.le.s32.totalorder 2, %s11
      // Predicated region
      $region37: #{_lambda_.10} parent=5 // pred_check
        %p307 = pneg %p306
      $region38: #{_lambda_.10} parent=5 // pred_check_branch
        %309 = sbr.rel (%p307) target = $region40
      $region39: #{_lambda_.10} parent=5 // pred_region
        %s310 = ssub.s32 %s11, 2
        // Predicated region
        $region41: #{_lambda_.10} parent=39 // pred_check
          %p311 = pneg %p106
        $region42: #{_lambda_.10} parent=39 // pred_check_branch
          %313 = sbr.rel (%p311) target = $region44
        $region43: #{_lambda_.10} parent=39 // pred_region
          %s314 = smul.u32 4, %s23
          %p315 = scmp.lt.s32.totalorder %s22, 0
          %s316 = scalar_select %p315, %s22, 0
          %p317 = scmp.lt.s32.totalorder %s314, 63
          %s318 = scalar_select %p317, %s314, 63
          %s319 = smul.addr %s316, 64
          %s320 = sadd.s32 %s318, %s319
          %s321 = smul.addr %s320, 8
          %s322 = scalar_lea.vmem %s2, %s321
        $region44: #{_lambda_.10} parent=39 // pred_fallthru
          _
      $region40: #{_lambda_.10} parent=5 // pred_fallthru
        _
    $region6: #{_lambda_.10} parent=1 // loop_footer
      %s15 = sadd.s32 1, %s11
    $region7: #{_lambda_.10} parent=1 // loop_footer_branch
      %10 = sbr.rel target = $region3
    $region8: #{_lambda_.10} parent=1 // loop_exit
      _
    %323 = vsyncpa [#allocation3], 1
    %s324 = scalar_lea.sflag [#allocation3], 1
    %325 = vsyncpa %s324, 1

// kernel: _lambda_.11
$region0: #{_lambda_.11}
  #allocation0 [shape = 'u32[]', space=smem, size = 0x4, offset = 0x4, fixed_abs, tag = 'smem constant byte address 0x4 - core index']
  #allocation1 [shape = 'u32[72,128]{1,0:T(1,128)}', space=vmem, size = 0x9000, scoped, tag = 'internal scratch']
  %s0 = inlined_call_operand.vmem [shape: f32[32,512], index: 0, kind: input, shape index: {}]
  %s1 = inlined_call_operand.vmem [shape: f32[1,512], index: 1, kind: input, shape index: {}]
  %s2 = inlined_call_operand.vmem [shape: f32[1,512], index: 2, kind: input, shape index: {}]
  %s3 = inlined_call_operand.vmem [shape: bf16[32,512], index: 3, kind: output, shape index: {}]
  %s4 = sld [smem:[#allocation0]]
  $region45: #{_lambda_.11} parent=0
    _
  %s6 = ssub.s32 1, %s4
  %s7 = scalar_select 0, %s6, %s4
  loop: start=0, step=1, limit=4
  $region2: #{_lambda_.11} parent=0 // loop_pre_header
    _
  $region3: #{_lambda_.11} parent=0 // loop_header
    %s9 = sphi 0, %s13
    %p10 = scmp.ge.s32.totalorder %s9, 4
    %s19 = sphi 0, %s21
    %s22 = sphi 0, %s19
    %s23 = sphi 0, %s22
    %s39 = sphi 0, %s23
    %s43 = sphi 0, %s43
    %s45 = sphi 0, %s43
    %s46 = sphi 0, %s45
    %s60 = sphi 0, %s46
    %s64 = sphi 0, %s64
    %s66 = sphi 0, %s64
    %s67 = sphi 0, %s66
    %s81 = sphi 0, %s67
    %s87 = sphi 0, %s89
    %s90 = sphi 0, %s87
    %s91 = sphi 0, %s90
    %s107 = sphi 0, %s91
  $region4: #{_lambda_.11} parent=0 // loop_header_branch
    %12 = sbr.rel (%p10) target = $region8
  $region5: #{_lambda_.11} parent=0 // loop_body
    %s14 = ssub.s32 %s9, 1
    %s15 = ssub.s32 %s9, 2
    %s16 = sadd.s32 %s9, 1
    %s17 = ssub.s32 %s9, %s16
    %p18 = scmp.eq.s32.totalorder %s17, 0
    %s20 = sadd.s32 %s19, 1
    %s21 = scalar_select %p18, %s19, %s20
    %p24 = pneg %p18
    %p25 = scmp.eq.s32.totalorder %s9, 1
    %p26 = por %p24, %p25
    %p27 = scmp.ne.s32.totalorder %s19, %s22
    %p28 = scmp.eq.s32.totalorder %s9, 0
    %p29 = por %p27, %p28
    %p30 = scmp.ne.s32.totalorder %s19, %s22
    %p31 = scmp.eq.s32.totalorder %s14, 1
    %p32 = por %p30, %p31
    %p33 = scmp.ne.s32.totalorder %s22, %s23
    %p34 = scmp.eq.s32.totalorder %s14, 0
    %p35 = por %p33, %p34
    %p36 = scmp.ne.s32.totalorder %s22, %s23
    %p37 = scmp.eq.s32.totalorder %s15, 1
    %p38 = por %p36, %p37
    %p40 = scmp.ne.s32.totalorder %s23, %s39
    %p41 = scmp.eq.s32.totalorder %s15, 0
    %p42 = por %p40, %p41
    %s44 = sadd.s32 %s43, 1
    %p47 = scmp.eq.s32.totalorder %s9, 1
    %p48 = scmp.ne.s32.totalorder %s43, %s45
    %p49 = scmp.eq.s32.totalorder %s9, 0
    %p50 = por %p48, %p49
    %p51 = scmp.ne.s32.totalorder %s43, %s45
    %p52 = scmp.eq.s32.totalorder %s14, 1
    %p53 = por %p51, %p52
    %p54 = scmp.ne.s32.totalorder %s45, %s46
    %p55 = scmp.eq.s32.totalorder %s14, 0
    %p56 = por %p54, %p55
    %p57 = scmp.ne.s32.totalorder %s45, %s46
    %p58 = scmp.eq.s32.totalorder %s15, 1
    %p59 = por %p57, %p58
    %p61 = scmp.ne.s32.totalorder %s46, %s60
    %p62 = scmp.eq.s32.totalorder %s15, 0
    %p63 = por %p61, %p62
    %s65 = sadd.s32 %s64, 1
    %p68 = scmp.eq.s32.totalorder %s9, 1
    %p69 = scmp.ne.s32.totalorder %s64, %s66
    %p70 = scmp.eq.s32.totalorder %s9, 0
    %p71 = por %p69, %p70
    %p72 = scmp.ne.s32.totalorder %s64, %s66
    %p73 = scmp.eq.s32.totalorder %s14, 1
    %p74 = por %p72, %p73
    %p75 = scmp.ne.s32.totalorder %s66, %s67
    %p76 = scmp.eq.s32.totalorder %s14, 0
    %p77 = por %p75, %p76
    %p78 = scmp.ne.s32.totalorder %s66, %s67
    %p79 = scmp.eq.s32.totalorder %s15, 1
    %p80 = por %p78, %p79
    %p82 = scmp.ne.s32.totalorder %s67, %s81
    %p83 = scmp.eq.s32.totalorder %s15, 0
    %p84 = por %p82, %p83
    %s85 = ssub.s32 %s9, %s16
    %p86 = scmp.eq.s32.totalorder %s85, 0
    %s88 = sadd.s32 %s87, 1
    %s89 = scalar_select %p86, %s87, %s88
    %p92 = pneg %p86
    %p93 = scmp.eq.s32.totalorder %s9, 1
    %p94 = por %p92, %p93
    %p95 = scmp.ne.s32.totalorder %s87, %s90
    %p96 = scmp.eq.s32.totalorder %s9, 0
    %p97 = por %p95, %p96
    %p98 = scmp.ne.s32.totalorder %s87, %s90
    %p99 = scmp.eq.s32.totalorder %s14, 1
    %p100 = por %p98, %p99
    %p101 = scmp.ne.s32.totalorder %s90, %s91
    %p102 = scmp.eq.s32.totalorder %s14, 0
    %p103 = por %p101, %p102
    %p104 = scmp.ne.s32.totalorder %s90, %s91
    %p105 = scmp.eq.s32.totalorder %s15, 1
    %p106 = por %p104, %p105
    %p108 = scmp.ne.s32.totalorder %s91, %s107
    %p109 = scmp.eq.s32.totalorder %s15, 0
    %p110 = por %p108, %p109
    %p111 = scmp.le.s32.totalorder 1, %s9
    %p112 = scmp.lt.s32.totalorder %s9, 3
    %p113 = pnand %p111, %p112
    %p114 = pneg %p113
    // Predicated region
    $region9: #{_lambda_.11} parent=5 // pred_check
      _
    $region10: #{_lambda_.11} parent=5 // pred_check_branch
      %116 = sbr.rel (%p113) target = $region12
    $region11: #{_lambda_.11} parent=5 // pred_region
      %s117 = ssub.s32 %s9, 1
      // Predicated region
      $region13: #{_lambda_.11} parent=11 // pred_check
        %p118 = pneg %p56
      $region14: #{_lambda_.11} parent=11 // pred_check_branch
        %120 = sbr.rel (%p118) target = $region16
      $region15: #{_lambda_.11} parent=11 // pred_region
        _
      $region16: #{_lambda_.11} parent=11 // pred_fallthru
        _
      // Predicated region
      $region17: #{_lambda_.11} parent=11 // pred_check
        %p121 = pneg %p77
      $region18: #{_lambda_.11} parent=11 // pred_check_branch
        %123 = sbr.rel (%p121) target = $region20
      $region19: #{_lambda_.11} parent=11 // pred_region
        _
      $region20: #{_lambda_.11} parent=11 // pred_fallthru
        _
    $region12: #{_lambda_.11} parent=5 // pred_fallthru
      _
    %p124 = scmp.lt.s32.totalorder %s9, 2
    // Predicated region
    $region21: #{_lambda_.11} parent=5 // pred_check
      %p125 = pneg %p124
    $region22: #{_lambda_.11} parent=5 // pred_check_branch
      %127 = sbr.rel (%p125) target = $region24
    $region23: #{_lambda_.11} parent=5 // pred_region
      // Predicated region
      $region25: #{_lambda_.11} parent=23 // pred_check
        %p128 = pneg %p29
      $region26: #{_lambda_.11} parent=23 // pred_check_branch
        %130 = sbr.rel (%p128) target = $region28
      $region27: #{_lambda_.11} parent=23 // pred_region
        %s131 = smul.u32 2, %s9
        %p132 = scmp.lt.s32.totalorder %s131, 3
        %s133 = scalar_select %p132, %s131, 3
        %s134 = smul.addr %s133, 4
        %s135 = smul.addr %s134, 8
        %s136 = scalar_lea.vmem %s0, %s135
        %s137 = smul.u32 2, %s9
      $region28: #{_lambda_.11} parent=23 // pred_fallthru
        _
    $region24: #{_lambda_.11} parent=5 // pred_fallthru
      _
    %p138 = scmp.le.s32.totalorder 1, %s9
    %p139 = scmp.lt.s32.totalorder %s9, 3
    %p140 = pnand %p138, %p139
    %p141 = pneg %p140
    // Predicated region
    $region29: #{_lambda_.11} parent=5 // pred_check
      _
    $region30: #{_lambda_.11} parent=5 // pred_check_branch
      %143 = sbr.rel (%p140) target = $region32
    $region31: #{_lambda_.11} parent=5 // pred_region
      %s144 = ssub.s32 %s9, 1
      %s145 = smul.u32 2, %s14
      %p146 = scmp.lt.s32.totalorder %s145, 3
      %s147 = scalar_select %p146, %s145, 3
      %s148 = smul.addr %s147, 4
      %s149 = smul.addr %s148, 8
      %s150 = scalar_lea.vmem %s0, %s149
      %p151 = pneg %p35
      %p152 = pneg %p32
      %p153 = pneg %p56
      %p154 = pneg %p53
      %p155 = pneg %p77
      %p156 = pneg %p74
      %p157 = pneg %p103
      %p158 = pneg %p100
      %s159 = smul.u32 2, %s14
      %p160 = scmp.lt.s32.totalorder %s159, 3
      %s161 = scalar_select %p160, %s159, 3
      %s162 = smul.addr %s161, 4
      %s163 = smul.addr %s162, 4
      %s164 = scalar_lea.vmem %s3, %s163
      %s165 = smul.u32 2, %s14
      %p166 = scmp.lt.s32.totalorder %s165, 3
      %s167 = scalar_select %p166, %s165, 3
      %s168 = smul.addr %s167, 4
      %s169 = smul.addr %s168, 8
      %s170 = scalar_lea.vmem %s0, %s169
      %s171 = smul.u32 2, %s14
      %s172 = smul.u32 2, %s14
      %p173 = scmp.lt.s32.totalorder %s172, 3
      %s174 = scalar_select %p173, %s172, 3
      %s175 = smul.addr %s174, 4
      %s176 = smul.addr %s175, 4
      %s177 = scalar_lea.vmem %s3, %s176
      %s178 = smul.u32 2, %s14
      %v179 = vld [vmem:[%s170] sm:$0xff]
      %v180 = vld [vmem:[%s170 + $0x8] sm:$0xff]
      %v181 = vld [vmem:[%s170 + $0x10] sm:$0xff]
      %v182 = vld [vmem:[%s170 + $0x18] sm:$0xff]
      %v183 = vld [vmem:[%s170 + $0x20] sm:$0xff]
      %v184 = vld [vmem:[%s170 + $0x28] sm:$0xff]
      %v185 = vld [vmem:[%s170 + $0x30] sm:$0xff]
      %v186 = vld [vmem:[%s170 + $0x38] sm:$0xff]
      %v187 = vld [vmem:[%s1] sm:$0xf]
      %v189 = vperm.slane %v187, 0
      %v190 = vperm.slane %v187, 1
      %v191 = vperm.slane %v187, 2
      %v192 = vperm.slane %v187, 3
      %v197 = vmul.f32 %v179, %v189
      %v198 = vmul.f32 %v180, %v190
      %v199 = vmul.f32 %v181, %v191
      %v200 = vmul.f32 %v182, %v192
      %v201 = vmul.f32 %v183, %v189
      %v202 = vmul.f32 %v184, %v190
      %v203 = vmul.f32 %v185, %v191
      %v204 = vmul.f32 %v186, %v192
      %v205 = vld [vmem:[%s2] sm:$0xf]
      %v207 = vperm.slane %v205, 0
      %v208 = vperm.slane %v205, 1
      %v209 = vperm.slane %v205, 2
      %v210 = vperm.slane %v205, 3
      %v215 = vadd.f32 %v197, %v207
      %v216 = vadd.f32 %v198, %v208
      %v217 = vadd.f32 %v199, %v209
      %v218 = vadd.f32 %v200, %v210
      %v219 = vadd.f32 %v201, %v207
      %v220 = vadd.f32 %v202, %v208
      %v221 = vadd.f32 %v203, %v209
      %v222 = vadd.f32 %v204, %v210
      %v223 = vmax.f32 %v215, 0.0
      %v224 = vmax.f32 %v216, 0.0
      %v225 = vmax.f32 %v217, 0.0
      %v226 = vmax.f32 %v218, 0.0
      %v227 = vmax.f32 %v219, 0.0
      %v228 = vmax.f32 %v220, 0.0
      %v229 = vmax.f32 %v221, 0.0
      %v230 = vmax.f32 %v222, 0.0
      %v231 = vpack.c.bf16 %v224, %v223
      %v232 = vpack.c.bf16 %v226, %v225
      %v233 = vpack.c.bf16 %v228, %v227
      %v234 = vpack.c.bf16 %v230, %v229
      %235 = vst [vmem:[%s177] sm:$0xff] %v231
      %236 = vst [vmem:[%s177 + $0x8] sm:$0xff] %v232
      %237 = vst [vmem:[%s177 + $0x10] sm:$0xff] %v233
      %238 = vst [vmem:[%s177 + $0x18] sm:$0xff] %v234
      %s239 = smul.u32 2, %s14
      %p240 = scmp.lt.s32.totalorder %s239, 3
      %s241 = scalar_select %p240, %s239, 3
      %s242 = smul.addr %s241, 4
      %s243 = smul.addr %s242, 4
      %s244 = scalar_lea.vmem %s3, %s243
      // Predicated region
      $region33: #{_lambda_.11} parent=31 // pred_check
        %p245 = pneg %p100
      $region34: #{_lambda_.11} parent=31 // pred_check_branch
        %247 = sbr.rel (%p245) target = $region36
      $region35: #{_lambda_.11} parent=31 // pred_region
        %s248 = smul.u32 2, %s14
      $region36: #{_lambda_.11} parent=31 // pred_fallthru
        _
    $region32: #{_lambda_.11} parent=5 // pred_fallthru
      _
    %p249 = scmp.le.s32.totalorder 2, %s9
    // Predicated region
    $region37: #{_lambda_.11} parent=5 // pred_check
      %p250 = pneg %p249
    $region38: #{_lambda_.11} parent=5 // pred_check_branch
      %252 = sbr.rel (%p250) target = $region40
    $region39: #{_lambda_.11} parent=5 // pred_region
      %s253 = ssub.s32 %s9, 2
      // Predicated region
      $region41: #{_lambda_.11} parent=39 // pred_check
        %p254 = pneg %p106
      $region42: #{_lambda_.11} parent=39 // pred_check_branch
        %256 = sbr.rel (%p254) target = $region44
      $region43: #{_lambda_.11} parent=39 // pred_region
        %s257 = smul.u32 2, %s15
        %p258 = scmp.lt.s32.totalorder %s257, 3
        %s259 = scalar_select %p258, %s257, 3
        %s260 = smul.addr %s259, 4
        %s261 = smul.addr %s260, 4
        %s262 = scalar_lea.vmem %s3, %s261
      $region44: #{_lambda_.11} parent=39 // pred_fallthru
        _
    $region40: #{_lambda_.11} parent=5 // pred_fallthru
      _
  $region6: #{_lambda_.11} parent=0 // loop_footer
    %s13 = sadd.s32 1, %s9
  $region7: #{_lambda_.11} parent=0 // loop_footer_branch
    %8 = sbr.rel target = $region3
  $region8: #{_lambda_.11} parent=0 // loop_exit
    _

// kernel: _lambda_.12
$region0: #{_lambda_.12}
  #allocation0 [shape = 'u32[]', space=smem, size = 0x4, offset = 0x4, fixed_abs, tag = 'smem constant byte address 0x4 - core index']
  #allocation1 [shape = 'u32[72,128]{1,0:T(1,128)}', space=vmem, size = 0x9000, scoped, tag = 'internal scratch']
  %s0 = inlined_call_operand.vmem [shape: bf16[32,512], index: 0, kind: input, shape index: {}]
  %s1 = inlined_call_operand.hbm [shape: bf16[512,4096], index: 1, kind: input, shape index: {}]
  %s2 = inlined_call_operand.vmem [shape: f32[32,4096], index: 2, kind: output, shape index: {}]
  %s3 = sld [smem:[#allocation0]]
  $region64: #{_lambda_.12} parent=0
    _
  %s5 = ssub.s32 1, %s3
  %s6 = scalar_select 0, %s5, %s3
  $region1: #{_lambda_.12} parent=0
    #allocation2 [shape = 'u8[1048576]{0}', space=vmem, size = 0x100000, scoped, tag = 'input window, operand 1']
    #allocation3 [shape = 's32[2]{0}', space=sflag, size = 0x8, scoped, tag = 'scoped memory for _lambda_.12']
    #allocation4 [shape = 'u8[131072]{0}', space=vmem, size = 0x20000, scoped, tag = 'output window, operand 0']
    %7 = vsyncpa [#allocation3], 0
    %s8 = scalar_lea.sflag [#allocation3], 1
    %9 = vsyncpa %s8, 0
    loop: start=0, step=1, limit=10
    $region2: #{_lambda_.12} parent=1 // loop_pre_header
      _
    $region3: #{_lambda_.12} parent=1 // loop_header
      %s11 = sphi 0, %s15
      %p12 = scmp.ge.s32.totalorder %s11, 10
      %s18 = sphi 0, %s30
      %s19 = sphi 0, %s26
      %s20 = sphi 0, %s18
      %s21 = sphi 0, %s19
      %s22 = sphi 0, %s20
      %s23 = sphi 0, %s21
      %s33 = sphi 0, %s35
      %s36 = sphi 0, %s33
      %s37 = sphi 0, %s36
      %s53 = sphi 0, %s37
      %s59 = sphi 0, %s61
      %s62 = sphi 0, %s59
      %s63 = sphi 0, %s62
      %s79 = sphi 0, %s63
      %s87 = sphi 0, %s89
      %s90 = sphi 0, %s87
      %s91 = sphi 0, %s90
      %s107 = sphi 0, %s91
    $region4: #{_lambda_.12} parent=1 // loop_header_branch
      %14 = sbr.rel (%p12) target = $region8
    $region5: #{_lambda_.12} parent=1 // loop_body
      %s16 = ssub.s32 %s11, 1
      %s17 = ssub.s32 %s11, 2
      %s24 = sadd.s32 1, %s19
      %p25 = scmp.ge.s32.totalorder %s24, 8
      %s26 = scalar_select %p25, 0, %s24
      %s27 = sadd.s32 1, %s18
      %s28 = scalar_select %p25, %s27, %s18
      %p29 = scmp.ge.s32.totalorder %s28, 1
      %s30 = scalar_select %p29, 0, %s28
      %s31 = ssub.s32 %s18, %s30
      %p32 = scmp.eq.s32.totalorder %s31, 0
      %s34 = sadd.s32 %s33, 1
      %s35 = scalar_select %p32, %s33, %s34
      %p38 = pneg %p32
      %p39 = scmp.eq.s32.totalorder %s11, 7
      %p40 = por %p38, %p39
      %p41 = scmp.ne.s32.totalorder %s33, %s36
      %p42 = scmp.eq.s32.totalorder %s11, 0
      %p43 = por %p41, %p42
      %p44 = scmp.ne.s32.totalorder %s33, %s36
      %p45 = scmp.eq.s32.totalorder %s16, 7
      %p46 = por %p44, %p45
      %p47 = scmp.ne.s32.totalorder %s36, %s37
      %p48 = scmp.eq.s32.totalorder %s16, 0
      %p49 = por %p47, %p48
      %p50 = scmp.ne.s32.totalorder %s36, %s37
      %p51 = scmp.eq.s32.totalorder %s17, 7
      %p52 = por %p50, %p51
      %p54 = scmp.ne.s32.totalorder %s37, %s53
      %p55 = scmp.eq.s32.totalorder %s17, 0
      %p56 = por %p54, %p55
      %s57 = ssub.s32 %s19, %s26
      %p58 = scmp.eq.s32.totalorder %s57, 0
      %s60 = sadd.s32 %s59, 1
      %s61 = scalar_select %p58, %s59, %s60
      %p64 = pneg %p58
      %p65 = scmp.eq.s32.totalorder %s11, 7
      %p66 = por %p64, %p65
      %p67 = scmp.ne.s32.totalorder %s59, %s62
      %p68 = scmp.eq.s32.totalorder %s11, 0
      %p69 = por %p67, %p68
      %p70 = scmp.ne.s32.totalorder %s59, %s62
      %p71 = scmp.eq.s32.totalorder %s16, 7
      %p72 = por %p70, %p71
      %p73 = scmp.ne.s32.totalorder %s62, %s63
      %p74 = scmp.eq.s32.totalorder %s16, 0
      %p75 = por %p73, %p74
      %p76 = scmp.ne.s32.totalorder %s62, %s63
      %p77 = scmp.eq.s32.totalorder %s17, 7
      %p78 = por %p76, %p77
      %p80 = scmp.ne.s32.totalorder %s63, %s79
      %p81 = scmp.eq.s32.totalorder %s17, 0
      %p82 = por %p80, %p81
      %s83 = ssub.s32 %s18, %s30
      %s84 = ssub.s32 %s19, %s26
      %s85 = sor.u32 %s83, %s84
      %p86 = scmp.eq.s32.totalorder %s85, 0
      %s88 = sadd.s32 %s87, 1
      %s89 = scalar_select %p86, %s87, %s88
      %p92 = pneg %p86
      %p93 = scmp.eq.s32.totalorder %s11, 7
      %p94 = por %p92, %p93
      %p95 = scmp.ne.s32.totalorder %s87, %s90
      %p96 = scmp.eq.s32.totalorder %s11, 0
      %p97 = por %p95, %p96
      %p98 = scmp.ne.s32.totalorder %s87, %s90
      %p99 = scmp.eq.s32.totalorder %s16, 7
      %p100 = por %p98, %p99
      %p101 = scmp.ne.s32.totalorder %s90, %s91
      %p102 = scmp.eq.s32.totalorder %s16, 0
      %p103 = por %p101, %p102
      %p104 = scmp.ne.s32.totalorder %s90, %s91
      %p105 = scmp.eq.s32.totalorder %s17, 7
      %p106 = por %p104, %p105
      %p108 = scmp.ne.s32.totalorder %s91, %s107
      %p109 = scmp.eq.s32.totalorder %s17, 0
      %p110 = por %p108, %p109
      %p111 = scmp.le.s32.totalorder 1, %s11
      %p112 = scmp.lt.s32.totalorder %s11, 9
      %p113 = pnand %p111, %p112
      %p114 = pneg %p113
      // Predicated region
      $region9: #{_lambda_.12} parent=5 // pred_check
        _
      $region10: #{_lambda_.12} parent=5 // pred_check_branch
        %116 = sbr.rel (%p113) target = $region12
      $region11: #{_lambda_.12} parent=5 // pred_region
        %s117 = ssub.s32 %s11, 1
        // Predicated region
        $region13: #{_lambda_.12} parent=11 // pred_check
          %p118 = pneg %p49
        $region14: #{_lambda_.12} parent=11 // pred_check_branch
          %120 = sbr.rel (%p118) target = $region16
        $region15: #{_lambda_.12} parent=11 // pred_region
          %s121 = smul.u32 4, %s20
          %p122 = scmp.lt.s32.totalorder %s121, 3
          %s123 = scalar_select %p122, %s121, 3
          %s124 = smul.addr %s123, 4
          %s125 = smul.addr %s124, 4
          %s126 = scalar_lea.vmem %s0, %s125
          %s127 = smul.u32 4, %s20
        $region16: #{_lambda_.12} parent=11 // pred_fallthru
          _
      $region12: #{_lambda_.12} parent=5 // pred_fallthru
        _
      %p128 = scmp.lt.s32.totalorder %s11, 8
      // Predicated region
      $region17: #{_lambda_.12} parent=5 // pred_check
        %p129 = pneg %p128
      $region18: #{_lambda_.12} parent=5 // pred_check_branch
        %131 = sbr.rel (%p129) target = $region20
      $region19: #{_lambda_.12} parent=5 // pred_region
        // Predicated region
        $region21: #{_lambda_.12} parent=19 // pred_check
          %p132 = pneg %p69
        $region22: #{_lambda_.12} parent=19 // pred_check_branch
          %134 = sbr.rel (%p132) target = $region24
        $region23: #{_lambda_.12} parent=19 // pred_region
          %s135 = sand.u32 %s59, 1
          %s136 = scalar_lea.sflag [#allocation3], %s135
          %s137 = sand.u32 %s59, 1
          %s138 = smul.addr %s137, 1024
          %s139 = scalar_lea.vmem [#allocation2], %s138
          %s140 = smul.u32 4, %s19
          %142 = vsyncadd %s136, 0
          %s143 = smul.addr %s140, 4
          %s144 = scalar_lea.hbm %s1, %s143
          %s145 = sshll.u32 %s144, 4
          %s146 = int_to_ptr.hbm [resolvable:$true] %s145
          %s147 = sshll.u32 %s139, 4
          %s148 = int_to_ptr.vmem [resolvable:$true] %s147
          %153 = dma.hbm_to_vmem [thread:$0]  %s146, 16384, %s148, %s136, 2048, 256, 16
        $region24: #{_lambda_.12} parent=19 // pred_fallthru
          _
      $region20: #{_lambda_.12} parent=5 // pred_fallthru
        _
      %p154 = scmp.le.s32.totalorder 1, %s11
      %p155 = scmp.lt.s32.totalorder %s11, 9
      %p156 = pnand %p154, %p155
      %p157 = pneg %p156
      // Predicated region
      $region25: #{_lambda_.12} parent=5 // pred_check
        _
      $region26: #{_lambda_.12} parent=5 // pred_check_branch
        %159 = sbr.rel (%p156) target = $region28
      $region27: #{_lambda_.12} parent=5 // pred_region
        %s160 = ssub.s32 %s11, 1
        %s161 = sand.u32 %s62, 1
        %s162 = scalar_lea.sflag [#allocation3], %s161
        %s163 = sand.u32 %s62, 1
        %s164 = smul.addr %s163, 1024
        %s165 = scalar_lea.vmem [#allocation2], %s164
        // Predicated region
        $region29: #{_lambda_.12} parent=27 // pred_check
          %p166 = pneg %p75
        $region30: #{_lambda_.12} parent=27 // pred_check_branch
          %168 = sbr.rel (%p166) target = $region32
        $region31: #{_lambda_.12} parent=27 // pred_region
          %170 = dma.done %s162, 16384
        $region32: #{_lambda_.12} parent=27 // pred_fallthru
          _
        %s171 = smul.u32 4, %s20
        %p172 = scmp.lt.s32.totalorder %s171, 3
        %s173 = scalar_select %p172, %s171, 3
        %s174 = smul.addr %s173, 4
        %s175 = smul.addr %s174, 4
        %s176 = scalar_lea.vmem %s0, %s175
        %p177 = pneg %p49
        %p178 = pneg %p46
        %s179 = sand.u32 %s62, 1
        %s180 = scalar_lea.sflag [#allocation3], %s179
        %s181 = sand.u32 %s62, 1
        %s182 = smul.addr %s181, 1024
        %s183 = scalar_lea.vmem [#allocation2], %s182
        %p184 = pneg %p75
        %p185 = pneg %p72
        %p186 = pneg %p103
        %p187 = pneg %p100
        %s188 = sand.u32 %s90, 1
        %s189 = sand.u32 %s90, 1
        %s190 = smul.addr %s189, 128
        %s191 = scalar_lea.vmem [#allocation4], %s190
        %s192 = smul.u32 4, %s20
        %p193 = scmp.lt.s32.totalorder %s192, 3
        %s194 = scalar_select %p193, %s192, 3
        %s195 = smul.addr %s194, 4
        %s196 = smul.addr %s195, 4
        %s197 = scalar_lea.vmem %s0, %s196
        %s198 = smul.u32 4, %s20
        %s199 = smul.u32 4, %s21
        %s200 = smul.u32 4, %s20
        %s201 = smul.u32 4, %s21
        %v202 = vld [vmem:[%s197] sm:$0xff]
        %v203 = vld [vmem:[%s197 + $0x8] sm:$0xff]
        %v204 = vld [vmem:[%s197 + $0x10] sm:$0xff]
        %v205 = vld [vmem:[%s197 + $0x18] sm:$0xff]
        %v206 = vld [vmem:[%s197 + $0x20] sm:$0xff]
        %v207 = vld [vmem:[%s197 + $0x28] sm:$0xff]
        %v208 = vld [vmem:[%s197 + $0x30] sm:$0xff]
        %v209 = vld [vmem:[%s197 + $0x38] sm:$0xff]
        %v210 = vld [vmem:[%s165] sm:$0xff]
        %v211 = vld [vmem:[%s165 + $0x8] sm:$0xff]
        %v212 = vld [vmem:[%s165 + $0x10] sm:$0xff]
        %v213 = vld [vmem:[%s165 + $0x18] sm:$0xff]
        %v214 = vld [vmem:[%s165 + $0x20] sm:$0xff]
        %v215 = vld [vmem:[%s165 + $0x28] sm:$0xff]
        %v216 = vld [vmem:[%s165 + $0x30] sm:$0xff]
        %v217 = vld [vmem:[%s165 + $0x38] sm:$0xff]
        %v218 = vld [vmem:[%s165 + $0x40] sm:$0xff]
        %v219 = vld [vmem:[%s165 + $0x48] sm:$0xff]
        %v220 = vld [vmem:[%s165 + $0x50] sm:$0xff]
        %v221 = vld [vmem:[%s165 + $0x58] sm:$0xff]
        %v222 = vld [vmem:[%s165 + $0x60] sm:$0xff]
        %v223 = vld [vmem:[%s165 + $0x68] sm:$0xff]
        %v224 = vld [vmem:[%s165 + $0x70] sm:$0xff]
        %v225 = vld [vmem:[%s165 + $0x78] sm:$0xff]
        %v226 = vld [vmem:[%s165 + $0x80] sm:$0xff]
        %v227 = vld [vmem:[%s165 + $0x88] sm:$0xff]
        %v228 = vld [vmem:[%s165 + $0x90] sm:$0xff]
        %v229 = vld [vmem:[%s165 + $0x98] sm:$0xff]
        %v230 = vld [vmem:[%s165 + $0xa0] sm:$0xff]
        %v231 = vld [vmem:[%s165 + $0xa8] sm:$0xff]
        %v232 = vld [vmem:[%s165 + $0xb0] sm:$0xff]
        %v233 = vld [vmem:[%s165 + $0xb8] sm:$0xff]
        %v234 = vld [vmem:[%s165 + $0xc0] sm:$0xff]
        %v235 = vld [vmem:[%s165 + $0xc8] sm:$0xff]
        %v236 = vld [vmem:[%s165 + $0xd0] sm:$0xff]
        %v237 = vld [vmem:[%s165 + $0xd8] sm:$0xff]
        %v238 = vld [vmem:[%s165 + $0xe0] sm:$0xff]
        %v239 = vld [vmem:[%s165 + $0xe8] sm:$0xff]
        %v240 = vld [vmem:[%s165 + $0xf0] sm:$0xff]
        %v241 = vld [vmem:[%s165 + $0xf8] sm:$0xff]
        %v242 = vld [vmem:[%s165 + $0x100] sm:$0xff]
        %v243 = vld [vmem:[%s165 + $0x108] sm:$0xff]
        %v244 = vld [vmem:[%s165 + $0x110] sm:$0xff]
        %v245 = vld [vmem:[%s165 + $0x118] sm:$0xff]
        %v246 = vld [vmem:[%s165 + $0x120] sm:$0xff]
        %v247 = vld [vmem:[%s165 + $0x128] sm:$0xff]
        %v248 = vld [vmem:[%s165 + $0x130] sm:$0xff]
        %v249 = vld [vmem:[%s165 + $0x138] sm:$0xff]
        %v250 = vld [vmem:[%s165 + $0x140] sm:$0xff]
        %v251 = vld [vmem:[%s165 + $0x148] sm:$0xff]
        %v252 = vld [vmem:[%s165 + $0x150] sm:$0xff]
        %v253 = vld [vmem:[%s165 + $0x158] sm:$0xff]
        %v254 = vld [vmem:[%s165 + $0x160] sm:$0xff]
        %v255 = vld [vmem:[%s165 + $0x168] sm:$0xff]
        %v256 = vld [vmem:[%s165 + $0x170] sm:$0xff]
        %v257 = vld [vmem:[%s165 + $0x178] sm:$0xff]
        %v258 = vld [vmem:[%s165 + $0x180] sm:$0xff]
        %v259 = vld [vmem:[%s165 + $0x188] sm:$0xff]
        %v260 = vld [vmem:[%s165 + $0x190] sm:$0xff]
        %v261 = vld [vmem:[%s165 + $0x198] sm:$0xff]
        %v262 = vld [vmem:[%s165 + $0x1a0] sm:$0xff]
        %v263 = vld [vmem:[%s165 + $0x1a8] sm:$0xff]
        %v264 = vld [vmem:[%s165 + $0x1b0] sm:$0xff]
        %v265 = vld [vmem:[%s165 + $0x1b8] sm:$0xff]
        %v266 = vld [vmem:[%s165 + $0x1c0] sm:$0xff]
        %v267 = vld [vmem:[%s165 + $0x1c8] sm:$0xff]
        %v268 = vld [vmem:[%s165 + $0x1d0] sm:$0xff]
        %v269 = vld [vmem:[%s165 + $0x1d8] sm:$0xff]
        %v270 = vld [vmem:[%s165 + $0x1e0] sm:$0xff]
        %v271 = vld [vmem:[%s165 + $0x1e8] sm:$0xff]
        %v272 = vld [vmem:[%s165 + $0x1f0] sm:$0xff]
        %v273 = vld [vmem:[%s165 + $0x1f8] sm:$0xff]
        %v274 = vld [vmem:[%s165 + $0x200] sm:$0xff]
        %v275 = vld [vmem:[%s165 + $0x208] sm:$0xff]
        %v276 = vld [vmem:[%s165 + $0x210] sm:$0xff]
        %v277 = vld [vmem:[%s165 + $0x218] sm:$0xff]
        %v278 = vld [vmem:[%s165 + $0x220] sm:$0xff]
        %v279 = vld [vmem:[%s165 + $0x228] sm:$0xff]
        %v280 = vld [vmem:[%s165 + $0x230] sm:$0xff]
        %v281 = vld [vmem:[%s165 + $0x238] sm:$0xff]
        %v282 = vld [vmem:[%s165 + $0x240] sm:$0xff]
        %v283 = vld [vmem:[%s165 + $0x248] sm:$0xff]
        %v284 = vld [vmem:[%s165 + $0x250] sm:$0xff]
        %v285 = vld [vmem:[%s165 + $0x258] sm:$0xff]
        %v286 = vld [vmem:[%s165 + $0x260] sm:$0xff]
        %v287 = vld [vmem:[%s165 + $0x268] sm:$0xff]
        %v288 = vld [vmem:[%s165 + $0x270] sm:$0xff]
        %v289 = vld [vmem:[%s165 + $0x278] sm:$0xff]
        %v290 = vld [vmem:[%s165 + $0x280] sm:$0xff]
        %v291 = vld [vmem:[%s165 + $0x288] sm:$0xff]
        %v292 = vld [vmem:[%s165 + $0x290] sm:$0xff]
        %v293 = vld [vmem:[%s165 + $0x298] sm:$0xff]
        %v294 = vld [vmem:[%s165 + $0x2a0] sm:$0xff]
        %v295 = vld [vmem:[%s165 + $0x2a8] sm:$0xff]
        %v296 = vld [vmem:[%s165 + $0x2b0] sm:$0xff]
        %v297 = vld [vmem:[%s165 + $0x2b8] sm:$0xff]
        %v298 = vld [vmem:[%s165 + $0x2c0] sm:$0xff]
        %v299 = vld [vmem:[%s165 + $0x2c8] sm:$0xff]
        %v300 = vld [vmem:[%s165 + $0x2d0] sm:$0xff]
        %v301 = vld [vmem:[%s165 + $0x2d8] sm:$0xff]
        %v302 = vld [vmem:[%s165 + $0x2e0] sm:$0xff]
        %v303 = vld [vmem:[%s165 + $0x2e8] sm:$0xff]
        %v304 = vld [vmem:[%s165 + $0x2f0] sm:$0xff]
        %v305 = vld [vmem:[%s165 + $0x2f8] sm:$0xff]
        %v306 = vld [vmem:[%s165 + $0x300] sm:$0xff]
        %v307 = vld [vmem:[%s165 + $0x308] sm:$0xff]
        %v308 = vld [vmem:[%s165 + $0x310] sm:$0xff]
        %v309 = vld [vmem:[%s165 + $0x318] sm:$0xff]
        %v310 = vld [vmem:[%s165 + $0x320] sm:$0xff]
        %v311 = vld [vmem:[%s165 + $0x328] sm:$0xff]
        %v312 = vld [vmem:[%s165 + $0x330] sm:$0xff]
        %v313 = vld [vmem:[%s165 + $0x338] sm:$0xff]
        %v314 = vld [vmem:[%s165 + $0x340] sm:$0xff]
        %v315 = vld [vmem:[%s165 + $0x348] sm:$0xff]
        %v316 = vld [vmem:[%s165 + $0x350] sm:$0xff]
        %v317 = vld [vmem:[%s165 + $0x358] sm:$0xff]
        %v318 = vld [vmem:[%s165 + $0x360] sm:$0xff]
        %v319 = vld [vmem:[%s165 + $0x368] sm:$0xff]
        %v320 = vld [vmem:[%s165 + $0x370] sm:$0xff]
        %v321 = vld [vmem:[%s165 + $0x378] sm:$0xff]
        %v322 = vld [vmem:[%s165 + $0x380] sm:$0xff]
        %v323 = vld [vmem:[%s165 + $0x388] sm:$0xff]
        %v324 = vld [vmem:[%s165 + $0x390] sm:$0xff]
        %v325 = vld [vmem:[%s165 + $0x398] sm:$0xff]
        %v326 = vld [vmem:[%s165 + $0x3a0] sm:$0xff]
        %v327 = vld [vmem:[%s165 + $0x3a8] sm:$0xff]
        %v328 = vld [vmem:[%s165 + $0x3b0] sm:$0xff]
        %v329 = vld [vmem:[%s165 + $0x3b8] sm:$0xff]
        %v330 = vld [vmem:[%s165 + $0x3c0] sm:$0xff]
        %v331 = vld [vmem:[%s165 + $0x3c8] sm:$0xff]
        %v332 = vld [vmem:[%s165 + $0x3d0] sm:$0xff]
        %v333 = vld [vmem:[%s165 + $0x3d8] sm:$0xff]
        %v334 = vld [vmem:[%s165 + $0x3e0] sm:$0xff]
        %v335 = vld [vmem:[%s165 + $0x3e8] sm:$0xff]
        %v336 = vld [vmem:[%s165 + $0x3f0] sm:$0xff]
        %v337 = vld [vmem:[%s165 + $0x3f8] sm:$0xff]
        %v346 = vunpack.c.l.b16 %v202
        %v347 = vunpack.c.h.b16 %v202
        %v348 = vunpack.c.l.b16 %v203
        %v349 = vunpack.c.h.b16 %v203
        %v350 = vunpack.c.l.b16 %v204
        %v351 = vunpack.c.h.b16 %v204
        %v352 = vunpack.c.l.b16 %v205
        %v353 = vunpack.c.h.b16 %v205
        %v354 = vunpack.c.l.b16 %v206
        %v355 = vunpack.c.h.b16 %v206
        %v356 = vunpack.c.l.b16 %v207
        %v357 = vunpack.c.h.b16 %v207
        %v358 = vunpack.c.l.b16 %v208
        %v359 = vunpack.c.h.b16 %v208
        %v360 = vunpack.c.l.b16 %v209
        %v361 = vunpack.c.h.b16 %v209
        %v362 = vpack.c.b16 %v350, %v346
        %v363 = vpack.c.b16 %v351, %v347
        %v364 = vpack.c.b16 %v352, %v348
        %v365 = vpack.c.b16 %v353, %v349
        %v366 = vpack.c.b16 %v358, %v354
        %v367 = vpack.c.b16 %v359, %v355
        %v368 = vpack.c.b16 %v360, %v356
        %v369 = vpack.c.b16 %v361, %v357
        %v506 = vunpack.c.l.b16 %v210
        %v507 = vunpack.c.h.b16 %v210
        %v508 = vunpack.c.l.b16 %v211
        %v509 = vunpack.c.h.b16 %v211
        %v510 = vunpack.c.l.b16 %v212
        %v511 = vunpack.c.h.b16 %v212
        %v512 = vunpack.c.l.b16 %v213
        %v513 = vunpack.c.h.b16 %v213
        %v514 = vunpack.c.l.b16 %v214
        %v515 = vunpack.c.h.b16 %v214
        %v516 = vunpack.c.l.b16 %v215
        %v517 = vunpack.c.h.b16 %v215
        %v518 = vunpack.c.l.b16 %v216
        %v519 = vunpack.c.h.b16 %v216
        %v520 = vunpack.c.l.b16 %v217
        %v521 = vunpack.c.h.b16 %v217
        %v522 = vunpack.c.l.b16 %v218
        %v523 = vunpack.c.h.b16 %v218
        %v524 = vunpack.c.l.b16 %v219
        %v525 = vunpack.c.h.b16 %v219
        %v526 = vunpack.c.l.b16 %v220
        %v527 = vunpack.c.h.b16 %v220
        %v528 = vunpack.c.l.b16 %v221
        %v529 = vunpack.c.h.b16 %v221
        %v530 = vunpack.c.l.b16 %v222
        %v531 = vunpack.c.h.b16 %v222
        %v532 = vunpack.c.l.b16 %v223
        %v533 = vunpack.c.h.b16 %v223
        %v534 = vunpack.c.l.b16 %v224
        %v535 = vunpack.c.h.b16 %v224
        %v536 = vunpack.c.l.b16 %v225
        %v537 = vunpack.c.h.b16 %v225
        %v538 = vunpack.c.l.b16 %v226
        %v539 = vunpack.c.h.b16 %v226
        %v540 = vunpack.c.l.b16 %v227
        %v541 = vunpack.c.h.b16 %v227
        %v542 = vunpack.c.l.b16 %v228
        %v543 = vunpack.c.h.b16 %v228
        %v544 = vunpack.c.l.b16 %v229
        %v545 = vunpack.c.h.b16 %v229
        %v546 = vunpack.c.l.b16 %v230
        %v547 = vunpack.c.h.b16 %v230
        %v548 = vunpack.c.l.b16 %v231
        %v549 = vunpack.c.h.b16 %v231
        %v550 = vunpack.c.l.b16 %v232
        %v551 = vunpack.c.h.b16 %v232
        %v552 = vunpack.c.l.b16 %v233
        %v553 = vunpack.c.h.b16 %v233
        %v554 = vunpack.c.l.b16 %v234
        %v555 = vunpack.c.h.b16 %v234
        %v556 = vunpack.c.l.b16 %v235
        %v557 = vunpack.c.h.b16 %v235
        %v558 = vunpack.c.l.b16 %v236
        %v559 = vunpack.c.h.b16 %v236
        %v560 = vunpack.c.l.b16 %v237
        %v561 = vunpack.c.h.b16 %v237
        %v562 = vunpack.c.l.b16 %v238
        %v563 = vunpack.c.h.b16 %v238
        %v564 = vunpack.c.l.b16 %v239
        %v565 = vunpack.c.h.b16 %v239
        %v566 = vunpack.c.l.b16 %v240
        %v567 = vunpack.c.h.b16 %v240
        %v568 = vunpack.c.l.b16 %v241
        %v569 = vunpack.c.h.b16 %v241
        %v570 = vunpack.c.l.b16 %v242
        %v571 = vunpack.c.h.b16 %v242
        %v572 = vunpack.c.l.b16 %v243
        %v573 = vunpack.c.h.b16 %v243
        %v574 = vunpack.c.l.b16 %v244
        %v575 = vunpack.c.h.b16 %v244
        %v576 = vunpack.c.l.b16 %v245
        %v577 = vunpack.c.h.b16 %v245
        %v578 = vunpack.c.l.b16 %v246
        %v579 = vunpack.c.h.b16 %v246
        %v580 = vunpack.c.l.b16 %v247
        %v581 = vunpack.c.h.b16 %v247
        %v582 = vunpack.c.l.b16 %v248
        %v583 = vunpack.c.h.b16 %v248
        %v584 = vunpack.c.l.b16 %v249
        %v585 = vunpack.c.h.b16 %v249
        %v586 = vunpack.c.l.b16 %v250
        %v587 = vunpack.c.h.b16 %v250
        %v588 = vunpack.c.l.b16 %v251
        %v589 = vunpack.c.h.b16 %v251
        %v590 = vunpack.c.l.b16 %v252
        %v591 = vunpack.c.h.b16 %v252
        %v592 = vunpack.c.l.b16 %v253
        %v593 = vunpack.c.h.b16 %v253
        %v594 = vunpack.c.l.b16 %v254
        %v595 = vunpack.c.h.b16 %v254
        %v596 = vunpack.c.l.b16 %v255
        %v597 = vunpack.c.h.b16 %v255
        %v598 = vunpack.c.l.b16 %v256
        %v599 = vunpack.c.h.b16 %v256
        %v600 = vunpack.c.l.b16 %v257
        %v601 = vunpack.c.h.b16 %v257
        %v602 = vunpack.c.l.b16 %v258
        %v603 = vunpack.c.h.b16 %v258
        %v604 = vunpack.c.l.b16 %v259
        %v605 = vunpack.c.h.b16 %v259
        %v606 = vunpack.c.l.b16 %v260
        %v607 = vunpack.c.h.b16 %v260
        %v608 = vunpack.c.l.b16 %v261
        %v609 = vunpack.c.h.b16 %v261
        %v610 = vunpack.c.l.b16 %v262
        %v611 = vunpack.c.h.b16 %v262
        %v612 = vunpack.c.l.b16 %v263
        %v613 = vunpack.c.h.b16 %v263
        %v614 = vunpack.c.l.b16 %v264
        %v615 = vunpack.c.h.b16 %v264
        %v616 = vunpack.c.l.b16 %v265
        %v617 = vunpack.c.h.b16 %v265
        %v618 = vunpack.c.l.b16 %v266
        %v619 = vunpack.c.h.b16 %v266
        %v620 = vunpack.c.l.b16 %v267
        %v621 = vunpack.c.h.b16 %v267
        %v622 = vunpack.c.l.b16 %v268
        %v623 = vunpack.c.h.b16 %v268
        %v624 = vunpack.c.l.b16 %v269
        %v625 = vunpack.c.h.b16 %v269
        %v626 = vunpack.c.l.b16 %v270
        %v627 = vunpack.c.h.b16 %v270
        %v628 = vunpack.c.l.b16 %v271
        %v629 = vunpack.c.h.b16 %v271
        %v630 = vunpack.c.l.b16 %v272
        %v631 = vunpack.c.h.b16 %v272
        %v632 = vunpack.c.l.b16 %v273
        %v633 = vunpack.c.h.b16 %v273
        %v634 = vunpack.c.l.b16 %v274
        %v635 = vunpack.c.h.b16 %v274
        %v636 = vunpack.c.l.b16 %v275
        %v637 = vunpack.c.h.b16 %v275
        %v638 = vunpack.c.l.b16 %v276
        %v639 = vunpack.c.h.b16 %v276
        %v640 = vunpack.c.l.b16 %v277
        %v641 = vunpack.c.h.b16 %v277
        %v642 = vunpack.c.l.b16 %v278
        %v643 = vunpack.c.h.b16 %v278
        %v644 = vunpack.c.l.b16 %v279
        %v645 = vunpack.c.h.b16 %v279
        %v646 = vunpack.c.l.b16 %v280
        %v647 = vunpack.c.h.b16 %v280
        %v648 = vunpack.c.l.b16 %v281
        %v649 = vunpack.c.h.b16 %v281
        %v650 = vunpack.c.l.b16 %v282
        %v651 = vunpack.c.h.b16 %v282
        %v652 = vunpack.c.l.b16 %v283
        %v653 = vunpack.c.h.b16 %v283
        %v654 = vunpack.c.l.b16 %v284
        %v655 = vunpack.c.h.b16 %v284
        %v656 = vunpack.c.l.b16 %v285
        %v657 = vunpack.c.h.b16 %v285
        %v658 = vunpack.c.l.b16 %v286
        %v659 = vunpack.c.h.b16 %v286
        %v660 = vunpack.c.l.b16 %v287
        %v661 = vunpack.c.h.b16 %v287
        %v662 = vunpack.c.l.b16 %v288
        %v663 = vunpack.c.h.b16 %v288
        %v664 = vunpack.c.l.b16 %v289
        %v665 = vunpack.c.h.b16 %v289
        %v666 = vunpack.c.l.b16 %v290
        %v667 = vunpack.c.h.b16 %v290
        %v668 = vunpack.c.l.b16 %v291
        %v669 = vunpack.c.h.b16 %v291
        %v670 = vunpack.c.l.b16 %v292
        %v671 = vunpack.c.h.b16 %v292
        %v672 = vunpack.c.l.b16 %v293
        %v673 = vunpack.c.h.b16 %v293
        %v674 = vunpack.c.l.b16 %v294
        %v675 = vunpack.c.h.b16 %v294
        %v676 = vunpack.c.l.b16 %v295
        %v677 = vunpack.c.h.b16 %v295
        %v678 = vunpack.c.l.b16 %v296
        %v679 = vunpack.c.h.b16 %v296
        %v680 = vunpack.c.l.b16 %v297
        %v681 = vunpack.c.h.b16 %v297
        %v682 = vunpack.c.l.b16 %v298
        %v683 = vunpack.c.h.b16 %v298
        %v684 = vunpack.c.l.b16 %v299
        %v685 = vunpack.c.h.b16 %v299
        %v686 = vunpack.c.l.b16 %v300
        %v687 = vunpack.c.h.b16 %v300
        %v688 = vunpack.c.l.b16 %v301
        %v689 = vunpack.c.h.b16 %v301
        %v690 = vunpack.c.l.b16 %v302
        %v691 = vunpack.c.h.b16 %v302
        %v692 = vunpack.c.l.b16 %v303
        %v693 = vunpack.c.h.b16 %v303
        %v694 = vunpack.c.l.b16 %v304
        %v695 = vunpack.c.h.b16 %v304
        %v696 = vunpack.c.l.b16 %v305
        %v697 = vunpack.c.h.b16 %v305
        %v698 = vunpack.c.l.b16 %v306
        %v699 = vunpack.c.h.b16 %v306
        %v700 = vunpack.c.l.b16 %v307
        %v701 = vunpack.c.h.b16 %v307
        %v702 = vunpack.c.l.b16 %v308
        %v703 = vunpack.c.h.b16 %v308
        %v704 = vunpack.c.l.b16 %v309
        %v705 = vunpack.c.h.b16 %v309
        %v706 = vunpack.c.l.b16 %v310
        %v707 = vunpack.c.h.b16 %v310
        %v708 = vunpack.c.l.b16 %v311
        %v709 = vunpack.c.h.b16 %v311
        %v710 = vunpack.c.l.b16 %v312
        %v711 = vunpack.c.h.b16 %v312
        %v712 = vunpack.c.l.b16 %v313
        %v713 = vunpack.c.h.b16 %v313
        %v714 = vunpack.c.l.b16 %v314
        %v715 = vunpack.c.h.b16 %v314
        %v716 = vunpack.c.l.b16 %v315
        %v717 = vunpack.c.h.b16 %v315
        %v718 = vunpack.c.l.b16 %v316
        %v719 = vunpack.c.h.b16 %v316
        %v720 = vunpack.c.l.b16 %v317
        %v721 = vunpack.c.h.b16 %v317
        %v722 = vunpack.c.l.b16 %v318
        %v723 = vunpack.c.h.b16 %v318
        %v724 = vunpack.c.l.b16 %v319
        %v725 = vunpack.c.h.b16 %v319
        %v726 = vunpack.c.l.b16 %v320
        %v727 = vunpack.c.h.b16 %v320
        %v728 = vunpack.c.l.b16 %v321
        %v729 = vunpack.c.h.b16 %v321
        %v730 = vunpack.c.l.b16 %v322
        %v731 = vunpack.c.h.b16 %v322
        %v732 = vunpack.c.l.b16 %v323
        %v733 = vunpack.c.h.b16 %v323
        %v734 = vunpack.c.l.b16 %v324
        %v735 = vunpack.c.h.b16 %v324
        %v736 = vunpack.c.l.b16 %v325
        %v737 = vunpack.c.h.b16 %v325
        %v738 = vunpack.c.l.b16 %v326
        %v739 = vunpack.c.h.b16 %v326
        %v740 = vunpack.c.l.b16 %v327
        %v741 = vunpack.c.h.b16 %v327
        %v742 = vunpack.c.l.b16 %v328
        %v743 = vunpack.c.h.b16 %v328
        %v744 = vunpack.c.l.b16 %v329
        %v745 = vunpack.c.h.b16 %v329
        %v746 = vunpack.c.l.b16 %v330
        %v747 = vunpack.c.h.b16 %v330
        %v748 = vunpack.c.l.b16 %v331
        %v749 = vunpack.c.h.b16 %v331
        %v750 = vunpack.c.l.b16 %v332
        %v751 = vunpack.c.h.b16 %v332
        %v752 = vunpack.c.l.b16 %v333
        %v753 = vunpack.c.h.b16 %v333
        %v754 = vunpack.c.l.b16 %v334
        %v755 = vunpack.c.h.b16 %v334
        %v756 = vunpack.c.l.b16 %v335
        %v757 = vunpack.c.h.b16 %v335
        %v758 = vunpack.c.l.b16 %v336
        %v759 = vunpack.c.h.b16 %v336
        %v760 = vunpack.c.l.b16 %v337
        %v761 = vunpack.c.h.b16 %v337
        %v762 = vpack.c.b16 %v510, %v506
        %v763 = vpack.c.b16 %v511, %v507
        %v764 = vpack.c.b16 %v512, %v508
        %v765 = vpack.c.b16 %v513, %v509
        %v766 = vpack.c.b16 %v518, %v514
        %v767 = vpack.c.b16 %v519, %v515
        %v768 = vpack.c.b16 %v520, %v516
        %v769 = vpack.c.b16 %v521, %v517
        %v770 = vpack.c.b16 %v526, %v522
        %v771 = vpack.c.b16 %v527, %v523
        %v772 = vpack.c.b16 %v528, %v524
        %v773 = vpack.c.b16 %v529, %v525
        %v774 = vpack.c.b16 %v534, %v530
        %v775 = vpack.c.b16 %v535, %v531
        %v776 = vpack.c.b16 %v536, %v532
        %v777 = vpack.c.b16 %v537, %v533
        %v778 = vpack.c.b16 %v542, %v538
        %v779 = vpack.c.b16 %v543, %v539
        %v780 = vpack.c.b16 %v544, %v540
        %v781 = vpack.c.b16 %v545, %v541
        %v782 = vpack.c.b16 %v550, %v546
        %v783 = vpack.c.b16 %v551, %v547
        %v784 = vpack.c.b16 %v552, %v548
        %v785 = vpack.c.b16 %v553, %v549
        %v786 = vpack.c.b16 %v558, %v554
        %v787 = vpack.c.b16 %v559, %v555
        %v788 = vpack.c.b16 %v560, %v556
        %v789 = vpack.c.b16 %v561, %v557
        %v790 = vpack.c.b16 %v566, %v562
        %v791 = vpack.c.b16 %v567, %v563
        %v792 = vpack.c.b16 %v568, %v564
        %v793 = vpack.c.b16 %v569, %v565
        %v794 = vpack.c.b16 %v574, %v570
        %v795 = vpack.c.b16 %v575, %v571
        %v796 = vpack.c.b16 %v576, %v572
        %v797 = vpack.c.b16 %v577, %v573
        %v798 = vpack.c.b16 %v582, %v578
        %v799 = vpack.c.b16 %v583, %v579
        %v800 = vpack.c.b16 %v584, %v580
        %v801 = vpack.c.b16 %v585, %v581
        %v802 = vpack.c.b16 %v590, %v586
        %v803 = vpack.c.b16 %v591, %v587
        %v804 = vpack.c.b16 %v592, %v588
        %v805 = vpack.c.b16 %v593, %v589
        %v806 = vpack.c.b16 %v598, %v594
        %v807 = vpack.c.b16 %v599, %v595
        %v808 = vpack.c.b16 %v600, %v596
        %v809 = vpack.c.b16 %v601, %v597
        %v810 = vpack.c.b16 %v606, %v602
        %v811 = vpack.c.b16 %v607, %v603
        %v812 = vpack.c.b16 %v608, %v604
        %v813 = vpack.c.b16 %v609, %v605
        %v814 = vpack.c.b16 %v614, %v610
        %v815 = vpack.c.b16 %v615, %v611
        %v816 = vpack.c.b16 %v616, %v612
        %v817 = vpack.c.b16 %v617, %v613
        %v818 = vpack.c.b16 %v622, %v618
        %v819 = vpack.c.b16 %v623, %v619
        %v820 = vpack.c.b16 %v624, %v620
        %v821 = vpack.c.b16 %v625, %v621
        %v822 = vpack.c.b16 %v630, %v626
        %v823 = vpack.c.b16 %v631, %v627
        %v824 = vpack.c.b16 %v632, %v628
        %v825 = vpack.c.b16 %v633, %v629
        %v826 = vpack.c.b16 %v638, %v634
        %v827 = vpack.c.b16 %v639, %v635
        %v828 = vpack.c.b16 %v640, %v636
        %v829 = vpack.c.b16 %v641, %v637
        %v830 = vpack.c.b16 %v646, %v642
        %v831 = vpack.c.b16 %v647, %v643
        %v832 = vpack.c.b16 %v648, %v644
        %v833 = vpack.c.b16 %v649, %v645
        %v834 = vpack.c.b16 %v654, %v650
        %v835 = vpack.c.b16 %v655, %v651
        %v836 = vpack.c.b16 %v656, %v652
        %v837 = vpack.c.b16 %v657, %v653
        %v838 = vpack.c.b16 %v662, %v658
        %v839 = vpack.c.b16 %v663, %v659
        %v840 = vpack.c.b16 %v664, %v660
        %v841 = vpack.c.b16 %v665, %v661
        %v842 = vpack.c.b16 %v670, %v666
        %v843 = vpack.c.b16 %v671, %v667
        %v844 = vpack.c.b16 %v672, %v668
        %v845 = vpack.c.b16 %v673, %v669
        %v846 = vpack.c.b16 %v678, %v674
        %v847 = vpack.c.b16 %v679, %v675
        %v848 = vpack.c.b16 %v680, %v676
        %v849 = vpack.c.b16 %v681, %v677
        %v850 = vpack.c.b16 %v686, %v682
        %v851 = vpack.c.b16 %v687, %v683
        %v852 = vpack.c.b16 %v688, %v684
        %v853 = vpack.c.b16 %v689, %v685
        %v854 = vpack.c.b16 %v694, %v690
        %v855 = vpack.c.b16 %v695, %v691
        %v856 = vpack.c.b16 %v696, %v692
        %v857 = vpack.c.b16 %v697, %v693
        %v858 = vpack.c.b16 %v702, %v698
        %v859 = vpack.c.b16 %v703, %v699
        %v860 = vpack.c.b16 %v704, %v700
        %v861 = vpack.c.b16 %v705, %v701
        %v862 = vpack.c.b16 %v710, %v706
        %v863 = vpack.c.b16 %v711, %v707
        %v864 = vpack.c.b16 %v712, %v708
        %v865 = vpack.c.b16 %v713, %v709
        %v866 = vpack.c.b16 %v718, %v714
        %v867 = vpack.c.b16 %v719, %v715
        %v868 = vpack.c.b16 %v720, %v716
        %v869 = vpack.c.b16 %v721, %v717
        %v870 = vpack.c.b16 %v726, %v722
        %v871 = vpack.c.b16 %v727, %v723
        %v872 = vpack.c.b16 %v728, %v724
        %v873 = vpack.c.b16 %v729, %v725
        %v874 = vpack.c.b16 %v734, %v730
        %v875 = vpack.c.b16 %v735, %v731
        %v876 = vpack.c.b16 %v736, %v732
        %v877 = vpack.c.b16 %v737, %v733
        %v878 = vpack.c.b16 %v742, %v738
        %v879 = vpack.c.b16 %v743, %v739
        %v880 = vpack.c.b16 %v744, %v740
        %v881 = vpack.c.b16 %v745, %v741
        %v882 = vpack.c.b16 %v750, %v746
        %v883 = vpack.c.b16 %v751, %v747
        %v884 = vpack.c.b16 %v752, %v748
        %v885 = vpack.c.b16 %v753, %v749
        %v886 = vpack.c.b16 %v758, %v754
        %v887 = vpack.c.b16 %v759, %v755
        %v888 = vpack.c.b16 %v760, %v756
        %v889 = vpack.c.b16 %v761, %v757
        %1018 = vmatpush.bf16.msra.mxu0 %v790
        %1019 = vmatpush.bf16.msra.mxu0 %v786
        %1020 = vmatpush.bf16.msra.mxu0 %v782
        %1021 = vmatpush.bf16.msra.mxu0 %v778
        %1022 = vmatpush.bf16.msra.mxu0 %v774
        %1023 = vmatpush.bf16.msra.mxu0 %v770
        %1024 = vmatpush.bf16.msra.mxu0 %v766
        %1025 = vmatpush.bf16.msra.mxu0 %v762
        %1026 = vmatmul.bf16.gmra.mxu0 %v362
        %v1027 = vpop.f32.mrf.mxu0
        %v1028 = vadd.f32 0.0, %v1027
        %v1029 = vpop.f32.mrf.mxu0
        %v1030 = vadd.f32 0.0, %v1029
        %1031 = vmatmul.bf16.gmra.mxu0 %v366
        %v1032 = vpop.f32.mrf.mxu0
        %v1033 = vadd.f32 0.0, %v1032
        %v1034 = vpop.f32.mrf.mxu0
        %v1035 = vadd.f32 0.0, %v1034
        %1036 = vdwg.mxu0
        %1037 = vmatpush.bf16.msra.mxu0 %v822
        %1038 = vmatpush.bf16.msra.mxu0 %v818
        %1039 = vmatpush.bf16.msra.mxu0 %v814
        %1040 = vmatpush.bf16.msra.mxu0 %v810
        %1041 = vmatpush.bf16.msra.mxu0 %v806
        %1042 = vmatpush.bf16.msra.mxu0 %v802
        %1043 = vmatpush.bf16.msra.mxu0 %v798
        %1044 = vmatpush.bf16.msra.mxu0 %v794
        %1045 = vmatmul.bf16.gmra.mxu0 %v363
        %v1046 = vpop.f32.mrf.mxu0
        %v1047 = vadd.f32 %v1028, %v1046
        %v1048 = vpop.f32.mrf.mxu0
        %v1049 = vadd.f32 %v1030, %v1048
        %1050 = vmatmul.bf16.gmra.mxu0 %v367
        %v1051 = vpop.f32.mrf.mxu0
        %v1052 = vadd.f32 %v1033, %v1051
        %v1053 = vpop.f32.mrf.mxu0
        %v1054 = vadd.f32 %v1035, %v1053
        %1055 = vdwg.mxu0
        %1056 = vmatpush.bf16.msra.mxu0 %v854
        %1057 = vmatpush.bf16.msra.mxu0 %v850
        %1058 = vmatpush.bf16.msra.mxu0 %v846
        %1059 = vmatpush.bf16.msra.mxu0 %v842
        %1060 = vmatpush.bf16.msra.mxu0 %v838
        %1061 = vmatpush.bf16.msra.mxu0 %v834
        %1062 = vmatpush.bf16.msra.mxu0 %v830
        %1063 = vmatpush.bf16.msra.mxu0 %v826
        %1064 = vmatmul.bf16.gmra.mxu0 %v364
        %v1065 = vpop.f32.mrf.mxu0
        %v1066 = vadd.f32 %v1047, %v1065
        %v1067 = vpop.f32.mrf.mxu0
        %v1068 = vadd.f32 %v1049, %v1067
        %1069 = vmatmul.bf16.gmra.mxu0 %v368
        %v1070 = vpop.f32.mrf.mxu0
        %v1071 = vadd.f32 %v1052, %v1070
        %v1072 = vpop.f32.mrf.mxu0
        %v1073 = vadd.f32 %v1054, %v1072
        %1074 = vdwg.mxu0
        %1075 = vmatpush.bf16.msra.mxu0 %v886
        %1076 = vmatpush.bf16.msra.mxu0 %v882
        %1077 = vmatpush.bf16.msra.mxu0 %v878
        %1078 = vmatpush.bf16.msra.mxu0 %v874
        %1079 = vmatpush.bf16.msra.mxu0 %v870
        %1080 = vmatpush.bf16.msra.mxu0 %v866
        %1081 = vmatpush.bf16.msra.mxu0 %v862
        %1082 = vmatpush.bf16.msra.mxu0 %v858
        %1083 = vmatmul.bf16.gmra.mxu0 %v365
        %v1084 = vpop.f32.mrf.mxu0
        %v1085 = vadd.f32 %v1066, %v1084
        %v1086 = vpop.f32.mrf.mxu0
        %v1087 = vadd.f32 %v1068, %v1086
        %1088 = vmatmul.bf16.gmra.mxu0 %v369
        %v1089 = vpop.f32.mrf.mxu0
        %v1090 = vadd.f32 %v1071, %v1089
        %v1091 = vpop.f32.mrf.mxu0
        %v1092 = vadd.f32 %v1073, %v1091
        %1093 = vdwg.mxu0
        %1094 = vmatpush.bf16.msra.mxu0 %v791
        %1095 = vmatpush.bf16.msra.mxu0 %v787
        %1096 = vmatpush.bf16.msra.mxu0 %v783
        %1097 = vmatpush.bf16.msra.mxu0 %v779
        %1098 = vmatpush.bf16.msra.mxu0 %v775
        %1099 = vmatpush.bf16.msra.mxu0 %v771
        %1100 = vmatpush.bf16.msra.mxu0 %v767
        %1101 = vmatpush.bf16.msra.mxu0 %v763
        %1102 = vmatmul.bf16.gmra.mxu0 %v362
        %v1103 = vpop.f32.mrf.mxu0
        %v1104 = vadd.f32 0.0, %v1103
        %v1105 = vpop.f32.mrf.mxu0
        %v1106 = vadd.f32 0.0, %v1105
        %1107 = vmatmul.bf16.gmra.mxu0 %v366
        %v1108 = vpop.f32.mrf.mxu0
        %v1109 = vadd.f32 0.0, %v1108
        %v1110 = vpop.f32.mrf.mxu0
        %v1111 = vadd.f32 0.0, %v1110
        %1112 = vdwg.mxu0
        %1113 = vmatpush.bf16.msra.mxu0 %v823
        %1114 = vmatpush.bf16.msra.mxu0 %v819
        %1115 = vmatpush.bf16.msra.mxu0 %v815
        %1116 = vmatpush.bf16.msra.mxu0 %v811
        %1117 = vmatpush.bf16.msra.mxu0 %v807
        %1118 = vmatpush.bf16.msra.mxu0 %v803
        %1119 = vmatpush.bf16.msra.mxu0 %v799
        %1120 = vmatpush.bf16.msra.mxu0 %v795
        %1121 = vmatmul.bf16.gmra.mxu0 %v363
        %v1122 = vpop.f32.mrf.mxu0
        %v1123 = vadd.f32 %v1104, %v1122
        %v1124 = vpop.f32.mrf.mxu0
        %v1125 = vadd.f32 %v1106, %v1124
        %1126 = vmatmul.bf16.gmra.mxu0 %v367
        %v1127 = vpop.f32.mrf.mxu0
        %v1128 = vadd.f32 %v1109, %v1127
        %v1129 = vpop.f32.mrf.mxu0
        %v1130 = vadd.f32 %v1111, %v1129
        %1131 = vdwg.mxu0
        %1132 = vmatpush.bf16.msra.mxu0 %v855
        %1133 = vmatpush.bf16.msra.mxu0 %v851
        %1134 = vmatpush.bf16.msra.mxu0 %v847
        %1135 = vmatpush.bf16.msra.mxu0 %v843
        %1136 = vmatpush.bf16.msra.mxu0 %v839
        %1137 = vmatpush.bf16.msra.mxu0 %v835
        %1138 = vmatpush.bf16.msra.mxu0 %v831
        %1139 = vmatpush.bf16.msra.mxu0 %v827
        %1140 = vmatmul.bf16.gmra.mxu0 %v364
        %v1141 = vpop.f32.mrf.mxu0
        %v1142 = vadd.f32 %v1123, %v1141
        %v1143 = vpop.f32.mrf.mxu0
        %v1144 = vadd.f32 %v1125, %v1143
        %1145 = vmatmul.bf16.gmra.mxu0 %v368
        %v1146 = vpop.f32.mrf.mxu0
        %v1147 = vadd.f32 %v1128, %v1146
        %v1148 = vpop.f32.mrf.mxu0
        %v1149 = vadd.f32 %v1130, %v1148
        %1150 = vdwg.mxu0
        %1151 = vmatpush.bf16.msra.mxu0 %v887
        %1152 = vmatpush.bf16.msra.mxu0 %v883
        %1153 = vmatpush.bf16.msra.mxu0 %v879
        %1154 = vmatpush.bf16.msra.mxu0 %v875
        %1155 = vmatpush.bf16.msra.mxu0 %v871
        %1156 = vmatpush.bf16.msra.mxu0 %v867
        %1157 = vmatpush.bf16.msra.mxu0 %v863
        %1158 = vmatpush.bf16.msra.mxu0 %v859
        %1159 = vmatmul.bf16.gmra.mxu0 %v365
        %v1160 = vpop.f32.mrf.mxu0
        %v1161 = vadd.f32 %v1142, %v1160
        %v1162 = vpop.f32.mrf.mxu0
        %v1163 = vadd.f32 %v1144, %v1162
        %1164 = vmatmul.bf16.gmra.mxu0 %v369
        %v1165 = vpop.f32.mrf.mxu0
        %v1166 = vadd.f32 %v1147, %v1165
        %v1167 = vpop.f32.mrf.mxu0
        %v1168 = vadd.f32 %v1149, %v1167
        %1169 = vdwg.mxu0
        %1170 = vmatpush.bf16.msra.mxu0 %v792
        %1171 = vmatpush.bf16.msra.mxu0 %v788
        %1172 = vmatpush.bf16.msra.mxu0 %v784
        %1173 = vmatpush.bf16.msra.mxu0 %v780
        %1174 = vmatpush.bf16.msra.mxu0 %v776
        %1175 = vmatpush.bf16.msra.mxu0 %v772
        %1176 = vmatpush.bf16.msra.mxu0 %v768
        %1177 = vmatpush.bf16.msra.mxu0 %v764
        %1178 = vmatmul.bf16.gmra.mxu0 %v362
        %v1179 = vpop.f32.mrf.mxu0
        %v1180 = vadd.f32 0.0, %v1179
        %v1181 = vpop.f32.mrf.mxu0
        %v1182 = vadd.f32 0.0, %v1181
        %1183 = vmatmul.bf16.gmra.mxu0 %v366
        %v1184 = vpop.f32.mrf.mxu0
        %v1185 = vadd.f32 0.0, %v1184
        %v1186 = vpop.f32.mrf.mxu0
        %v1187 = vadd.f32 0.0, %v1186
        %1188 = vdwg.mxu0
        %1189 = vmatpush.bf16.msra.mxu0 %v824
        %1190 = vmatpush.bf16.msra.mxu0 %v820
        %1191 = vmatpush.bf16.msra.mxu0 %v816
        %1192 = vmatpush.bf16.msra.mxu0 %v812
        %1193 = vmatpush.bf16.msra.mxu0 %v808
        %1194 = vmatpush.bf16.msra.mxu0 %v804
        %1195 = vmatpush.bf16.msra.mxu0 %v800
        %1196 = vmatpush.bf16.msra.mxu0 %v796
        %1197 = vmatmul.bf16.gmra.mxu0 %v363
        %v1198 = vpop.f32.mrf.mxu0
        %v1199 = vadd.f32 %v1180, %v1198
        %v1200 = vpop.f32.mrf.mxu0
        %v1201 = vadd.f32 %v1182, %v1200
        %1202 = vmatmul.bf16.gmra.mxu0 %v367
        %v1203 = vpop.f32.mrf.mxu0
        %v1204 = vadd.f32 %v1185, %v1203
        %v1205 = vpop.f32.mrf.mxu0
        %v1206 = vadd.f32 %v1187, %v1205
        %1207 = vdwg.mxu0
        %1208 = vmatpush.bf16.msra.mxu0 %v856
        %1209 = vmatpush.bf16.msra.mxu0 %v852
        %1210 = vmatpush.bf16.msra.mxu0 %v848
        %1211 = vmatpush.bf16.msra.mxu0 %v844
        %1212 = vmatpush.bf16.msra.mxu0 %v840
        %1213 = vmatpush.bf16.msra.mxu0 %v836
        %1214 = vmatpush.bf16.msra.mxu0 %v832
        %1215 = vmatpush.bf16.msra.mxu0 %v828
        %1216 = vmatmul.bf16.gmra.mxu0 %v364
        %v1217 = vpop.f32.mrf.mxu0
        %v1218 = vadd.f32 %v1199, %v1217
        %v1219 = vpop.f32.mrf.mxu0
        %v1220 = vadd.f32 %v1201, %v1219
        %1221 = vmatmul.bf16.gmra.mxu0 %v368
        %v1222 = vpop.f32.mrf.mxu0
        %v1223 = vadd.f32 %v1204, %v1222
        %v1224 = vpop.f32.mrf.mxu0
        %v1225 = vadd.f32 %v1206, %v1224
        %1226 = vdwg.mxu0
        %1227 = vmatpush.bf16.msra.mxu0 %v888
        %1228 = vmatpush.bf16.msra.mxu0 %v884
        %1229 = vmatpush.bf16.msra.mxu0 %v880
        %1230 = vmatpush.bf16.msra.mxu0 %v876
        %1231 = vmatpush.bf16.msra.mxu0 %v872
        %1232 = vmatpush.bf16.msra.mxu0 %v868
        %1233 = vmatpush.bf16.msra.mxu0 %v864
        %1234 = vmatpush.bf16.msra.mxu0 %v860
        %1235 = vmatmul.bf16.gmra.mxu0 %v365
        %v1236 = vpop.f32.mrf.mxu0
        %v1237 = vadd.f32 %v1218, %v1236
        %v1238 = vpop.f32.mrf.mxu0
        %v1239 = vadd.f32 %v1220, %v1238
        %1240 = vmatmul.bf16.gmra.mxu0 %v369
        %v1241 = vpop.f32.mrf.mxu0
        %v1242 = vadd.f32 %v1223, %v1241
        %v1243 = vpop.f32.mrf.mxu0
        %v1244 = vadd.f32 %v1225, %v1243
        %1245 = vdwg.mxu0
        %1246 = vmatpush.bf16.msra.mxu0 %v793
        %1247 = vmatpush.bf16.msra.mxu0 %v789
        %1248 = vmatpush.bf16.msra.mxu0 %v785
        %1249 = vmatpush.bf16.msra.mxu0 %v781
        %1250 = vmatpush.bf16.msra.mxu0 %v777
        %1251 = vmatpush.bf16.msra.mxu0 %v773
        %1252 = vmatpush.bf16.msra.mxu0 %v769
        %1253 = vmatpush.bf16.msra.mxu0 %v765
        %1254 = vmatmul.bf16.gmra.mxu0 %v362
        %v1255 = vpop.f32.mrf.mxu0
        %v1256 = vadd.f32 0.0, %v1255
        %v1257 = vpop.f32.mrf.mxu0
        %v1258 = vadd.f32 0.0, %v1257
        %1259 = vmatmul.bf16.gmra.mxu0 %v366
        %v1260 = vpop.f32.mrf.mxu0
        %v1261 = vadd.f32 0.0, %v1260
        %v1262 = vpop.f32.mrf.mxu0
        %v1263 = vadd.f32 0.0, %v1262
        %1264 = vdwg.mxu0
        %1265 = vmatpush.bf16.msra.mxu0 %v825
        %1266 = vmatpush.bf16.msra.mxu0 %v821
        %1267 = vmatpush.bf16.msra.mxu0 %v817
        %1268 = vmatpush.bf16.msra.mxu0 %v813
        %1269 = vmatpush.bf16.msra.mxu0 %v809
        %1270 = vmatpush.bf16.msra.mxu0 %v805
        %1271 = vmatpush.bf16.msra.mxu0 %v801
        %1272 = vmatpush.bf16.msra.mxu0 %v797
        %1273 = vmatmul.bf16.gmra.mxu0 %v363
        %v1274 = vpop.f32.mrf.mxu0
        %v1275 = vadd.f32 %v1256, %v1274
        %v1276 = vpop.f32.mrf.mxu0
        %v1277 = vadd.f32 %v1258, %v1276
        %1278 = vmatmul.bf16.gmra.mxu0 %v367
        %v1279 = vpop.f32.mrf.mxu0
        %v1280 = vadd.f32 %v1261, %v1279
        %v1281 = vpop.f32.mrf.mxu0
        %v1282 = vadd.f32 %v1263, %v1281
        %1283 = vdwg.mxu0
        %1284 = vmatpush.bf16.msra.mxu0 %v857
        %1285 = vmatpush.bf16.msra.mxu0 %v853
        %1286 = vmatpush.bf16.msra.mxu0 %v849
        %1287 = vmatpush.bf16.msra.mxu0 %v845
        %1288 = vmatpush.bf16.msra.mxu0 %v841
        %1289 = vmatpush.bf16.msra.mxu0 %v837
        %1290 = vmatpush.bf16.msra.mxu0 %v833
        %1291 = vmatpush.bf16.msra.mxu0 %v829
        %1292 = vmatmul.bf16.gmra.mxu0 %v364
        %v1293 = vpop.f32.mrf.mxu0
        %v1294 = vadd.f32 %v1275, %v1293
        %v1295 = vpop.f32.mrf.mxu0
        %v1296 = vadd.f32 %v1277, %v1295
        %1297 = vmatmul.bf16.gmra.mxu0 %v368
        %v1298 = vpop.f32.mrf.mxu0
        %v1299 = vadd.f32 %v1280, %v1298
        %v1300 = vpop.f32.mrf.mxu0
        %v1301 = vadd.f32 %v1282, %v1300
        %1302 = vdwg.mxu0
        %1303 = vmatpush.bf16.msra.mxu0 %v889
        %1304 = vmatpush.bf16.msra.mxu0 %v885
        %1305 = vmatpush.bf16.msra.mxu0 %v881
        %1306 = vmatpush.bf16.msra.mxu0 %v877
        %1307 = vmatpush.bf16.msra.mxu0 %v873
        %1308 = vmatpush.bf16.msra.mxu0 %v869
        %1309 = vmatpush.bf16.msra.mxu0 %v865
        %1310 = vmatpush.bf16.msra.mxu0 %v861
        %1311 = vmatmul.bf16.gmra.mxu0 %v365
        %v1312 = vpop.f32.mrf.mxu0
        %v1313 = vadd.f32 %v1294, %v1312
        %v1314 = vpop.f32.mrf.mxu0
        %v1315 = vadd.f32 %v1296, %v1314
        %1316 = vmatmul.bf16.gmra.mxu0 %v369
        %v1317 = vpop.f32.mrf.mxu0
        %v1318 = vadd.f32 %v1299, %v1317
        %v1319 = vpop.f32.mrf.mxu0
        %v1320 = vadd.f32 %v1301, %v1319
        %1321 = vdwg.mxu0
        %1322 = vst [vmem:[%s191] sm:$0xff] %v1085
        %1323 = vst [vmem:[%s191 + $0x8] sm:$0xff] %v1161
        %1324 = vst [vmem:[%s191 + $0x10] sm:$0xff] %v1237
        %1325 = vst [vmem:[%s191 + $0x18] sm:$0xff] %v1313
        %1326 = vst [vmem:[%s191 + $0x20] sm:$0xff] %v1087
        %1327 = vst [vmem:[%s191 + $0x28] sm:$0xff] %v1163
        %1328 = vst [vmem:[%s191 + $0x30] sm:$0xff] %v1239
        %1329 = vst [vmem:[%s191 + $0x38] sm:$0xff] %v1315
        %1330 = vst [vmem:[%s191 + $0x40] sm:$0xff] %v1090
        %1331 = vst [vmem:[%s191 + $0x48] sm:$0xff] %v1166
        %1332 = vst [vmem:[%s191 + $0x50] sm:$0xff] %v1242
        %1333 = vst [vmem:[%s191 + $0x58] sm:$0xff] %v1318
        %1334 = vst [vmem:[%s191 + $0x60] sm:$0xff] %v1092
        %1335 = vst [vmem:[%s191 + $0x68] sm:$0xff] %v1168
        %1336 = vst [vmem:[%s191 + $0x70] sm:$0xff] %v1244
        %1337 = vst [vmem:[%s191 + $0x78] sm:$0xff] %v1320
        %s1338 = sand.u32 %s90, 1
        %s1339 = sand.u32 %s90, 1
        %s1340 = smul.addr %s1339, 128
        %s1341 = scalar_lea.vmem [#allocation4], %s1340
        // Predicated region
        $region33: #{_lambda_.12} parent=27 // pred_check
          %p1342 = pneg %p100
        $region34: #{_lambda_.12} parent=27 // pred_check_branch
          %1344 = sbr.rel (%p1342) target = $region36
        $region35: #{_lambda_.12} parent=27 // pred_region
          %s1345 = smul.u32 4, %s20
          %s1346 = smul.u32 4, %s21
          %s1347 = smul.addr %s1345, 32
          %s1348 = sadd.s32 %s1346, %s1347
          %s1349 = smul.addr %s1348, 8
          %s1350 = scalar_lea.vmem %s2, %s1349
          // Predicated region
          $region37: #{_lambda_.12} parent=35 // pred_check
            _
          $region38: #{_lambda_.12} parent=35 // pred_check_branch
            %1352 = sbr.rel (0) target = $region40
          $region39: #{_lambda_.12} parent=35 // pred_region
            // Predicated region
            $region41: #{_lambda_.12} parent=39 // pred_check
              _
            $region42: #{_lambda_.12} parent=39 // pred_check_branch
              %1354 = sbr.rel (0) target = $region44
            $region43: #{_lambda_.12} parent=39 // pred_region
              loop: start=0, step=1, limit=1
              $region45: #{_lambda_.12} parent=43 // loop_pre_header
                _
              $region46: #{_lambda_.12} parent=43 // loop_header
                %s1356 = sphi 0, %s1360
                %p1357 = scmp.ge.s32.totalorder %s1356, 1
                %s1361 = sphi %s1341, %s1341
                %s1362 = sphi %s1350, %s1350
              $region47: #{_lambda_.12} parent=43 // loop_header_branch
                %1359 = sbr.rel (%p1357) target = $region51
              $region48: #{_lambda_.12} parent=43 // loop_body
                %v1363 = vld [vmem:[%s1361] sm:$0xff]
                %1364 = vst [vmem:[%s1362] sm:$0xff] %v1363
                %v1365 = vld [vmem:[%s1361 + $0x8] sm:$0xff]
                %1366 = vst [vmem:[%s1362 + $0x8] sm:$0xff] %v1365
                %v1367 = vld [vmem:[%s1361 + $0x10] sm:$0xff]
                %1368 = vst [vmem:[%s1362 + $0x10] sm:$0xff] %v1367
                %v1369 = vld [vmem:[%s1361 + $0x18] sm:$0xff]
                %1370 = vst [vmem:[%s1362 + $0x18] sm:$0xff] %v1369
                %v1371 = vld [vmem:[%s1361 + $0x20] sm:$0xff]
                %1372 = vst [vmem:[%s1362 + $0x100] sm:$0xff] %v1371
                %v1373 = vld [vmem:[%s1361 + $0x28] sm:$0xff]
                %1374 = vst [vmem:[%s1362 + $0x108] sm:$0xff] %v1373
                %v1375 = vld [vmem:[%s1361 + $0x30] sm:$0xff]
                %1376 = vst [vmem:[%s1362 + $0x110] sm:$0xff] %v1375
                %v1377 = vld [vmem:[%s1361 + $0x38] sm:$0xff]
                %1378 = vst [vmem:[%s1362 + $0x118] sm:$0xff] %v1377
                %v1379 = vld [vmem:[%s1361 + $0x40] sm:$0xff]
                %1380 = vst [vmem:[%s1362 + $0x200] sm:$0xff] %v1379
                %v1381 = vld [vmem:[%s1361 + $0x48] sm:$0xff]
                %1382 = vst [vmem:[%s1362 + $0x208] sm:$0xff] %v1381
                %v1383 = vld [vmem:[%s1361 + $0x50] sm:$0xff]
                %1384 = vst [vmem:[%s1362 + $0x210] sm:$0xff] %v1383
                %v1385 = vld [vmem:[%s1361 + $0x58] sm:$0xff]
                %1386 = vst [vmem:[%s1362 + $0x218] sm:$0xff] %v1385
                %v1387 = vld [vmem:[%s1361 + $0x60] sm:$0xff]
                %1388 = vst [vmem:[%s1362 + $0x300] sm:$0xff] %v1387
                %v1389 = vld [vmem:[%s1361 + $0x68] sm:$0xff]
                %1390 = vst [vmem:[%s1362 + $0x308] sm:$0xff] %v1389
                %v1391 = vld [vmem:[%s1361 + $0x70] sm:$0xff]
                %1392 = vst [vmem:[%s1362 + $0x310] sm:$0xff] %v1391
                %v1393 = vld [vmem:[%s1361 + $0x78] sm:$0xff]
                %1394 = vst [vmem:[%s1362 + $0x318] sm:$0xff] %v1393
              $region49: #{_lambda_.12} parent=43 // loop_footer
                %s1360 = sadd.s32 1, %s1356
              $region50: #{_lambda_.12} parent=43 // loop_footer_branch
                %1355 = sbr.rel target = $region46
              $region51: #{_lambda_.12} parent=43 // loop_exit
                _
            $region44: #{_lambda_.12} parent=39 // pred_fallthru
              _
            // Predicated region
            $region52: #{_lambda_.12} parent=39 // pred_check
              _
            $region53: #{_lambda_.12} parent=39 // pred_check_branch
              %1396 = sbr.rel target = $region55
            $region54: #{_lambda_.12} parent=39 // pred_region
              _
            $region55: #{_lambda_.12} parent=39 // pred_fallthru
              _
          $region40: #{_lambda_.12} parent=35 // pred_fallthru
            _
          %1397 = vnop
        $region36: #{_lambda_.12} parent=27 // pred_fallthru
          _
      $region28: #{_lambda_.12} parent=5 // pred_fallthru
        _
      %p1398 = scmp.le.s32.totalorder 2, %s11
      // Predicated region
      $region56: #{_lambda_.12} parent=5 // pred_check
        %p1399 = pneg %p1398
      $region57: #{_lambda_.12} parent=5 // pred_check_branch
        %1401 = sbr.rel (%p1399) target = $region59
      $region58: #{_lambda_.12} parent=5 // pred_region
        %s1402 = ssub.s32 %s11, 2
        // Predicated region
        $region60: #{_lambda_.12} parent=58 // pred_check
          %p1403 = pneg %p106
        $region61: #{_lambda_.12} parent=58 // pred_check_branch
          %1405 = sbr.rel (%p1403) target = $region63
        $region62: #{_lambda_.12} parent=58 // pred_region
          %s1406 = sand.u32 %s91, 1
          %s1407 = sand.u32 %s91, 1
          %s1408 = smul.addr %s1407, 128
          %s1409 = scalar_lea.vmem [#allocation4], %s1408
        $region63: #{_lambda_.12} parent=58 // pred_fallthru
          _
      $region59: #{_lambda_.12} parent=5 // pred_fallthru
        _
    $region6: #{_lambda_.12} parent=1 // loop_footer
      %s15 = sadd.s32 1, %s11
    $region7: #{_lambda_.12} parent=1 // loop_footer_branch
      %10 = sbr.rel target = $region3
    $region8: #{_lambda_.12} parent=1 // loop_exit
      _
    %1410 = vsyncpa [#allocation3], 1
    %s1411 = scalar_lea.sflag [#allocation3], 1
    %1412 = vsyncpa %s1411, 1

// kernel: _lambda_.13
$region0: #{_lambda_.13}
  #allocation0 [shape = 'u32[]', space=smem, size = 0x4, offset = 0x4, fixed_abs, tag = 'smem constant byte address 0x4 - core index']
  #allocation1 [shape = 'u32[72,128]{1,0:T(1,128)}', space=vmem, size = 0x9000, scoped, tag = 'internal scratch']
  %s0 = inlined_call_operand.vmem [shape: f32[128,256], index: 0, kind: input, shape index: {}]
  %s1 = inlined_call_operand.vmem [shape: f32[1,256], index: 1, kind: input, shape index: {}]
  %s2 = inlined_call_operand.vmem [shape: f32[1,256], index: 2, kind: input, shape index: {}]
  %s3 = inlined_call_operand.vmem [shape: bf16[128,256], index: 3, kind: output, shape index: {}]
  %s4 = sld [smem:[#allocation0]]
  $region45: #{_lambda_.13} parent=0
    _
  %s6 = ssub.s32 1, %s4
  %s7 = scalar_select 0, %s6, %s4
  loop: start=0, step=1, limit=4
  $region2: #{_lambda_.13} parent=0 // loop_pre_header
    _
  $region3: #{_lambda_.13} parent=0 // loop_header
    %s9 = sphi 0, %s13
    %p10 = scmp.ge.s32.totalorder %s9, 4
    %s19 = sphi 0, %s21
    %s22 = sphi 0, %s19
    %s23 = sphi 0, %s22
    %s39 = sphi 0, %s23
    %s43 = sphi 0, %s43
    %s45 = sphi 0, %s43
    %s46 = sphi 0, %s45
    %s60 = sphi 0, %s46
    %s64 = sphi 0, %s64
    %s66 = sphi 0, %s64
    %s67 = sphi 0, %s66
    %s81 = sphi 0, %s67
    %s87 = sphi 0, %s89
    %s90 = sphi 0, %s87
    %s91 = sphi 0, %s90
    %s107 = sphi 0, %s91
  $region4: #{_lambda_.13} parent=0 // loop_header_branch
    %12 = sbr.rel (%p10) target = $region8
  $region5: #{_lambda_.13} parent=0 // loop_body
    %s14 = ssub.s32 %s9, 1
    %s15 = ssub.s32 %s9, 2
    %s16 = sadd.s32 %s9, 1
    %s17 = ssub.s32 %s9, %s16
    %p18 = scmp.eq.s32.totalorder %s17, 0
    %s20 = sadd.s32 %s19, 1
    %s21 = scalar_select %p18, %s19, %s20
    %p24 = pneg %p18
    %p25 = scmp.eq.s32.totalorder %s9, 1
    %p26 = por %p24, %p25
    %p27 = scmp.ne.s32.totalorder %s19, %s22
    %p28 = scmp.eq.s32.totalorder %s9, 0
    %p29 = por %p27, %p28
    %p30 = scmp.ne.s32.totalorder %s19, %s22
    %p31 = scmp.eq.s32.totalorder %s14, 1
    %p32 = por %p30, %p31
    %p33 = scmp.ne.s32.totalorder %s22, %s23
    %p34 = scmp.eq.s32.totalorder %s14, 0
    %p35 = por %p33, %p34
    %p36 = scmp.ne.s32.totalorder %s22, %s23
    %p37 = scmp.eq.s32.totalorder %s15, 1
    %p38 = por %p36, %p37
    %p40 = scmp.ne.s32.totalorder %s23, %s39
    %p41 = scmp.eq.s32.totalorder %s15, 0
    %p42 = por %p40, %p41
    %s44 = sadd.s32 %s43, 1
    %p47 = scmp.eq.s32.totalorder %s9, 1
    %p48 = scmp.ne.s32.totalorder %s43, %s45
    %p49 = scmp.eq.s32.totalorder %s9, 0
    %p50 = por %p48, %p49
    %p51 = scmp.ne.s32.totalorder %s43, %s45
    %p52 = scmp.eq.s32.totalorder %s14, 1
    %p53 = por %p51, %p52
    %p54 = scmp.ne.s32.totalorder %s45, %s46
    %p55 = scmp.eq.s32.totalorder %s14, 0
    %p56 = por %p54, %p55
    %p57 = scmp.ne.s32.totalorder %s45, %s46
    %p58 = scmp.eq.s32.totalorder %s15, 1
    %p59 = por %p57, %p58
    %p61 = scmp.ne.s32.totalorder %s46, %s60
    %p62 = scmp.eq.s32.totalorder %s15, 0
    %p63 = por %p61, %p62
    %s65 = sadd.s32 %s64, 1
    %p68 = scmp.eq.s32.totalorder %s9, 1
    %p69 = scmp.ne.s32.totalorder %s64, %s66
    %p70 = scmp.eq.s32.totalorder %s9, 0
    %p71 = por %p69, %p70
    %p72 = scmp.ne.s32.totalorder %s64, %s66
    %p73 = scmp.eq.s32.totalorder %s14, 1
    %p74 = por %p72, %p73
    %p75 = scmp.ne.s32.totalorder %s66, %s67
    %p76 = scmp.eq.s32.totalorder %s14, 0
    %p77 = por %p75, %p76
    %p78 = scmp.ne.s32.totalorder %s66, %s67
    %p79 = scmp.eq.s32.totalorder %s15, 1
    %p80 = por %p78, %p79
    %p82 = scmp.ne.s32.totalorder %s67, %s81
    %p83 = scmp.eq.s32.totalorder %s15, 0
    %p84 = por %p82, %p83
    %s85 = ssub.s32 %s9, %s16
    %p86 = scmp.eq.s32.totalorder %s85, 0
    %s88 = sadd.s32 %s87, 1
    %s89 = scalar_select %p86, %s87, %s88
    %p92 = pneg %p86
    %p93 = scmp.eq.s32.totalorder %s9, 1
    %p94 = por %p92, %p93
    %p95 = scmp.ne.s32.totalorder %s87, %s90
    %p96 = scmp.eq.s32.totalorder %s9, 0
    %p97 = por %p95, %p96
    %p98 = scmp.ne.s32.totalorder %s87, %s90
    %p99 = scmp.eq.s32.totalorder %s14, 1
    %p100 = por %p98, %p99
    %p101 = scmp.ne.s32.totalorder %s90, %s91
    %p102 = scmp.eq.s32.totalorder %s14, 0
    %p103 = por %p101, %p102
    %p104 = scmp.ne.s32.totalorder %s90, %s91
    %p105 = scmp.eq.s32.totalorder %s15, 1
    %p106 = por %p104, %p105
    %p108 = scmp.ne.s32.totalorder %s91, %s107
    %p109 = scmp.eq.s32.totalorder %s15, 0
    %p110 = por %p108, %p109
    %p111 = scmp.le.s32.totalorder 1, %s9
    %p112 = scmp.lt.s32.totalorder %s9, 3
    %p113 = pnand %p111, %p112
    %p114 = pneg %p113
    // Predicated region
    $region9: #{_lambda_.13} parent=5 // pred_check
      _
    $region10: #{_lambda_.13} parent=5 // pred_check_branch
      %116 = sbr.rel (%p113) target = $region12
    $region11: #{_lambda_.13} parent=5 // pred_region
      %s117 = ssub.s32 %s9, 1
      // Predicated region
      $region13: #{_lambda_.13} parent=11 // pred_check
        %p118 = pneg %p56
      $region14: #{_lambda_.13} parent=11 // pred_check_branch
        %120 = sbr.rel (%p118) target = $region16
      $region15: #{_lambda_.13} parent=11 // pred_region
        _
      $region16: #{_lambda_.13} parent=11 // pred_fallthru
        _
      // Predicated region
      $region17: #{_lambda_.13} parent=11 // pred_check
        %p121 = pneg %p77
      $region18: #{_lambda_.13} parent=11 // pred_check_branch
        %123 = sbr.rel (%p121) target = $region20
      $region19: #{_lambda_.13} parent=11 // pred_region
        _
      $region20: #{_lambda_.13} parent=11 // pred_fallthru
        _
    $region12: #{_lambda_.13} parent=5 // pred_fallthru
      _
    %p124 = scmp.lt.s32.totalorder %s9, 2
    // Predicated region
    $region21: #{_lambda_.13} parent=5 // pred_check
      %p125 = pneg %p124
    $region22: #{_lambda_.13} parent=5 // pred_check_branch
      %127 = sbr.rel (%p125) target = $region24
    $region23: #{_lambda_.13} parent=5 // pred_region
      // Predicated region
      $region25: #{_lambda_.13} parent=23 // pred_check
        %p128 = pneg %p29
      $region26: #{_lambda_.13} parent=23 // pred_check_branch
        %130 = sbr.rel (%p128) target = $region28
      $region27: #{_lambda_.13} parent=23 // pred_region
        %s131 = smul.u32 8, %s9
        %p132 = scmp.lt.s32.totalorder %s131, 15
        %s133 = scalar_select %p132, %s131, 15
        %s134 = smul.addr %s133, 2
        %s135 = smul.addr %s134, 8
        %s136 = scalar_lea.vmem %s0, %s135
        %s137 = smul.u32 8, %s9
      $region28: #{_lambda_.13} parent=23 // pred_fallthru
        _
    $region24: #{_lambda_.13} parent=5 // pred_fallthru
      _
    %p138 = scmp.le.s32.totalorder 1, %s9
    %p139 = scmp.lt.s32.totalorder %s9, 3
    %p140 = pnand %p138, %p139
    %p141 = pneg %p140
    // Predicated region
    $region29: #{_lambda_.13} parent=5 // pred_check
      _
    $region30: #{_lambda_.13} parent=5 // pred_check_branch
      %143 = sbr.rel (%p140) target = $region32
    $region31: #{_lambda_.13} parent=5 // pred_region
      %s144 = ssub.s32 %s9, 1
      %s145 = smul.u32 8, %s14
      %p146 = scmp.lt.s32.totalorder %s145, 15
      %s147 = scalar_select %p146, %s145, 15
      %s148 = smul.addr %s147, 2
      %s149 = smul.addr %s148, 8
      %s150 = scalar_lea.vmem %s0, %s149
      %p151 = pneg %p35
      %p152 = pneg %p32
      %p153 = pneg %p56
      %p154 = pneg %p53
      %p155 = pneg %p77
      %p156 = pneg %p74
      %p157 = pneg %p103
      %p158 = pneg %p100
      %s159 = smul.u32 8, %s14
      %p160 = scmp.lt.s32.totalorder %s159, 15
      %s161 = scalar_select %p160, %s159, 15
      %s162 = smul.addr %s161, 2
      %s163 = smul.addr %s162, 4
      %s164 = scalar_lea.vmem %s3, %s163
      %s165 = smul.u32 8, %s14
      %p166 = scmp.lt.s32.totalorder %s165, 15
      %s167 = scalar_select %p166, %s165, 15
      %s168 = smul.addr %s167, 2
      %s169 = smul.addr %s168, 8
      %s170 = scalar_lea.vmem %s0, %s169
      %s171 = smul.u32 8, %s14
      %s172 = smul.u32 8, %s14
      %p173 = scmp.lt.s32.totalorder %s172, 15
      %s174 = scalar_select %p173, %s172, 15
      %s175 = smul.addr %s174, 2
      %s176 = smul.addr %s175, 4
      %s177 = scalar_lea.vmem %s3, %s176
      %s178 = smul.u32 8, %s14
      %v179 = vld [vmem:[%s170] sm:$0xff]
      %v180 = vld [vmem:[%s170 + $0x8] sm:$0xff]
      %v181 = vld [vmem:[%s170 + $0x10] sm:$0xff]
      %v182 = vld [vmem:[%s170 + $0x18] sm:$0xff]
      %v183 = vld [vmem:[%s170 + $0x20] sm:$0xff]
      %v184 = vld [vmem:[%s170 + $0x28] sm:$0xff]
      %v185 = vld [vmem:[%s170 + $0x30] sm:$0xff]
      %v186 = vld [vmem:[%s170 + $0x38] sm:$0xff]
      %v187 = vld [vmem:[%s170 + $0x40] sm:$0xff]
      %v188 = vld [vmem:[%s170 + $0x48] sm:$0xff]
      %v189 = vld [vmem:[%s170 + $0x50] sm:$0xff]
      %v190 = vld [vmem:[%s170 + $0x58] sm:$0xff]
      %v191 = vld [vmem:[%s170 + $0x60] sm:$0xff]
      %v192 = vld [vmem:[%s170 + $0x68] sm:$0xff]
      %v193 = vld [vmem:[%s170 + $0x70] sm:$0xff]
      %v194 = vld [vmem:[%s170 + $0x78] sm:$0xff]
      %v195 = vld [vmem:[%s1] sm:$0x3]
      %v197 = vperm.slane %v195, 0
      %v198 = vperm.slane %v195, 1
      %v201 = vmul.f32 %v179, %v197
      %v202 = vmul.f32 %v180, %v198
      %v203 = vmul.f32 %v181, %v197
      %v204 = vmul.f32 %v182, %v198
      %v205 = vmul.f32 %v183, %v197
      %v206 = vmul.f32 %v184, %v198
      %v207 = vmul.f32 %v185, %v197
      %v208 = vmul.f32 %v186, %v198
      %v209 = vmul.f32 %v187, %v197
      %v210 = vmul.f32 %v188, %v198
      %v211 = vmul.f32 %v189, %v197
      %v212 = vmul.f32 %v190, %v198
      %v213 = vmul.f32 %v191, %v197
      %v214 = vmul.f32 %v192, %v198
      %v215 = vmul.f32 %v193, %v197
      %v216 = vmul.f32 %v194, %v198
      %v217 = vld [vmem:[%s2] sm:$0x3]
      %v219 = vperm.slane %v217, 0
      %v220 = vperm.slane %v217, 1
      %v223 = vadd.f32 %v201, %v219
      %v224 = vadd.f32 %v202, %v220
      %v225 = vadd.f32 %v203, %v219
      %v226 = vadd.f32 %v204, %v220
      %v227 = vadd.f32 %v205, %v219
      %v228 = vadd.f32 %v206, %v220
      %v229 = vadd.f32 %v207, %v219
      %v230 = vadd.f32 %v208, %v220
      %v231 = vadd.f32 %v209, %v219
      %v232 = vadd.f32 %v210, %v220
      %v233 = vadd.f32 %v211, %v219
      %v234 = vadd.f32 %v212, %v220
      %v235 = vadd.f32 %v213, %v219
      %v236 = vadd.f32 %v214, %v220
      %v237 = vadd.f32 %v215, %v219
      %v238 = vadd.f32 %v216, %v220
      %v239 = vmax.f32 %v223, 0.0
      %v240 = vmax.f32 %v224, 0.0
      %v241 = vmax.f32 %v225, 0.0
      %v242 = vmax.f32 %v226, 0.0
      %v243 = vmax.f32 %v227, 0.0
      %v244 = vmax.f32 %v228, 0.0
      %v245 = vmax.f32 %v229, 0.0
      %v246 = vmax.f32 %v230, 0.0
      %v247 = vmax.f32 %v231, 0.0
      %v248 = vmax.f32 %v232, 0.0
      %v249 = vmax.f32 %v233, 0.0
      %v250 = vmax.f32 %v234, 0.0
      %v251 = vmax.f32 %v235, 0.0
      %v252 = vmax.f32 %v236, 0.0
      %v253 = vmax.f32 %v237, 0.0
      %v254 = vmax.f32 %v238, 0.0
      %v255 = vpack.c.bf16 %v240, %v239
      %v256 = vpack.c.bf16 %v242, %v241
      %v257 = vpack.c.bf16 %v244, %v243
      %v258 = vpack.c.bf16 %v246, %v245
      %v259 = vpack.c.bf16 %v248, %v247
      %v260 = vpack.c.bf16 %v250, %v249
      %v261 = vpack.c.bf16 %v252, %v251
      %v262 = vpack.c.bf16 %v254, %v253
      %263 = vst [vmem:[%s177] sm:$0xff] %v255
      %264 = vst [vmem:[%s177 + $0x8] sm:$0xff] %v256
      %265 = vst [vmem:[%s177 + $0x10] sm:$0xff] %v257
      %266 = vst [vmem:[%s177 + $0x18] sm:$0xff] %v258
      %267 = vst [vmem:[%s177 + $0x20] sm:$0xff] %v259
      %268 = vst [vmem:[%s177 + $0x28] sm:$0xff] %v260
      %269 = vst [vmem:[%s177 + $0x30] sm:$0xff] %v261
      %270 = vst [vmem:[%s177 + $0x38] sm:$0xff] %v262
      %s271 = smul.u32 8, %s14
      %p272 = scmp.lt.s32.totalorder %s271, 15
      %s273 = scalar_select %p272, %s271, 15
      %s274 = smul.addr %s273, 2
      %s275 = smul.addr %s274, 4
      %s276 = scalar_lea.vmem %s3, %s275
      // Predicated region
      $region33: #{_lambda_.13} parent=31 // pred_check
        %p277 = pneg %p100
      $region34: #{_lambda_.13} parent=31 // pred_check_branch
        %279 = sbr.rel (%p277) target = $region36
      $region35: #{_lambda_.13} parent=31 // pred_region
        %s280 = smul.u32 8, %s14
      $region36: #{_lambda_.13} parent=31 // pred_fallthru
        _
    $region32: #{_lambda_.13} parent=5 // pred_fallthru
      _
    %p281 = scmp.le.s32.totalorder 2, %s9
    // Predicated region
    $region37: #{_lambda_.13} parent=5 // pred_check
      %p282 = pneg %p281
    $region38: #{_lambda_.13} parent=5 // pred_check_branch
      %284 = sbr.rel (%p282) target = $region40
    $region39: #{_lambda_.13} parent=5 // pred_region
      %s285 = ssub.s32 %s9, 2
      // Predicated region
      $region41: #{_lambda_.13} parent=39 // pred_check
        %p286 = pneg %p106
      $region42: #{_lambda_.13} parent=39 // pred_check_branch
        %288 = sbr.rel (%p286) target = $region44
      $region43: #{_lambda_.13} parent=39 // pred_region
        %s289 = smul.u32 8, %s15
        %p290 = scmp.lt.s32.totalorder %s289, 15
        %s291 = scalar_select %p290, %s289, 15
        %s292 = smul.addr %s291, 2
        %s293 = smul.addr %s292, 4
        %s294 = scalar_lea.vmem %s3, %s293
      $region44: #{_lambda_.13} parent=39 // pred_fallthru
        _
    $region40: #{_lambda_.13} parent=5 // pred_fallthru
      _
  $region6: #{_lambda_.13} parent=0 // loop_footer
    %s13 = sadd.s32 1, %s9
  $region7: #{_lambda_.13} parent=0 // loop_footer_branch
    %8 = sbr.rel target = $region3
  $region8: #{_lambda_.13} parent=0 // loop_exit
    _

// kernel: _lambda_.14
$region0: #{_lambda_.14}
  #allocation0 [shape = 'u32[]', space=smem, size = 0x4, offset = 0x4, fixed_abs, tag = 'smem constant byte address 0x4 - core index']
  #allocation1 [shape = 'u32[72,128]{1,0:T(1,128)}', space=vmem, size = 0x9000, scoped, tag = 'internal scratch']
  %s0 = inlined_call_operand.vmem [shape: bf16[128,256], index: 0, kind: input, shape index: {}]
  %s1 = inlined_call_operand.vmem [shape: bf16[256,2048], index: 1, kind: input, shape index: {}]
  %s2 = inlined_call_operand.vmem [shape: f32[128,2048], index: 2, kind: output, shape index: {}]
  %s3 = sld [smem:[#allocation0]]
  $region83: #{_lambda_.14} parent=0
    _
  %s5 = ssub.s32 1, %s3
  %s6 = scalar_select 0, %s5, %s3
  $region1: #{_lambda_.14} parent=0
    #allocation2 [shape = 'u8[524288]{0}', space=vmem, size = 0x80000, scoped, tag = 'input window, operand 1']
    #allocation3 [shape = 'u8[524288]{0}', space=vmem, size = 0x80000, scoped, tag = 'output window, operand 0']
    loop: start=0, step=1, limit=6
    $region2: #{_lambda_.14} parent=1 // loop_pre_header
      _
    $region3: #{_lambda_.14} parent=1 // loop_header
      %s8 = sphi 0, %s12
      %p9 = scmp.ge.s32.totalorder %s8, 6
      %s15 = sphi 0, %s27
      %s16 = sphi 0, %s23
      %s17 = sphi 0, %s15
      %s18 = sphi 0, %s16
      %s19 = sphi 0, %s17
      %s20 = sphi 0, %s18
      %s30 = sphi 0, %s32
      %s33 = sphi 0, %s30
      %s34 = sphi 0, %s33
      %s50 = sphi 0, %s34
      %s56 = sphi 0, %s58
      %s59 = sphi 0, %s56
      %s60 = sphi 0, %s59
      %s76 = sphi 0, %s60
      %s84 = sphi 0, %s86
      %s87 = sphi 0, %s84
      %s88 = sphi 0, %s87
      %s104 = sphi 0, %s88
    $region4: #{_lambda_.14} parent=1 // loop_header_branch
      %11 = sbr.rel (%p9) target = $region8
    $region5: #{_lambda_.14} parent=1 // loop_body
      %s13 = ssub.s32 %s8, 1
      %s14 = ssub.s32 %s8, 2
      %s21 = sadd.s32 1, %s16
      %p22 = scmp.ge.s32.totalorder %s21, 4
      %s23 = scalar_select %p22, 0, %s21
      %s24 = sadd.s32 1, %s15
      %s25 = scalar_select %p22, %s24, %s15
      %p26 = scmp.ge.s32.totalorder %s25, 1
      %s27 = scalar_select %p26, 0, %s25
      %s28 = ssub.s32 %s15, %s27
      %p29 = scmp.eq.s32.totalorder %s28, 0
      %s31 = sadd.s32 %s30, 1
      %s32 = scalar_select %p29, %s30, %s31
      %p35 = pneg %p29
      %p36 = scmp.eq.s32.totalorder %s8, 3
      %p37 = por %p35, %p36
      %p38 = scmp.ne.s32.totalorder %s30, %s33
      %p39 = scmp.eq.s32.totalorder %s8, 0
      %p40 = por %p38, %p39
      %p41 = scmp.ne.s32.totalorder %s30, %s33
      %p42 = scmp.eq.s32.totalorder %s13, 3
      %p43 = por %p41, %p42
      %p44 = scmp.ne.s32.totalorder %s33, %s34
      %p45 = scmp.eq.s32.totalorder %s13, 0
      %p46 = por %p44, %p45
      %p47 = scmp.ne.s32.totalorder %s33, %s34
      %p48 = scmp.eq.s32.totalorder %s14, 3
      %p49 = por %p47, %p48
      %p51 = scmp.ne.s32.totalorder %s34, %s50
      %p52 = scmp.eq.s32.totalorder %s14, 0
      %p53 = por %p51, %p52
      %s54 = ssub.s32 %s16, %s23
      %p55 = scmp.eq.s32.totalorder %s54, 0
      %s57 = sadd.s32 %s56, 1
      %s58 = scalar_select %p55, %s56, %s57
      %p61 = pneg %p55
      %p62 = scmp.eq.s32.totalorder %s8, 3
      %p63 = por %p61, %p62
      %p64 = scmp.ne.s32.totalorder %s56, %s59
      %p65 = scmp.eq.s32.totalorder %s8, 0
      %p66 = por %p64, %p65
      %p67 = scmp.ne.s32.totalorder %s56, %s59
      %p68 = scmp.eq.s32.totalorder %s13, 3
      %p69 = por %p67, %p68
      %p70 = scmp.ne.s32.totalorder %s59, %s60
      %p71 = scmp.eq.s32.totalorder %s13, 0
      %p72 = por %p70, %p71
      %p73 = scmp.ne.s32.totalorder %s59, %s60
      %p74 = scmp.eq.s32.totalorder %s14, 3
      %p75 = por %p73, %p74
      %p77 = scmp.ne.s32.totalorder %s60, %s76
      %p78 = scmp.eq.s32.totalorder %s14, 0
      %p79 = por %p77, %p78
      %s80 = ssub.s32 %s15, %s27
      %s81 = ssub.s32 %s16, %s23
      %s82 = sor.u32 %s80, %s81
      %p83 = scmp.eq.s32.totalorder %s82, 0
      %s85 = sadd.s32 %s84, 1
      %s86 = scalar_select %p83, %s84, %s85
      %p89 = pneg %p83
      %p90 = scmp.eq.s32.totalorder %s8, 3
      %p91 = por %p89, %p90
      %p92 = scmp.ne.s32.totalorder %s84, %s87
      %p93 = scmp.eq.s32.totalorder %s8, 0
      %p94 = por %p92, %p93
      %p95 = scmp.ne.s32.totalorder %s84, %s87
      %p96 = scmp.eq.s32.totalorder %s13, 3
      %p97 = por %p95, %p96
      %p98 = scmp.ne.s32.totalorder %s87, %s88
      %p99 = scmp.eq.s32.totalorder %s13, 0
      %p100 = por %p98, %p99
      %p101 = scmp.ne.s32.totalorder %s87, %s88
      %p102 = scmp.eq.s32.totalorder %s14, 3
      %p103 = por %p101, %p102
      %p105 = scmp.ne.s32.totalorder %s88, %s104
      %p106 = scmp.eq.s32.totalorder %s14, 0
      %p107 = por %p105, %p106
      %p108 = scmp.le.s32.totalorder 1, %s8
      %p109 = scmp.lt.s32.totalorder %s8, 5
      %p110 = pnand %p108, %p109
      %p111 = pneg %p110
      // Predicated region
      $region9: #{_lambda_.14} parent=5 // pred_check
        _
      $region10: #{_lambda_.14} parent=5 // pred_check_branch
        %113 = sbr.rel (%p110) target = $region12
      $region11: #{_lambda_.14} parent=5 // pred_region
        %s114 = ssub.s32 %s8, 1
        // Predicated region
        $region13: #{_lambda_.14} parent=11 // pred_check
          %p115 = pneg %p46
        $region14: #{_lambda_.14} parent=11 // pred_check_branch
          %117 = sbr.rel (%p115) target = $region16
        $region15: #{_lambda_.14} parent=11 // pred_region
          %s118 = smul.u32 16, %s17
          %p119 = scmp.lt.s32.totalorder %s118, 15
          %s120 = scalar_select %p119, %s118, 15
          %s121 = smul.addr %s120, 2
          %s122 = smul.addr %s121, 4
          %s123 = scalar_lea.vmem %s0, %s122
          %s124 = smul.u32 16, %s17
        $region16: #{_lambda_.14} parent=11 // pred_fallthru
          _
      $region12: #{_lambda_.14} parent=5 // pred_fallthru
        _
      %p125 = scmp.lt.s32.totalorder %s8, 4
      // Predicated region
      $region17: #{_lambda_.14} parent=5 // pred_check
        %p126 = pneg %p125
      $region18: #{_lambda_.14} parent=5 // pred_check_branch
        %128 = sbr.rel (%p126) target = $region20
      $region19: #{_lambda_.14} parent=5 // pred_region
        // Predicated region
        $region21: #{_lambda_.14} parent=19 // pred_check
          %p129 = pneg %p66
        $region22: #{_lambda_.14} parent=19 // pred_check_branch
          %131 = sbr.rel (%p129) target = $region24
        $region23: #{_lambda_.14} parent=19 // pred_region
          %s132 = sand.u32 %s56, 1
          %s133 = sand.u32 %s56, 1
          %s134 = smul.addr %s133, 512
          %s135 = scalar_lea.vmem [#allocation2], %s134
          %s136 = smul.u32 4, %s16
          %s137 = smul.addr %s136, 4
          %s138 = scalar_lea.vmem %s1, %s137
          // Predicated region
          $region25: #{_lambda_.14} parent=23 // pred_check
            _
          $region26: #{_lambda_.14} parent=23 // pred_check_branch
            %140 = sbr.rel (0) target = $region28
          $region27: #{_lambda_.14} parent=23 // pred_region
            // Predicated region
            $region29: #{_lambda_.14} parent=27 // pred_check
              _
            $region30: #{_lambda_.14} parent=27 // pred_check_branch
              %142 = sbr.rel (0) target = $region32
            $region31: #{_lambda_.14} parent=27 // pred_region
              loop: start=0, step=1, limit=1
              $region33: #{_lambda_.14} parent=31 // loop_pre_header
                _
              $region34: #{_lambda_.14} parent=31 // loop_header
                %s144 = sphi 0, %s148
                %p145 = scmp.ge.s32.totalorder %s144, 1
                %s149 = sphi %s138, %s138
                %s150 = sphi %s135, %s135
              $region35: #{_lambda_.14} parent=31 // loop_header_branch
                %147 = sbr.rel (%p145) target = $region39
              $region36: #{_lambda_.14} parent=31 // loop_body
                %v151 = vld [vmem:[%s149] sm:$0xff]
                %152 = vst [vmem:[%s150] sm:$0xff] %v151
                %v153 = vld [vmem:[%s149 + $0x8] sm:$0xff]
                %154 = vst [vmem:[%s150 + $0x8] sm:$0xff] %v153
                %v155 = vld [vmem:[%s149 + $0x40] sm:$0xff]
                %156 = vst [vmem:[%s150 + $0x10] sm:$0xff] %v155
                %v157 = vld [vmem:[%s149 + $0x48] sm:$0xff]
                %158 = vst [vmem:[%s150 + $0x18] sm:$0xff] %v157
                %v159 = vld [vmem:[%s149 + $0x80] sm:$0xff]
                %160 = vst [vmem:[%s150 + $0x20] sm:$0xff] %v159
                %v161 = vld [vmem:[%s149 + $0x88] sm:$0xff]
                %162 = vst [vmem:[%s150 + $0x28] sm:$0xff] %v161
                %v163 = vld [vmem:[%s149 + $0xc0] sm:$0xff]
                %164 = vst [vmem:[%s150 + $0x30] sm:$0xff] %v163
                %v165 = vld [vmem:[%s149 + $0xc8] sm:$0xff]
                %166 = vst [vmem:[%s150 + $0x38] sm:$0xff] %v165
                %v167 = vld [vmem:[%s149 + $0x100] sm:$0xff]
                %168 = vst [vmem:[%s150 + $0x40] sm:$0xff] %v167
                %v169 = vld [vmem:[%s149 + $0x108] sm:$0xff]
                %170 = vst [vmem:[%s150 + $0x48] sm:$0xff] %v169
                %v171 = vld [vmem:[%s149 + $0x140] sm:$0xff]
                %172 = vst [vmem:[%s150 + $0x50] sm:$0xff] %v171
                %v173 = vld [vmem:[%s149 + $0x148] sm:$0xff]
                %174 = vst [vmem:[%s150 + $0x58] sm:$0xff] %v173
                %v175 = vld [vmem:[%s149 + $0x180] sm:$0xff]
                %176 = vst [vmem:[%s150 + $0x60] sm:$0xff] %v175
                %v177 = vld [vmem:[%s149 + $0x188] sm:$0xff]
                %178 = vst [vmem:[%s150 + $0x68] sm:$0xff] %v177
                %v179 = vld [vmem:[%s149 + $0x1c0] sm:$0xff]
                %180 = vst [vmem:[%s150 + $0x70] sm:$0xff] %v179
                %v181 = vld [vmem:[%s149 + $0x1c8] sm:$0xff]
                %182 = vst [vmem:[%s150 + $0x78] sm:$0xff] %v181
                %v183 = vld [vmem:[%s149 + $0x200] sm:$0xff]
                %184 = vst [vmem:[%s150 + $0x80] sm:$0xff] %v183
                %v185 = vld [vmem:[%s149 + $0x208] sm:$0xff]
                %186 = vst [vmem:[%s150 + $0x88] sm:$0xff] %v185
                %v187 = vld [vmem:[%s149 + $0x240] sm:$0xff]
                %188 = vst [vmem:[%s150 + $0x90] sm:$0xff] %v187
                %v189 = vld [vmem:[%s149 + $0x248] sm:$0xff]
                %190 = vst [vmem:[%s150 + $0x98] sm:$0xff] %v189
                %v191 = vld [vmem:[%s149 + $0x280] sm:$0xff]
                %192 = vst [vmem:[%s150 + $0xa0] sm:$0xff] %v191
                %v193 = vld [vmem:[%s149 + $0x288] sm:$0xff]
                %194 = vst [vmem:[%s150 + $0xa8] sm:$0xff] %v193
                %v195 = vld [vmem:[%s149 + $0x2c0] sm:$0xff]
                %196 = vst [vmem:[%s150 + $0xb0] sm:$0xff] %v195
                %v197 = vld [vmem:[%s149 + $0x2c8] sm:$0xff]
                %198 = vst [vmem:[%s150 + $0xb8] sm:$0xff] %v197
                %v199 = vld [vmem:[%s149 + $0x300] sm:$0xff]
                %200 = vst [vmem:[%s150 + $0xc0] sm:$0xff] %v199
                %v201 = vld [vmem:[%s149 + $0x308] sm:$0xff]
                %202 = vst [vmem:[%s150 + $0xc8] sm:$0xff] %v201
                %v203 = vld [vmem:[%s149 + $0x340] sm:$0xff]
                %204 = vst [vmem:[%s150 + $0xd0] sm:$0xff] %v203
                %v205 = vld [vmem:[%s149 + $0x348] sm:$0xff]
                %206 = vst [vmem:[%s150 + $0xd8] sm:$0xff] %v205
                %v207 = vld [vmem:[%s149 + $0x380] sm:$0xff]
                %208 = vst [vmem:[%s150 + $0xe0] sm:$0xff] %v207
                %v209 = vld [vmem:[%s149 + $0x388] sm:$0xff]
                %210 = vst [vmem:[%s150 + $0xe8] sm:$0xff] %v209
                %v211 = vld [vmem:[%s149 + $0x3c0] sm:$0xff]
                %212 = vst [vmem:[%s150 + $0xf0] sm:$0xff] %v211
                %v213 = vld [vmem:[%s149 + $0x3c8] sm:$0xff]
                %214 = vst [vmem:[%s150 + $0xf8] sm:$0xff] %v213
                %v215 = vld [vmem:[%s149 + $0x400] sm:$0xff]
                %216 = vst [vmem:[%s150 + $0x100] sm:$0xff] %v215
                %v217 = vld [vmem:[%s149 + $0x408] sm:$0xff]
                %218 = vst [vmem:[%s150 + $0x108] sm:$0xff] %v217
                %v219 = vld [vmem:[%s149 + $0x440] sm:$0xff]
                %220 = vst [vmem:[%s150 + $0x110] sm:$0xff] %v219
                %v221 = vld [vmem:[%s149 + $0x448] sm:$0xff]
                %222 = vst [vmem:[%s150 + $0x118] sm:$0xff] %v221
                %v223 = vld [vmem:[%s149 + $0x480] sm:$0xff]
                %224 = vst [vmem:[%s150 + $0x120] sm:$0xff] %v223
                %v225 = vld [vmem:[%s149 + $0x488] sm:$0xff]
                %226 = vst [vmem:[%s150 + $0x128] sm:$0xff] %v225
                %v227 = vld [vmem:[%s149 + $0x4c0] sm:$0xff]
                %228 = vst [vmem:[%s150 + $0x130] sm:$0xff] %v227
                %v229 = vld [vmem:[%s149 + $0x4c8] sm:$0xff]
                %230 = vst [vmem:[%s150 + $0x138] sm:$0xff] %v229
                %v231 = vld [vmem:[%s149 + $0x500] sm:$0xff]
                %232 = vst [vmem:[%s150 + $0x140] sm:$0xff] %v231
                %v233 = vld [vmem:[%s149 + $0x508] sm:$0xff]
                %234 = vst [vmem:[%s150 + $0x148] sm:$0xff] %v233
                %v235 = vld [vmem:[%s149 + $0x540] sm:$0xff]
                %236 = vst [vmem:[%s150 + $0x150] sm:$0xff] %v235
                %v237 = vld [vmem:[%s149 + $0x548] sm:$0xff]
                %238 = vst [vmem:[%s150 + $0x158] sm:$0xff] %v237
                %v239 = vld [vmem:[%s149 + $0x580] sm:$0xff]
                %240 = vst [vmem:[%s150 + $0x160] sm:$0xff] %v239
                %v241 = vld [vmem:[%s149 + $0x588] sm:$0xff]
                %242 = vst [vmem:[%s150 + $0x168] sm:$0xff] %v241
                %v243 = vld [vmem:[%s149 + $0x5c0] sm:$0xff]
                %244 = vst [vmem:[%s150 + $0x170] sm:$0xff] %v243
                %v245 = vld [vmem:[%s149 + $0x5c8] sm:$0xff]
                %246 = vst [vmem:[%s150 + $0x178] sm:$0xff] %v245
                %v247 = vld [vmem:[%s149 + $0x600] sm:$0xff]
                %248 = vst [vmem:[%s150 + $0x180] sm:$0xff] %v247
                %v249 = vld [vmem:[%s149 + $0x608] sm:$0xff]
                %250 = vst [vmem:[%s150 + $0x188] sm:$0xff] %v249
                %v251 = vld [vmem:[%s149 + $0x640] sm:$0xff]
                %252 = vst [vmem:[%s150 + $0x190] sm:$0xff] %v251
                %v253 = vld [vmem:[%s149 + $0x648] sm:$0xff]
                %254 = vst [vmem:[%s150 + $0x198] sm:$0xff] %v253
                %v255 = vld [vmem:[%s149 + $0x680] sm:$0xff]
                %256 = vst [vmem:[%s150 + $0x1a0] sm:$0xff] %v255
                %v257 = vld [vmem:[%s149 + $0x688] sm:$0xff]
                %258 = vst [vmem:[%s150 + $0x1a8] sm:$0xff] %v257
                %v259 = vld [vmem:[%s149 + $0x6c0] sm:$0xff]
                %260 = vst [vmem:[%s150 + $0x1b0] sm:$0xff] %v259
                %v261 = vld [vmem:[%s149 + $0x6c8] sm:$0xff]
                %262 = vst [vmem:[%s150 + $0x1b8] sm:$0xff] %v261
                %v263 = vld [vmem:[%s149 + $0x700] sm:$0xff]
                %264 = vst [vmem:[%s150 + $0x1c0] sm:$0xff] %v263
                %v265 = vld [vmem:[%s149 + $0x708] sm:$0xff]
                %266 = vst [vmem:[%s150 + $0x1c8] sm:$0xff] %v265
                %v267 = vld [vmem:[%s149 + $0x740] sm:$0xff]
                %268 = vst [vmem:[%s150 + $0x1d0] sm:$0xff] %v267
                %v269 = vld [vmem:[%s149 + $0x748] sm:$0xff]
                %270 = vst [vmem:[%s150 + $0x1d8] sm:$0xff] %v269
                %v271 = vld [vmem:[%s149 + $0x780] sm:$0xff]
                %272 = vst [vmem:[%s150 + $0x1e0] sm:$0xff] %v271
                %v273 = vld [vmem:[%s149 + $0x788] sm:$0xff]
                %274 = vst [vmem:[%s150 + $0x1e8] sm:$0xff] %v273
                %v275 = vld [vmem:[%s149 + $0x7c0] sm:$0xff]
                %276 = vst [vmem:[%s150 + $0x1f0] sm:$0xff] %v275
                %v277 = vld [vmem:[%s149 + $0x7c8] sm:$0xff]
                %278 = vst [vmem:[%s150 + $0x1f8] sm:$0xff] %v277
              $region37: #{_lambda_.14} parent=31 // loop_footer
                %s148 = sadd.s32 1, %s144
              $region38: #{_lambda_.14} parent=31 // loop_footer_branch
                %143 = sbr.rel target = $region34
              $region39: #{_lambda_.14} parent=31 // loop_exit
                _
            $region32: #{_lambda_.14} parent=27 // pred_fallthru
              _
            // Predicated region
            $region40: #{_lambda_.14} parent=27 // pred_check
              _
            $region41: #{_lambda_.14} parent=27 // pred_check_branch
              %280 = sbr.rel target = $region43
            $region42: #{_lambda_.14} parent=27 // pred_region
              _
            $region43: #{_lambda_.14} parent=27 // pred_fallthru
              _
          $region28: #{_lambda_.14} parent=23 // pred_fallthru
            _
          %281 = vnop
        $region24: #{_lambda_.14} parent=19 // pred_fallthru
          _
      $region20: #{_lambda_.14} parent=5 // pred_fallthru
        _
      %p282 = scmp.le.s32.totalorder 1, %s8
      %p283 = scmp.lt.s32.totalorder %s8, 5
      %p284 = pnand %p282, %p283
      %p285 = pneg %p284
      // Predicated region
      $region44: #{_lambda_.14} parent=5 // pred_check
        _
      $region45: #{_lambda_.14} parent=5 // pred_check_branch
        %287 = sbr.rel (%p284) target = $region47
      $region46: #{_lambda_.14} parent=5 // pred_region
        %s288 = ssub.s32 %s8, 1
        %s289 = sand.u32 %s59, 1
        %s290 = sand.u32 %s59, 1
        %s291 = smul.addr %s290, 512
        %s292 = scalar_lea.vmem [#allocation2], %s291
        // Predicated region
        $region48: #{_lambda_.14} parent=46 // pred_check
          %p293 = pneg %p72
        $region49: #{_lambda_.14} parent=46 // pred_check_branch
          %295 = sbr.rel (%p293) target = $region51
        $region50: #{_lambda_.14} parent=46 // pred_region
          _
        $region51: #{_lambda_.14} parent=46 // pred_fallthru
          _
        %s296 = smul.u32 16, %s17
        %p297 = scmp.lt.s32.totalorder %s296, 15
        %s298 = scalar_select %p297, %s296, 15
        %s299 = smul.addr %s298, 2
        %s300 = smul.addr %s299, 4
        %s301 = scalar_lea.vmem %s0, %s300
        %p302 = pneg %p46
        %p303 = pneg %p43
        %s304 = sand.u32 %s59, 1
        %s305 = sand.u32 %s59, 1
        %s306 = smul.addr %s305, 512
        %s307 = scalar_lea.vmem [#allocation2], %s306
        %p308 = pneg %p72
        %p309 = pneg %p69
        %p310 = pneg %p100
        %p311 = pneg %p97
        %s312 = sand.u32 %s87, 1
        %s313 = sand.u32 %s87, 1
        %s314 = smul.addr %s313, 512
        %s315 = scalar_lea.vmem [#allocation3], %s314
        %s316 = smul.u32 16, %s17
        %p317 = scmp.lt.s32.totalorder %s316, 15
        %s318 = scalar_select %p317, %s316, 15
        %s319 = smul.addr %s318, 2
        %s320 = smul.addr %s319, 4
        %s321 = scalar_lea.vmem %s0, %s320
        %s322 = smul.u32 16, %s17
        %s323 = smul.u32 4, %s18
        %s324 = smul.u32 16, %s17
        %s325 = smul.u32 4, %s18
        %v326 = vld [vmem:[%s321] sm:$0xff]
        %v327 = vld [vmem:[%s321 + $0x8] sm:$0xff]
        %v328 = vld [vmem:[%s321 + $0x10] sm:$0xff]
        %v329 = vld [vmem:[%s321 + $0x18] sm:$0xff]
        %v330 = vld [vmem:[%s321 + $0x20] sm:$0xff]
        %v331 = vld [vmem:[%s321 + $0x28] sm:$0xff]
        %v332 = vld [vmem:[%s321 + $0x30] sm:$0xff]
        %v333 = vld [vmem:[%s321 + $0x38] sm:$0xff]
        %v334 = vld [vmem:[%s321 + $0x40] sm:$0xff]
        %v335 = vld [vmem:[%s321 + $0x48] sm:$0xff]
        %v336 = vld [vmem:[%s321 + $0x50] sm:$0xff]
        %v337 = vld [vmem:[%s321 + $0x58] sm:$0xff]
        %v338 = vld [vmem:[%s321 + $0x60] sm:$0xff]
        %v339 = vld [vmem:[%s321 + $0x68] sm:$0xff]
        %v340 = vld [vmem:[%s321 + $0x70] sm:$0xff]
        %v341 = vld [vmem:[%s321 + $0x78] sm:$0xff]
        %v342 = vld [vmem:[%s292] sm:$0xff]
        %v343 = vld [vmem:[%s292 + $0x8] sm:$0xff]
        %v344 = vld [vmem:[%s292 + $0x10] sm:$0xff]
        %v345 = vld [vmem:[%s292 + $0x18] sm:$0xff]
        %v346 = vld [vmem:[%s292 + $0x20] sm:$0xff]
        %v347 = vld [vmem:[%s292 + $0x28] sm:$0xff]
        %v348 = vld [vmem:[%s292 + $0x30] sm:$0xff]
        %v349 = vld [vmem:[%s292 + $0x38] sm:$0xff]
        %v350 = vld [vmem:[%s292 + $0x40] sm:$0xff]
        %v351 = vld [vmem:[%s292 + $0x48] sm:$0xff]
        %v352 = vld [vmem:[%s292 + $0x50] sm:$0xff]
        %v353 = vld [vmem:[%s292 + $0x58] sm:$0xff]
        %v354 = vld [vmem:[%s292 + $0x60] sm:$0xff]
        %v355 = vld [vmem:[%s292 + $0x68] sm:$0xff]
        %v356 = vld [vmem:[%s292 + $0x70] sm:$0xff]
        %v357 = vld [vmem:[%s292 + $0x78] sm:$0xff]
        %v358 = vld [vmem:[%s292 + $0x80] sm:$0xff]
        %v359 = vld [vmem:[%s292 + $0x88] sm:$0xff]
        %v360 = vld [vmem:[%s292 + $0x90] sm:$0xff]
        %v361 = vld [vmem:[%s292 + $0x98] sm:$0xff]
        %v362 = vld [vmem:[%s292 + $0xa0] sm:$0xff]
        %v363 = vld [vmem:[%s292 + $0xa8] sm:$0xff]
        %v364 = vld [vmem:[%s292 + $0xb0] sm:$0xff]
        %v365 = vld [vmem:[%s292 + $0xb8] sm:$0xff]
        %v366 = vld [vmem:[%s292 + $0xc0] sm:$0xff]
        %v367 = vld [vmem:[%s292 + $0xc8] sm:$0xff]
        %v368 = vld [vmem:[%s292 + $0xd0] sm:$0xff]
        %v369 = vld [vmem:[%s292 + $0xd8] sm:$0xff]
        %v370 = vld [vmem:[%s292 + $0xe0] sm:$0xff]
        %v371 = vld [vmem:[%s292 + $0xe8] sm:$0xff]
        %v372 = vld [vmem:[%s292 + $0xf0] sm:$0xff]
        %v373 = vld [vmem:[%s292 + $0xf8] sm:$0xff]
        %v374 = vld [vmem:[%s292 + $0x100] sm:$0xff]
        %v375 = vld [vmem:[%s292 + $0x108] sm:$0xff]
        %v376 = vld [vmem:[%s292 + $0x110] sm:$0xff]
        %v377 = vld [vmem:[%s292 + $0x118] sm:$0xff]
        %v378 = vld [vmem:[%s292 + $0x120] sm:$0xff]
        %v379 = vld [vmem:[%s292 + $0x128] sm:$0xff]
        %v380 = vld [vmem:[%s292 + $0x130] sm:$0xff]
        %v381 = vld [vmem:[%s292 + $0x138] sm:$0xff]
        %v382 = vld [vmem:[%s292 + $0x140] sm:$0xff]
        %v383 = vld [vmem:[%s292 + $0x148] sm:$0xff]
        %v384 = vld [vmem:[%s292 + $0x150] sm:$0xff]
        %v385 = vld [vmem:[%s292 + $0x158] sm:$0xff]
        %v386 = vld [vmem:[%s292 + $0x160] sm:$0xff]
        %v387 = vld [vmem:[%s292 + $0x168] sm:$0xff]
        %v388 = vld [vmem:[%s292 + $0x170] sm:$0xff]
        %v389 = vld [vmem:[%s292 + $0x178] sm:$0xff]
        %v390 = vld [vmem:[%s292 + $0x180] sm:$0xff]
        %v391 = vld [vmem:[%s292 + $0x188] sm:$0xff]
        %v392 = vld [vmem:[%s292 + $0x190] sm:$0xff]
        %v393 = vld [vmem:[%s292 + $0x198] sm:$0xff]
        %v394 = vld [vmem:[%s292 + $0x1a0] sm:$0xff]
        %v395 = vld [vmem:[%s292 + $0x1a8] sm:$0xff]
        %v396 = vld [vmem:[%s292 + $0x1b0] sm:$0xff]
        %v397 = vld [vmem:[%s292 + $0x1b8] sm:$0xff]
        %v398 = vld [vmem:[%s292 + $0x1c0] sm:$0xff]
        %v399 = vld [vmem:[%s292 + $0x1c8] sm:$0xff]
        %v400 = vld [vmem:[%s292 + $0x1d0] sm:$0xff]
        %v401 = vld [vmem:[%s292 + $0x1d8] sm:$0xff]
        %v402 = vld [vmem:[%s292 + $0x1e0] sm:$0xff]
        %v403 = vld [vmem:[%s292 + $0x1e8] sm:$0xff]
        %v404 = vld [vmem:[%s292 + $0x1f0] sm:$0xff]
        %v405 = vld [vmem:[%s292 + $0x1f8] sm:$0xff]
        %v422 = vunpack.c.l.b16 %v326
        %v423 = vunpack.c.h.b16 %v326
        %v424 = vunpack.c.l.b16 %v327
        %v425 = vunpack.c.h.b16 %v327
        %v426 = vunpack.c.l.b16 %v328
        %v427 = vunpack.c.h.b16 %v328
        %v428 = vunpack.c.l.b16 %v329
        %v429 = vunpack.c.h.b16 %v329
        %v430 = vunpack.c.l.b16 %v330
        %v431 = vunpack.c.h.b16 %v330
        %v432 = vunpack.c.l.b16 %v331
        %v433 = vunpack.c.h.b16 %v331
        %v434 = vunpack.c.l.b16 %v332
        %v435 = vunpack.c.h.b16 %v332
        %v436 = vunpack.c.l.b16 %v333
        %v437 = vunpack.c.h.b16 %v333
        %v438 = vunpack.c.l.b16 %v334
        %v439 = vunpack.c.h.b16 %v334
        %v440 = vunpack.c.l.b16 %v335
        %v441 = vunpack.c.h.b16 %v335
        %v442 = vunpack.c.l.b16 %v336
        %v443 = vunpack.c.h.b16 %v336
        %v444 = vunpack.c.l.b16 %v337
        %v445 = vunpack.c.h.b16 %v337
        %v446 = vunpack.c.l.b16 %v338
        %v447 = vunpack.c.h.b16 %v338
        %v448 = vunpack.c.l.b16 %v339
        %v449 = vunpack.c.h.b16 %v339
        %v450 = vunpack.c.l.b16 %v340
        %v451 = vunpack.c.h.b16 %v340
        %v452 = vunpack.c.l.b16 %v341
        %v453 = vunpack.c.h.b16 %v341
        %v454 = vpack.c.b16 %v424, %v422
        %v455 = vpack.c.b16 %v425, %v423
        %v456 = vpack.c.b16 %v428, %v426
        %v457 = vpack.c.b16 %v429, %v427
        %v458 = vpack.c.b16 %v432, %v430
        %v459 = vpack.c.b16 %v433, %v431
        %v460 = vpack.c.b16 %v436, %v434
        %v461 = vpack.c.b16 %v437, %v435
        %v462 = vpack.c.b16 %v440, %v438
        %v463 = vpack.c.b16 %v441, %v439
        %v464 = vpack.c.b16 %v444, %v442
        %v465 = vpack.c.b16 %v445, %v443
        %v466 = vpack.c.b16 %v448, %v446
        %v467 = vpack.c.b16 %v449, %v447
        %v468 = vpack.c.b16 %v452, %v450
        %v469 = vpack.c.b16 %v453, %v451
        %v550 = vunpack.c.l.b16 %v342
        %v551 = vunpack.c.h.b16 %v342
        %v552 = vunpack.c.l.b16 %v343
        %v553 = vunpack.c.h.b16 %v343
        %v554 = vunpack.c.l.b16 %v344
        %v555 = vunpack.c.h.b16 %v344
        %v556 = vunpack.c.l.b16 %v345
        %v557 = vunpack.c.h.b16 %v345
        %v558 = vunpack.c.l.b16 %v346
        %v559 = vunpack.c.h.b16 %v346
        %v560 = vunpack.c.l.b16 %v347
        %v561 = vunpack.c.h.b16 %v347
        %v562 = vunpack.c.l.b16 %v348
        %v563 = vunpack.c.h.b16 %v348
        %v564 = vunpack.c.l.b16 %v349
        %v565 = vunpack.c.h.b16 %v349
        %v566 = vunpack.c.l.b16 %v350
        %v567 = vunpack.c.h.b16 %v350
        %v568 = vunpack.c.l.b16 %v351
        %v569 = vunpack.c.h.b16 %v351
        %v570 = vunpack.c.l.b16 %v352
        %v571 = vunpack.c.h.b16 %v352
        %v572 = vunpack.c.l.b16 %v353
        %v573 = vunpack.c.h.b16 %v353
        %v574 = vunpack.c.l.b16 %v354
        %v575 = vunpack.c.h.b16 %v354
        %v576 = vunpack.c.l.b16 %v355
        %v577 = vunpack.c.h.b16 %v355
        %v578 = vunpack.c.l.b16 %v356
        %v579 = vunpack.c.h.b16 %v356
        %v580 = vunpack.c.l.b16 %v357
        %v581 = vunpack.c.h.b16 %v357
        %v582 = vunpack.c.l.b16 %v358
        %v583 = vunpack.c.h.b16 %v358
        %v584 = vunpack.c.l.b16 %v359
        %v585 = vunpack.c.h.b16 %v359
        %v586 = vunpack.c.l.b16 %v360
        %v587 = vunpack.c.h.b16 %v360
        %v588 = vunpack.c.l.b16 %v361
        %v589 = vunpack.c.h.b16 %v361
        %v590 = vunpack.c.l.b16 %v362
        %v591 = vunpack.c.h.b16 %v362
        %v592 = vunpack.c.l.b16 %v363
        %v593 = vunpack.c.h.b16 %v363
        %v594 = vunpack.c.l.b16 %v364
        %v595 = vunpack.c.h.b16 %v364
        %v596 = vunpack.c.l.b16 %v365
        %v597 = vunpack.c.h.b16 %v365
        %v598 = vunpack.c.l.b16 %v366
        %v599 = vunpack.c.h.b16 %v366
        %v600 = vunpack.c.l.b16 %v367
        %v601 = vunpack.c.h.b16 %v367
        %v602 = vunpack.c.l.b16 %v368
        %v603 = vunpack.c.h.b16 %v368
        %v604 = vunpack.c.l.b16 %v369
        %v605 = vunpack.c.h.b16 %v369
        %v606 = vunpack.c.l.b16 %v370
        %v607 = vunpack.c.h.b16 %v370
        %v608 = vunpack.c.l.b16 %v371
        %v609 = vunpack.c.h.b16 %v371
        %v610 = vunpack.c.l.b16 %v372
        %v611 = vunpack.c.h.b16 %v372
        %v612 = vunpack.c.l.b16 %v373
        %v613 = vunpack.c.h.b16 %v373
        %v614 = vunpack.c.l.b16 %v374
        %v615 = vunpack.c.h.b16 %v374
        %v616 = vunpack.c.l.b16 %v375
        %v617 = vunpack.c.h.b16 %v375
        %v618 = vunpack.c.l.b16 %v376
        %v619 = vunpack.c.h.b16 %v376
        %v620 = vunpack.c.l.b16 %v377
        %v621 = vunpack.c.h.b16 %v377
        %v622 = vunpack.c.l.b16 %v378
        %v623 = vunpack.c.h.b16 %v378
        %v624 = vunpack.c.l.b16 %v379
        %v625 = vunpack.c.h.b16 %v379
        %v626 = vunpack.c.l.b16 %v380
        %v627 = vunpack.c.h.b16 %v380
        %v628 = vunpack.c.l.b16 %v381
        %v629 = vunpack.c.h.b16 %v381
        %v630 = vunpack.c.l.b16 %v382
        %v631 = vunpack.c.h.b16 %v382
        %v632 = vunpack.c.l.b16 %v383
        %v633 = vunpack.c.h.b16 %v383
        %v634 = vunpack.c.l.b16 %v384
        %v635 = vunpack.c.h.b16 %v384
        %v636 = vunpack.c.l.b16 %v385
        %v637 = vunpack.c.h.b16 %v385
        %v638 = vunpack.c.l.b16 %v386
        %v639 = vunpack.c.h.b16 %v386
        %v640 = vunpack.c.l.b16 %v387
        %v641 = vunpack.c.h.b16 %v387
        %v642 = vunpack.c.l.b16 %v388
        %v643 = vunpack.c.h.b16 %v388
        %v644 = vunpack.c.l.b16 %v389
        %v645 = vunpack.c.h.b16 %v389
        %v646 = vunpack.c.l.b16 %v390
        %v647 = vunpack.c.h.b16 %v390
        %v648 = vunpack.c.l.b16 %v391
        %v649 = vunpack.c.h.b16 %v391
        %v650 = vunpack.c.l.b16 %v392
        %v651 = vunpack.c.h.b16 %v392
        %v652 = vunpack.c.l.b16 %v393
        %v653 = vunpack.c.h.b16 %v393
        %v654 = vunpack.c.l.b16 %v394
        %v655 = vunpack.c.h.b16 %v394
        %v656 = vunpack.c.l.b16 %v395
        %v657 = vunpack.c.h.b16 %v395
        %v658 = vunpack.c.l.b16 %v396
        %v659 = vunpack.c.h.b16 %v396
        %v660 = vunpack.c.l.b16 %v397
        %v661 = vunpack.c.h.b16 %v397
        %v662 = vunpack.c.l.b16 %v398
        %v663 = vunpack.c.h.b16 %v398
        %v664 = vunpack.c.l.b16 %v399
        %v665 = vunpack.c.h.b16 %v399
        %v666 = vunpack.c.l.b16 %v400
        %v667 = vunpack.c.h.b16 %v400
        %v668 = vunpack.c.l.b16 %v401
        %v669 = vunpack.c.h.b16 %v401
        %v670 = vunpack.c.l.b16 %v402
        %v671 = vunpack.c.h.b16 %v402
        %v672 = vunpack.c.l.b16 %v403
        %v673 = vunpack.c.h.b16 %v403
        %v674 = vunpack.c.l.b16 %v404
        %v675 = vunpack.c.h.b16 %v404
        %v676 = vunpack.c.l.b16 %v405
        %v677 = vunpack.c.h.b16 %v405
        %v678 = vpack.c.b16 %v554, %v550
        %v679 = vpack.c.b16 %v555, %v551
        %v680 = vpack.c.b16 %v556, %v552
        %v681 = vpack.c.b16 %v557, %v553
        %v682 = vpack.c.b16 %v562, %v558
        %v683 = vpack.c.b16 %v563, %v559
        %v684 = vpack.c.b16 %v564, %v560
        %v685 = vpack.c.b16 %v565, %v561
        %v686 = vpack.c.b16 %v570, %v566
        %v687 = vpack.c.b16 %v571, %v567
        %v688 = vpack.c.b16 %v572, %v568
        %v689 = vpack.c.b16 %v573, %v569
        %v690 = vpack.c.b16 %v578, %v574
        %v691 = vpack.c.b16 %v579, %v575
        %v692 = vpack.c.b16 %v580, %v576
        %v693 = vpack.c.b16 %v581, %v577
        %v694 = vpack.c.b16 %v586, %v582
        %v695 = vpack.c.b16 %v587, %v583
        %v696 = vpack.c.b16 %v588, %v584
        %v697 = vpack.c.b16 %v589, %v585
        %v698 = vpack.c.b16 %v594, %v590
        %v699 = vpack.c.b16 %v595, %v591
        %v700 = vpack.c.b16 %v596, %v592
        %v701 = vpack.c.b16 %v597, %v593
        %v702 = vpack.c.b16 %v602, %v598
        %v703 = vpack.c.b16 %v603, %v599
        %v704 = vpack.c.b16 %v604, %v600
        %v705 = vpack.c.b16 %v605, %v601
        %v706 = vpack.c.b16 %v610, %v606
        %v707 = vpack.c.b16 %v611, %v607
        %v708 = vpack.c.b16 %v612, %v608
        %v709 = vpack.c.b16 %v613, %v609
        %v710 = vpack.c.b16 %v618, %v614
        %v711 = vpack.c.b16 %v619, %v615
        %v712 = vpack.c.b16 %v620, %v616
        %v713 = vpack.c.b16 %v621, %v617
        %v714 = vpack.c.b16 %v626, %v622
        %v715 = vpack.c.b16 %v627, %v623
        %v716 = vpack.c.b16 %v628, %v624
        %v717 = vpack.c.b16 %v629, %v625
        %v718 = vpack.c.b16 %v634, %v630
        %v719 = vpack.c.b16 %v635, %v631
        %v720 = vpack.c.b16 %v636, %v632
        %v721 = vpack.c.b16 %v637, %v633
        %v722 = vpack.c.b16 %v642, %v638
        %v723 = vpack.c.b16 %v643, %v639
        %v724 = vpack.c.b16 %v644, %v640
        %v725 = vpack.c.b16 %v645, %v641
        %v726 = vpack.c.b16 %v650, %v646
        %v727 = vpack.c.b16 %v651, %v647
        %v728 = vpack.c.b16 %v652, %v648
        %v729 = vpack.c.b16 %v653, %v649
        %v730 = vpack.c.b16 %v658, %v654
        %v731 = vpack.c.b16 %v659, %v655
        %v732 = vpack.c.b16 %v660, %v656
        %v733 = vpack.c.b16 %v661, %v657
        %v734 = vpack.c.b16 %v666, %v662
        %v735 = vpack.c.b16 %v667, %v663
        %v736 = vpack.c.b16 %v668, %v664
        %v737 = vpack.c.b16 %v669, %v665
        %v738 = vpack.c.b16 %v674, %v670
        %v739 = vpack.c.b16 %v675, %v671
        %v740 = vpack.c.b16 %v676, %v672
        %v741 = vpack.c.b16 %v677, %v673
        %806 = vmatpush.bf16.msra.mxu0 %v706
        %807 = vmatpush.bf16.msra.mxu0 %v702
        %808 = vmatpush.bf16.msra.mxu0 %v698
        %809 = vmatpush.bf16.msra.mxu0 %v694
        %810 = vmatpush.bf16.msra.mxu0 %v690
        %811 = vmatpush.bf16.msra.mxu0 %v686
        %812 = vmatpush.bf16.msra.mxu0 %v682
        %813 = vmatpush.bf16.msra.mxu0 %v678
        %814 = vmatmul.bf16.gmra.mxu0 %v454
        %v815 = vpop.f32.mrf.mxu0
        %v816 = vadd.f32 0.0, %v815
        %v817 = vpop.f32.mrf.mxu0
        %v818 = vadd.f32 0.0, %v817
        %819 = vmatmul.bf16.gmra.mxu0 %v456
        %v820 = vpop.f32.mrf.mxu0
        %v821 = vadd.f32 0.0, %v820
        %v822 = vpop.f32.mrf.mxu0
        %v823 = vadd.f32 0.0, %v822
        %824 = vmatmul.bf16.gmra.mxu0 %v458
        %v825 = vpop.f32.mrf.mxu0
        %v826 = vadd.f32 0.0, %v825
        %v827 = vpop.f32.mrf.mxu0
        %v828 = vadd.f32 0.0, %v827
        %829 = vmatmul.bf16.gmra.mxu0 %v460
        %v830 = vpop.f32.mrf.mxu0
        %v831 = vadd.f32 0.0, %v830
        %v832 = vpop.f32.mrf.mxu0
        %v833 = vadd.f32 0.0, %v832
        %834 = vmatmul.bf16.gmra.mxu0 %v462
        %v835 = vpop.f32.mrf.mxu0
        %v836 = vadd.f32 0.0, %v835
        %v837 = vpop.f32.mrf.mxu0
        %v838 = vadd.f32 0.0, %v837
        %839 = vmatmul.bf16.gmra.mxu0 %v464
        %v840 = vpop.f32.mrf.mxu0
        %v841 = vadd.f32 0.0, %v840
        %v842 = vpop.f32.mrf.mxu0
        %v843 = vadd.f32 0.0, %v842
        %844 = vmatmul.bf16.gmra.mxu0 %v466
        %v845 = vpop.f32.mrf.mxu0
        %v846 = vadd.f32 0.0, %v845
        %v847 = vpop.f32.mrf.mxu0
        %v848 = vadd.f32 0.0, %v847
        %849 = vmatmul.bf16.gmra.mxu0 %v468
        %v850 = vpop.f32.mrf.mxu0
        %v851 = vadd.f32 0.0, %v850
        %v852 = vpop.f32.mrf.mxu0
        %v853 = vadd.f32 0.0, %v852
        %854 = vdwg.mxu0
        %855 = vmatpush.bf16.msra.mxu0 %v738
        %856 = vmatpush.bf16.msra.mxu0 %v734
        %857 = vmatpush.bf16.msra.mxu0 %v730
        %858 = vmatpush.bf16.msra.mxu0 %v726
        %859 = vmatpush.bf16.msra.mxu0 %v722
        %860 = vmatpush.bf16.msra.mxu0 %v718
        %861 = vmatpush.bf16.msra.mxu0 %v714
        %862 = vmatpush.bf16.msra.mxu0 %v710
        %863 = vmatmul.bf16.gmra.mxu0 %v455
        %v864 = vpop.f32.mrf.mxu0
        %v865 = vadd.f32 %v816, %v864
        %v866 = vpop.f32.mrf.mxu0
        %v867 = vadd.f32 %v818, %v866
        %868 = vmatmul.bf16.gmra.mxu0 %v457
        %v869 = vpop.f32.mrf.mxu0
        %v870 = vadd.f32 %v821, %v869
        %v871 = vpop.f32.mrf.mxu0
        %v872 = vadd.f32 %v823, %v871
        %873 = vmatmul.bf16.gmra.mxu0 %v459
        %v874 = vpop.f32.mrf.mxu0
        %v875 = vadd.f32 %v826, %v874
        %v876 = vpop.f32.mrf.mxu0
        %v877 = vadd.f32 %v828, %v876
        %878 = vmatmul.bf16.gmra.mxu0 %v461
        %v879 = vpop.f32.mrf.mxu0
        %v880 = vadd.f32 %v831, %v879
        %v881 = vpop.f32.mrf.mxu0
        %v882 = vadd.f32 %v833, %v881
        %883 = vmatmul.bf16.gmra.mxu0 %v463
        %v884 = vpop.f32.mrf.mxu0
        %v885 = vadd.f32 %v836, %v884
        %v886 = vpop.f32.mrf.mxu0
        %v887 = vadd.f32 %v838, %v886
        %888 = vmatmul.bf16.gmra.mxu0 %v465
        %v889 = vpop.f32.mrf.mxu0
        %v890 = vadd.f32 %v841, %v889
        %v891 = vpop.f32.mrf.mxu0
        %v892 = vadd.f32 %v843, %v891
        %893 = vmatmul.bf16.gmra.mxu0 %v467
        %v894 = vpop.f32.mrf.mxu0
        %v895 = vadd.f32 %v846, %v894
        %v896 = vpop.f32.mrf.mxu0
        %v897 = vadd.f32 %v848, %v896
        %898 = vmatmul.bf16.gmra.mxu0 %v469
        %v899 = vpop.f32.mrf.mxu0
        %v900 = vadd.f32 %v851, %v899
        %v901 = vpop.f32.mrf.mxu0
        %v902 = vadd.f32 %v853, %v901
        %903 = vdwg.mxu0
        %904 = vmatpush.bf16.msra.mxu0 %v707
        %905 = vmatpush.bf16.msra.mxu0 %v703
        %906 = vmatpush.bf16.msra.mxu0 %v699
        %907 = vmatpush.bf16.msra.mxu0 %v695
        %908 = vmatpush.bf16.msra.mxu0 %v691
        %909 = vmatpush.bf16.msra.mxu0 %v687
        %910 = vmatpush.bf16.msra.mxu0 %v683
        %911 = vmatpush.bf16.msra.mxu0 %v679
        %912 = vmatmul.bf16.gmra.mxu0 %v454
        %v913 = vpop.f32.mrf.mxu0
        %v914 = vadd.f32 0.0, %v913
        %v915 = vpop.f32.mrf.mxu0
        %v916 = vadd.f32 0.0, %v915
        %917 = vmatmul.bf16.gmra.mxu0 %v456
        %v918 = vpop.f32.mrf.mxu0
        %v919 = vadd.f32 0.0, %v918
        %v920 = vpop.f32.mrf.mxu0
        %v921 = vadd.f32 0.0, %v920
        %922 = vmatmul.bf16.gmra.mxu0 %v458
        %v923 = vpop.f32.mrf.mxu0
        %v924 = vadd.f32 0.0, %v923
        %v925 = vpop.f32.mrf.mxu0
        %v926 = vadd.f32 0.0, %v925
        %927 = vmatmul.bf16.gmra.mxu0 %v460
        %v928 = vpop.f32.mrf.mxu0
        %v929 = vadd.f32 0.0, %v928
        %v930 = vpop.f32.mrf.mxu0
        %v931 = vadd.f32 0.0, %v930
        %932 = vmatmul.bf16.gmra.mxu0 %v462
        %v933 = vpop.f32.mrf.mxu0
        %v934 = vadd.f32 0.0, %v933
        %v935 = vpop.f32.mrf.mxu0
        %v936 = vadd.f32 0.0, %v935
        %937 = vmatmul.bf16.gmra.mxu0 %v464
        %v938 = vpop.f32.mrf.mxu0
        %v939 = vadd.f32 0.0, %v938
        %v940 = vpop.f32.mrf.mxu0
        %v941 = vadd.f32 0.0, %v940
        %942 = vmatmul.bf16.gmra.mxu0 %v466
        %v943 = vpop.f32.mrf.mxu0
        %v944 = vadd.f32 0.0, %v943
        %v945 = vpop.f32.mrf.mxu0
        %v946 = vadd.f32 0.0, %v945
        %947 = vmatmul.bf16.gmra.mxu0 %v468
        %v948 = vpop.f32.mrf.mxu0
        %v949 = vadd.f32 0.0, %v948
        %v950 = vpop.f32.mrf.mxu0
        %v951 = vadd.f32 0.0, %v950
        %952 = vdwg.mxu0
        %953 = vmatpush.bf16.msra.mxu0 %v739
        %954 = vmatpush.bf16.msra.mxu0 %v735
        %955 = vmatpush.bf16.msra.mxu0 %v731
        %956 = vmatpush.bf16.msra.mxu0 %v727
        %957 = vmatpush.bf16.msra.mxu0 %v723
        %958 = vmatpush.bf16.msra.mxu0 %v719
        %959 = vmatpush.bf16.msra.mxu0 %v715
        %960 = vmatpush.bf16.msra.mxu0 %v711
        %961 = vmatmul.bf16.gmra.mxu0 %v455
        %v962 = vpop.f32.mrf.mxu0
        %v963 = vadd.f32 %v914, %v962
        %v964 = vpop.f32.mrf.mxu0
        %v965 = vadd.f32 %v916, %v964
        %966 = vmatmul.bf16.gmra.mxu0 %v457
        %v967 = vpop.f32.mrf.mxu0
        %v968 = vadd.f32 %v919, %v967
        %v969 = vpop.f32.mrf.mxu0
        %v970 = vadd.f32 %v921, %v969
        %971 = vmatmul.bf16.gmra.mxu0 %v459
        %v972 = vpop.f32.mrf.mxu0
        %v973 = vadd.f32 %v924, %v972
        %v974 = vpop.f32.mrf.mxu0
        %v975 = vadd.f32 %v926, %v974
        %976 = vmatmul.bf16.gmra.mxu0 %v461
        %v977 = vpop.f32.mrf.mxu0
        %v978 = vadd.f32 %v929, %v977
        %v979 = vpop.f32.mrf.mxu0
        %v980 = vadd.f32 %v931, %v979
        %981 = vmatmul.bf16.gmra.mxu0 %v463
        %v982 = vpop.f32.mrf.mxu0
        %v983 = vadd.f32 %v934, %v982
        %v984 = vpop.f32.mrf.mxu0
        %v985 = vadd.f32 %v936, %v984
        %986 = vmatmul.bf16.gmra.mxu0 %v465
        %v987 = vpop.f32.mrf.mxu0
        %v988 = vadd.f32 %v939, %v987
        %v989 = vpop.f32.mrf.mxu0
        %v990 = vadd.f32 %v941, %v989
        %991 = vmatmul.bf16.gmra.mxu0 %v467
        %v992 = vpop.f32.mrf.mxu0
        %v993 = vadd.f32 %v944, %v992
        %v994 = vpop.f32.mrf.mxu0
        %v995 = vadd.f32 %v946, %v994
        %996 = vmatmul.bf16.gmra.mxu0 %v469
        %v997 = vpop.f32.mrf.mxu0
        %v998 = vadd.f32 %v949, %v997
        %v999 = vpop.f32.mrf.mxu0
        %v1000 = vadd.f32 %v951, %v999
        %1001 = vdwg.mxu0
        %1002 = vmatpush.bf16.msra.mxu0 %v708
        %1003 = vmatpush.bf16.msra.mxu0 %v704
        %1004 = vmatpush.bf16.msra.mxu0 %v700
        %1005 = vmatpush.bf16.msra.mxu0 %v696
        %1006 = vmatpush.bf16.msra.mxu0 %v692
        %1007 = vmatpush.bf16.msra.mxu0 %v688
        %1008 = vmatpush.bf16.msra.mxu0 %v684
        %1009 = vmatpush.bf16.msra.mxu0 %v680
        %1010 = vmatmul.bf16.gmra.mxu0 %v454
        %v1011 = vpop.f32.mrf.mxu0
        %v1012 = vadd.f32 0.0, %v1011
        %v1013 = vpop.f32.mrf.mxu0
        %v1014 = vadd.f32 0.0, %v1013
        %1015 = vmatmul.bf16.gmra.mxu0 %v456
        %v1016 = vpop.f32.mrf.mxu0
        %v1017 = vadd.f32 0.0, %v1016
        %v1018 = vpop.f32.mrf.mxu0
        %v1019 = vadd.f32 0.0, %v1018
        %1020 = vmatmul.bf16.gmra.mxu0 %v458
        %v1021 = vpop.f32.mrf.mxu0
        %v1022 = vadd.f32 0.0, %v1021
        %v1023 = vpop.f32.mrf.mxu0
        %v1024 = vadd.f32 0.0, %v1023
        %1025 = vmatmul.bf16.gmra.mxu0 %v460
        %v1026 = vpop.f32.mrf.mxu0
        %v1027 = vadd.f32 0.0, %v1026
        %v1028 = vpop.f32.mrf.mxu0
        %v1029 = vadd.f32 0.0, %v1028
        %1030 = vmatmul.bf16.gmra.mxu0 %v462
        %v1031 = vpop.f32.mrf.mxu0
        %v1032 = vadd.f32 0.0, %v1031
        %v1033 = vpop.f32.mrf.mxu0
        %v1034 = vadd.f32 0.0, %v1033
        %1035 = vmatmul.bf16.gmra.mxu0 %v464
        %v1036 = vpop.f32.mrf.mxu0
        %v1037 = vadd.f32 0.0, %v1036
        %v1038 = vpop.f32.mrf.mxu0
        %v1039 = vadd.f32 0.0, %v1038
        %1040 = vmatmul.bf16.gmra.mxu0 %v466
        %v1041 = vpop.f32.mrf.mxu0
        %v1042 = vadd.f32 0.0, %v1041
        %v1043 = vpop.f32.mrf.mxu0
        %v1044 = vadd.f32 0.0, %v1043
        %1045 = vmatmul.bf16.gmra.mxu0 %v468
        %v1046 = vpop.f32.mrf.mxu0
        %v1047 = vadd.f32 0.0, %v1046
        %v1048 = vpop.f32.mrf.mxu0
        %v1049 = vadd.f32 0.0, %v1048
        %1050 = vdwg.mxu0
        %1051 = vmatpush.bf16.msra.mxu0 %v740
        %1052 = vmatpush.bf16.msra.mxu0 %v736
        %1053 = vmatpush.bf16.msra.mxu0 %v732
        %1054 = vmatpush.bf16.msra.mxu0 %v728
        %1055 = vmatpush.bf16.msra.mxu0 %v724
        %1056 = vmatpush.bf16.msra.mxu0 %v720
        %1057 = vmatpush.bf16.msra.mxu0 %v716
        %1058 = vmatpush.bf16.msra.mxu0 %v712
        %1059 = vmatmul.bf16.gmra.mxu0 %v455
        %v1060 = vpop.f32.mrf.mxu0
        %v1061 = vadd.f32 %v1012, %v1060
        %v1062 = vpop.f32.mrf.mxu0
        %v1063 = vadd.f32 %v1014, %v1062
        %1064 = vmatmul.bf16.gmra.mxu0 %v457
        %v1065 = vpop.f32.mrf.mxu0
        %v1066 = vadd.f32 %v1017, %v1065
        %v1067 = vpop.f32.mrf.mxu0
        %v1068 = vadd.f32 %v1019, %v1067
        %1069 = vmatmul.bf16.gmra.mxu0 %v459
        %v1070 = vpop.f32.mrf.mxu0
        %v1071 = vadd.f32 %v1022, %v1070
        %v1072 = vpop.f32.mrf.mxu0
        %v1073 = vadd.f32 %v1024, %v1072
        %1074 = vmatmul.bf16.gmra.mxu0 %v461
        %v1075 = vpop.f32.mrf.mxu0
        %v1076 = vadd.f32 %v1027, %v1075
        %v1077 = vpop.f32.mrf.mxu0
        %v1078 = vadd.f32 %v1029, %v1077
        %1079 = vmatmul.bf16.gmra.mxu0 %v463
        %v1080 = vpop.f32.mrf.mxu0
        %v1081 = vadd.f32 %v1032, %v1080
        %v1082 = vpop.f32.mrf.mxu0
        %v1083 = vadd.f32 %v1034, %v1082
        %1084 = vmatmul.bf16.gmra.mxu0 %v465
        %v1085 = vpop.f32.mrf.mxu0
        %v1086 = vadd.f32 %v1037, %v1085
        %v1087 = vpop.f32.mrf.mxu0
        %v1088 = vadd.f32 %v1039, %v1087
        %1089 = vmatmul.bf16.gmra.mxu0 %v467
        %v1090 = vpop.f32.mrf.mxu0
        %v1091 = vadd.f32 %v1042, %v1090
        %v1092 = vpop.f32.mrf.mxu0
        %v1093 = vadd.f32 %v1044, %v1092
        %1094 = vmatmul.bf16.gmra.mxu0 %v469
        %v1095 = vpop.f32.mrf.mxu0
        %v1096 = vadd.f32 %v1047, %v1095
        %v1097 = vpop.f32.mrf.mxu0
        %v1098 = vadd.f32 %v1049, %v1097
        %1099 = vdwg.mxu0
        %1100 = vmatpush.bf16.msra.mxu0 %v709
        %1101 = vmatpush.bf16.msra.mxu0 %v705
        %1102 = vmatpush.bf16.msra.mxu0 %v701
        %1103 = vmatpush.bf16.msra.mxu0 %v697
        %1104 = vmatpush.bf16.msra.mxu0 %v693
        %1105 = vmatpush.bf16.msra.mxu0 %v689
        %1106 = vmatpush.bf16.msra.mxu0 %v685
        %1107 = vmatpush.bf16.msra.mxu0 %v681
        %1108 = vmatmul.bf16.gmra.mxu0 %v454
        %v1109 = vpop.f32.mrf.mxu0
        %v1110 = vadd.f32 0.0, %v1109
        %v1111 = vpop.f32.mrf.mxu0
        %v1112 = vadd.f32 0.0, %v1111
        %1113 = vmatmul.bf16.gmra.mxu0 %v456
        %v1114 = vpop.f32.mrf.mxu0
        %v1115 = vadd.f32 0.0, %v1114
        %v1116 = vpop.f32.mrf.mxu0
        %v1117 = vadd.f32 0.0, %v1116
        %1118 = vmatmul.bf16.gmra.mxu0 %v458
        %v1119 = vpop.f32.mrf.mxu0
        %v1120 = vadd.f32 0.0, %v1119
        %v1121 = vpop.f32.mrf.mxu0
        %v1122 = vadd.f32 0.0, %v1121
        %1123 = vmatmul.bf16.gmra.mxu0 %v460
        %v1124 = vpop.f32.mrf.mxu0
        %v1125 = vadd.f32 0.0, %v1124
        %v1126 = vpop.f32.mrf.mxu0
        %v1127 = vadd.f32 0.0, %v1126
        %1128 = vmatmul.bf16.gmra.mxu0 %v462
        %v1129 = vpop.f32.mrf.mxu0
        %v1130 = vadd.f32 0.0, %v1129
        %v1131 = vpop.f32.mrf.mxu0
        %v1132 = vadd.f32 0.0, %v1131
        %1133 = vmatmul.bf16.gmra.mxu0 %v464
        %v1134 = vpop.f32.mrf.mxu0
        %v1135 = vadd.f32 0.0, %v1134
        %v1136 = vpop.f32.mrf.mxu0
        %v1137 = vadd.f32 0.0, %v1136
        %1138 = vmatmul.bf16.gmra.mxu0 %v466
        %v1139 = vpop.f32.mrf.mxu0
        %v1140 = vadd.f32 0.0, %v1139
        %v1141 = vpop.f32.mrf.mxu0
        %v1142 = vadd.f32 0.0, %v1141
        %1143 = vmatmul.bf16.gmra.mxu0 %v468
        %v1144 = vpop.f32.mrf.mxu0
        %v1145 = vadd.f32 0.0, %v1144
        %v1146 = vpop.f32.mrf.mxu0
        %v1147 = vadd.f32 0.0, %v1146
        %1148 = vdwg.mxu0
        %1149 = vmatpush.bf16.msra.mxu0 %v741
        %1150 = vmatpush.bf16.msra.mxu0 %v737
        %1151 = vmatpush.bf16.msra.mxu0 %v733
        %1152 = vmatpush.bf16.msra.mxu0 %v729
        %1153 = vmatpush.bf16.msra.mxu0 %v725
        %1154 = vmatpush.bf16.msra.mxu0 %v721
        %1155 = vmatpush.bf16.msra.mxu0 %v717
        %1156 = vmatpush.bf16.msra.mxu0 %v713
        %1157 = vmatmul.bf16.gmra.mxu0 %v455
        %v1158 = vpop.f32.mrf.mxu0
        %v1159 = vadd.f32 %v1110, %v1158
        %v1160 = vpop.f32.mrf.mxu0
        %v1161 = vadd.f32 %v1112, %v1160
        %1162 = vmatmul.bf16.gmra.mxu0 %v457
        %v1163 = vpop.f32.mrf.mxu0
        %v1164 = vadd.f32 %v1115, %v1163
        %v1165 = vpop.f32.mrf.mxu0
        %v1166 = vadd.f32 %v1117, %v1165
        %1167 = vmatmul.bf16.gmra.mxu0 %v459
        %v1168 = vpop.f32.mrf.mxu0
        %v1169 = vadd.f32 %v1120, %v1168
        %v1170 = vpop.f32.mrf.mxu0
        %v1171 = vadd.f32 %v1122, %v1170
        %1172 = vmatmul.bf16.gmra.mxu0 %v461
        %v1173 = vpop.f32.mrf.mxu0
        %v1174 = vadd.f32 %v1125, %v1173
        %v1175 = vpop.f32.mrf.mxu0
        %v1176 = vadd.f32 %v1127, %v1175
        %1177 = vmatmul.bf16.gmra.mxu0 %v463
        %v1178 = vpop.f32.mrf.mxu0
        %v1179 = vadd.f32 %v1130, %v1178
        %v1180 = vpop.f32.mrf.mxu0
        %v1181 = vadd.f32 %v1132, %v1180
        %1182 = vmatmul.bf16.gmra.mxu0 %v465
        %v1183 = vpop.f32.mrf.mxu0
        %v1184 = vadd.f32 %v1135, %v1183
        %v1185 = vpop.f32.mrf.mxu0
        %v1186 = vadd.f32 %v1137, %v1185
        %1187 = vmatmul.bf16.gmra.mxu0 %v467
        %v1188 = vpop.f32.mrf.mxu0
        %v1189 = vadd.f32 %v1140, %v1188
        %v1190 = vpop.f32.mrf.mxu0
        %v1191 = vadd.f32 %v1142, %v1190
        %1192 = vmatmul.bf16.gmra.mxu0 %v469
        %v1193 = vpop.f32.mrf.mxu0
        %v1194 = vadd.f32 %v1145, %v1193
        %v1195 = vpop.f32.mrf.mxu0
        %v1196 = vadd.f32 %v1147, %v1195
        %1197 = vdwg.mxu0
        %1198 = vst [vmem:[%s315] sm:$0xff] %v865
        %1199 = vst [vmem:[%s315 + $0x8] sm:$0xff] %v963
        %1200 = vst [vmem:[%s315 + $0x10] sm:$0xff] %v1061
        %1201 = vst [vmem:[%s315 + $0x18] sm:$0xff] %v1159
        %1202 = vst [vmem:[%s315 + $0x20] sm:$0xff] %v867
        %1203 = vst [vmem:[%s315 + $0x28] sm:$0xff] %v965
        %1204 = vst [vmem:[%s315 + $0x30] sm:$0xff] %v1063
        %1205 = vst [vmem:[%s315 + $0x38] sm:$0xff] %v1161
        %1206 = vst [vmem:[%s315 + $0x40] sm:$0xff] %v870
        %1207 = vst [vmem:[%s315 + $0x48] sm:$0xff] %v968
        %1208 = vst [vmem:[%s315 + $0x50] sm:$0xff] %v1066
        %1209 = vst [vmem:[%s315 + $0x58] sm:$0xff] %v1164
        %1210 = vst [vmem:[%s315 + $0x60] sm:$0xff] %v872
        %1211 = vst [vmem:[%s315 + $0x68] sm:$0xff] %v970
        %1212 = vst [vmem:[%s315 + $0x70] sm:$0xff] %v1068
        %1213 = vst [vmem:[%s315 + $0x78] sm:$0xff] %v1166
        %1214 = vst [vmem:[%s315 + $0x80] sm:$0xff] %v875
        %1215 = vst [vmem:[%s315 + $0x88] sm:$0xff] %v973
        %1216 = vst [vmem:[%s315 + $0x90] sm:$0xff] %v1071
        %1217 = vst [vmem:[%s315 + $0x98] sm:$0xff] %v1169
        %1218 = vst [vmem:[%s315 + $0xa0] sm:$0xff] %v877
        %1219 = vst [vmem:[%s315 + $0xa8] sm:$0xff] %v975
        %1220 = vst [vmem:[%s315 + $0xb0] sm:$0xff] %v1073
        %1221 = vst [vmem:[%s315 + $0xb8] sm:$0xff] %v1171
        %1222 = vst [vmem:[%s315 + $0xc0] sm:$0xff] %v880
        %1223 = vst [vmem:[%s315 + $0xc8] sm:$0xff] %v978
        %1224 = vst [vmem:[%s315 + $0xd0] sm:$0xff] %v1076
        %1225 = vst [vmem:[%s315 + $0xd8] sm:$0xff] %v1174
        %1226 = vst [vmem:[%s315 + $0xe0] sm:$0xff] %v882
        %1227 = vst [vmem:[%s315 + $0xe8] sm:$0xff] %v980
        %1228 = vst [vmem:[%s315 + $0xf0] sm:$0xff] %v1078
        %1229 = vst [vmem:[%s315 + $0xf8] sm:$0xff] %v1176
        %1230 = vst [vmem:[%s315 + $0x100] sm:$0xff] %v885
        %1231 = vst [vmem:[%s315 + $0x108] sm:$0xff] %v983
        %1232 = vst [vmem:[%s315 + $0x110] sm:$0xff] %v1081
        %1233 = vst [vmem:[%s315 + $0x118] sm:$0xff] %v1179
        %1234 = vst [vmem:[%s315 + $0x120] sm:$0xff] %v887
        %1235 = vst [vmem:[%s315 + $0x128] sm:$0xff] %v985
        %1236 = vst [vmem:[%s315 + $0x130] sm:$0xff] %v1083
        %1237 = vst [vmem:[%s315 + $0x138] sm:$0xff] %v1181
        %1238 = vst [vmem:[%s315 + $0x140] sm:$0xff] %v890
        %1239 = vst [vmem:[%s315 + $0x148] sm:$0xff] %v988
        %1240 = vst [vmem:[%s315 + $0x150] sm:$0xff] %v1086
        %1241 = vst [vmem:[%s315 + $0x158] sm:$0xff] %v1184
        %1242 = vst [vmem:[%s315 + $0x160] sm:$0xff] %v892
        %1243 = vst [vmem:[%s315 + $0x168] sm:$0xff] %v990
        %1244 = vst [vmem:[%s315 + $0x170] sm:$0xff] %v1088
        %1245 = vst [vmem:[%s315 + $0x178] sm:$0xff] %v1186
        %1246 = vst [vmem:[%s315 + $0x180] sm:$0xff] %v895
        %1247 = vst [vmem:[%s315 + $0x188] sm:$0xff] %v993
        %1248 = vst [vmem:[%s315 + $0x190] sm:$0xff] %v1091
        %1249 = vst [vmem:[%s315 + $0x198] sm:$0xff] %v1189
        %1250 = vst [vmem:[%s315 + $0x1a0] sm:$0xff] %v897
        %1251 = vst [vmem:[%s315 + $0x1a8] sm:$0xff] %v995
        %1252 = vst [vmem:[%s315 + $0x1b0] sm:$0xff] %v1093
        %1253 = vst [vmem:[%s315 + $0x1b8] sm:$0xff] %v1191
        %1254 = vst [vmem:[%s315 + $0x1c0] sm:$0xff] %v900
        %1255 = vst [vmem:[%s315 + $0x1c8] sm:$0xff] %v998
        %1256 = vst [vmem:[%s315 + $0x1d0] sm:$0xff] %v1096
        %1257 = vst [vmem:[%s315 + $0x1d8] sm:$0xff] %v1194
        %1258 = vst [vmem:[%s315 + $0x1e0] sm:$0xff] %v902
        %1259 = vst [vmem:[%s315 + $0x1e8] sm:$0xff] %v1000
        %1260 = vst [vmem:[%s315 + $0x1f0] sm:$0xff] %v1098
        %1261 = vst [vmem:[%s315 + $0x1f8] sm:$0xff] %v1196
        %s1262 = sand.u32 %s87, 1
        %s1263 = sand.u32 %s87, 1
        %s1264 = smul.addr %s1263, 512
        %s1265 = scalar_lea.vmem [#allocation3], %s1264
        // Predicated region
        $region52: #{_lambda_.14} parent=46 // pred_check
          %p1266 = pneg %p97
        $region53: #{_lambda_.14} parent=46 // pred_check_branch
          %1268 = sbr.rel (%p1266) target = $region55
        $region54: #{_lambda_.14} parent=46 // pred_region
          %s1269 = smul.u32 16, %s17
          %s1270 = smul.u32 4, %s18
          %s1271 = smul.addr %s1269, 16
          %s1272 = sadd.s32 %s1270, %s1271
          %s1273 = smul.addr %s1272, 8
          %s1274 = scalar_lea.vmem %s2, %s1273
          // Predicated region
          $region56: #{_lambda_.14} parent=54 // pred_check
            _
          $region57: #{_lambda_.14} parent=54 // pred_check_branch
            %1276 = sbr.rel (0) target = $region59
          $region58: #{_lambda_.14} parent=54 // pred_region
            // Predicated region
            $region60: #{_lambda_.14} parent=58 // pred_check
              _
            $region61: #{_lambda_.14} parent=58 // pred_check_branch
              %1278 = sbr.rel (0) target = $region63
            $region62: #{_lambda_.14} parent=58 // pred_region
              loop: start=0, step=1, limit=1
              $region64: #{_lambda_.14} parent=62 // loop_pre_header
                _
              $region65: #{_lambda_.14} parent=62 // loop_header
                %s1280 = sphi 0, %s1284
                %p1281 = scmp.ge.s32.totalorder %s1280, 1
                %s1285 = sphi %s1265, %s1265
                %s1286 = sphi %s1274, %s1274
              $region66: #{_lambda_.14} parent=62 // loop_header_branch
                %1283 = sbr.rel (%p1281) target = $region70
              $region67: #{_lambda_.14} parent=62 // loop_body
                %v1287 = vld [vmem:[%s1285] sm:$0xff]
                %1288 = vst [vmem:[%s1286] sm:$0xff] %v1287
                %v1289 = vld [vmem:[%s1285 + $0x8] sm:$0xff]
                %1290 = vst [vmem:[%s1286 + $0x8] sm:$0xff] %v1289
                %v1291 = vld [vmem:[%s1285 + $0x10] sm:$0xff]
                %1292 = vst [vmem:[%s1286 + $0x10] sm:$0xff] %v1291
                %v1293 = vld [vmem:[%s1285 + $0x18] sm:$0xff]
                %1294 = vst [vmem:[%s1286 + $0x18] sm:$0xff] %v1293
                %v1295 = vld [vmem:[%s1285 + $0x20] sm:$0xff]
                %1296 = vst [vmem:[%s1286 + $0x80] sm:$0xff] %v1295
                %v1297 = vld [vmem:[%s1285 + $0x28] sm:$0xff]
                %1298 = vst [vmem:[%s1286 + $0x88] sm:$0xff] %v1297
                %v1299 = vld [vmem:[%s1285 + $0x30] sm:$0xff]
                %1300 = vst [vmem:[%s1286 + $0x90] sm:$0xff] %v1299
                %v1301 = vld [vmem:[%s1285 + $0x38] sm:$0xff]
                %1302 = vst [vmem:[%s1286 + $0x98] sm:$0xff] %v1301
                %v1303 = vld [vmem:[%s1285 + $0x40] sm:$0xff]
                %1304 = vst [vmem:[%s1286 + $0x100] sm:$0xff] %v1303
                %v1305 = vld [vmem:[%s1285 + $0x48] sm:$0xff]
                %1306 = vst [vmem:[%s1286 + $0x108] sm:$0xff] %v1305
                %v1307 = vld [vmem:[%s1285 + $0x50] sm:$0xff]
                %1308 = vst [vmem:[%s1286 + $0x110] sm:$0xff] %v1307
                %v1309 = vld [vmem:[%s1285 + $0x58] sm:$0xff]
                %1310 = vst [vmem:[%s1286 + $0x118] sm:$0xff] %v1309
                %v1311 = vld [vmem:[%s1285 + $0x60] sm:$0xff]
                %1312 = vst [vmem:[%s1286 + $0x180] sm:$0xff] %v1311
                %v1313 = vld [vmem:[%s1285 + $0x68] sm:$0xff]
                %1314 = vst [vmem:[%s1286 + $0x188] sm:$0xff] %v1313
                %v1315 = vld [vmem:[%s1285 + $0x70] sm:$0xff]
                %1316 = vst [vmem:[%s1286 + $0x190] sm:$0xff] %v1315
                %v1317 = vld [vmem:[%s1285 + $0x78] sm:$0xff]
                %1318 = vst [vmem:[%s1286 + $0x198] sm:$0xff] %v1317
                %v1319 = vld [vmem:[%s1285 + $0x80] sm:$0xff]
                %1320 = vst [vmem:[%s1286 + $0x200] sm:$0xff] %v1319
                %v1321 = vld [vmem:[%s1285 + $0x88] sm:$0xff]
                %1322 = vst [vmem:[%s1286 + $0x208] sm:$0xff] %v1321
                %v1323 = vld [vmem:[%s1285 + $0x90] sm:$0xff]
                %1324 = vst [vmem:[%s1286 + $0x210] sm:$0xff] %v1323
                %v1325 = vld [vmem:[%s1285 + $0x98] sm:$0xff]
                %1326 = vst [vmem:[%s1286 + $0x218] sm:$0xff] %v1325
                %v1327 = vld [vmem:[%s1285 + $0xa0] sm:$0xff]
                %1328 = vst [vmem:[%s1286 + $0x280] sm:$0xff] %v1327
                %v1329 = vld [vmem:[%s1285 + $0xa8] sm:$0xff]
                %1330 = vst [vmem:[%s1286 + $0x288] sm:$0xff] %v1329
                %v1331 = vld [vmem:[%s1285 + $0xb0] sm:$0xff]
                %1332 = vst [vmem:[%s1286 + $0x290] sm:$0xff] %v1331
                %v1333 = vld [vmem:[%s1285 + $0xb8] sm:$0xff]
                %1334 = vst [vmem:[%s1286 + $0x298] sm:$0xff] %v1333
                %v1335 = vld [vmem:[%s1285 + $0xc0] sm:$0xff]
                %1336 = vst [vmem:[%s1286 + $0x300] sm:$0xff] %v1335
                %v1337 = vld [vmem:[%s1285 + $0xc8] sm:$0xff]
                %1338 = vst [vmem:[%s1286 + $0x308] sm:$0xff] %v1337
                %v1339 = vld [vmem:[%s1285 + $0xd0] sm:$0xff]
                %1340 = vst [vmem:[%s1286 + $0x310] sm:$0xff] %v1339
                %v1341 = vld [vmem:[%s1285 + $0xd8] sm:$0xff]
                %1342 = vst [vmem:[%s1286 + $0x318] sm:$0xff] %v1341
                %v1343 = vld [vmem:[%s1285 + $0xe0] sm:$0xff]
                %1344 = vst [vmem:[%s1286 + $0x380] sm:$0xff] %v1343
                %v1345 = vld [vmem:[%s1285 + $0xe8] sm:$0xff]
                %1346 = vst [vmem:[%s1286 + $0x388] sm:$0xff] %v1345
                %v1347 = vld [vmem:[%s1285 + $0xf0] sm:$0xff]
                %1348 = vst [vmem:[%s1286 + $0x390] sm:$0xff] %v1347
                %v1349 = vld [vmem:[%s1285 + $0xf8] sm:$0xff]
                %1350 = vst [vmem:[%s1286 + $0x398] sm:$0xff] %v1349
                %v1351 = vld [vmem:[%s1285 + $0x100] sm:$0xff]
                %1352 = vst [vmem:[%s1286 + $0x400] sm:$0xff] %v1351
                %v1353 = vld [vmem:[%s1285 + $0x108] sm:$0xff]
                %1354 = vst [vmem:[%s1286 + $0x408] sm:$0xff] %v1353
                %v1355 = vld [vmem:[%s1285 + $0x110] sm:$0xff]
                %1356 = vst [vmem:[%s1286 + $0x410] sm:$0xff] %v1355
                %v1357 = vld [vmem:[%s1285 + $0x118] sm:$0xff]
                %1358 = vst [vmem:[%s1286 + $0x418] sm:$0xff] %v1357
                %v1359 = vld [vmem:[%s1285 + $0x120] sm:$0xff]
                %1360 = vst [vmem:[%s1286 + $0x480] sm:$0xff] %v1359
                %v1361 = vld [vmem:[%s1285 + $0x128] sm:$0xff]
                %1362 = vst [vmem:[%s1286 + $0x488] sm:$0xff] %v1361
                %v1363 = vld [vmem:[%s1285 + $0x130] sm:$0xff]
                %1364 = vst [vmem:[%s1286 + $0x490] sm:$0xff] %v1363
                %v1365 = vld [vmem:[%s1285 + $0x138] sm:$0xff]
                %1366 = vst [vmem:[%s1286 + $0x498] sm:$0xff] %v1365
                %v1367 = vld [vmem:[%s1285 + $0x140] sm:$0xff]
                %1368 = vst [vmem:[%s1286 + $0x500] sm:$0xff] %v1367
                %v1369 = vld [vmem:[%s1285 + $0x148] sm:$0xff]
                %1370 = vst [vmem:[%s1286 + $0x508] sm:$0xff] %v1369
                %v1371 = vld [vmem:[%s1285 + $0x150] sm:$0xff]
                %1372 = vst [vmem:[%s1286 + $0x510] sm:$0xff] %v1371
                %v1373 = vld [vmem:[%s1285 + $0x158] sm:$0xff]
                %1374 = vst [vmem:[%s1286 + $0x518] sm:$0xff] %v1373
                %v1375 = vld [vmem:[%s1285 + $0x160] sm:$0xff]
                %1376 = vst [vmem:[%s1286 + $0x580] sm:$0xff] %v1375
                %v1377 = vld [vmem:[%s1285 + $0x168] sm:$0xff]
                %1378 = vst [vmem:[%s1286 + $0x588] sm:$0xff] %v1377
                %v1379 = vld [vmem:[%s1285 + $0x170] sm:$0xff]
                %1380 = vst [vmem:[%s1286 + $0x590] sm:$0xff] %v1379
                %v1381 = vld [vmem:[%s1285 + $0x178] sm:$0xff]
                %1382 = vst [vmem:[%s1286 + $0x598] sm:$0xff] %v1381
                %v1383 = vld [vmem:[%s1285 + $0x180] sm:$0xff]
                %1384 = vst [vmem:[%s1286 + $0x600] sm:$0xff] %v1383
                %v1385 = vld [vmem:[%s1285 + $0x188] sm:$0xff]
                %1386 = vst [vmem:[%s1286 + $0x608] sm:$0xff] %v1385
                %v1387 = vld [vmem:[%s1285 + $0x190] sm:$0xff]
                %1388 = vst [vmem:[%s1286 + $0x610] sm:$0xff] %v1387
                %v1389 = vld [vmem:[%s1285 + $0x198] sm:$0xff]
                %1390 = vst [vmem:[%s1286 + $0x618] sm:$0xff] %v1389
                %v1391 = vld [vmem:[%s1285 + $0x1a0] sm:$0xff]
                %1392 = vst [vmem:[%s1286 + $0x680] sm:$0xff] %v1391
                %v1393 = vld [vmem:[%s1285 + $0x1a8] sm:$0xff]
                %1394 = vst [vmem:[%s1286 + $0x688] sm:$0xff] %v1393
                %v1395 = vld [vmem:[%s1285 + $0x1b0] sm:$0xff]
                %1396 = vst [vmem:[%s1286 + $0x690] sm:$0xff] %v1395
                %v1397 = vld [vmem:[%s1285 + $0x1b8] sm:$0xff]
                %1398 = vst [vmem:[%s1286 + $0x698] sm:$0xff] %v1397
                %v1399 = vld [vmem:[%s1285 + $0x1c0] sm:$0xff]
                %1400 = vst [vmem:[%s1286 + $0x700] sm:$0xff] %v1399
                %v1401 = vld [vmem:[%s1285 + $0x1c8] sm:$0xff]
                %1402 = vst [vmem:[%s1286 + $0x708] sm:$0xff] %v1401
                %v1403 = vld [vmem:[%s1285 + $0x1d0] sm:$0xff]
                %1404 = vst [vmem:[%s1286 + $0x710] sm:$0xff] %v1403
                %v1405 = vld [vmem:[%s1285 + $0x1d8] sm:$0xff]
                %1406 = vst [vmem:[%s1286 + $0x718] sm:$0xff] %v1405
                %v1407 = vld [vmem:[%s1285 + $0x1e0] sm:$0xff]
                %1408 = vst [vmem:[%s1286 + $0x780] sm:$0xff] %v1407
                %v1409 = vld [vmem:[%s1285 + $0x1e8] sm:$0xff]
                %1410 = vst [vmem:[%s1286 + $0x788] sm:$0xff] %v1409
                %v1411 = vld [vmem:[%s1285 + $0x1f0] sm:$0xff]
                %1412 = vst [vmem:[%s1286 + $0x790] sm:$0xff] %v1411
                %v1413 = vld [vmem:[%s1285 + $0x1f8] sm:$0xff]
                %1414 = vst [vmem:[%s1286 + $0x798] sm:$0xff] %v1413
              $region68: #{_lambda_.14} parent=62 // loop_footer
                %s1284 = sadd.s32 1, %s1280
              $region69: #{_lambda_.14} parent=62 // loop_footer_branch
                %1279 = sbr.rel target = $region65
              $region70: #{_lambda_.14} parent=62 // loop_exit
                _
            $region63: #{_lambda_.14} parent=58 // pred_fallthru
              _
            // Predicated region
            $region71: #{_lambda_.14} parent=58 // pred_check
              _
            $region72: #{_lambda_.14} parent=58 // pred_check_branch
              %1416 = sbr.rel target = $region74
            $region73: #{_lambda_.14} parent=58 // pred_region
              _
            $region74: #{_lambda_.14} parent=58 // pred_fallthru
              _
          $region59: #{_lambda_.14} parent=54 // pred_fallthru
            _
          %1417 = vnop
        $region55: #{_lambda_.14} parent=46 // pred_fallthru
          _
      $region47: #{_lambda_.14} parent=5 // pred_fallthru
        _
      %p1418 = scmp.le.s32.totalorder 2, %s8
      // Predicated region
      $region75: #{_lambda_.14} parent=5 // pred_check
        %p1419 = pneg %p1418
      $region76: #{_lambda_.14} parent=5 // pred_check_branch
        %1421 = sbr.rel (%p1419) target = $region78
      $region77: #{_lambda_.14} parent=5 // pred_region
        %s1422 = ssub.s32 %s8, 2
        // Predicated region
        $region79: #{_lambda_.14} parent=77 // pred_check
          %p1423 = pneg %p103
        $region80: #{_lambda_.14} parent=77 // pred_check_branch
          %1425 = sbr.rel (%p1423) target = $region82
        $region81: #{_lambda_.14} parent=77 // pred_region
          %s1426 = sand.u32 %s88, 1
          %s1427 = sand.u32 %s88, 1
          %s1428 = smul.addr %s1427, 512
          %s1429 = scalar_lea.vmem [#allocation3], %s1428
        $region82: #{_lambda_.14} parent=77 // pred_fallthru
          _
      $region78: #{_lambda_.14} parent=5 // pred_fallthru
        _
    $region6: #{_lambda_.14} parent=1 // loop_footer
      %s12 = sadd.s32 1, %s8
    $region7: #{_lambda_.14} parent=1 // loop_footer_branch
      %7 = sbr.rel target = $region3
    $region8: #{_lambda_.14} parent=1 // loop_exit
      _

// kernel: _lambda_.15
$region0: #{_lambda_.15}
  #allocation0 [shape = 'u32[]', space=smem, size = 0x4, offset = 0x4, fixed_abs, tag = 'smem constant byte address 0x4 - core index']
  #allocation1 [shape = 'u32[72,128]{1,0:T(1,128)}', space=vmem, size = 0x9000, scoped, tag = 'internal scratch']
  %s0 = inlined_call_operand.vmem [shape: f32[512,128], index: 0, kind: input, shape index: {}]
  %s1 = inlined_call_operand.vmem [shape: f32[1,128], index: 1, kind: input, shape index: {}]
  %s2 = inlined_call_operand.vmem [shape: f32[1,128], index: 2, kind: input, shape index: {}]
  %s3 = inlined_call_operand.vmem [shape: bf16[512,128], index: 3, kind: output, shape index: {}]
  %s4 = sld [smem:[#allocation0]]
  $region45: #{_lambda_.15} parent=0
    _
  %s6 = ssub.s32 1, %s4
  %s7 = scalar_select 0, %s6, %s4
  loop: start=0, step=1, limit=4
  $region2: #{_lambda_.15} parent=0 // loop_pre_header
    _
  $region3: #{_lambda_.15} parent=0 // loop_header
    %s9 = sphi 0, %s13
    %p10 = scmp.ge.s32.totalorder %s9, 4
    %s19 = sphi 0, %s21
    %s22 = sphi 0, %s19
    %s23 = sphi 0, %s22
    %s39 = sphi 0, %s23
    %s43 = sphi 0, %s43
    %s45 = sphi 0, %s43
    %s46 = sphi 0, %s45
    %s60 = sphi 0, %s46
    %s64 = sphi 0, %s64
    %s66 = sphi 0, %s64
    %s67 = sphi 0, %s66
    %s81 = sphi 0, %s67
    %s87 = sphi 0, %s89
    %s90 = sphi 0, %s87
    %s91 = sphi 0, %s90
    %s107 = sphi 0, %s91
  $region4: #{_lambda_.15} parent=0 // loop_header_branch
    %12 = sbr.rel (%p10) target = $region8
  $region5: #{_lambda_.15} parent=0 // loop_body
    %s14 = ssub.s32 %s9, 1
    %s15 = ssub.s32 %s9, 2
    %s16 = sadd.s32 %s9, 1
    %s17 = ssub.s32 %s9, %s16
    %p18 = scmp.eq.s32.totalorder %s17, 0
    %s20 = sadd.s32 %s19, 1
    %s21 = scalar_select %p18, %s19, %s20
    %p24 = pneg %p18
    %p25 = scmp.eq.s32.totalorder %s9, 1
    %p26 = por %p24, %p25
    %p27 = scmp.ne.s32.totalorder %s19, %s22
    %p28 = scmp.eq.s32.totalorder %s9, 0
    %p29 = por %p27, %p28
    %p30 = scmp.ne.s32.totalorder %s19, %s22
    %p31 = scmp.eq.s32.totalorder %s14, 1
    %p32 = por %p30, %p31
    %p33 = scmp.ne.s32.totalorder %s22, %s23
    %p34 = scmp.eq.s32.totalorder %s14, 0
    %p35 = por %p33, %p34
    %p36 = scmp.ne.s32.totalorder %s22, %s23
    %p37 = scmp.eq.s32.totalorder %s15, 1
    %p38 = por %p36, %p37
    %p40 = scmp.ne.s32.totalorder %s23, %s39
    %p41 = scmp.eq.s32.totalorder %s15, 0
    %p42 = por %p40, %p41
    %s44 = sadd.s32 %s43, 1
    %p47 = scmp.eq.s32.totalorder %s9, 1
    %p48 = scmp.ne.s32.totalorder %s43, %s45
    %p49 = scmp.eq.s32.totalorder %s9, 0
    %p50 = por %p48, %p49
    %p51 = scmp.ne.s32.totalorder %s43, %s45
    %p52 = scmp.eq.s32.totalorder %s14, 1
    %p53 = por %p51, %p52
    %p54 = scmp.ne.s32.totalorder %s45, %s46
    %p55 = scmp.eq.s32.totalorder %s14, 0
    %p56 = por %p54, %p55
    %p57 = scmp.ne.s32.totalorder %s45, %s46
    %p58 = scmp.eq.s32.totalorder %s15, 1
    %p59 = por %p57, %p58
    %p61 = scmp.ne.s32.totalorder %s46, %s60
    %p62 = scmp.eq.s32.totalorder %s15, 0
    %p63 = por %p61, %p62
    %s65 = sadd.s32 %s64, 1
    %p68 = scmp.eq.s32.totalorder %s9, 1
    %p69 = scmp.ne.s32.totalorder %s64, %s66
    %p70 = scmp.eq.s32.totalorder %s9, 0
    %p71 = por %p69, %p70
    %p72 = scmp.ne.s32.totalorder %s64, %s66
    %p73 = scmp.eq.s32.totalorder %s14, 1
    %p74 = por %p72, %p73
    %p75 = scmp.ne.s32.totalorder %s66, %s67
    %p76 = scmp.eq.s32.totalorder %s14, 0
    %p77 = por %p75, %p76
    %p78 = scmp.ne.s32.totalorder %s66, %s67
    %p79 = scmp.eq.s32.totalorder %s15, 1
    %p80 = por %p78, %p79
    %p82 = scmp.ne.s32.totalorder %s67, %s81
    %p83 = scmp.eq.s32.totalorder %s15, 0
    %p84 = por %p82, %p83
    %s85 = ssub.s32 %s9, %s16
    %p86 = scmp.eq.s32.totalorder %s85, 0
    %s88 = sadd.s32 %s87, 1
    %s89 = scalar_select %p86, %s87, %s88
    %p92 = pneg %p86
    %p93 = scmp.eq.s32.totalorder %s9, 1
    %p94 = por %p92, %p93
    %p95 = scmp.ne.s32.totalorder %s87, %s90
    %p96 = scmp.eq.s32.totalorder %s9, 0
    %p97 = por %p95, %p96
    %p98 = scmp.ne.s32.totalorder %s87, %s90
    %p99 = scmp.eq.s32.totalorder %s14, 1
    %p100 = por %p98, %p99
    %p101 = scmp.ne.s32.totalorder %s90, %s91
    %p102 = scmp.eq.s32.totalorder %s14, 0
    %p103 = por %p101, %p102
    %p104 = scmp.ne.s32.totalorder %s90, %s91
    %p105 = scmp.eq.s32.totalorder %s15, 1
    %p106 = por %p104, %p105
    %p108 = scmp.ne.s32.totalorder %s91, %s107
    %p109 = scmp.eq.s32.totalorder %s15, 0
    %p110 = por %p108, %p109
    %p111 = scmp.le.s32.totalorder 1, %s9
    %p112 = scmp.lt.s32.totalorder %s9, 3
    %p113 = pnand %p111, %p112
    %p114 = pneg %p113
    // Predicated region
    $region9: #{_lambda_.15} parent=5 // pred_check
      _
    $region10: #{_lambda_.15} parent=5 // pred_check_branch
      %116 = sbr.rel (%p113) target = $region12
    $region11: #{_lambda_.15} parent=5 // pred_region
      %s117 = ssub.s32 %s9, 1
      // Predicated region
      $region13: #{_lambda_.15} parent=11 // pred_check
        %p118 = pneg %p56
      $region14: #{_lambda_.15} parent=11 // pred_check_branch
        %120 = sbr.rel (%p118) target = $region16
      $region15: #{_lambda_.15} parent=11 // pred_region
        _
      $region16: #{_lambda_.15} parent=11 // pred_fallthru
        _
      // Predicated region
      $region17: #{_lambda_.15} parent=11 // pred_check
        %p121 = pneg %p77
      $region18: #{_lambda_.15} parent=11 // pred_check_branch
        %123 = sbr.rel (%p121) target = $region20
      $region19: #{_lambda_.15} parent=11 // pred_region
        _
      $region20: #{_lambda_.15} parent=11 // pred_fallthru
        _
    $region12: #{_lambda_.15} parent=5 // pred_fallthru
      _
    %p124 = scmp.lt.s32.totalorder %s9, 2
    // Predicated region
    $region21: #{_lambda_.15} parent=5 // pred_check
      %p125 = pneg %p124
    $region22: #{_lambda_.15} parent=5 // pred_check_branch
      %127 = sbr.rel (%p125) target = $region24
    $region23: #{_lambda_.15} parent=5 // pred_region
      // Predicated region
      $region25: #{_lambda_.15} parent=23 // pred_check
        %p128 = pneg %p29
      $region26: #{_lambda_.15} parent=23 // pred_check_branch
        %130 = sbr.rel (%p128) target = $region28
      $region27: #{_lambda_.15} parent=23 // pred_region
        %s131 = smul.u32 32, %s9
        %p132 = scmp.lt.s32.totalorder %s131, 63
        %s133 = scalar_select %p132, %s131, 63
        %s134 = smul.addr %s133, 8
        %s135 = scalar_lea.vmem %s0, %s134
        %s136 = smul.u32 32, %s9
      $region28: #{_lambda_.15} parent=23 // pred_fallthru
        _
    $region24: #{_lambda_.15} parent=5 // pred_fallthru
      _
    %p137 = scmp.le.s32.totalorder 1, %s9
    %p138 = scmp.lt.s32.totalorder %s9, 3
    %p139 = pnand %p137, %p138
    %p140 = pneg %p139
    // Predicated region
    $region29: #{_lambda_.15} parent=5 // pred_check
      _
    $region30: #{_lambda_.15} parent=5 // pred_check_branch
      %142 = sbr.rel (%p139) target = $region32
    $region31: #{_lambda_.15} parent=5 // pred_region
      %s143 = ssub.s32 %s9, 1
      %s144 = smul.u32 32, %s14
      %p145 = scmp.lt.s32.totalorder %s144, 63
      %s146 = scalar_select %p145, %s144, 63
      %s147 = smul.addr %s146, 8
      %s148 = scalar_lea.vmem %s0, %s147
      %p149 = pneg %p35
      %p150 = pneg %p32
      %p151 = pneg %p56
      %p152 = pneg %p53
      %p153 = pneg %p77
      %p154 = pneg %p74
      %p155 = pneg %p103
      %p156 = pneg %p100
      %s157 = smul.u32 32, %s14
      %p158 = scmp.lt.s32.totalorder %s157, 63
      %s159 = scalar_select %p158, %s157, 63
      %s160 = smul.addr %s159, 4
      %s161 = scalar_lea.vmem %s3, %s160
      %s162 = smul.u32 32, %s14
      %p163 = scmp.lt.s32.totalorder %s162, 63
      %s164 = scalar_select %p163, %s162, 63
      %s165 = smul.addr %s164, 8
      %s166 = scalar_lea.vmem %s0, %s165
      %s167 = smul.u32 32, %s14
      %s168 = smul.u32 32, %s14
      %p169 = scmp.lt.s32.totalorder %s168, 63
      %s170 = scalar_select %p169, %s168, 63
      %s171 = smul.addr %s170, 4
      %s172 = scalar_lea.vmem %s3, %s171
      %s173 = smul.u32 32, %s14
      %v174 = vld [vmem:[%s166] sm:$0xff]
      %v175 = vld [vmem:[%s166 + $0x8] sm:$0xff]
      %v176 = vld [vmem:[%s166 + $0x10] sm:$0xff]
      %v177 = vld [vmem:[%s166 + $0x18] sm:$0xff]
      %v178 = vld [vmem:[%s166 + $0x20] sm:$0xff]
      %v179 = vld [vmem:[%s166 + $0x28] sm:$0xff]
      %v180 = vld [vmem:[%s166 + $0x30] sm:$0xff]
      %v181 = vld [vmem:[%s166 + $0x38] sm:$0xff]
      %v182 = vld [vmem:[%s166 + $0x40] sm:$0xff]
      %v183 = vld [vmem:[%s166 + $0x48] sm:$0xff]
      %v184 = vld [vmem:[%s166 + $0x50] sm:$0xff]
      %v185 = vld [vmem:[%s166 + $0x58] sm:$0xff]
      %v186 = vld [vmem:[%s166 + $0x60] sm:$0xff]
      %v187 = vld [vmem:[%s166 + $0x68] sm:$0xff]
      %v188 = vld [vmem:[%s166 + $0x70] sm:$0xff]
      %v189 = vld [vmem:[%s166 + $0x78] sm:$0xff]
      %v190 = vld [vmem:[%s166 + $0x80] sm:$0xff]
      %v191 = vld [vmem:[%s166 + $0x88] sm:$0xff]
      %v192 = vld [vmem:[%s166 + $0x90] sm:$0xff]
      %v193 = vld [vmem:[%s166 + $0x98] sm:$0xff]
      %v194 = vld [vmem:[%s166 + $0xa0] sm:$0xff]
      %v195 = vld [vmem:[%s166 + $0xa8] sm:$0xff]
      %v196 = vld [vmem:[%s166 + $0xb0] sm:$0xff]
      %v197 = vld [vmem:[%s166 + $0xb8] sm:$0xff]
      %v198 = vld [vmem:[%s166 + $0xc0] sm:$0xff]
      %v199 = vld [vmem:[%s166 + $0xc8] sm:$0xff]
      %v200 = vld [vmem:[%s166 + $0xd0] sm:$0xff]
      %v201 = vld [vmem:[%s166 + $0xd8] sm:$0xff]
      %v202 = vld [vmem:[%s166 + $0xe0] sm:$0xff]
      %v203 = vld [vmem:[%s166 + $0xe8] sm:$0xff]
      %v204 = vld [vmem:[%s166 + $0xf0] sm:$0xff]
      %v205 = vld [vmem:[%s166 + $0xf8] sm:$0xff]
      %v206 = vld [vmem:[%s1] sm:$0x1]
      %v208 = vperm.slane %v206, 0
      %v210 = vmul.f32 %v174, %v208
      %v211 = vmul.f32 %v175, %v208
      %v212 = vmul.f32 %v176, %v208
      %v213 = vmul.f32 %v177, %v208
      %v214 = vmul.f32 %v178, %v208
      %v215 = vmul.f32 %v179, %v208
      %v216 = vmul.f32 %v180, %v208
      %v217 = vmul.f32 %v181, %v208
      %v218 = vmul.f32 %v182, %v208
      %v219 = vmul.f32 %v183, %v208
      %v220 = vmul.f32 %v184, %v208
      %v221 = vmul.f32 %v185, %v208
      %v222 = vmul.f32 %v186, %v208
      %v223 = vmul.f32 %v187, %v208
      %v224 = vmul.f32 %v188, %v208
      %v225 = vmul.f32 %v189, %v208
      %v226 = vmul.f32 %v190, %v208
      %v227 = vmul.f32 %v191, %v208
      %v228 = vmul.f32 %v192, %v208
      %v229 = vmul.f32 %v193, %v208
      %v230 = vmul.f32 %v194, %v208
      %v231 = vmul.f32 %v195, %v208
      %v232 = vmul.f32 %v196, %v208
      %v233 = vmul.f32 %v197, %v208
      %v234 = vmul.f32 %v198, %v208
      %v235 = vmul.f32 %v199, %v208
      %v236 = vmul.f32 %v200, %v208
      %v237 = vmul.f32 %v201, %v208
      %v238 = vmul.f32 %v202, %v208
      %v239 = vmul.f32 %v203, %v208
      %v240 = vmul.f32 %v204, %v208
      %v241 = vmul.f32 %v205, %v208
      %v242 = vld [vmem:[%s2] sm:$0x1]
      %v244 = vperm.slane %v242, 0
      %v246 = vadd.f32 %v210, %v244
      %v247 = vadd.f32 %v211, %v244
      %v248 = vadd.f32 %v212, %v244
      %v249 = vadd.f32 %v213, %v244
      %v250 = vadd.f32 %v214, %v244
      %v251 = vadd.f32 %v215, %v244
      %v252 = vadd.f32 %v216, %v244
      %v253 = vadd.f32 %v217, %v244
      %v254 = vadd.f32 %v218, %v244
      %v255 = vadd.f32 %v219, %v244
      %v256 = vadd.f32 %v220, %v244
      %v257 = vadd.f32 %v221, %v244
      %v258 = vadd.f32 %v222, %v244
      %v259 = vadd.f32 %v223, %v244
      %v260 = vadd.f32 %v224, %v244
      %v261 = vadd.f32 %v225, %v244
      %v262 = vadd.f32 %v226, %v244
      %v263 = vadd.f32 %v227, %v244
      %v264 = vadd.f32 %v228, %v244
      %v265 = vadd.f32 %v229, %v244
      %v266 = vadd.f32 %v230, %v244
      %v267 = vadd.f32 %v231, %v244
      %v268 = vadd.f32 %v232, %v244
      %v269 = vadd.f32 %v233, %v244
      %v270 = vadd.f32 %v234, %v244
      %v271 = vadd.f32 %v235, %v244
      %v272 = vadd.f32 %v236, %v244
      %v273 = vadd.f32 %v237, %v244
      %v274 = vadd.f32 %v238, %v244
      %v275 = vadd.f32 %v239, %v244
      %v276 = vadd.f32 %v240, %v244
      %v277 = vadd.f32 %v241, %v244
      %v278 = vmax.f32 %v246, 0.0
      %v279 = vmax.f32 %v247, 0.0
      %v280 = vmax.f32 %v248, 0.0
      %v281 = vmax.f32 %v249, 0.0
      %v282 = vmax.f32 %v250, 0.0
      %v283 = vmax.f32 %v251, 0.0
      %v284 = vmax.f32 %v252, 0.0
      %v285 = vmax.f32 %v253, 0.0
      %v286 = vmax.f32 %v254, 0.0
      %v287 = vmax.f32 %v255, 0.0
      %v288 = vmax.f32 %v256, 0.0
      %v289 = vmax.f32 %v257, 0.0
      %v290 = vmax.f32 %v258, 0.0
      %v291 = vmax.f32 %v259, 0.0
      %v292 = vmax.f32 %v260, 0.0
      %v293 = vmax.f32 %v261, 0.0
      %v294 = vmax.f32 %v262, 0.0
      %v295 = vmax.f32 %v263, 0.0
      %v296 = vmax.f32 %v264, 0.0
      %v297 = vmax.f32 %v265, 0.0
      %v298 = vmax.f32 %v266, 0.0
      %v299 = vmax.f32 %v267, 0.0
      %v300 = vmax.f32 %v268, 0.0
      %v301 = vmax.f32 %v269, 0.0
      %v302 = vmax.f32 %v270, 0.0
      %v303 = vmax.f32 %v271, 0.0
      %v304 = vmax.f32 %v272, 0.0
      %v305 = vmax.f32 %v273, 0.0
      %v306 = vmax.f32 %v274, 0.0
      %v307 = vmax.f32 %v275, 0.0
      %v308 = vmax.f32 %v276, 0.0
      %v309 = vmax.f32 %v277, 0.0
      %v310 = vpack.c.bf16 %v278, %v278
      %v311 = vpack.c.bf16 %v279, %v279
      %v312 = vpack.c.bf16 %v280, %v280
      %v313 = vpack.c.bf16 %v281, %v281
      %v314 = vpack.c.bf16 %v282, %v282
      %v315 = vpack.c.bf16 %v283, %v283
      %v316 = vpack.c.bf16 %v284, %v284
      %v317 = vpack.c.bf16 %v285, %v285
      %v318 = vpack.c.bf16 %v286, %v286
      %v319 = vpack.c.bf16 %v287, %v287
      %v320 = vpack.c.bf16 %v288, %v288
      %v321 = vpack.c.bf16 %v289, %v289
      %v322 = vpack.c.bf16 %v290, %v290
      %v323 = vpack.c.bf16 %v291, %v291
      %v324 = vpack.c.bf16 %v292, %v292
      %v325 = vpack.c.bf16 %v293, %v293
      %v326 = vpack.c.bf16 %v294, %v294
      %v327 = vpack.c.bf16 %v295, %v295
      %v328 = vpack.c.bf16 %v296, %v296
      %v329 = vpack.c.bf16 %v297, %v297
      %v330 = vpack.c.bf16 %v298, %v298
      %v331 = vpack.c.bf16 %v299, %v299
      %v332 = vpack.c.bf16 %v300, %v300
      %v333 = vpack.c.bf16 %v301, %v301
      %v334 = vpack.c.bf16 %v302, %v302
      %v335 = vpack.c.bf16 %v303, %v303
      %v336 = vpack.c.bf16 %v304, %v304
      %v337 = vpack.c.bf16 %v305, %v305
      %v338 = vpack.c.bf16 %v306, %v306
      %v339 = vpack.c.bf16 %v307, %v307
      %v340 = vpack.c.bf16 %v308, %v308
      %v341 = vpack.c.bf16 %v309, %v309
      %342 = vst [vmem:[%s172] sm:$0xf] %v310
      %343 = vst [vmem:[%s172 + $0x4] sm:$0xf] %v311
      %344 = vst [vmem:[%s172 + $0x8] sm:$0xf] %v312
      %345 = vst [vmem:[%s172 + $0xc] sm:$0xf] %v313
      %346 = vst [vmem:[%s172 + $0x10] sm:$0xf] %v314
      %347 = vst [vmem:[%s172 + $0x14] sm:$0xf] %v315
      %348 = vst [vmem:[%s172 + $0x18] sm:$0xf] %v316
      %349 = vst [vmem:[%s172 + $0x1c] sm:$0xf] %v317
      %350 = vst [vmem:[%s172 + $0x20] sm:$0xf] %v318
      %351 = vst [vmem:[%s172 + $0x24] sm:$0xf] %v319
      %352 = vst [vmem:[%s172 + $0x28] sm:$0xf] %v320
      %353 = vst [vmem:[%s172 + $0x2c] sm:$0xf] %v321
      %354 = vst [vmem:[%s172 + $0x30] sm:$0xf] %v322
      %355 = vst [vmem:[%s172 + $0x34] sm:$0xf] %v323
      %356 = vst [vmem:[%s172 + $0x38] sm:$0xf] %v324
      %357 = vst [vmem:[%s172 + $0x3c] sm:$0xf] %v325
      %358 = vst [vmem:[%s172 + $0x40] sm:$0xf] %v326
      %359 = vst [vmem:[%s172 + $0x44] sm:$0xf] %v327
      %360 = vst [vmem:[%s172 + $0x48] sm:$0xf] %v328
      %361 = vst [vmem:[%s172 + $0x4c] sm:$0xf] %v329
      %362 = vst [vmem:[%s172 + $0x50] sm:$0xf] %v330
      %363 = vst [vmem:[%s172 + $0x54] sm:$0xf] %v331
      %364 = vst [vmem:[%s172 + $0x58] sm:$0xf] %v332
      %365 = vst [vmem:[%s172 + $0x5c] sm:$0xf] %v333
      %366 = vst [vmem:[%s172 + $0x60] sm:$0xf] %v334
      %367 = vst [vmem:[%s172 + $0x64] sm:$0xf] %v335
      %368 = vst [vmem:[%s172 + $0x68] sm:$0xf] %v336
      %369 = vst [vmem:[%s172 + $0x6c] sm:$0xf] %v337
      %370 = vst [vmem:[%s172 + $0x70] sm:$0xf] %v338
      %371 = vst [vmem:[%s172 + $0x74] sm:$0xf] %v339
      %372 = vst [vmem:[%s172 + $0x78] sm:$0xf] %v340
      %373 = vst [vmem:[%s172 + $0x7c] sm:$0xf] %v341
      %s374 = smul.u32 32, %s14
      %p375 = scmp.lt.s32.totalorder %s374, 63
      %s376 = scalar_select %p375, %s374, 63
      %s377 = smul.addr %s376, 4
      %s378 = scalar_lea.vmem %s3, %s377
      // Predicated region
      $region33: #{_lambda_.15} parent=31 // pred_check
        %p379 = pneg %p100
      $region34: #{_lambda_.15} parent=31 // pred_check_branch
        %381 = sbr.rel (%p379) target = $region36
      $region35: #{_lambda_.15} parent=31 // pred_region
        %s382 = smul.u32 32, %s14
      $region36: #{_lambda_.15} parent=31 // pred_fallthru
        _
    $region32: #{_lambda_.15} parent=5 // pred_fallthru
      _
    %p383 = scmp.le.s32.totalorder 2, %s9
    // Predicated region
    $region37: #{_lambda_.15} parent=5 // pred_check
      %p384 = pneg %p383
    $region38: #{_lambda_.15} parent=5 // pred_check_branch
      %386 = sbr.rel (%p384) target = $region40
    $region39: #{_lambda_.15} parent=5 // pred_region
      %s387 = ssub.s32 %s9, 2
      // Predicated region
      $region41: #{_lambda_.15} parent=39 // pred_check
        %p388 = pneg %p106
      $region42: #{_lambda_.15} parent=39 // pred_check_branch
        %390 = sbr.rel (%p388) target = $region44
      $region43: #{_lambda_.15} parent=39 // pred_region
        %s391 = smul.u32 32, %s15
        %p392 = scmp.lt.s32.totalorder %s391, 63
        %s393 = scalar_select %p392, %s391, 63
        %s394 = smul.addr %s393, 4
        %s395 = scalar_lea.vmem %s3, %s394
      $region44: #{_lambda_.15} parent=39 // pred_fallthru
        _
    $region40: #{_lambda_.15} parent=5 // pred_fallthru
      _
  $region6: #{_lambda_.15} parent=0 // loop_footer
    %s13 = sadd.s32 1, %s9
  $region7: #{_lambda_.15} parent=0 // loop_footer_branch
    %8 = sbr.rel target = $region3
  $region8: #{_lambda_.15} parent=0 // loop_exit
    _

// kernel: _lambda_.16
$region0: #{_lambda_.16}
  #allocation0 [shape = 'u32[]', space=smem, size = 0x4, offset = 0x4, fixed_abs, tag = 'smem constant byte address 0x4 - core index']
  #allocation1 [shape = 'u32[72,128]{1,0:T(1,128)}', space=vmem, size = 0x9000, scoped, tag = 'internal scratch']
  %s0 = inlined_call_operand.vmem [shape: bf16[512,128], index: 0, kind: input, shape index: {}]
  %s1 = inlined_call_operand.vmem [shape: bf16[128,1024], index: 1, kind: input, shape index: {}]
  %s2 = inlined_call_operand.vmem [shape: f32[512,1024], index: 2, kind: output, shape index: {}]
  %s3 = sld [smem:[#allocation0]]
  $region83: #{_lambda_.16} parent=0
    _
  %s5 = ssub.s32 1, %s3
  %s6 = scalar_select 0, %s5, %s3
  $region1: #{_lambda_.16} parent=0
    #allocation2 [shape = 'u8[262144]{0}', space=vmem, size = 0x40000, scoped, tag = 'input window, operand 1']
    #allocation3 [shape = 'u8[1048576]{0}', space=vmem, size = 0x100000, scoped, tag = 'output window, operand 0']
    loop: start=0, step=1, limit=6
    $region2: #{_lambda_.16} parent=1 // loop_pre_header
      _
    $region3: #{_lambda_.16} parent=1 // loop_header
      %s8 = sphi 0, %s12
      %p9 = scmp.ge.s32.totalorder %s8, 6
      %s15 = sphi 0, %s27
      %s16 = sphi 0, %s23
      %s17 = sphi 0, %s15
      %s18 = sphi 0, %s16
      %s19 = sphi 0, %s17
      %s20 = sphi 0, %s18
      %s30 = sphi 0, %s32
      %s33 = sphi 0, %s30
      %s34 = sphi 0, %s33
      %s50 = sphi 0, %s34
      %s56 = sphi 0, %s58
      %s59 = sphi 0, %s56
      %s60 = sphi 0, %s59
      %s76 = sphi 0, %s60
      %s84 = sphi 0, %s86
      %s87 = sphi 0, %s84
      %s88 = sphi 0, %s87
      %s104 = sphi 0, %s88
    $region4: #{_lambda_.16} parent=1 // loop_header_branch
      %11 = sbr.rel (%p9) target = $region8
    $region5: #{_lambda_.16} parent=1 // loop_body
      %s13 = ssub.s32 %s8, 1
      %s14 = ssub.s32 %s8, 2
      %s21 = sadd.s32 1, %s16
      %p22 = scmp.ge.s32.totalorder %s21, 2
      %s23 = scalar_select %p22, 0, %s21
      %s24 = sadd.s32 1, %s15
      %s25 = scalar_select %p22, %s24, %s15
      %p26 = scmp.ge.s32.totalorder %s25, 2
      %s27 = scalar_select %p26, 0, %s25
      %s28 = ssub.s32 %s15, %s27
      %p29 = scmp.eq.s32.totalorder %s28, 0
      %s31 = sadd.s32 %s30, 1
      %s32 = scalar_select %p29, %s30, %s31
      %p35 = pneg %p29
      %p36 = scmp.eq.s32.totalorder %s8, 3
      %p37 = por %p35, %p36
      %p38 = scmp.ne.s32.totalorder %s30, %s33
      %p39 = scmp.eq.s32.totalorder %s8, 0
      %p40 = por %p38, %p39
      %p41 = scmp.ne.s32.totalorder %s30, %s33
      %p42 = scmp.eq.s32.totalorder %s13, 3
      %p43 = por %p41, %p42
      %p44 = scmp.ne.s32.totalorder %s33, %s34
      %p45 = scmp.eq.s32.totalorder %s13, 0
      %p46 = por %p44, %p45
      %p47 = scmp.ne.s32.totalorder %s33, %s34
      %p48 = scmp.eq.s32.totalorder %s14, 3
      %p49 = por %p47, %p48
      %p51 = scmp.ne.s32.totalorder %s34, %s50
      %p52 = scmp.eq.s32.totalorder %s14, 0
      %p53 = por %p51, %p52
      %s54 = ssub.s32 %s16, %s23
      %p55 = scmp.eq.s32.totalorder %s54, 0
      %s57 = sadd.s32 %s56, 1
      %s58 = scalar_select %p55, %s56, %s57
      %p61 = pneg %p55
      %p62 = scmp.eq.s32.totalorder %s8, 3
      %p63 = por %p61, %p62
      %p64 = scmp.ne.s32.totalorder %s56, %s59
      %p65 = scmp.eq.s32.totalorder %s8, 0
      %p66 = por %p64, %p65
      %p67 = scmp.ne.s32.totalorder %s56, %s59
      %p68 = scmp.eq.s32.totalorder %s13, 3
      %p69 = por %p67, %p68
      %p70 = scmp.ne.s32.totalorder %s59, %s60
      %p71 = scmp.eq.s32.totalorder %s13, 0
      %p72 = por %p70, %p71
      %p73 = scmp.ne.s32.totalorder %s59, %s60
      %p74 = scmp.eq.s32.totalorder %s14, 3
      %p75 = por %p73, %p74
      %p77 = scmp.ne.s32.totalorder %s60, %s76
      %p78 = scmp.eq.s32.totalorder %s14, 0
      %p79 = por %p77, %p78
      %s80 = ssub.s32 %s15, %s27
      %s81 = ssub.s32 %s16, %s23
      %s82 = sor.u32 %s80, %s81
      %p83 = scmp.eq.s32.totalorder %s82, 0
      %s85 = sadd.s32 %s84, 1
      %s86 = scalar_select %p83, %s84, %s85
      %p89 = pneg %p83
      %p90 = scmp.eq.s32.totalorder %s8, 3
      %p91 = por %p89, %p90
      %p92 = scmp.ne.s32.totalorder %s84, %s87
      %p93 = scmp.eq.s32.totalorder %s8, 0
      %p94 = por %p92, %p93
      %p95 = scmp.ne.s32.totalorder %s84, %s87
      %p96 = scmp.eq.s32.totalorder %s13, 3
      %p97 = por %p95, %p96
      %p98 = scmp.ne.s32.totalorder %s87, %s88
      %p99 = scmp.eq.s32.totalorder %s13, 0
      %p100 = por %p98, %p99
      %p101 = scmp.ne.s32.totalorder %s87, %s88
      %p102 = scmp.eq.s32.totalorder %s14, 3
      %p103 = por %p101, %p102
      %p105 = scmp.ne.s32.totalorder %s88, %s104
      %p106 = scmp.eq.s32.totalorder %s14, 0
      %p107 = por %p105, %p106
      %p108 = scmp.le.s32.totalorder 1, %s8
      %p109 = scmp.lt.s32.totalorder %s8, 5
      %p110 = pnand %p108, %p109
      %p111 = pneg %p110
      // Predicated region
      $region9: #{_lambda_.16} parent=5 // pred_check
        _
      $region10: #{_lambda_.16} parent=5 // pred_check_branch
        %113 = sbr.rel (%p110) target = $region12
      $region11: #{_lambda_.16} parent=5 // pred_region
        %s114 = ssub.s32 %s8, 1
      $region12: #{_lambda_.16} parent=5 // pred_fallthru
        _
      %p115 = scmp.lt.s32.totalorder %s8, 4
      // Predicated region
      $region13: #{_lambda_.16} parent=5 // pred_check
        %p116 = pneg %p115
      $region14: #{_lambda_.16} parent=5 // pred_check_branch
        %118 = sbr.rel (%p116) target = $region16
      $region15: #{_lambda_.16} parent=5 // pred_region
        // Predicated region
        $region17: #{_lambda_.16} parent=15 // pred_check
          %p119 = pneg %p40
        $region18: #{_lambda_.16} parent=15 // pred_check_branch
          %121 = sbr.rel (%p119) target = $region20
        $region19: #{_lambda_.16} parent=15 // pred_region
          %s122 = smul.u32 32, %s15
          %p123 = scmp.lt.s32.totalorder %s122, 63
          %s124 = scalar_select %p123, %s122, 63
          %s125 = smul.addr %s124, 4
          %s126 = scalar_lea.vmem %s0, %s125
          %s127 = smul.u32 32, %s15
        $region20: #{_lambda_.16} parent=15 // pred_fallthru
          _
        // Predicated region
        $region21: #{_lambda_.16} parent=15 // pred_check
          %p128 = pneg %p66
        $region22: #{_lambda_.16} parent=15 // pred_check_branch
          %130 = sbr.rel (%p128) target = $region24
        $region23: #{_lambda_.16} parent=15 // pred_region
          %s131 = sand.u32 %s56, 1
          %s132 = sand.u32 %s56, 1
          %s133 = smul.addr %s132, 256
          %s134 = scalar_lea.vmem [#allocation2], %s133
          %s135 = smul.u32 4, %s16
          %s136 = smul.addr %s135, 4
          %s137 = scalar_lea.vmem %s1, %s136
          // Predicated region
          $region25: #{_lambda_.16} parent=23 // pred_check
            _
          $region26: #{_lambda_.16} parent=23 // pred_check_branch
            %139 = sbr.rel (0) target = $region28
          $region27: #{_lambda_.16} parent=23 // pred_region
            // Predicated region
            $region29: #{_lambda_.16} parent=27 // pred_check
              _
            $region30: #{_lambda_.16} parent=27 // pred_check_branch
              %141 = sbr.rel (0) target = $region32
            $region31: #{_lambda_.16} parent=27 // pred_region
              loop: start=0, step=1, limit=1
              $region33: #{_lambda_.16} parent=31 // loop_pre_header
                _
              $region34: #{_lambda_.16} parent=31 // loop_header
                %s143 = sphi 0, %s147
                %p144 = scmp.ge.s32.totalorder %s143, 1
                %s148 = sphi %s137, %s137
                %s149 = sphi %s134, %s134
              $region35: #{_lambda_.16} parent=31 // loop_header_branch
                %146 = sbr.rel (%p144) target = $region39
              $region36: #{_lambda_.16} parent=31 // loop_body
                %v150 = vld [vmem:[%s148] sm:$0xff]
                %151 = vst [vmem:[%s149] sm:$0xff] %v150
                %v152 = vld [vmem:[%s148 + $0x8] sm:$0xff]
                %153 = vst [vmem:[%s149 + $0x8] sm:$0xff] %v152
                %v154 = vld [vmem:[%s148 + $0x20] sm:$0xff]
                %155 = vst [vmem:[%s149 + $0x10] sm:$0xff] %v154
                %v156 = vld [vmem:[%s148 + $0x28] sm:$0xff]
                %157 = vst [vmem:[%s149 + $0x18] sm:$0xff] %v156
                %v158 = vld [vmem:[%s148 + $0x40] sm:$0xff]
                %159 = vst [vmem:[%s149 + $0x20] sm:$0xff] %v158
                %v160 = vld [vmem:[%s148 + $0x48] sm:$0xff]
                %161 = vst [vmem:[%s149 + $0x28] sm:$0xff] %v160
                %v162 = vld [vmem:[%s148 + $0x60] sm:$0xff]
                %163 = vst [vmem:[%s149 + $0x30] sm:$0xff] %v162
                %v164 = vld [vmem:[%s148 + $0x68] sm:$0xff]
                %165 = vst [vmem:[%s149 + $0x38] sm:$0xff] %v164
                %v166 = vld [vmem:[%s148 + $0x80] sm:$0xff]
                %167 = vst [vmem:[%s149 + $0x40] sm:$0xff] %v166
                %v168 = vld [vmem:[%s148 + $0x88] sm:$0xff]
                %169 = vst [vmem:[%s149 + $0x48] sm:$0xff] %v168
                %v170 = vld [vmem:[%s148 + $0xa0] sm:$0xff]
                %171 = vst [vmem:[%s149 + $0x50] sm:$0xff] %v170
                %v172 = vld [vmem:[%s148 + $0xa8] sm:$0xff]
                %173 = vst [vmem:[%s149 + $0x58] sm:$0xff] %v172
                %v174 = vld [vmem:[%s148 + $0xc0] sm:$0xff]
                %175 = vst [vmem:[%s149 + $0x60] sm:$0xff] %v174
                %v176 = vld [vmem:[%s148 + $0xc8] sm:$0xff]
                %177 = vst [vmem:[%s149 + $0x68] sm:$0xff] %v176
                %v178 = vld [vmem:[%s148 + $0xe0] sm:$0xff]
                %179 = vst [vmem:[%s149 + $0x70] sm:$0xff] %v178
                %v180 = vld [vmem:[%s148 + $0xe8] sm:$0xff]
                %181 = vst [vmem:[%s149 + $0x78] sm:$0xff] %v180
                %v182 = vld [vmem:[%s148 + $0x100] sm:$0xff]
                %183 = vst [vmem:[%s149 + $0x80] sm:$0xff] %v182
                %v184 = vld [vmem:[%s148 + $0x108] sm:$0xff]
                %185 = vst [vmem:[%s149 + $0x88] sm:$0xff] %v184
                %v186 = vld [vmem:[%s148 + $0x120] sm:$0xff]
                %187 = vst [vmem:[%s149 + $0x90] sm:$0xff] %v186
                %v188 = vld [vmem:[%s148 + $0x128] sm:$0xff]
                %189 = vst [vmem:[%s149 + $0x98] sm:$0xff] %v188
                %v190 = vld [vmem:[%s148 + $0x140] sm:$0xff]
                %191 = vst [vmem:[%s149 + $0xa0] sm:$0xff] %v190
                %v192 = vld [vmem:[%s148 + $0x148] sm:$0xff]
                %193 = vst [vmem:[%s149 + $0xa8] sm:$0xff] %v192
                %v194 = vld [vmem:[%s148 + $0x160] sm:$0xff]
                %195 = vst [vmem:[%s149 + $0xb0] sm:$0xff] %v194
                %v196 = vld [vmem:[%s148 + $0x168] sm:$0xff]
                %197 = vst [vmem:[%s149 + $0xb8] sm:$0xff] %v196
                %v198 = vld [vmem:[%s148 + $0x180] sm:$0xff]
                %199 = vst [vmem:[%s149 + $0xc0] sm:$0xff] %v198
                %v200 = vld [vmem:[%s148 + $0x188] sm:$0xff]
                %201 = vst [vmem:[%s149 + $0xc8] sm:$0xff] %v200
                %v202 = vld [vmem:[%s148 + $0x1a0] sm:$0xff]
                %203 = vst [vmem:[%s149 + $0xd0] sm:$0xff] %v202
                %v204 = vld [vmem:[%s148 + $0x1a8] sm:$0xff]
                %205 = vst [vmem:[%s149 + $0xd8] sm:$0xff] %v204
                %v206 = vld [vmem:[%s148 + $0x1c0] sm:$0xff]
                %207 = vst [vmem:[%s149 + $0xe0] sm:$0xff] %v206
                %v208 = vld [vmem:[%s148 + $0x1c8] sm:$0xff]
                %209 = vst [vmem:[%s149 + $0xe8] sm:$0xff] %v208
                %v210 = vld [vmem:[%s148 + $0x1e0] sm:$0xff]
                %211 = vst [vmem:[%s149 + $0xf0] sm:$0xff] %v210
                %v212 = vld [vmem:[%s148 + $0x1e8] sm:$0xff]
                %213 = vst [vmem:[%s149 + $0xf8] sm:$0xff] %v212
              $region37: #{_lambda_.16} parent=31 // loop_footer
                %s147 = sadd.s32 1, %s143
              $region38: #{_lambda_.16} parent=31 // loop_footer_branch
                %142 = sbr.rel target = $region34
              $region39: #{_lambda_.16} parent=31 // loop_exit
                _
            $region32: #{_lambda_.16} parent=27 // pred_fallthru
              _
            // Predicated region
            $region40: #{_lambda_.16} parent=27 // pred_check
              _
            $region41: #{_lambda_.16} parent=27 // pred_check_branch
              %215 = sbr.rel target = $region43
            $region42: #{_lambda_.16} parent=27 // pred_region
              _
            $region43: #{_lambda_.16} parent=27 // pred_fallthru
              _
          $region28: #{_lambda_.16} parent=23 // pred_fallthru
            _
          %216 = vnop
        $region24: #{_lambda_.16} parent=15 // pred_fallthru
          _
      $region16: #{_lambda_.16} parent=5 // pred_fallthru
        _
      %p217 = scmp.le.s32.totalorder 1, %s8
      %p218 = scmp.lt.s32.totalorder %s8, 5
      %p219 = pnand %p217, %p218
      %p220 = pneg %p219
      // Predicated region
      $region44: #{_lambda_.16} parent=5 // pred_check
        _
      $region45: #{_lambda_.16} parent=5 // pred_check_branch
        %222 = sbr.rel (%p219) target = $region47
      $region46: #{_lambda_.16} parent=5 // pred_region
        %s223 = ssub.s32 %s8, 1
        %s224 = sand.u32 %s59, 1
        %s225 = sand.u32 %s59, 1
        %s226 = smul.addr %s225, 256
        %s227 = scalar_lea.vmem [#allocation2], %s226
        // Predicated region
        $region48: #{_lambda_.16} parent=46 // pred_check
          %p228 = pneg %p72
        $region49: #{_lambda_.16} parent=46 // pred_check_branch
          %230 = sbr.rel (%p228) target = $region51
        $region50: #{_lambda_.16} parent=46 // pred_region
          _
        $region51: #{_lambda_.16} parent=46 // pred_fallthru
          _
        %s231 = smul.u32 32, %s17
        %p232 = scmp.lt.s32.totalorder %s231, 63
        %s233 = scalar_select %p232, %s231, 63
        %s234 = smul.addr %s233, 4
        %s235 = scalar_lea.vmem %s0, %s234
        %p236 = pneg %p46
        %p237 = pneg %p43
        %s238 = sand.u32 %s59, 1
        %s239 = sand.u32 %s59, 1
        %s240 = smul.addr %s239, 256
        %s241 = scalar_lea.vmem [#allocation2], %s240
        %p242 = pneg %p72
        %p243 = pneg %p69
        %p244 = pneg %p100
        %p245 = pneg %p97
        %s246 = sand.u32 %s87, 1
        %s247 = sand.u32 %s87, 1
        %s248 = smul.addr %s247, 1024
        %s249 = scalar_lea.vmem [#allocation3], %s248
        %s250 = smul.u32 32, %s17
        %p251 = scmp.lt.s32.totalorder %s250, 63
        %s252 = scalar_select %p251, %s250, 63
        %s253 = smul.addr %s252, 4
        %s254 = scalar_lea.vmem %s0, %s253
        %s255 = smul.u32 32, %s17
        %s256 = smul.u32 4, %s18
        %s257 = smul.u32 32, %s17
        %s258 = smul.u32 4, %s18
        %v259 = vld [vmem:[%s254] sm:$0xf]
        %v260 = vld [vmem:[%s254 + $0x4] sm:$0xf]
        %v261 = vld [vmem:[%s254 + $0x8] sm:$0xf]
        %v262 = vld [vmem:[%s254 + $0xc] sm:$0xf]
        %v263 = vld [vmem:[%s254 + $0x10] sm:$0xf]
        %v264 = vld [vmem:[%s254 + $0x14] sm:$0xf]
        %v265 = vld [vmem:[%s254 + $0x18] sm:$0xf]
        %v266 = vld [vmem:[%s254 + $0x1c] sm:$0xf]
        %v267 = vld [vmem:[%s254 + $0x20] sm:$0xf]
        %v268 = vld [vmem:[%s254 + $0x24] sm:$0xf]
        %v269 = vld [vmem:[%s254 + $0x28] sm:$0xf]
        %v270 = vld [vmem:[%s254 + $0x2c] sm:$0xf]
        %v271 = vld [vmem:[%s254 + $0x30] sm:$0xf]
        %v272 = vld [vmem:[%s254 + $0x34] sm:$0xf]
        %v273 = vld [vmem:[%s254 + $0x38] sm:$0xf]
        %v274 = vld [vmem:[%s254 + $0x3c] sm:$0xf]
        %v275 = vld [vmem:[%s254 + $0x40] sm:$0xf]
        %v276 = vld [vmem:[%s254 + $0x44] sm:$0xf]
        %v277 = vld [vmem:[%s254 + $0x48] sm:$0xf]
        %v278 = vld [vmem:[%s254 + $0x4c] sm:$0xf]
        %v279 = vld [vmem:[%s254 + $0x50] sm:$0xf]
        %v280 = vld [vmem:[%s254 + $0x54] sm:$0xf]
        %v281 = vld [vmem:[%s254 + $0x58] sm:$0xf]
        %v282 = vld [vmem:[%s254 + $0x5c] sm:$0xf]
        %v283 = vld [vmem:[%s254 + $0x60] sm:$0xf]
        %v284 = vld [vmem:[%s254 + $0x64] sm:$0xf]
        %v285 = vld [vmem:[%s254 + $0x68] sm:$0xf]
        %v286 = vld [vmem:[%s254 + $0x6c] sm:$0xf]
        %v287 = vld [vmem:[%s254 + $0x70] sm:$0xf]
        %v288 = vld [vmem:[%s254 + $0x74] sm:$0xf]
        %v289 = vld [vmem:[%s254 + $0x78] sm:$0xf]
        %v290 = vld [vmem:[%s254 + $0x7c] sm:$0xf]
        %v291 = vld [vmem:[%s227] sm:$0xff]
        %v292 = vld [vmem:[%s227 + $0x8] sm:$0xff]
        %v293 = vld [vmem:[%s227 + $0x10] sm:$0xff]
        %v294 = vld [vmem:[%s227 + $0x18] sm:$0xff]
        %v295 = vld [vmem:[%s227 + $0x20] sm:$0xff]
        %v296 = vld [vmem:[%s227 + $0x28] sm:$0xff]
        %v297 = vld [vmem:[%s227 + $0x30] sm:$0xff]
        %v298 = vld [vmem:[%s227 + $0x38] sm:$0xff]
        %v299 = vld [vmem:[%s227 + $0x40] sm:$0xff]
        %v300 = vld [vmem:[%s227 + $0x48] sm:$0xff]
        %v301 = vld [vmem:[%s227 + $0x50] sm:$0xff]
        %v302 = vld [vmem:[%s227 + $0x58] sm:$0xff]
        %v303 = vld [vmem:[%s227 + $0x60] sm:$0xff]
        %v304 = vld [vmem:[%s227 + $0x68] sm:$0xff]
        %v305 = vld [vmem:[%s227 + $0x70] sm:$0xff]
        %v306 = vld [vmem:[%s227 + $0x78] sm:$0xff]
        %v307 = vld [vmem:[%s227 + $0x80] sm:$0xff]
        %v308 = vld [vmem:[%s227 + $0x88] sm:$0xff]
        %v309 = vld [vmem:[%s227 + $0x90] sm:$0xff]
        %v310 = vld [vmem:[%s227 + $0x98] sm:$0xff]
        %v311 = vld [vmem:[%s227 + $0xa0] sm:$0xff]
        %v312 = vld [vmem:[%s227 + $0xa8] sm:$0xff]
        %v313 = vld [vmem:[%s227 + $0xb0] sm:$0xff]
        %v314 = vld [vmem:[%s227 + $0xb8] sm:$0xff]
        %v315 = vld [vmem:[%s227 + $0xc0] sm:$0xff]
        %v316 = vld [vmem:[%s227 + $0xc8] sm:$0xff]
        %v317 = vld [vmem:[%s227 + $0xd0] sm:$0xff]
        %v318 = vld [vmem:[%s227 + $0xd8] sm:$0xff]
        %v319 = vld [vmem:[%s227 + $0xe0] sm:$0xff]
        %v320 = vld [vmem:[%s227 + $0xe8] sm:$0xff]
        %v321 = vld [vmem:[%s227 + $0xf0] sm:$0xff]
        %v322 = vld [vmem:[%s227 + $0xf8] sm:$0xff]
        %v355 = vunpack.c.l.b16 %v259
        %v356 = vunpack.c.l.b16 %v260
        %v357 = vunpack.c.l.b16 %v261
        %v358 = vunpack.c.l.b16 %v262
        %v359 = vunpack.c.l.b16 %v263
        %v360 = vunpack.c.l.b16 %v264
        %v361 = vunpack.c.l.b16 %v265
        %v362 = vunpack.c.l.b16 %v266
        %v363 = vunpack.c.l.b16 %v267
        %v364 = vunpack.c.l.b16 %v268
        %v365 = vunpack.c.l.b16 %v269
        %v366 = vunpack.c.l.b16 %v270
        %v367 = vunpack.c.l.b16 %v271
        %v368 = vunpack.c.l.b16 %v272
        %v369 = vunpack.c.l.b16 %v273
        %v370 = vunpack.c.l.b16 %v274
        %v371 = vunpack.c.l.b16 %v275
        %v372 = vunpack.c.l.b16 %v276
        %v373 = vunpack.c.l.b16 %v277
        %v374 = vunpack.c.l.b16 %v278
        %v375 = vunpack.c.l.b16 %v279
        %v376 = vunpack.c.l.b16 %v280
        %v377 = vunpack.c.l.b16 %v281
        %v378 = vunpack.c.l.b16 %v282
        %v379 = vunpack.c.l.b16 %v283
        %v380 = vunpack.c.l.b16 %v284
        %v381 = vunpack.c.l.b16 %v285
        %v382 = vunpack.c.l.b16 %v286
        %v383 = vunpack.c.l.b16 %v287
        %v384 = vunpack.c.l.b16 %v288
        %v385 = vunpack.c.l.b16 %v289
        %v386 = vunpack.c.l.b16 %v290
        %v387 = vpack.c.b16 %v356, %v355
        %v388 = vpack.c.b16 %v358, %v357
        %v389 = vpack.c.b16 %v360, %v359
        %v390 = vpack.c.b16 %v362, %v361
        %v391 = vpack.c.b16 %v364, %v363
        %v392 = vpack.c.b16 %v366, %v365
        %v393 = vpack.c.b16 %v368, %v367
        %v394 = vpack.c.b16 %v370, %v369
        %v395 = vpack.c.b16 %v372, %v371
        %v396 = vpack.c.b16 %v374, %v373
        %v397 = vpack.c.b16 %v376, %v375
        %v398 = vpack.c.b16 %v378, %v377
        %v399 = vpack.c.b16 %v380, %v379
        %v400 = vpack.c.b16 %v382, %v381
        %v401 = vpack.c.b16 %v384, %v383
        %v402 = vpack.c.b16 %v386, %v385
        %v451 = vunpack.c.l.b16 %v291
        %v452 = vunpack.c.h.b16 %v291
        %v453 = vunpack.c.l.b16 %v292
        %v454 = vunpack.c.h.b16 %v292
        %v455 = vunpack.c.l.b16 %v293
        %v456 = vunpack.c.h.b16 %v293
        %v457 = vunpack.c.l.b16 %v294
        %v458 = vunpack.c.h.b16 %v294
        %v459 = vunpack.c.l.b16 %v295
        %v460 = vunpack.c.h.b16 %v295
        %v461 = vunpack.c.l.b16 %v296
        %v462 = vunpack.c.h.b16 %v296
        %v463 = vunpack.c.l.b16 %v297
        %v464 = vunpack.c.h.b16 %v297
        %v465 = vunpack.c.l.b16 %v298
        %v466 = vunpack.c.h.b16 %v298
        %v467 = vunpack.c.l.b16 %v299
        %v468 = vunpack.c.h.b16 %v299
        %v469 = vunpack.c.l.b16 %v300
        %v470 = vunpack.c.h.b16 %v300
        %v471 = vunpack.c.l.b16 %v301
        %v472 = vunpack.c.h.b16 %v301
        %v473 = vunpack.c.l.b16 %v302
        %v474 = vunpack.c.h.b16 %v302
        %v475 = vunpack.c.l.b16 %v303
        %v476 = vunpack.c.h.b16 %v303
        %v477 = vunpack.c.l.b16 %v304
        %v478 = vunpack.c.h.b16 %v304
        %v479 = vunpack.c.l.b16 %v305
        %v480 = vunpack.c.h.b16 %v305
        %v481 = vunpack.c.l.b16 %v306
        %v482 = vunpack.c.h.b16 %v306
        %v483 = vunpack.c.l.b16 %v307
        %v484 = vunpack.c.h.b16 %v307
        %v485 = vunpack.c.l.b16 %v308
        %v486 = vunpack.c.h.b16 %v308
        %v487 = vunpack.c.l.b16 %v309
        %v488 = vunpack.c.h.b16 %v309
        %v489 = vunpack.c.l.b16 %v310
        %v490 = vunpack.c.h.b16 %v310
        %v491 = vunpack.c.l.b16 %v311
        %v492 = vunpack.c.h.b16 %v311
        %v493 = vunpack.c.l.b16 %v312
        %v494 = vunpack.c.h.b16 %v312
        %v495 = vunpack.c.l.b16 %v313
        %v496 = vunpack.c.h.b16 %v313
        %v497 = vunpack.c.l.b16 %v314
        %v498 = vunpack.c.h.b16 %v314
        %v499 = vunpack.c.l.b16 %v315
        %v500 = vunpack.c.h.b16 %v315
        %v501 = vunpack.c.l.b16 %v316
        %v502 = vunpack.c.h.b16 %v316
        %v503 = vunpack.c.l.b16 %v317
        %v504 = vunpack.c.h.b16 %v317
        %v505 = vunpack.c.l.b16 %v318
        %v506 = vunpack.c.h.b16 %v318
        %v507 = vunpack.c.l.b16 %v319
        %v508 = vunpack.c.h.b16 %v319
        %v509 = vunpack.c.l.b16 %v320
        %v510 = vunpack.c.h.b16 %v320
        %v511 = vunpack.c.l.b16 %v321
        %v512 = vunpack.c.h.b16 %v321
        %v513 = vunpack.c.l.b16 %v322
        %v514 = vunpack.c.h.b16 %v322
        %v515 = vpack.c.b16 %v455, %v451
        %v516 = vpack.c.b16 %v456, %v452
        %v517 = vpack.c.b16 %v457, %v453
        %v518 = vpack.c.b16 %v458, %v454
        %v519 = vpack.c.b16 %v463, %v459
        %v520 = vpack.c.b16 %v464, %v460
        %v521 = vpack.c.b16 %v465, %v461
        %v522 = vpack.c.b16 %v466, %v462
        %v523 = vpack.c.b16 %v471, %v467
        %v524 = vpack.c.b16 %v472, %v468
        %v525 = vpack.c.b16 %v473, %v469
        %v526 = vpack.c.b16 %v474, %v470
        %v527 = vpack.c.b16 %v479, %v475
        %v528 = vpack.c.b16 %v480, %v476
        %v529 = vpack.c.b16 %v481, %v477
        %v530 = vpack.c.b16 %v482, %v478
        %v531 = vpack.c.b16 %v487, %v483
        %v532 = vpack.c.b16 %v488, %v484
        %v533 = vpack.c.b16 %v489, %v485
        %v534 = vpack.c.b16 %v490, %v486
        %v535 = vpack.c.b16 %v495, %v491
        %v536 = vpack.c.b16 %v496, %v492
        %v537 = vpack.c.b16 %v497, %v493
        %v538 = vpack.c.b16 %v498, %v494
        %v539 = vpack.c.b16 %v503, %v499
        %v540 = vpack.c.b16 %v504, %v500
        %v541 = vpack.c.b16 %v505, %v501
        %v542 = vpack.c.b16 %v506, %v502
        %v543 = vpack.c.b16 %v511, %v507
        %v544 = vpack.c.b16 %v512, %v508
        %v545 = vpack.c.b16 %v513, %v509
        %v546 = vpack.c.b16 %v514, %v510
        %579 = vmatpush.bf16.msra.mxu0 %v543
        %580 = vmatpush.bf16.msra.mxu0 %v539
        %581 = vmatpush.bf16.msra.mxu0 %v535
        %582 = vmatpush.bf16.msra.mxu0 %v531
        %583 = vmatpush.bf16.msra.mxu0 %v527
        %584 = vmatpush.bf16.msra.mxu0 %v523
        %585 = vmatpush.bf16.msra.mxu0 %v519
        %586 = vmatpush.bf16.msra.mxu0 %v515
        %587 = vmatmul.bf16.gmra.mxu0 %v387
        %v588 = vpop.f32.mrf.mxu0
        %v589 = vadd.f32 0.0, %v588
        %v590 = vpop.f32.mrf.mxu0
        %v591 = vadd.f32 0.0, %v590
        %592 = vmatmul.bf16.gmra.mxu0 %v388
        %v593 = vpop.f32.mrf.mxu0
        %v594 = vadd.f32 0.0, %v593
        %v595 = vpop.f32.mrf.mxu0
        %v596 = vadd.f32 0.0, %v595
        %597 = vmatmul.bf16.gmra.mxu0 %v389
        %v598 = vpop.f32.mrf.mxu0
        %v599 = vadd.f32 0.0, %v598
        %v600 = vpop.f32.mrf.mxu0
        %v601 = vadd.f32 0.0, %v600
        %602 = vmatmul.bf16.gmra.mxu0 %v390
        %v603 = vpop.f32.mrf.mxu0
        %v604 = vadd.f32 0.0, %v603
        %v605 = vpop.f32.mrf.mxu0
        %v606 = vadd.f32 0.0, %v605
        %607 = vmatmul.bf16.gmra.mxu0 %v391
        %v608 = vpop.f32.mrf.mxu0
        %v609 = vadd.f32 0.0, %v608
        %v610 = vpop.f32.mrf.mxu0
        %v611 = vadd.f32 0.0, %v610
        %612 = vmatmul.bf16.gmra.mxu0 %v392
        %v613 = vpop.f32.mrf.mxu0
        %v614 = vadd.f32 0.0, %v613
        %v615 = vpop.f32.mrf.mxu0
        %v616 = vadd.f32 0.0, %v615
        %617 = vmatmul.bf16.gmra.mxu0 %v393
        %v618 = vpop.f32.mrf.mxu0
        %v619 = vadd.f32 0.0, %v618
        %v620 = vpop.f32.mrf.mxu0
        %v621 = vadd.f32 0.0, %v620
        %622 = vmatmul.bf16.gmra.mxu0 %v394
        %v623 = vpop.f32.mrf.mxu0
        %v624 = vadd.f32 0.0, %v623
        %v625 = vpop.f32.mrf.mxu0
        %v626 = vadd.f32 0.0, %v625
        %627 = vmatmul.bf16.gmra.mxu0 %v395
        %v628 = vpop.f32.mrf.mxu0
        %v629 = vadd.f32 0.0, %v628
        %v630 = vpop.f32.mrf.mxu0
        %v631 = vadd.f32 0.0, %v630
        %632 = vmatmul.bf16.gmra.mxu0 %v396
        %v633 = vpop.f32.mrf.mxu0
        %v634 = vadd.f32 0.0, %v633
        %v635 = vpop.f32.mrf.mxu0
        %v636 = vadd.f32 0.0, %v635
        %637 = vmatmul.bf16.gmra.mxu0 %v397
        %v638 = vpop.f32.mrf.mxu0
        %v639 = vadd.f32 0.0, %v638
        %v640 = vpop.f32.mrf.mxu0
        %v641 = vadd.f32 0.0, %v640
        %642 = vmatmul.bf16.gmra.mxu0 %v398
        %v643 = vpop.f32.mrf.mxu0
        %v644 = vadd.f32 0.0, %v643
        %v645 = vpop.f32.mrf.mxu0
        %v646 = vadd.f32 0.0, %v645
        %647 = vmatmul.bf16.gmra.mxu0 %v399
        %v648 = vpop.f32.mrf.mxu0
        %v649 = vadd.f32 0.0, %v648
        %v650 = vpop.f32.mrf.mxu0
        %v651 = vadd.f32 0.0, %v650
        %652 = vmatmul.bf16.gmra.mxu0 %v400
        %v653 = vpop.f32.mrf.mxu0
        %v654 = vadd.f32 0.0, %v653
        %v655 = vpop.f32.mrf.mxu0
        %v656 = vadd.f32 0.0, %v655
        %657 = vmatmul.bf16.gmra.mxu0 %v401
        %v658 = vpop.f32.mrf.mxu0
        %v659 = vadd.f32 0.0, %v658
        %v660 = vpop.f32.mrf.mxu0
        %v661 = vadd.f32 0.0, %v660
        %662 = vmatmul.bf16.gmra.mxu0 %v402
        %v663 = vpop.f32.mrf.mxu0
        %v664 = vadd.f32 0.0, %v663
        %v665 = vpop.f32.mrf.mxu0
        %v666 = vadd.f32 0.0, %v665
        %667 = vdwg.mxu0
        %668 = vmatpush.bf16.msra.mxu0 %v544
        %669 = vmatpush.bf16.msra.mxu0 %v540
        %670 = vmatpush.bf16.msra.mxu0 %v536
        %671 = vmatpush.bf16.msra.mxu0 %v532
        %672 = vmatpush.bf16.msra.mxu0 %v528
        %673 = vmatpush.bf16.msra.mxu0 %v524
        %674 = vmatpush.bf16.msra.mxu0 %v520
        %675 = vmatpush.bf16.msra.mxu0 %v516
        %676 = vmatmul.bf16.gmra.mxu0 %v387
        %v677 = vpop.f32.mrf.mxu0
        %v678 = vadd.f32 0.0, %v677
        %v679 = vpop.f32.mrf.mxu0
        %v680 = vadd.f32 0.0, %v679
        %681 = vmatmul.bf16.gmra.mxu0 %v388
        %v682 = vpop.f32.mrf.mxu0
        %v683 = vadd.f32 0.0, %v682
        %v684 = vpop.f32.mrf.mxu0
        %v685 = vadd.f32 0.0, %v684
        %686 = vmatmul.bf16.gmra.mxu0 %v389
        %v687 = vpop.f32.mrf.mxu0
        %v688 = vadd.f32 0.0, %v687
        %v689 = vpop.f32.mrf.mxu0
        %v690 = vadd.f32 0.0, %v689
        %691 = vmatmul.bf16.gmra.mxu0 %v390
        %v692 = vpop.f32.mrf.mxu0
        %v693 = vadd.f32 0.0, %v692
        %v694 = vpop.f32.mrf.mxu0
        %v695 = vadd.f32 0.0, %v694
        %696 = vmatmul.bf16.gmra.mxu0 %v391
        %v697 = vpop.f32.mrf.mxu0
        %v698 = vadd.f32 0.0, %v697
        %v699 = vpop.f32.mrf.mxu0
        %v700 = vadd.f32 0.0, %v699
        %701 = vmatmul.bf16.gmra.mxu0 %v392
        %v702 = vpop.f32.mrf.mxu0
        %v703 = vadd.f32 0.0, %v702
        %v704 = vpop.f32.mrf.mxu0
        %v705 = vadd.f32 0.0, %v704
        %706 = vmatmul.bf16.gmra.mxu0 %v393
        %v707 = vpop.f32.mrf.mxu0
        %v708 = vadd.f32 0.0, %v707
        %v709 = vpop.f32.mrf.mxu0
        %v710 = vadd.f32 0.0, %v709
        %711 = vmatmul.bf16.gmra.mxu0 %v394
        %v712 = vpop.f32.mrf.mxu0
        %v713 = vadd.f32 0.0, %v712
        %v714 = vpop.f32.mrf.mxu0
        %v715 = vadd.f32 0.0, %v714
        %716 = vmatmul.bf16.gmra.mxu0 %v395
        %v717 = vpop.f32.mrf.mxu0
        %v718 = vadd.f32 0.0, %v717
        %v719 = vpop.f32.mrf.mxu0
        %v720 = vadd.f32 0.0, %v719
        %721 = vmatmul.bf16.gmra.mxu0 %v396
        %v722 = vpop.f32.mrf.mxu0
        %v723 = vadd.f32 0.0, %v722
        %v724 = vpop.f32.mrf.mxu0
        %v725 = vadd.f32 0.0, %v724
        %726 = vmatmul.bf16.gmra.mxu0 %v397
        %v727 = vpop.f32.mrf.mxu0
        %v728 = vadd.f32 0.0, %v727
        %v729 = vpop.f32.mrf.mxu0
        %v730 = vadd.f32 0.0, %v729
        %731 = vmatmul.bf16.gmra.mxu0 %v398
        %v732 = vpop.f32.mrf.mxu0
        %v733 = vadd.f32 0.0, %v732
        %v734 = vpop.f32.mrf.mxu0
        %v735 = vadd.f32 0.0, %v734
        %736 = vmatmul.bf16.gmra.mxu0 %v399
        %v737 = vpop.f32.mrf.mxu0
        %v738 = vadd.f32 0.0, %v737
        %v739 = vpop.f32.mrf.mxu0
        %v740 = vadd.f32 0.0, %v739
        %741 = vmatmul.bf16.gmra.mxu0 %v400
        %v742 = vpop.f32.mrf.mxu0
        %v743 = vadd.f32 0.0, %v742
        %v744 = vpop.f32.mrf.mxu0
        %v745 = vadd.f32 0.0, %v744
        %746 = vmatmul.bf16.gmra.mxu0 %v401
        %v747 = vpop.f32.mrf.mxu0
        %v748 = vadd.f32 0.0, %v747
        %v749 = vpop.f32.mrf.mxu0
        %v750 = vadd.f32 0.0, %v749
        %751 = vmatmul.bf16.gmra.mxu0 %v402
        %v752 = vpop.f32.mrf.mxu0
        %v753 = vadd.f32 0.0, %v752
        %v754 = vpop.f32.mrf.mxu0
        %v755 = vadd.f32 0.0, %v754
        %756 = vdwg.mxu0
        %757 = vmatpush.bf16.msra.mxu0 %v545
        %758 = vmatpush.bf16.msra.mxu0 %v541
        %759 = vmatpush.bf16.msra.mxu0 %v537
        %760 = vmatpush.bf16.msra.mxu0 %v533
        %761 = vmatpush.bf16.msra.mxu0 %v529
        %762 = vmatpush.bf16.msra.mxu0 %v525
        %763 = vmatpush.bf16.msra.mxu0 %v521
        %764 = vmatpush.bf16.msra.mxu0 %v517
        %765 = vmatmul.bf16.gmra.mxu0 %v387
        %v766 = vpop.f32.mrf.mxu0
        %v767 = vadd.f32 0.0, %v766
        %v768 = vpop.f32.mrf.mxu0
        %v769 = vadd.f32 0.0, %v768
        %770 = vmatmul.bf16.gmra.mxu0 %v388
        %v771 = vpop.f32.mrf.mxu0
        %v772 = vadd.f32 0.0, %v771
        %v773 = vpop.f32.mrf.mxu0
        %v774 = vadd.f32 0.0, %v773
        %775 = vmatmul.bf16.gmra.mxu0 %v389
        %v776 = vpop.f32.mrf.mxu0
        %v777 = vadd.f32 0.0, %v776
        %v778 = vpop.f32.mrf.mxu0
        %v779 = vadd.f32 0.0, %v778
        %780 = vmatmul.bf16.gmra.mxu0 %v390
        %v781 = vpop.f32.mrf.mxu0
        %v782 = vadd.f32 0.0, %v781
        %v783 = vpop.f32.mrf.mxu0
        %v784 = vadd.f32 0.0, %v783
        %785 = vmatmul.bf16.gmra.mxu0 %v391
        %v786 = vpop.f32.mrf.mxu0
        %v787 = vadd.f32 0.0, %v786
        %v788 = vpop.f32.mrf.mxu0
        %v789 = vadd.f32 0.0, %v788
        %790 = vmatmul.bf16.gmra.mxu0 %v392
        %v791 = vpop.f32.mrf.mxu0
        %v792 = vadd.f32 0.0, %v791
        %v793 = vpop.f32.mrf.mxu0
        %v794 = vadd.f32 0.0, %v793
        %795 = vmatmul.bf16.gmra.mxu0 %v393
        %v796 = vpop.f32.mrf.mxu0
        %v797 = vadd.f32 0.0, %v796
        %v798 = vpop.f32.mrf.mxu0
        %v799 = vadd.f32 0.0, %v798
        %800 = vmatmul.bf16.gmra.mxu0 %v394
        %v801 = vpop.f32.mrf.mxu0
        %v802 = vadd.f32 0.0, %v801
        %v803 = vpop.f32.mrf.mxu0
        %v804 = vadd.f32 0.0, %v803
        %805 = vmatmul.bf16.gmra.mxu0 %v395
        %v806 = vpop.f32.mrf.mxu0
        %v807 = vadd.f32 0.0, %v806
        %v808 = vpop.f32.mrf.mxu0
        %v809 = vadd.f32 0.0, %v808
        %810 = vmatmul.bf16.gmra.mxu0 %v396
        %v811 = vpop.f32.mrf.mxu0
        %v812 = vadd.f32 0.0, %v811
        %v813 = vpop.f32.mrf.mxu0
        %v814 = vadd.f32 0.0, %v813
        %815 = vmatmul.bf16.gmra.mxu0 %v397
        %v816 = vpop.f32.mrf.mxu0
        %v817 = vadd.f32 0.0, %v816
        %v818 = vpop.f32.mrf.mxu0
        %v819 = vadd.f32 0.0, %v818
        %820 = vmatmul.bf16.gmra.mxu0 %v398
        %v821 = vpop.f32.mrf.mxu0
        %v822 = vadd.f32 0.0, %v821
        %v823 = vpop.f32.mrf.mxu0
        %v824 = vadd.f32 0.0, %v823
        %825 = vmatmul.bf16.gmra.mxu0 %v399
        %v826 = vpop.f32.mrf.mxu0
        %v827 = vadd.f32 0.0, %v826
        %v828 = vpop.f32.mrf.mxu0
        %v829 = vadd.f32 0.0, %v828
        %830 = vmatmul.bf16.gmra.mxu0 %v400
        %v831 = vpop.f32.mrf.mxu0
        %v832 = vadd.f32 0.0, %v831
        %v833 = vpop.f32.mrf.mxu0
        %v834 = vadd.f32 0.0, %v833
        %835 = vmatmul.bf16.gmra.mxu0 %v401
        %v836 = vpop.f32.mrf.mxu0
        %v837 = vadd.f32 0.0, %v836
        %v838 = vpop.f32.mrf.mxu0
        %v839 = vadd.f32 0.0, %v838
        %840 = vmatmul.bf16.gmra.mxu0 %v402
        %v841 = vpop.f32.mrf.mxu0
        %v842 = vadd.f32 0.0, %v841
        %v843 = vpop.f32.mrf.mxu0
        %v844 = vadd.f32 0.0, %v843
        %845 = vdwg.mxu0
        %846 = vmatpush.bf16.msra.mxu0 %v546
        %847 = vmatpush.bf16.msra.mxu0 %v542
        %848 = vmatpush.bf16.msra.mxu0 %v538
        %849 = vmatpush.bf16.msra.mxu0 %v534
        %850 = vmatpush.bf16.msra.mxu0 %v530
        %851 = vmatpush.bf16.msra.mxu0 %v526
        %852 = vmatpush.bf16.msra.mxu0 %v522
        %853 = vmatpush.bf16.msra.mxu0 %v518
        %854 = vmatmul.bf16.gmra.mxu0 %v387
        %v855 = vpop.f32.mrf.mxu0
        %v856 = vadd.f32 0.0, %v855
        %v857 = vpop.f32.mrf.mxu0
        %v858 = vadd.f32 0.0, %v857
        %859 = vmatmul.bf16.gmra.mxu0 %v388
        %v860 = vpop.f32.mrf.mxu0
        %v861 = vadd.f32 0.0, %v860
        %v862 = vpop.f32.mrf.mxu0
        %v863 = vadd.f32 0.0, %v862
        %864 = vmatmul.bf16.gmra.mxu0 %v389
        %v865 = vpop.f32.mrf.mxu0
        %v866 = vadd.f32 0.0, %v865
        %v867 = vpop.f32.mrf.mxu0
        %v868 = vadd.f32 0.0, %v867
        %869 = vmatmul.bf16.gmra.mxu0 %v390
        %v870 = vpop.f32.mrf.mxu0
        %v871 = vadd.f32 0.0, %v870
        %v872 = vpop.f32.mrf.mxu0
        %v873 = vadd.f32 0.0, %v872
        %874 = vmatmul.bf16.gmra.mxu0 %v391
        %v875 = vpop.f32.mrf.mxu0
        %v876 = vadd.f32 0.0, %v875
        %v877 = vpop.f32.mrf.mxu0
        %v878 = vadd.f32 0.0, %v877
        %879 = vmatmul.bf16.gmra.mxu0 %v392
        %v880 = vpop.f32.mrf.mxu0
        %v881 = vadd.f32 0.0, %v880
        %v882 = vpop.f32.mrf.mxu0
        %v883 = vadd.f32 0.0, %v882
        %884 = vmatmul.bf16.gmra.mxu0 %v393
        %v885 = vpop.f32.mrf.mxu0
        %v886 = vadd.f32 0.0, %v885
        %v887 = vpop.f32.mrf.mxu0
        %v888 = vadd.f32 0.0, %v887
        %889 = vmatmul.bf16.gmra.mxu0 %v394
        %v890 = vpop.f32.mrf.mxu0
        %v891 = vadd.f32 0.0, %v890
        %v892 = vpop.f32.mrf.mxu0
        %v893 = vadd.f32 0.0, %v892
        %894 = vmatmul.bf16.gmra.mxu0 %v395
        %v895 = vpop.f32.mrf.mxu0
        %v896 = vadd.f32 0.0, %v895
        %v897 = vpop.f32.mrf.mxu0
        %v898 = vadd.f32 0.0, %v897
        %899 = vmatmul.bf16.gmra.mxu0 %v396
        %v900 = vpop.f32.mrf.mxu0
        %v901 = vadd.f32 0.0, %v900
        %v902 = vpop.f32.mrf.mxu0
        %v903 = vadd.f32 0.0, %v902
        %904 = vmatmul.bf16.gmra.mxu0 %v397
        %v905 = vpop.f32.mrf.mxu0
        %v906 = vadd.f32 0.0, %v905
        %v907 = vpop.f32.mrf.mxu0
        %v908 = vadd.f32 0.0, %v907
        %909 = vmatmul.bf16.gmra.mxu0 %v398
        %v910 = vpop.f32.mrf.mxu0
        %v911 = vadd.f32 0.0, %v910
        %v912 = vpop.f32.mrf.mxu0
        %v913 = vadd.f32 0.0, %v912
        %914 = vmatmul.bf16.gmra.mxu0 %v399
        %v915 = vpop.f32.mrf.mxu0
        %v916 = vadd.f32 0.0, %v915
        %v917 = vpop.f32.mrf.mxu0
        %v918 = vadd.f32 0.0, %v917
        %919 = vmatmul.bf16.gmra.mxu0 %v400
        %v920 = vpop.f32.mrf.mxu0
        %v921 = vadd.f32 0.0, %v920
        %v922 = vpop.f32.mrf.mxu0
        %v923 = vadd.f32 0.0, %v922
        %924 = vmatmul.bf16.gmra.mxu0 %v401
        %v925 = vpop.f32.mrf.mxu0
        %v926 = vadd.f32 0.0, %v925
        %v927 = vpop.f32.mrf.mxu0
        %v928 = vadd.f32 0.0, %v927
        %929 = vmatmul.bf16.gmra.mxu0 %v402
        %v930 = vpop.f32.mrf.mxu0
        %v931 = vadd.f32 0.0, %v930
        %v932 = vpop.f32.mrf.mxu0
        %v933 = vadd.f32 0.0, %v932
        %934 = vdwg.mxu0
        %935 = vst [vmem:[%s249] sm:$0xff] %v589
        %936 = vst [vmem:[%s249 + $0x8] sm:$0xff] %v678
        %937 = vst [vmem:[%s249 + $0x10] sm:$0xff] %v767
        %938 = vst [vmem:[%s249 + $0x18] sm:$0xff] %v856
        %939 = vst [vmem:[%s249 + $0x20] sm:$0xff] %v591
        %940 = vst [vmem:[%s249 + $0x28] sm:$0xff] %v680
        %941 = vst [vmem:[%s249 + $0x30] sm:$0xff] %v769
        %942 = vst [vmem:[%s249 + $0x38] sm:$0xff] %v858
        %943 = vst [vmem:[%s249 + $0x40] sm:$0xff] %v594
        %944 = vst [vmem:[%s249 + $0x48] sm:$0xff] %v683
        %945 = vst [vmem:[%s249 + $0x50] sm:$0xff] %v772
        %946 = vst [vmem:[%s249 + $0x58] sm:$0xff] %v861
        %947 = vst [vmem:[%s249 + $0x60] sm:$0xff] %v596
        %948 = vst [vmem:[%s249 + $0x68] sm:$0xff] %v685
        %949 = vst [vmem:[%s249 + $0x70] sm:$0xff] %v774
        %950 = vst [vmem:[%s249 + $0x78] sm:$0xff] %v863
        %951 = vst [vmem:[%s249 + $0x80] sm:$0xff] %v599
        %952 = vst [vmem:[%s249 + $0x88] sm:$0xff] %v688
        %953 = vst [vmem:[%s249 + $0x90] sm:$0xff] %v777
        %954 = vst [vmem:[%s249 + $0x98] sm:$0xff] %v866
        %955 = vst [vmem:[%s249 + $0xa0] sm:$0xff] %v601
        %956 = vst [vmem:[%s249 + $0xa8] sm:$0xff] %v690
        %957 = vst [vmem:[%s249 + $0xb0] sm:$0xff] %v779
        %958 = vst [vmem:[%s249 + $0xb8] sm:$0xff] %v868
        %959 = vst [vmem:[%s249 + $0xc0] sm:$0xff] %v604
        %960 = vst [vmem:[%s249 + $0xc8] sm:$0xff] %v693
        %961 = vst [vmem:[%s249 + $0xd0] sm:$0xff] %v782
        %962 = vst [vmem:[%s249 + $0xd8] sm:$0xff] %v871
        %963 = vst [vmem:[%s249 + $0xe0] sm:$0xff] %v606
        %964 = vst [vmem:[%s249 + $0xe8] sm:$0xff] %v695
        %965 = vst [vmem:[%s249 + $0xf0] sm:$0xff] %v784
        %966 = vst [vmem:[%s249 + $0xf8] sm:$0xff] %v873
        %967 = vst [vmem:[%s249 + $0x100] sm:$0xff] %v609
        %968 = vst [vmem:[%s249 + $0x108] sm:$0xff] %v698
        %969 = vst [vmem:[%s249 + $0x110] sm:$0xff] %v787
        %970 = vst [vmem:[%s249 + $0x118] sm:$0xff] %v876
        %971 = vst [vmem:[%s249 + $0x120] sm:$0xff] %v611
        %972 = vst [vmem:[%s249 + $0x128] sm:$0xff] %v700
        %973 = vst [vmem:[%s249 + $0x130] sm:$0xff] %v789
        %974 = vst [vmem:[%s249 + $0x138] sm:$0xff] %v878
        %975 = vst [vmem:[%s249 + $0x140] sm:$0xff] %v614
        %976 = vst [vmem:[%s249 + $0x148] sm:$0xff] %v703
        %977 = vst [vmem:[%s249 + $0x150] sm:$0xff] %v792
        %978 = vst [vmem:[%s249 + $0x158] sm:$0xff] %v881
        %979 = vst [vmem:[%s249 + $0x160] sm:$0xff] %v616
        %980 = vst [vmem:[%s249 + $0x168] sm:$0xff] %v705
        %981 = vst [vmem:[%s249 + $0x170] sm:$0xff] %v794
        %982 = vst [vmem:[%s249 + $0x178] sm:$0xff] %v883
        %983 = vst [vmem:[%s249 + $0x180] sm:$0xff] %v619
        %984 = vst [vmem:[%s249 + $0x188] sm:$0xff] %v708
        %985 = vst [vmem:[%s249 + $0x190] sm:$0xff] %v797
        %986 = vst [vmem:[%s249 + $0x198] sm:$0xff] %v886
        %987 = vst [vmem:[%s249 + $0x1a0] sm:$0xff] %v621
        %988 = vst [vmem:[%s249 + $0x1a8] sm:$0xff] %v710
        %989 = vst [vmem:[%s249 + $0x1b0] sm:$0xff] %v799
        %990 = vst [vmem:[%s249 + $0x1b8] sm:$0xff] %v888
        %991 = vst [vmem:[%s249 + $0x1c0] sm:$0xff] %v624
        %992 = vst [vmem:[%s249 + $0x1c8] sm:$0xff] %v713
        %993 = vst [vmem:[%s249 + $0x1d0] sm:$0xff] %v802
        %994 = vst [vmem:[%s249 + $0x1d8] sm:$0xff] %v891
        %995 = vst [vmem:[%s249 + $0x1e0] sm:$0xff] %v626
        %996 = vst [vmem:[%s249 + $0x1e8] sm:$0xff] %v715
        %997 = vst [vmem:[%s249 + $0x1f0] sm:$0xff] %v804
        %998 = vst [vmem:[%s249 + $0x1f8] sm:$0xff] %v893
        %999 = vst [vmem:[%s249 + $0x200] sm:$0xff] %v629
        %1000 = vst [vmem:[%s249 + $0x208] sm:$0xff] %v718
        %1001 = vst [vmem:[%s249 + $0x210] sm:$0xff] %v807
        %1002 = vst [vmem:[%s249 + $0x218] sm:$0xff] %v896
        %1003 = vst [vmem:[%s249 + $0x220] sm:$0xff] %v631
        %1004 = vst [vmem:[%s249 + $0x228] sm:$0xff] %v720
        %1005 = vst [vmem:[%s249 + $0x230] sm:$0xff] %v809
        %1006 = vst [vmem:[%s249 + $0x238] sm:$0xff] %v898
        %1007 = vst [vmem:[%s249 + $0x240] sm:$0xff] %v634
        %1008 = vst [vmem:[%s249 + $0x248] sm:$0xff] %v723
        %1009 = vst [vmem:[%s249 + $0x250] sm:$0xff] %v812
        %1010 = vst [vmem:[%s249 + $0x258] sm:$0xff] %v901
        %1011 = vst [vmem:[%s249 + $0x260] sm:$0xff] %v636
        %1012 = vst [vmem:[%s249 + $0x268] sm:$0xff] %v725
        %1013 = vst [vmem:[%s249 + $0x270] sm:$0xff] %v814
        %1014 = vst [vmem:[%s249 + $0x278] sm:$0xff] %v903
        %1015 = vst [vmem:[%s249 + $0x280] sm:$0xff] %v639
        %1016 = vst [vmem:[%s249 + $0x288] sm:$0xff] %v728
        %1017 = vst [vmem:[%s249 + $0x290] sm:$0xff] %v817
        %1018 = vst [vmem:[%s249 + $0x298] sm:$0xff] %v906
        %1019 = vst [vmem:[%s249 + $0x2a0] sm:$0xff] %v641
        %1020 = vst [vmem:[%s249 + $0x2a8] sm:$0xff] %v730
        %1021 = vst [vmem:[%s249 + $0x2b0] sm:$0xff] %v819
        %1022 = vst [vmem:[%s249 + $0x2b8] sm:$0xff] %v908
        %1023 = vst [vmem:[%s249 + $0x2c0] sm:$0xff] %v644
        %1024 = vst [vmem:[%s249 + $0x2c8] sm:$0xff] %v733
        %1025 = vst [vmem:[%s249 + $0x2d0] sm:$0xff] %v822
        %1026 = vst [vmem:[%s249 + $0x2d8] sm:$0xff] %v911
        %1027 = vst [vmem:[%s249 + $0x2e0] sm:$0xff] %v646
        %1028 = vst [vmem:[%s249 + $0x2e8] sm:$0xff] %v735
        %1029 = vst [vmem:[%s249 + $0x2f0] sm:$0xff] %v824
        %1030 = vst [vmem:[%s249 + $0x2f8] sm:$0xff] %v913
        %1031 = vst [vmem:[%s249 + $0x300] sm:$0xff] %v649
        %1032 = vst [vmem:[%s249 + $0x308] sm:$0xff] %v738
        %1033 = vst [vmem:[%s249 + $0x310] sm:$0xff] %v827
        %1034 = vst [vmem:[%s249 + $0x318] sm:$0xff] %v916
        %1035 = vst [vmem:[%s249 + $0x320] sm:$0xff] %v651
        %1036 = vst [vmem:[%s249 + $0x328] sm:$0xff] %v740
        %1037 = vst [vmem:[%s249 + $0x330] sm:$0xff] %v829
        %1038 = vst [vmem:[%s249 + $0x338] sm:$0xff] %v918
        %1039 = vst [vmem:[%s249 + $0x340] sm:$0xff] %v654
        %1040 = vst [vmem:[%s249 + $0x348] sm:$0xff] %v743
        %1041 = vst [vmem:[%s249 + $0x350] sm:$0xff] %v832
        %1042 = vst [vmem:[%s249 + $0x358] sm:$0xff] %v921
        %1043 = vst [vmem:[%s249 + $0x360] sm:$0xff] %v656
        %1044 = vst [vmem:[%s249 + $0x368] sm:$0xff] %v745
        %1045 = vst [vmem:[%s249 + $0x370] sm:$0xff] %v834
        %1046 = vst [vmem:[%s249 + $0x378] sm:$0xff] %v923
        %1047 = vst [vmem:[%s249 + $0x380] sm:$0xff] %v659
        %1048 = vst [vmem:[%s249 + $0x388] sm:$0xff] %v748
        %1049 = vst [vmem:[%s249 + $0x390] sm:$0xff] %v837
        %1050 = vst [vmem:[%s249 + $0x398] sm:$0xff] %v926
        %1051 = vst [vmem:[%s249 + $0x3a0] sm:$0xff] %v661
        %1052 = vst [vmem:[%s249 + $0x3a8] sm:$0xff] %v750
        %1053 = vst [vmem:[%s249 + $0x3b0] sm:$0xff] %v839
        %1054 = vst [vmem:[%s249 + $0x3b8] sm:$0xff] %v928
        %1055 = vst [vmem:[%s249 + $0x3c0] sm:$0xff] %v664
        %1056 = vst [vmem:[%s249 + $0x3c8] sm:$0xff] %v753
        %1057 = vst [vmem:[%s249 + $0x3d0] sm:$0xff] %v842
        %1058 = vst [vmem:[%s249 + $0x3d8] sm:$0xff] %v931
        %1059 = vst [vmem:[%s249 + $0x3e0] sm:$0xff] %v666
        %1060 = vst [vmem:[%s249 + $0x3e8] sm:$0xff] %v755
        %1061 = vst [vmem:[%s249 + $0x3f0] sm:$0xff] %v844
        %1062 = vst [vmem:[%s249 + $0x3f8] sm:$0xff] %v933
        %s1063 = sand.u32 %s87, 1
        %s1064 = sand.u32 %s87, 1
        %s1065 = smul.addr %s1064, 1024
        %s1066 = scalar_lea.vmem [#allocation3], %s1065
        // Predicated region
        $region52: #{_lambda_.16} parent=46 // pred_check
          %p1067 = pneg %p97
        $region53: #{_lambda_.16} parent=46 // pred_check_branch
          %1069 = sbr.rel (%p1067) target = $region55
        $region54: #{_lambda_.16} parent=46 // pred_region
          %s1070 = smul.u32 32, %s17
          %s1071 = smul.u32 4, %s18
          %s1072 = smul.addr %s1070, 8
          %s1073 = sadd.s32 %s1071, %s1072
          %s1074 = smul.addr %s1073, 8
          %s1075 = scalar_lea.vmem %s2, %s1074
          // Predicated region
          $region56: #{_lambda_.16} parent=54 // pred_check
            _
          $region57: #{_lambda_.16} parent=54 // pred_check_branch
            %1077 = sbr.rel (0) target = $region59
          $region58: #{_lambda_.16} parent=54 // pred_region
            // Predicated region
            $region60: #{_lambda_.16} parent=58 // pred_check
              _
            $region61: #{_lambda_.16} parent=58 // pred_check_branch
              %1079 = sbr.rel (0) target = $region63
            $region62: #{_lambda_.16} parent=58 // pred_region
              loop: start=0, step=1, limit=1
              $region64: #{_lambda_.16} parent=62 // loop_pre_header
                _
              $region65: #{_lambda_.16} parent=62 // loop_header
                %s1081 = sphi 0, %s1085
                %p1082 = scmp.ge.s32.totalorder %s1081, 1
                %s1086 = sphi %s1066, %s1066
                %s1087 = sphi %s1075, %s1075
              $region66: #{_lambda_.16} parent=62 // loop_header_branch
                %1084 = sbr.rel (%p1082) target = $region70
              $region67: #{_lambda_.16} parent=62 // loop_body
                %v1088 = vld [vmem:[%s1086] sm:$0xff]
                %1089 = vst [vmem:[%s1087] sm:$0xff] %v1088
                %v1090 = vld [vmem:[%s1086 + $0x8] sm:$0xff]
                %1091 = vst [vmem:[%s1087 + $0x8] sm:$0xff] %v1090
                %v1092 = vld [vmem:[%s1086 + $0x10] sm:$0xff]
                %1093 = vst [vmem:[%s1087 + $0x10] sm:$0xff] %v1092
                %v1094 = vld [vmem:[%s1086 + $0x18] sm:$0xff]
                %1095 = vst [vmem:[%s1087 + $0x18] sm:$0xff] %v1094
                %v1096 = vld [vmem:[%s1086 + $0x20] sm:$0xff]
                %1097 = vst [vmem:[%s1087 + $0x40] sm:$0xff] %v1096
                %v1098 = vld [vmem:[%s1086 + $0x28] sm:$0xff]
                %1099 = vst [vmem:[%s1087 + $0x48] sm:$0xff] %v1098
                %v1100 = vld [vmem:[%s1086 + $0x30] sm:$0xff]
                %1101 = vst [vmem:[%s1087 + $0x50] sm:$0xff] %v1100
                %v1102 = vld [vmem:[%s1086 + $0x38] sm:$0xff]
                %1103 = vst [vmem:[%s1087 + $0x58] sm:$0xff] %v1102
                %v1104 = vld [vmem:[%s1086 + $0x40] sm:$0xff]
                %1105 = vst [vmem:[%s1087 + $0x80] sm:$0xff] %v1104
                %v1106 = vld [vmem:[%s1086 + $0x48] sm:$0xff]
                %1107 = vst [vmem:[%s1087 + $0x88] sm:$0xff] %v1106
                %v1108 = vld [vmem:[%s1086 + $0x50] sm:$0xff]
                %1109 = vst [vmem:[%s1087 + $0x90] sm:$0xff] %v1108
                %v1110 = vld [vmem:[%s1086 + $0x58] sm:$0xff]
                %1111 = vst [vmem:[%s1087 + $0x98] sm:$0xff] %v1110
                %v1112 = vld [vmem:[%s1086 + $0x60] sm:$0xff]
                %1113 = vst [vmem:[%s1087 + $0xc0] sm:$0xff] %v1112
                %v1114 = vld [vmem:[%s1086 + $0x68] sm:$0xff]
                %1115 = vst [vmem:[%s1087 + $0xc8] sm:$0xff] %v1114
                %v1116 = vld [vmem:[%s1086 + $0x70] sm:$0xff]
                %1117 = vst [vmem:[%s1087 + $0xd0] sm:$0xff] %v1116
                %v1118 = vld [vmem:[%s1086 + $0x78] sm:$0xff]
                %1119 = vst [vmem:[%s1087 + $0xd8] sm:$0xff] %v1118
                %v1120 = vld [vmem:[%s1086 + $0x80] sm:$0xff]
                %1121 = vst [vmem:[%s1087 + $0x100] sm:$0xff] %v1120
                %v1122 = vld [vmem:[%s1086 + $0x88] sm:$0xff]
                %1123 = vst [vmem:[%s1087 + $0x108] sm:$0xff] %v1122
                %v1124 = vld [vmem:[%s1086 + $0x90] sm:$0xff]
                %1125 = vst [vmem:[%s1087 + $0x110] sm:$0xff] %v1124
                %v1126 = vld [vmem:[%s1086 + $0x98] sm:$0xff]
                %1127 = vst [vmem:[%s1087 + $0x118] sm:$0xff] %v1126
                %v1128 = vld [vmem:[%s1086 + $0xa0] sm:$0xff]
                %1129 = vst [vmem:[%s1087 + $0x140] sm:$0xff] %v1128
                %v1130 = vld [vmem:[%s1086 + $0xa8] sm:$0xff]
                %1131 = vst [vmem:[%s1087 + $0x148] sm:$0xff] %v1130
                %v1132 = vld [vmem:[%s1086 + $0xb0] sm:$0xff]
                %1133 = vst [vmem:[%s1087 + $0x150] sm:$0xff] %v1132
                %v1134 = vld [vmem:[%s1086 + $0xb8] sm:$0xff]
                %1135 = vst [vmem:[%s1087 + $0x158] sm:$0xff] %v1134
                %v1136 = vld [vmem:[%s1086 + $0xc0] sm:$0xff]
                %1137 = vst [vmem:[%s1087 + $0x180] sm:$0xff] %v1136
                %v1138 = vld [vmem:[%s1086 + $0xc8] sm:$0xff]
                %1139 = vst [vmem:[%s1087 + $0x188] sm:$0xff] %v1138
                %v1140 = vld [vmem:[%s1086 + $0xd0] sm:$0xff]
                %1141 = vst [vmem:[%s1087 + $0x190] sm:$0xff] %v1140
                %v1142 = vld [vmem:[%s1086 + $0xd8] sm:$0xff]
                %1143 = vst [vmem:[%s1087 + $0x198] sm:$0xff] %v1142
                %v1144 = vld [vmem:[%s1086 + $0xe0] sm:$0xff]
                %1145 = vst [vmem:[%s1087 + $0x1c0] sm:$0xff] %v1144
                %v1146 = vld [vmem:[%s1086 + $0xe8] sm:$0xff]
                %1147 = vst [vmem:[%s1087 + $0x1c8] sm:$0xff] %v1146
                %v1148 = vld [vmem:[%s1086 + $0xf0] sm:$0xff]
                %1149 = vst [vmem:[%s1087 + $0x1d0] sm:$0xff] %v1148
                %v1150 = vld [vmem:[%s1086 + $0xf8] sm:$0xff]
                %1151 = vst [vmem:[%s1087 + $0x1d8] sm:$0xff] %v1150
                %v1152 = vld [vmem:[%s1086 + $0x100] sm:$0xff]
                %1153 = vst [vmem:[%s1087 + $0x200] sm:$0xff] %v1152
                %v1154 = vld [vmem:[%s1086 + $0x108] sm:$0xff]
                %1155 = vst [vmem:[%s1087 + $0x208] sm:$0xff] %v1154
                %v1156 = vld [vmem:[%s1086 + $0x110] sm:$0xff]
                %1157 = vst [vmem:[%s1087 + $0x210] sm:$0xff] %v1156
                %v1158 = vld [vmem:[%s1086 + $0x118] sm:$0xff]
                %1159 = vst [vmem:[%s1087 + $0x218] sm:$0xff] %v1158
                %v1160 = vld [vmem:[%s1086 + $0x120] sm:$0xff]
                %1161 = vst [vmem:[%s1087 + $0x240] sm:$0xff] %v1160
                %v1162 = vld [vmem:[%s1086 + $0x128] sm:$0xff]
                %1163 = vst [vmem:[%s1087 + $0x248] sm:$0xff] %v1162
                %v1164 = vld [vmem:[%s1086 + $0x130] sm:$0xff]
                %1165 = vst [vmem:[%s1087 + $0x250] sm:$0xff] %v1164
                %v1166 = vld [vmem:[%s1086 + $0x138] sm:$0xff]
                %1167 = vst [vmem:[%s1087 + $0x258] sm:$0xff] %v1166
                %v1168 = vld [vmem:[%s1086 + $0x140] sm:$0xff]
                %1169 = vst [vmem:[%s1087 + $0x280] sm:$0xff] %v1168
                %v1170 = vld [vmem:[%s1086 + $0x148] sm:$0xff]
                %1171 = vst [vmem:[%s1087 + $0x288] sm:$0xff] %v1170
                %v1172 = vld [vmem:[%s1086 + $0x150] sm:$0xff]
                %1173 = vst [vmem:[%s1087 + $0x290] sm:$0xff] %v1172
                %v1174 = vld [vmem:[%s1086 + $0x158] sm:$0xff]
                %1175 = vst [vmem:[%s1087 + $0x298] sm:$0xff] %v1174
                %v1176 = vld [vmem:[%s1086 + $0x160] sm:$0xff]
                %1177 = vst [vmem:[%s1087 + $0x2c0] sm:$0xff] %v1176
                %v1178 = vld [vmem:[%s1086 + $0x168] sm:$0xff]
                %1179 = vst [vmem:[%s1087 + $0x2c8] sm:$0xff] %v1178
                %v1180 = vld [vmem:[%s1086 + $0x170] sm:$0xff]
                %1181 = vst [vmem:[%s1087 + $0x2d0] sm:$0xff] %v1180
                %v1182 = vld [vmem:[%s1086 + $0x178] sm:$0xff]
                %1183 = vst [vmem:[%s1087 + $0x2d8] sm:$0xff] %v1182
                %v1184 = vld [vmem:[%s1086 + $0x180] sm:$0xff]
                %1185 = vst [vmem:[%s1087 + $0x300] sm:$0xff] %v1184
                %v1186 = vld [vmem:[%s1086 + $0x188] sm:$0xff]
                %1187 = vst [vmem:[%s1087 + $0x308] sm:$0xff] %v1186
                %v1188 = vld [vmem:[%s1086 + $0x190] sm:$0xff]
                %1189 = vst [vmem:[%s1087 + $0x310] sm:$0xff] %v1188
                %v1190 = vld [vmem:[%s1086 + $0x198] sm:$0xff]
                %1191 = vst [vmem:[%s1087 + $0x318] sm:$0xff] %v1190
                %v1192 = vld [vmem:[%s1086 + $0x1a0] sm:$0xff]
                %1193 = vst [vmem:[%s1087 + $0x340] sm:$0xff] %v1192
                %v1194 = vld [vmem:[%s1086 + $0x1a8] sm:$0xff]
                %1195 = vst [vmem:[%s1087 + $0x348] sm:$0xff] %v1194
                %v1196 = vld [vmem:[%s1086 + $0x1b0] sm:$0xff]
                %1197 = vst [vmem:[%s1087 + $0x350] sm:$0xff] %v1196
                %v1198 = vld [vmem:[%s1086 + $0x1b8] sm:$0xff]
                %1199 = vst [vmem:[%s1087 + $0x358] sm:$0xff] %v1198
                %v1200 = vld [vmem:[%s1086 + $0x1c0] sm:$0xff]
                %1201 = vst [vmem:[%s1087 + $0x380] sm:$0xff] %v1200
                %v1202 = vld [vmem:[%s1086 + $0x1c8] sm:$0xff]
                %1203 = vst [vmem:[%s1087 + $0x388] sm:$0xff] %v1202
                %v1204 = vld [vmem:[%s1086 + $0x1d0] sm:$0xff]
                %1205 = vst [vmem:[%s1087 + $0x390] sm:$0xff] %v1204
                %v1206 = vld [vmem:[%s1086 + $0x1d8] sm:$0xff]
                %1207 = vst [vmem:[%s1087 + $0x398] sm:$0xff] %v1206
                %v1208 = vld [vmem:[%s1086 + $0x1e0] sm:$0xff]
                %1209 = vst [vmem:[%s1087 + $0x3c0] sm:$0xff] %v1208
                %v1210 = vld [vmem:[%s1086 + $0x1e8] sm:$0xff]
                %1211 = vst [vmem:[%s1087 + $0x3c8] sm:$0xff] %v1210
                %v1212 = vld [vmem:[%s1086 + $0x1f0] sm:$0xff]
                %1213 = vst [vmem:[%s1087 + $0x3d0] sm:$0xff] %v1212
                %v1214 = vld [vmem:[%s1086 + $0x1f8] sm:$0xff]
                %1215 = vst [vmem:[%s1087 + $0x3d8] sm:$0xff] %v1214
                %v1216 = vld [vmem:[%s1086 + $0x200] sm:$0xff]
                %1217 = vst [vmem:[%s1087 + $0x400] sm:$0xff] %v1216
                %v1218 = vld [vmem:[%s1086 + $0x208] sm:$0xff]
                %1219 = vst [vmem:[%s1087 + $0x408] sm:$0xff] %v1218
                %v1220 = vld [vmem:[%s1086 + $0x210] sm:$0xff]
                %1221 = vst [vmem:[%s1087 + $0x410] sm:$0xff] %v1220
                %v1222 = vld [vmem:[%s1086 + $0x218] sm:$0xff]
                %1223 = vst [vmem:[%s1087 + $0x418] sm:$0xff] %v1222
                %v1224 = vld [vmem:[%s1086 + $0x220] sm:$0xff]
                %1225 = vst [vmem:[%s1087 + $0x440] sm:$0xff] %v1224
                %v1226 = vld [vmem:[%s1086 + $0x228] sm:$0xff]
                %1227 = vst [vmem:[%s1087 + $0x448] sm:$0xff] %v1226
                %v1228 = vld [vmem:[%s1086 + $0x230] sm:$0xff]
                %1229 = vst [vmem:[%s1087 + $0x450] sm:$0xff] %v1228
                %v1230 = vld [vmem:[%s1086 + $0x238] sm:$0xff]
                %1231 = vst [vmem:[%s1087 + $0x458] sm:$0xff] %v1230
                %v1232 = vld [vmem:[%s1086 + $0x240] sm:$0xff]
                %1233 = vst [vmem:[%s1087 + $0x480] sm:$0xff] %v1232
                %v1234 = vld [vmem:[%s1086 + $0x248] sm:$0xff]
                %1235 = vst [vmem:[%s1087 + $0x488] sm:$0xff] %v1234
                %v1236 = vld [vmem:[%s1086 + $0x250] sm:$0xff]
                %1237 = vst [vmem:[%s1087 + $0x490] sm:$0xff] %v1236
                %v1238 = vld [vmem:[%s1086 + $0x258] sm:$0xff]
                %1239 = vst [vmem:[%s1087 + $0x498] sm:$0xff] %v1238
                %v1240 = vld [vmem:[%s1086 + $0x260] sm:$0xff]
                %1241 = vst [vmem:[%s1087 + $0x4c0] sm:$0xff] %v1240
                %v1242 = vld [vmem:[%s1086 + $0x268] sm:$0xff]
                %1243 = vst [vmem:[%s1087 + $0x4c8] sm:$0xff] %v1242
                %v1244 = vld [vmem:[%s1086 + $0x270] sm:$0xff]
                %1245 = vst [vmem:[%s1087 + $0x4d0] sm:$0xff] %v1244
                %v1246 = vld [vmem:[%s1086 + $0x278] sm:$0xff]
                %1247 = vst [vmem:[%s1087 + $0x4d8] sm:$0xff] %v1246
                %v1248 = vld [vmem:[%s1086 + $0x280] sm:$0xff]
                %1249 = vst [vmem:[%s1087 + $0x500] sm:$0xff] %v1248
                %v1250 = vld [vmem:[%s1086 + $0x288] sm:$0xff]
                %1251 = vst [vmem:[%s1087 + $0x508] sm:$0xff] %v1250
                %v1252 = vld [vmem:[%s1086 + $0x290] sm:$0xff]
                %1253 = vst [vmem:[%s1087 + $0x510] sm:$0xff] %v1252
                %v1254 = vld [vmem:[%s1086 + $0x298] sm:$0xff]
                %1255 = vst [vmem:[%s1087 + $0x518] sm:$0xff] %v1254
                %v1256 = vld [vmem:[%s1086 + $0x2a0] sm:$0xff]
                %1257 = vst [vmem:[%s1087 + $0x540] sm:$0xff] %v1256
                %v1258 = vld [vmem:[%s1086 + $0x2a8] sm:$0xff]
                %1259 = vst [vmem:[%s1087 + $0x548] sm:$0xff] %v1258
                %v1260 = vld [vmem:[%s1086 + $0x2b0] sm:$0xff]
                %1261 = vst [vmem:[%s1087 + $0x550] sm:$0xff] %v1260
                %v1262 = vld [vmem:[%s1086 + $0x2b8] sm:$0xff]
                %1263 = vst [vmem:[%s1087 + $0x558] sm:$0xff] %v1262
                %v1264 = vld [vmem:[%s1086 + $0x2c0] sm:$0xff]
                %1265 = vst [vmem:[%s1087 + $0x580] sm:$0xff] %v1264
                %v1266 = vld [vmem:[%s1086 + $0x2c8] sm:$0xff]
                %1267 = vst [vmem:[%s1087 + $0x588] sm:$0xff] %v1266
                %v1268 = vld [vmem:[%s1086 + $0x2d0] sm:$0xff]
                %1269 = vst [vmem:[%s1087 + $0x590] sm:$0xff] %v1268
                %v1270 = vld [vmem:[%s1086 + $0x2d8] sm:$0xff]
                %1271 = vst [vmem:[%s1087 + $0x598] sm:$0xff] %v1270
                %v1272 = vld [vmem:[%s1086 + $0x2e0] sm:$0xff]
                %1273 = vst [vmem:[%s1087 + $0x5c0] sm:$0xff] %v1272
                %v1274 = vld [vmem:[%s1086 + $0x2e8] sm:$0xff]
                %1275 = vst [vmem:[%s1087 + $0x5c8] sm:$0xff] %v1274
                %v1276 = vld [vmem:[%s1086 + $0x2f0] sm:$0xff]
                %1277 = vst [vmem:[%s1087 + $0x5d0] sm:$0xff] %v1276
                %v1278 = vld [vmem:[%s1086 + $0x2f8] sm:$0xff]
                %1279 = vst [vmem:[%s1087 + $0x5d8] sm:$0xff] %v1278
                %v1280 = vld [vmem:[%s1086 + $0x300] sm:$0xff]
                %1281 = vst [vmem:[%s1087 + $0x600] sm:$0xff] %v1280
                %v1282 = vld [vmem:[%s1086 + $0x308] sm:$0xff]
                %1283 = vst [vmem:[%s1087 + $0x608] sm:$0xff] %v1282
                %v1284 = vld [vmem:[%s1086 + $0x310] sm:$0xff]
                %1285 = vst [vmem:[%s1087 + $0x610] sm:$0xff] %v1284
                %v1286 = vld [vmem:[%s1086 + $0x318] sm:$0xff]
                %1287 = vst [vmem:[%s1087 + $0x618] sm:$0xff] %v1286
                %v1288 = vld [vmem:[%s1086 + $0x320] sm:$0xff]
                %1289 = vst [vmem:[%s1087 + $0x640] sm:$0xff] %v1288
                %v1290 = vld [vmem:[%s1086 + $0x328] sm:$0xff]
                %1291 = vst [vmem:[%s1087 + $0x648] sm:$0xff] %v1290
                %v1292 = vld [vmem:[%s1086 + $0x330] sm:$0xff]
                %1293 = vst [vmem:[%s1087 + $0x650] sm:$0xff] %v1292
                %v1294 = vld [vmem:[%s1086 + $0x338] sm:$0xff]
                %1295 = vst [vmem:[%s1087 + $0x658] sm:$0xff] %v1294
                %v1296 = vld [vmem:[%s1086 + $0x340] sm:$0xff]
                %1297 = vst [vmem:[%s1087 + $0x680] sm:$0xff] %v1296
                %v1298 = vld [vmem:[%s1086 + $0x348] sm:$0xff]
                %1299 = vst [vmem:[%s1087 + $0x688] sm:$0xff] %v1298
                %v1300 = vld [vmem:[%s1086 + $0x350] sm:$0xff]
                %1301 = vst [vmem:[%s1087 + $0x690] sm:$0xff] %v1300
                %v1302 = vld [vmem:[%s1086 + $0x358] sm:$0xff]
                %1303 = vst [vmem:[%s1087 + $0x698] sm:$0xff] %v1302
                %v1304 = vld [vmem:[%s1086 + $0x360] sm:$0xff]
                %1305 = vst [vmem:[%s1087 + $0x6c0] sm:$0xff] %v1304
                %v1306 = vld [vmem:[%s1086 + $0x368] sm:$0xff]
                %1307 = vst [vmem:[%s1087 + $0x6c8] sm:$0xff] %v1306
                %v1308 = vld [vmem:[%s1086 + $0x370] sm:$0xff]
                %1309 = vst [vmem:[%s1087 + $0x6d0] sm:$0xff] %v1308
                %v1310 = vld [vmem:[%s1086 + $0x378] sm:$0xff]
                %1311 = vst [vmem:[%s1087 + $0x6d8] sm:$0xff] %v1310
                %v1312 = vld [vmem:[%s1086 + $0x380] sm:$0xff]
                %1313 = vst [vmem:[%s1087 + $0x700] sm:$0xff] %v1312
                %v1314 = vld [vmem:[%s1086 + $0x388] sm:$0xff]
                %1315 = vst [vmem:[%s1087 + $0x708] sm:$0xff] %v1314
                %v1316 = vld [vmem:[%s1086 + $0x390] sm:$0xff]
                %1317 = vst [vmem:[%s1087 + $0x710] sm:$0xff] %v1316
                %v1318 = vld [vmem:[%s1086 + $0x398] sm:$0xff]
                %1319 = vst [vmem:[%s1087 + $0x718] sm:$0xff] %v1318
                %v1320 = vld [vmem:[%s1086 + $0x3a0] sm:$0xff]
                %1321 = vst [vmem:[%s1087 + $0x740] sm:$0xff] %v1320
                %v1322 = vld [vmem:[%s1086 + $0x3a8] sm:$0xff]
                %1323 = vst [vmem:[%s1087 + $0x748] sm:$0xff] %v1322
                %v1324 = vld [vmem:[%s1086 + $0x3b0] sm:$0xff]
                %1325 = vst [vmem:[%s1087 + $0x750] sm:$0xff] %v1324
                %v1326 = vld [vmem:[%s1086 + $0x3b8] sm:$0xff]
                %1327 = vst [vmem:[%s1087 + $0x758] sm:$0xff] %v1326
                %v1328 = vld [vmem:[%s1086 + $0x3c0] sm:$0xff]
                %1329 = vst [vmem:[%s1087 + $0x780] sm:$0xff] %v1328
                %v1330 = vld [vmem:[%s1086 + $0x3c8] sm:$0xff]
                %1331 = vst [vmem:[%s1087 + $0x788] sm:$0xff] %v1330
                %v1332 = vld [vmem:[%s1086 + $0x3d0] sm:$0xff]
                %1333 = vst [vmem:[%s1087 + $0x790] sm:$0xff] %v1332
                %v1334 = vld [vmem:[%s1086 + $0x3d8] sm:$0xff]
                %1335 = vst [vmem:[%s1087 + $0x798] sm:$0xff] %v1334
                %v1336 = vld [vmem:[%s1086 + $0x3e0] sm:$0xff]
                %1337 = vst [vmem:[%s1087 + $0x7c0] sm:$0xff] %v1336
                %v1338 = vld [vmem:[%s1086 + $0x3e8] sm:$0xff]
                %1339 = vst [vmem:[%s1087 + $0x7c8] sm:$0xff] %v1338
                %v1340 = vld [vmem:[%s1086 + $0x3f0] sm:$0xff]
                %1341 = vst [vmem:[%s1087 + $0x7d0] sm:$0xff] %v1340
                %v1342 = vld [vmem:[%s1086 + $0x3f8] sm:$0xff]
                %1343 = vst [vmem:[%s1087 + $0x7d8] sm:$0xff] %v1342
              $region68: #{_lambda_.16} parent=62 // loop_footer
                %s1085 = sadd.s32 1, %s1081
              $region69: #{_lambda_.16} parent=62 // loop_footer_branch
                %1080 = sbr.rel target = $region65
              $region70: #{_lambda_.16} parent=62 // loop_exit
                _
            $region63: #{_lambda_.16} parent=58 // pred_fallthru
              _
            // Predicated region
            $region71: #{_lambda_.16} parent=58 // pred_check
              _
            $region72: #{_lambda_.16} parent=58 // pred_check_branch
              %1345 = sbr.rel target = $region74
            $region73: #{_lambda_.16} parent=58 // pred_region
              _
            $region74: #{_lambda_.16} parent=58 // pred_fallthru
              _
          $region59: #{_lambda_.16} parent=54 // pred_fallthru
            _
          %1346 = vnop
        $region55: #{_lambda_.16} parent=46 // pred_fallthru
          _
      $region47: #{_lambda_.16} parent=5 // pred_fallthru
        _
      %p1347 = scmp.le.s32.totalorder 2, %s8
      // Predicated region
      $region75: #{_lambda_.16} parent=5 // pred_check
        %p1348 = pneg %p1347
      $region76: #{_lambda_.16} parent=5 // pred_check_branch
        %1350 = sbr.rel (%p1348) target = $region78
      $region77: #{_lambda_.16} parent=5 // pred_region
        %s1351 = ssub.s32 %s8, 2
        // Predicated region
        $region79: #{_lambda_.16} parent=77 // pred_check
          %p1352 = pneg %p103
        $region80: #{_lambda_.16} parent=77 // pred_check_branch
          %1354 = sbr.rel (%p1352) target = $region82
        $region81: #{_lambda_.16} parent=77 // pred_region
          %s1355 = sand.u32 %s88, 1
          %s1356 = sand.u32 %s88, 1
          %s1357 = smul.addr %s1356, 1024
          %s1358 = scalar_lea.vmem [#allocation3], %s1357
        $region82: #{_lambda_.16} parent=77 // pred_fallthru
          _
      $region78: #{_lambda_.16} parent=5 // pred_fallthru
        _
    $region6: #{_lambda_.16} parent=1 // loop_footer
      %s12 = sadd.s32 1, %s8
    $region7: #{_lambda_.16} parent=1 // loop_footer_branch
      %7 = sbr.rel target = $region3
    $region8: #{_lambda_.16} parent=1 // loop_exit
      _

// kernel: tile.17
$region0: #{tile.17}
  #allocation0 [shape = 's32[1]{0}', space=sflag, size = 0x4, scoped, tag = 'scoped memory for tile.17']
  %s0 = inlined_call_operand.vmem [shape: f32[64], index: 0, kind: input, shape index: {}]
  %s1 = inlined_call_operand.vmem [shape: f32[2,64], index: 1, kind: output, shape index: {}]
  // Predicated region
  $region2: #{tile.17} parent=0 // pred_check
    _
  $region3: #{tile.17} parent=0 // pred_check_branch
    %3 = sbr.rel (0) target = $region5
  $region4: #{tile.17} parent=0 // pred_region
    _
  $region5: #{tile.17} parent=0 // pred_fallthru
    _
  %v4 = vld [vmem:[%s0] ss:$0 sm:$0xff]
  %5 = vst [vmem:[%s1] sm:$0x3] %v4

// kernel: tile.19
$region0: #{tile.19}
  %s0 = inlined_call_operand.vmem [shape: f32[2,64], index: 0, kind: input, shape index: {}]
  %s1 = inlined_call_operand.vmem [shape: f32[1,128], index: 1, kind: output, shape index: {}]
  $region1: #{tile.19} parent=0
    #allocation0 [shape = 'u8[4096]{0}', space=vmem, size = 0x1000, scoped, tag = 'scoped mem for output reshape']
    #allocation1 [shape = 'u8[4096]{0}', space=vmem, size = 0x1000, scoped, tag = 'scoped mem for input reshape']
    %s3 = ssub.s32 4, 1
    %v4 = vld [vmem:[%s0] sm:%s3]
    %5 = vst [vmem:[#allocation1] sm:%s3] %v4
    %v6 = vld [vmem:[#allocation1] sm:$0x1]
    %vm7 = vcmask 523264
    %8 = vst.msk [vmem:[#allocation0] sm:$0x1] %vm7, %v6
    %s9 = scalar_lea.vmem [#allocation1], 1
    %v10 = vld [vmem:[%s9] sm:$0x1]
    %11 = vrot.lane.b32.xlu0 %v10, 64
    %v12 = vpop.permute.xlu0 %11
    %vm13 = vcmask 1048064
    %14 = vst.msk [vmem:[#allocation0] sm:$0x1] %vm13, %v12
    %s16 = ssub.s32 2, 1
    %v17 = vld [vmem:[#allocation0] sm:%s16]
    %s19 = ssub.s32 2, 1
    %20 = vst [vmem:[%s1] sm:%s19] %v17

// kernel: _lambda_.17
$region0: #{_lambda_.17}
  #allocation0 [shape = 'u32[]', space=smem, size = 0x4, offset = 0x4, fixed_abs, tag = 'smem constant byte address 0x4 - core index']
  #allocation1 [shape = 'u32[72,128]{1,0:T(1,128)}', space=vmem, size = 0x9000, scoped, tag = 'internal scratch']
  %s0 = inlined_call_operand.vmem [shape: f32[1024,128], index: 0, kind: input, shape index: {}]
  %s1 = inlined_call_operand.vmem [shape: f32[1,128], index: 1, kind: input, shape index: {}]
  %s2 = inlined_call_operand.vmem [shape: f32[1,128], index: 2, kind: input, shape index: {}]
  %s3 = inlined_call_operand.vmem [shape: bf16[1024,128], index: 3, kind: output, shape index: {}]
  %s4 = sld [smem:[#allocation0]]
  $region45: #{_lambda_.17} parent=0
    _
  %s6 = ssub.s32 1, %s4
  %s7 = scalar_select 0, %s6, %s4
  loop: start=0, step=1, limit=4
  $region2: #{_lambda_.17} parent=0 // loop_pre_header
    _
  $region3: #{_lambda_.17} parent=0 // loop_header
    %s9 = sphi 0, %s13
    %p10 = scmp.ge.s32.totalorder %s9, 4
    %s19 = sphi 0, %s21
    %s22 = sphi 0, %s19
    %s23 = sphi 0, %s22
    %s39 = sphi 0, %s23
    %s43 = sphi 0, %s43
    %s45 = sphi 0, %s43
    %s46 = sphi 0, %s45
    %s60 = sphi 0, %s46
    %s64 = sphi 0, %s64
    %s66 = sphi 0, %s64
    %s67 = sphi 0, %s66
    %s81 = sphi 0, %s67
    %s87 = sphi 0, %s89
    %s90 = sphi 0, %s87
    %s91 = sphi 0, %s90
    %s107 = sphi 0, %s91
  $region4: #{_lambda_.17} parent=0 // loop_header_branch
    %12 = sbr.rel (%p10) target = $region8
  $region5: #{_lambda_.17} parent=0 // loop_body
    %s14 = ssub.s32 %s9, 1
    %s15 = ssub.s32 %s9, 2
    %s16 = sadd.s32 %s9, 1
    %s17 = ssub.s32 %s9, %s16
    %p18 = scmp.eq.s32.totalorder %s17, 0
    %s20 = sadd.s32 %s19, 1
    %s21 = scalar_select %p18, %s19, %s20
    %p24 = pneg %p18
    %p25 = scmp.eq.s32.totalorder %s9, 1
    %p26 = por %p24, %p25
    %p27 = scmp.ne.s32.totalorder %s19, %s22
    %p28 = scmp.eq.s32.totalorder %s9, 0
    %p29 = por %p27, %p28
    %p30 = scmp.ne.s32.totalorder %s19, %s22
    %p31 = scmp.eq.s32.totalorder %s14, 1
    %p32 = por %p30, %p31
    %p33 = scmp.ne.s32.totalorder %s22, %s23
    %p34 = scmp.eq.s32.totalorder %s14, 0
    %p35 = por %p33, %p34
    %p36 = scmp.ne.s32.totalorder %s22, %s23
    %p37 = scmp.eq.s32.totalorder %s15, 1
    %p38 = por %p36, %p37
    %p40 = scmp.ne.s32.totalorder %s23, %s39
    %p41 = scmp.eq.s32.totalorder %s15, 0
    %p42 = por %p40, %p41
    %s44 = sadd.s32 %s43, 1
    %p47 = scmp.eq.s32.totalorder %s9, 1
    %p48 = scmp.ne.s32.totalorder %s43, %s45
    %p49 = scmp.eq.s32.totalorder %s9, 0
    %p50 = por %p48, %p49
    %p51 = scmp.ne.s32.totalorder %s43, %s45
    %p52 = scmp.eq.s32.totalorder %s14, 1
    %p53 = por %p51, %p52
    %p54 = scmp.ne.s32.totalorder %s45, %s46
    %p55 = scmp.eq.s32.totalorder %s14, 0
    %p56 = por %p54, %p55
    %p57 = scmp.ne.s32.totalorder %s45, %s46
    %p58 = scmp.eq.s32.totalorder %s15, 1
    %p59 = por %p57, %p58
    %p61 = scmp.ne.s32.totalorder %s46, %s60
    %p62 = scmp.eq.s32.totalorder %s15, 0
    %p63 = por %p61, %p62
    %s65 = sadd.s32 %s64, 1
    %p68 = scmp.eq.s32.totalorder %s9, 1
    %p69 = scmp.ne.s32.totalorder %s64, %s66
    %p70 = scmp.eq.s32.totalorder %s9, 0
    %p71 = por %p69, %p70
    %p72 = scmp.ne.s32.totalorder %s64, %s66
    %p73 = scmp.eq.s32.totalorder %s14, 1
    %p74 = por %p72, %p73
    %p75 = scmp.ne.s32.totalorder %s66, %s67
    %p76 = scmp.eq.s32.totalorder %s14, 0
    %p77 = por %p75, %p76
    %p78 = scmp.ne.s32.totalorder %s66, %s67
    %p79 = scmp.eq.s32.totalorder %s15, 1
    %p80 = por %p78, %p79
    %p82 = scmp.ne.s32.totalorder %s67, %s81
    %p83 = scmp.eq.s32.totalorder %s15, 0
    %p84 = por %p82, %p83
    %s85 = ssub.s32 %s9, %s16
    %p86 = scmp.eq.s32.totalorder %s85, 0
    %s88 = sadd.s32 %s87, 1
    %s89 = scalar_select %p86, %s87, %s88
    %p92 = pneg %p86
    %p93 = scmp.eq.s32.totalorder %s9, 1
    %p94 = por %p92, %p93
    %p95 = scmp.ne.s32.totalorder %s87, %s90
    %p96 = scmp.eq.s32.totalorder %s9, 0
    %p97 = por %p95, %p96
    %p98 = scmp.ne.s32.totalorder %s87, %s90
    %p99 = scmp.eq.s32.totalorder %s14, 1
    %p100 = por %p98, %p99
    %p101 = scmp.ne.s32.totalorder %s90, %s91
    %p102 = scmp.eq.s32.totalorder %s14, 0
    %p103 = por %p101, %p102
    %p104 = scmp.ne.s32.totalorder %s90, %s91
    %p105 = scmp.eq.s32.totalorder %s15, 1
    %p106 = por %p104, %p105
    %p108 = scmp.ne.s32.totalorder %s91, %s107
    %p109 = scmp.eq.s32.totalorder %s15, 0
    %p110 = por %p108, %p109
    %p111 = scmp.le.s32.totalorder 1, %s9
    %p112 = scmp.lt.s32.totalorder %s9, 3
    %p113 = pnand %p111, %p112
    %p114 = pneg %p113
    // Predicated region
    $region9: #{_lambda_.17} parent=5 // pred_check
      _
    $region10: #{_lambda_.17} parent=5 // pred_check_branch
      %116 = sbr.rel (%p113) target = $region12
    $region11: #{_lambda_.17} parent=5 // pred_region
      %s117 = ssub.s32 %s9, 1
      // Predicated region
      $region13: #{_lambda_.17} parent=11 // pred_check
        %p118 = pneg %p56
      $region14: #{_lambda_.17} parent=11 // pred_check_branch
        %120 = sbr.rel (%p118) target = $region16
      $region15: #{_lambda_.17} parent=11 // pred_region
        _
      $region16: #{_lambda_.17} parent=11 // pred_fallthru
        _
      // Predicated region
      $region17: #{_lambda_.17} parent=11 // pred_check
        %p121 = pneg %p77
      $region18: #{_lambda_.17} parent=11 // pred_check_branch
        %123 = sbr.rel (%p121) target = $region20
      $region19: #{_lambda_.17} parent=11 // pred_region
        _
      $region20: #{_lambda_.17} parent=11 // pred_fallthru
        _
    $region12: #{_lambda_.17} parent=5 // pred_fallthru
      _
    %p124 = scmp.lt.s32.totalorder %s9, 2
    // Predicated region
    $region21: #{_lambda_.17} parent=5 // pred_check
      %p125 = pneg %p124
    $region22: #{_lambda_.17} parent=5 // pred_check_branch
      %127 = sbr.rel (%p125) target = $region24
    $region23: #{_lambda_.17} parent=5 // pred_region
      // Predicated region
      $region25: #{_lambda_.17} parent=23 // pred_check
        %p128 = pneg %p29
      $region26: #{_lambda_.17} parent=23 // pred_check_branch
        %130 = sbr.rel (%p128) target = $region28
      $region27: #{_lambda_.17} parent=23 // pred_region
        %s131 = smul.u32 64, %s9
        %p132 = scmp.lt.s32.totalorder %s131, 127
        %s133 = scalar_select %p132, %s131, 127
        %s134 = smul.addr %s133, 8
        %s135 = scalar_lea.vmem %s0, %s134
        %s136 = smul.u32 64, %s9
      $region28: #{_lambda_.17} parent=23 // pred_fallthru
        _
    $region24: #{_lambda_.17} parent=5 // pred_fallthru
      _
    %p137 = scmp.le.s32.totalorder 1, %s9
    %p138 = scmp.lt.s32.totalorder %s9, 3
    %p139 = pnand %p137, %p138
    %p140 = pneg %p139
    // Predicated region
    $region29: #{_lambda_.17} parent=5 // pred_check
      _
    $region30: #{_lambda_.17} parent=5 // pred_check_branch
      %142 = sbr.rel (%p139) target = $region32
    $region31: #{_lambda_.17} parent=5 // pred_region
      %s143 = ssub.s32 %s9, 1
      %s144 = smul.u32 64, %s14
      %p145 = scmp.lt.s32.totalorder %s144, 127
      %s146 = scalar_select %p145, %s144, 127
      %s147 = smul.addr %s146, 8
      %s148 = scalar_lea.vmem %s0, %s147
      %p149 = pneg %p35
      %p150 = pneg %p32
      %p151 = pneg %p56
      %p152 = pneg %p53
      %p153 = pneg %p77
      %p154 = pneg %p74
      %p155 = pneg %p103
      %p156 = pneg %p100
      %s157 = smul.u32 64, %s14
      %p158 = scmp.lt.s32.totalorder %s157, 127
      %s159 = scalar_select %p158, %s157, 127
      %s160 = smul.addr %s159, 4
      %s161 = scalar_lea.vmem %s3, %s160
      %s162 = smul.u32 64, %s14
      %p163 = scmp.lt.s32.totalorder %s162, 127
      %s164 = scalar_select %p163, %s162, 127
      %s165 = smul.addr %s164, 8
      %s166 = scalar_lea.vmem %s0, %s165
      %s167 = smul.u32 64, %s14
      %s168 = smul.u32 64, %s14
      %p169 = scmp.lt.s32.totalorder %s168, 127
      %s170 = scalar_select %p169, %s168, 127
      %s171 = smul.addr %s170, 4
      %s172 = scalar_lea.vmem %s3, %s171
      %s173 = smul.u32 64, %s14
      %v174 = vld [vmem:[%s166] sm:$0xff]
      %v175 = vld [vmem:[%s166 + $0x8] sm:$0xff]
      %v176 = vld [vmem:[%s166 + $0x10] sm:$0xff]
      %v177 = vld [vmem:[%s166 + $0x18] sm:$0xff]
      %v178 = vld [vmem:[%s166 + $0x20] sm:$0xff]
      %v179 = vld [vmem:[%s166 + $0x28] sm:$0xff]
      %v180 = vld [vmem:[%s166 + $0x30] sm:$0xff]
      %v181 = vld [vmem:[%s166 + $0x38] sm:$0xff]
      %v182 = vld [vmem:[%s166 + $0x40] sm:$0xff]
      %v183 = vld [vmem:[%s166 + $0x48] sm:$0xff]
      %v184 = vld [vmem:[%s166 + $0x50] sm:$0xff]
      %v185 = vld [vmem:[%s166 + $0x58] sm:$0xff]
      %v186 = vld [vmem:[%s166 + $0x60] sm:$0xff]
      %v187 = vld [vmem:[%s166 + $0x68] sm:$0xff]
      %v188 = vld [vmem:[%s166 + $0x70] sm:$0xff]
      %v189 = vld [vmem:[%s166 + $0x78] sm:$0xff]
      %v190 = vld [vmem:[%s166 + $0x80] sm:$0xff]
      %v191 = vld [vmem:[%s166 + $0x88] sm:$0xff]
      %v192 = vld [vmem:[%s166 + $0x90] sm:$0xff]
      %v193 = vld [vmem:[%s166 + $0x98] sm:$0xff]
      %v194 = vld [vmem:[%s166 + $0xa0] sm:$0xff]
      %v195 = vld [vmem:[%s166 + $0xa8] sm:$0xff]
      %v196 = vld [vmem:[%s166 + $0xb0] sm:$0xff]
      %v197 = vld [vmem:[%s166 + $0xb8] sm:$0xff]
      %v198 = vld [vmem:[%s166 + $0xc0] sm:$0xff]
      %v199 = vld [vmem:[%s166 + $0xc8] sm:$0xff]
      %v200 = vld [vmem:[%s166 + $0xd0] sm:$0xff]
      %v201 = vld [vmem:[%s166 + $0xd8] sm:$0xff]
      %v202 = vld [vmem:[%s166 + $0xe0] sm:$0xff]
      %v203 = vld [vmem:[%s166 + $0xe8] sm:$0xff]
      %v204 = vld [vmem:[%s166 + $0xf0] sm:$0xff]
      %v205 = vld [vmem:[%s166 + $0xf8] sm:$0xff]
      %v206 = vld [vmem:[%s166 + $0x100] sm:$0xff]
      %v207 = vld [vmem:[%s166 + $0x108] sm:$0xff]
      %v208 = vld [vmem:[%s166 + $0x110] sm:$0xff]
      %v209 = vld [vmem:[%s166 + $0x118] sm:$0xff]
      %v210 = vld [vmem:[%s166 + $0x120] sm:$0xff]
      %v211 = vld [vmem:[%s166 + $0x128] sm:$0xff]
      %v212 = vld [vmem:[%s166 + $0x130] sm:$0xff]
      %v213 = vld [vmem:[%s166 + $0x138] sm:$0xff]
      %v214 = vld [vmem:[%s166 + $0x140] sm:$0xff]
      %v215 = vld [vmem:[%s166 + $0x148] sm:$0xff]
      %v216 = vld [vmem:[%s166 + $0x150] sm:$0xff]
      %v217 = vld [vmem:[%s166 + $0x158] sm:$0xff]
      %v218 = vld [vmem:[%s166 + $0x160] sm:$0xff]
      %v219 = vld [vmem:[%s166 + $0x168] sm:$0xff]
      %v220 = vld [vmem:[%s166 + $0x170] sm:$0xff]
      %v221 = vld [vmem:[%s166 + $0x178] sm:$0xff]
      %v222 = vld [vmem:[%s166 + $0x180] sm:$0xff]
      %v223 = vld [vmem:[%s166 + $0x188] sm:$0xff]
      %v224 = vld [vmem:[%s166 + $0x190] sm:$0xff]
      %v225 = vld [vmem:[%s166 + $0x198] sm:$0xff]
      %v226 = vld [vmem:[%s166 + $0x1a0] sm:$0xff]
      %v227 = vld [vmem:[%s166 + $0x1a8] sm:$0xff]
      %v228 = vld [vmem:[%s166 + $0x1b0] sm:$0xff]
      %v229 = vld [vmem:[%s166 + $0x1b8] sm:$0xff]
      %v230 = vld [vmem:[%s166 + $0x1c0] sm:$0xff]
      %v231 = vld [vmem:[%s166 + $0x1c8] sm:$0xff]
      %v232 = vld [vmem:[%s166 + $0x1d0] sm:$0xff]
      %v233 = vld [vmem:[%s166 + $0x1d8] sm:$0xff]
      %v234 = vld [vmem:[%s166 + $0x1e0] sm:$0xff]
      %v235 = vld [vmem:[%s166 + $0x1e8] sm:$0xff]
      %v236 = vld [vmem:[%s166 + $0x1f0] sm:$0xff]
      %v237 = vld [vmem:[%s166 + $0x1f8] sm:$0xff]
      %v238 = vld [vmem:[%s1] sm:$0x1]
      %v240 = vperm.slane %v238, 0
      %v242 = vmul.f32 %v174, %v240
      %v243 = vmul.f32 %v175, %v240
      %v244 = vmul.f32 %v176, %v240
      %v245 = vmul.f32 %v177, %v240
      %v246 = vmul.f32 %v178, %v240
      %v247 = vmul.f32 %v179, %v240
      %v248 = vmul.f32 %v180, %v240
      %v249 = vmul.f32 %v181, %v240
      %v250 = vmul.f32 %v182, %v240
      %v251 = vmul.f32 %v183, %v240
      %v252 = vmul.f32 %v184, %v240
      %v253 = vmul.f32 %v185, %v240
      %v254 = vmul.f32 %v186, %v240
      %v255 = vmul.f32 %v187, %v240
      %v256 = vmul.f32 %v188, %v240
      %v257 = vmul.f32 %v189, %v240
      %v258 = vmul.f32 %v190, %v240
      %v259 = vmul.f32 %v191, %v240
      %v260 = vmul.f32 %v192, %v240
      %v261 = vmul.f32 %v193, %v240
      %v262 = vmul.f32 %v194, %v240
      %v263 = vmul.f32 %v195, %v240
      %v264 = vmul.f32 %v196, %v240
      %v265 = vmul.f32 %v197, %v240
      %v266 = vmul.f32 %v198, %v240
      %v267 = vmul.f32 %v199, %v240
      %v268 = vmul.f32 %v200, %v240
      %v269 = vmul.f32 %v201, %v240
      %v270 = vmul.f32 %v202, %v240
      %v271 = vmul.f32 %v203, %v240
      %v272 = vmul.f32 %v204, %v240
      %v273 = vmul.f32 %v205, %v240
      %v274 = vmul.f32 %v206, %v240
      %v275 = vmul.f32 %v207, %v240
      %v276 = vmul.f32 %v208, %v240
      %v277 = vmul.f32 %v209, %v240
      %v278 = vmul.f32 %v210, %v240
      %v279 = vmul.f32 %v211, %v240
      %v280 = vmul.f32 %v212, %v240
      %v281 = vmul.f32 %v213, %v240
      %v282 = vmul.f32 %v214, %v240
      %v283 = vmul.f32 %v215, %v240
      %v284 = vmul.f32 %v216, %v240
      %v285 = vmul.f32 %v217, %v240
      %v286 = vmul.f32 %v218, %v240
      %v287 = vmul.f32 %v219, %v240
      %v288 = vmul.f32 %v220, %v240
      %v289 = vmul.f32 %v221, %v240
      %v290 = vmul.f32 %v222, %v240
      %v291 = vmul.f32 %v223, %v240
      %v292 = vmul.f32 %v224, %v240
      %v293 = vmul.f32 %v225, %v240
      %v294 = vmul.f32 %v226, %v240
      %v295 = vmul.f32 %v227, %v240
      %v296 = vmul.f32 %v228, %v240
      %v297 = vmul.f32 %v229, %v240
      %v298 = vmul.f32 %v230, %v240
      %v299 = vmul.f32 %v231, %v240
      %v300 = vmul.f32 %v232, %v240
      %v301 = vmul.f32 %v233, %v240
      %v302 = vmul.f32 %v234, %v240
      %v303 = vmul.f32 %v235, %v240
      %v304 = vmul.f32 %v236, %v240
      %v305 = vmul.f32 %v237, %v240
      %v306 = vld [vmem:[%s2] sm:$0x1]
      %v308 = vperm.slane %v306, 0
      %v310 = vadd.f32 %v242, %v308
      %v311 = vadd.f32 %v243, %v308
      %v312 = vadd.f32 %v244, %v308
      %v313 = vadd.f32 %v245, %v308
      %v314 = vadd.f32 %v246, %v308
      %v315 = vadd.f32 %v247, %v308
      %v316 = vadd.f32 %v248, %v308
      %v317 = vadd.f32 %v249, %v308
      %v318 = vadd.f32 %v250, %v308
      %v319 = vadd.f32 %v251, %v308
      %v320 = vadd.f32 %v252, %v308
      %v321 = vadd.f32 %v253, %v308
      %v322 = vadd.f32 %v254, %v308
      %v323 = vadd.f32 %v255, %v308
      %v324 = vadd.f32 %v256, %v308
      %v325 = vadd.f32 %v257, %v308
      %v326 = vadd.f32 %v258, %v308
      %v327 = vadd.f32 %v259, %v308
      %v328 = vadd.f32 %v260, %v308
      %v329 = vadd.f32 %v261, %v308
      %v330 = vadd.f32 %v262, %v308
      %v331 = vadd.f32 %v263, %v308
      %v332 = vadd.f32 %v264, %v308
      %v333 = vadd.f32 %v265, %v308
      %v334 = vadd.f32 %v266, %v308
      %v335 = vadd.f32 %v267, %v308
      %v336 = vadd.f32 %v268, %v308
      %v337 = vadd.f32 %v269, %v308
      %v338 = vadd.f32 %v270, %v308
      %v339 = vadd.f32 %v271, %v308
      %v340 = vadd.f32 %v272, %v308
      %v341 = vadd.f32 %v273, %v308
      %v342 = vadd.f32 %v274, %v308
      %v343 = vadd.f32 %v275, %v308
      %v344 = vadd.f32 %v276, %v308
      %v345 = vadd.f32 %v277, %v308
      %v346 = vadd.f32 %v278, %v308
      %v347 = vadd.f32 %v279, %v308
      %v348 = vadd.f32 %v280, %v308
      %v349 = vadd.f32 %v281, %v308
      %v350 = vadd.f32 %v282, %v308
      %v351 = vadd.f32 %v283, %v308
      %v352 = vadd.f32 %v284, %v308
      %v353 = vadd.f32 %v285, %v308
      %v354 = vadd.f32 %v286, %v308
      %v355 = vadd.f32 %v287, %v308
      %v356 = vadd.f32 %v288, %v308
      %v357 = vadd.f32 %v289, %v308
      %v358 = vadd.f32 %v290, %v308
      %v359 = vadd.f32 %v291, %v308
      %v360 = vadd.f32 %v292, %v308
      %v361 = vadd.f32 %v293, %v308
      %v362 = vadd.f32 %v294, %v308
      %v363 = vadd.f32 %v295, %v308
      %v364 = vadd.f32 %v296, %v308
      %v365 = vadd.f32 %v297, %v308
      %v366 = vadd.f32 %v298, %v308
      %v367 = vadd.f32 %v299, %v308
      %v368 = vadd.f32 %v300, %v308
      %v369 = vadd.f32 %v301, %v308
      %v370 = vadd.f32 %v302, %v308
      %v371 = vadd.f32 %v303, %v308
      %v372 = vadd.f32 %v304, %v308
      %v373 = vadd.f32 %v305, %v308
      %v374 = vmax.f32 %v310, 0.0
      %v375 = vmax.f32 %v311, 0.0
      %v376 = vmax.f32 %v312, 0.0
      %v377 = vmax.f32 %v313, 0.0
      %v378 = vmax.f32 %v314, 0.0
      %v379 = vmax.f32 %v315, 0.0
      %v380 = vmax.f32 %v316, 0.0
      %v381 = vmax.f32 %v317, 0.0
      %v382 = vmax.f32 %v318, 0.0
      %v383 = vmax.f32 %v319, 0.0
      %v384 = vmax.f32 %v320, 0.0
      %v385 = vmax.f32 %v321, 0.0
      %v386 = vmax.f32 %v322, 0.0
      %v387 = vmax.f32 %v323, 0.0
      %v388 = vmax.f32 %v324, 0.0
      %v389 = vmax.f32 %v325, 0.0
      %v390 = vmax.f32 %v326, 0.0
      %v391 = vmax.f32 %v327, 0.0
      %v392 = vmax.f32 %v328, 0.0
      %v393 = vmax.f32 %v329, 0.0
      %v394 = vmax.f32 %v330, 0.0
      %v395 = vmax.f32 %v331, 0.0
      %v396 = vmax.f32 %v332, 0.0
      %v397 = vmax.f32 %v333, 0.0
      %v398 = vmax.f32 %v334, 0.0
      %v399 = vmax.f32 %v335, 0.0
      %v400 = vmax.f32 %v336, 0.0
      %v401 = vmax.f32 %v337, 0.0
      %v402 = vmax.f32 %v338, 0.0
      %v403 = vmax.f32 %v339, 0.0
      %v404 = vmax.f32 %v340, 0.0
      %v405 = vmax.f32 %v341, 0.0
      %v406 = vmax.f32 %v342, 0.0
      %v407 = vmax.f32 %v343, 0.0
      %v408 = vmax.f32 %v344, 0.0
      %v409 = vmax.f32 %v345, 0.0
      %v410 = vmax.f32 %v346, 0.0
      %v411 = vmax.f32 %v347, 0.0
      %v412 = vmax.f32 %v348, 0.0
      %v413 = vmax.f32 %v349, 0.0
      %v414 = vmax.f32 %v350, 0.0
      %v415 = vmax.f32 %v351, 0.0
      %v416 = vmax.f32 %v352, 0.0
      %v417 = vmax.f32 %v353, 0.0
      %v418 = vmax.f32 %v354, 0.0
      %v419 = vmax.f32 %v355, 0.0
      %v420 = vmax.f32 %v356, 0.0
      %v421 = vmax.f32 %v357, 0.0
      %v422 = vmax.f32 %v358, 0.0
      %v423 = vmax.f32 %v359, 0.0
      %v424 = vmax.f32 %v360, 0.0
      %v425 = vmax.f32 %v361, 0.0
      %v426 = vmax.f32 %v362, 0.0
      %v427 = vmax.f32 %v363, 0.0
      %v428 = vmax.f32 %v364, 0.0
      %v429 = vmax.f32 %v365, 0.0
      %v430 = vmax.f32 %v366, 0.0
      %v431 = vmax.f32 %v367, 0.0
      %v432 = vmax.f32 %v368, 0.0
      %v433 = vmax.f32 %v369, 0.0
      %v434 = vmax.f32 %v370, 0.0
      %v435 = vmax.f32 %v371, 0.0
      %v436 = vmax.f32 %v372, 0.0
      %v437 = vmax.f32 %v373, 0.0
      %v438 = vpack.c.bf16 %v374, %v374
      %v439 = vpack.c.bf16 %v375, %v375
      %v440 = vpack.c.bf16 %v376, %v376
      %v441 = vpack.c.bf16 %v377, %v377
      %v442 = vpack.c.bf16 %v378, %v378
      %v443 = vpack.c.bf16 %v379, %v379
      %v444 = vpack.c.bf16 %v380, %v380
      %v445 = vpack.c.bf16 %v381, %v381
      %v446 = vpack.c.bf16 %v382, %v382
      %v447 = vpack.c.bf16 %v383, %v383
      %v448 = vpack.c.bf16 %v384, %v384
      %v449 = vpack.c.bf16 %v385, %v385
      %v450 = vpack.c.bf16 %v386, %v386
      %v451 = vpack.c.bf16 %v387, %v387
      %v452 = vpack.c.bf16 %v388, %v388
      %v453 = vpack.c.bf16 %v389, %v389
      %v454 = vpack.c.bf16 %v390, %v390
      %v455 = vpack.c.bf16 %v391, %v391
      %v456 = vpack.c.bf16 %v392, %v392
      %v457 = vpack.c.bf16 %v393, %v393
      %v458 = vpack.c.bf16 %v394, %v394
      %v459 = vpack.c.bf16 %v395, %v395
      %v460 = vpack.c.bf16 %v396, %v396
      %v461 = vpack.c.bf16 %v397, %v397
      %v462 = vpack.c.bf16 %v398, %v398
      %v463 = vpack.c.bf16 %v399, %v399
      %v464 = vpack.c.bf16 %v400, %v400
      %v465 = vpack.c.bf16 %v401, %v401
      %v466 = vpack.c.bf16 %v402, %v402
      %v467 = vpack.c.bf16 %v403, %v403
      %v468 = vpack.c.bf16 %v404, %v404
      %v469 = vpack.c.bf16 %v405, %v405
      %v470 = vpack.c.bf16 %v406, %v406
      %v471 = vpack.c.bf16 %v407, %v407
      %v472 = vpack.c.bf16 %v408, %v408
      %v473 = vpack.c.bf16 %v409, %v409
      %v474 = vpack.c.bf16 %v410, %v410
      %v475 = vpack.c.bf16 %v411, %v411
      %v476 = vpack.c.bf16 %v412, %v412
      %v477 = vpack.c.bf16 %v413, %v413
      %v478 = vpack.c.bf16 %v414, %v414
      %v479 = vpack.c.bf16 %v415, %v415
      %v480 = vpack.c.bf16 %v416, %v416
      %v481 = vpack.c.bf16 %v417, %v417
      %v482 = vpack.c.bf16 %v418, %v418
      %v483 = vpack.c.bf16 %v419, %v419
      %v484 = vpack.c.bf16 %v420, %v420
      %v485 = vpack.c.bf16 %v421, %v421
      %v486 = vpack.c.bf16 %v422, %v422
      %v487 = vpack.c.bf16 %v423, %v423
      %v488 = vpack.c.bf16 %v424, %v424
      %v489 = vpack.c.bf16 %v425, %v425
      %v490 = vpack.c.bf16 %v426, %v426
      %v491 = vpack.c.bf16 %v427, %v427
      %v492 = vpack.c.bf16 %v428, %v428
      %v493 = vpack.c.bf16 %v429, %v429
      %v494 = vpack.c.bf16 %v430, %v430
      %v495 = vpack.c.bf16 %v431, %v431
      %v496 = vpack.c.bf16 %v432, %v432
      %v497 = vpack.c.bf16 %v433, %v433
      %v498 = vpack.c.bf16 %v434, %v434
      %v499 = vpack.c.bf16 %v435, %v435
      %v500 = vpack.c.bf16 %v436, %v436
      %v501 = vpack.c.bf16 %v437, %v437
      %502 = vst [vmem:[%s172] sm:$0xf] %v438
      %503 = vst [vmem:[%s172 + $0x4] sm:$0xf] %v439
      %504 = vst [vmem:[%s172 + $0x8] sm:$0xf] %v440
      %505 = vst [vmem:[%s172 + $0xc] sm:$0xf] %v441
      %506 = vst [vmem:[%s172 + $0x10] sm:$0xf] %v442
      %507 = vst [vmem:[%s172 + $0x14] sm:$0xf] %v443
      %508 = vst [vmem:[%s172 + $0x18] sm:$0xf] %v444
      %509 = vst [vmem:[%s172 + $0x1c] sm:$0xf] %v445
      %510 = vst [vmem:[%s172 + $0x20] sm:$0xf] %v446
      %511 = vst [vmem:[%s172 + $0x24] sm:$0xf] %v447
      %512 = vst [vmem:[%s172 + $0x28] sm:$0xf] %v448
      %513 = vst [vmem:[%s172 + $0x2c] sm:$0xf] %v449
      %514 = vst [vmem:[%s172 + $0x30] sm:$0xf] %v450
      %515 = vst [vmem:[%s172 + $0x34] sm:$0xf] %v451
      %516 = vst [vmem:[%s172 + $0x38] sm:$0xf] %v452
      %517 = vst [vmem:[%s172 + $0x3c] sm:$0xf] %v453
      %518 = vst [vmem:[%s172 + $0x40] sm:$0xf] %v454
      %519 = vst [vmem:[%s172 + $0x44] sm:$0xf] %v455
      %520 = vst [vmem:[%s172 + $0x48] sm:$0xf] %v456
      %521 = vst [vmem:[%s172 + $0x4c] sm:$0xf] %v457
      %522 = vst [vmem:[%s172 + $0x50] sm:$0xf] %v458
      %523 = vst [vmem:[%s172 + $0x54] sm:$0xf] %v459
      %524 = vst [vmem:[%s172 + $0x58] sm:$0xf] %v460
      %525 = vst [vmem:[%s172 + $0x5c] sm:$0xf] %v461
      %526 = vst [vmem:[%s172 + $0x60] sm:$0xf] %v462
      %527 = vst [vmem:[%s172 + $0x64] sm:$0xf] %v463
      %528 = vst [vmem:[%s172 + $0x68] sm:$0xf] %v464
      %529 = vst [vmem:[%s172 + $0x6c] sm:$0xf] %v465
      %530 = vst [vmem:[%s172 + $0x70] sm:$0xf] %v466
      %531 = vst [vmem:[%s172 + $0x74] sm:$0xf] %v467
      %532 = vst [vmem:[%s172 + $0x78] sm:$0xf] %v468
      %533 = vst [vmem:[%s172 + $0x7c] sm:$0xf] %v469
      %534 = vst [vmem:[%s172 + $0x80] sm:$0xf] %v470
      %535 = vst [vmem:[%s172 + $0x84] sm:$0xf] %v471
      %536 = vst [vmem:[%s172 + $0x88] sm:$0xf] %v472
      %537 = vst [vmem:[%s172 + $0x8c] sm:$0xf] %v473
      %538 = vst [vmem:[%s172 + $0x90] sm:$0xf] %v474
      %539 = vst [vmem:[%s172 + $0x94] sm:$0xf] %v475
      %540 = vst [vmem:[%s172 + $0x98] sm:$0xf] %v476
      %541 = vst [vmem:[%s172 + $0x9c] sm:$0xf] %v477
      %542 = vst [vmem:[%s172 + $0xa0] sm:$0xf] %v478
      %543 = vst [vmem:[%s172 + $0xa4] sm:$0xf] %v479
      %544 = vst [vmem:[%s172 + $0xa8] sm:$0xf] %v480
      %545 = vst [vmem:[%s172 + $0xac] sm:$0xf] %v481
      %546 = vst [vmem:[%s172 + $0xb0] sm:$0xf] %v482
      %547 = vst [vmem:[%s172 + $0xb4] sm:$0xf] %v483
      %548 = vst [vmem:[%s172 + $0xb8] sm:$0xf] %v484
      %549 = vst [vmem:[%s172 + $0xbc] sm:$0xf] %v485
      %550 = vst [vmem:[%s172 + $0xc0] sm:$0xf] %v486
      %551 = vst [vmem:[%s172 + $0xc4] sm:$0xf] %v487
      %552 = vst [vmem:[%s172 + $0xc8] sm:$0xf] %v488
      %553 = vst [vmem:[%s172 + $0xcc] sm:$0xf] %v489
      %554 = vst [vmem:[%s172 + $0xd0] sm:$0xf] %v490
      %555 = vst [vmem:[%s172 + $0xd4] sm:$0xf] %v491
      %556 = vst [vmem:[%s172 + $0xd8] sm:$0xf] %v492
      %557 = vst [vmem:[%s172 + $0xdc] sm:$0xf] %v493
      %558 = vst [vmem:[%s172 + $0xe0] sm:$0xf] %v494
      %559 = vst [vmem:[%s172 + $0xe4] sm:$0xf] %v495
      %560 = vst [vmem:[%s172 + $0xe8] sm:$0xf] %v496
      %561 = vst [vmem:[%s172 + $0xec] sm:$0xf] %v497
      %562 = vst [vmem:[%s172 + $0xf0] sm:$0xf] %v498
      %563 = vst [vmem:[%s172 + $0xf4] sm:$0xf] %v499
      %564 = vst [vmem:[%s172 + $0xf8] sm:$0xf] %v500
      %565 = vst [vmem:[%s172 + $0xfc] sm:$0xf] %v501
      %s566 = smul.u32 64, %s14
      %p567 = scmp.lt.s32.totalorder %s566, 127
      %s568 = scalar_select %p567, %s566, 127
      %s569 = smul.addr %s568, 4
      %s570 = scalar_lea.vmem %s3, %s569
      // Predicated region
      $region33: #{_lambda_.17} parent=31 // pred_check
        %p571 = pneg %p100
      $region34: #{_lambda_.17} parent=31 // pred_check_branch
        %573 = sbr.rel (%p571) target = $region36
      $region35: #{_lambda_.17} parent=31 // pred_region
        %s574 = smul.u32 64, %s14
      $region36: #{_lambda_.17} parent=31 // pred_fallthru
        _
    $region32: #{_lambda_.17} parent=5 // pred_fallthru
      _
    %p575 = scmp.le.s32.totalorder 2, %s9
    // Predicated region
    $region37: #{_lambda_.17} parent=5 // pred_check
      %p576 = pneg %p575
    $region38: #{_lambda_.17} parent=5 // pred_check_branch
      %578 = sbr.rel (%p576) target = $region40
    $region39: #{_lambda_.17} parent=5 // pred_region
      %s579 = ssub.s32 %s9, 2
      // Predicated region
      $region41: #{_lambda_.17} parent=39 // pred_check
        %p580 = pneg %p106
      $region42: #{_lambda_.17} parent=39 // pred_check_branch
        %582 = sbr.rel (%p580) target = $region44
      $region43: #{_lambda_.17} parent=39 // pred_region
        %s583 = smul.u32 64, %s15
        %p584 = scmp.lt.s32.totalorder %s583, 127
        %s585 = scalar_select %p584, %s583, 127
        %s586 = smul.addr %s585, 4
        %s587 = scalar_lea.vmem %s3, %s586
      $region44: #{_lambda_.17} parent=39 // pred_fallthru
        _
    $region40: #{_lambda_.17} parent=5 // pred_fallthru
      _
  $region6: #{_lambda_.17} parent=0 // loop_footer
    %s13 = sadd.s32 1, %s9
  $region7: #{_lambda_.17} parent=0 // loop_footer_branch
    %8 = sbr.rel target = $region3
  $region8: #{_lambda_.17} parent=0 // loop_exit
    _

// kernel: _lambda_.18
$region0: #{_lambda_.18}
  #allocation0 [shape = 'u32[]', space=smem, size = 0x4, offset = 0x4, fixed_abs, tag = 'smem constant byte address 0x4 - core index']
  #allocation1 [shape = 'u32[72,128]{1,0:T(1,128)}', space=vmem, size = 0x9000, scoped, tag = 'internal scratch']
  %s0 = inlined_call_operand.vmem [shape: bf16[2048,64], index: 0, kind: input, shape index: {}]
  %s1 = inlined_call_operand.vmem [shape: bf16[64,128], index: 1, kind: input, shape index: {}]
  %s2 = inlined_call_operand.vmem [shape: f32[2048,128], index: 2, kind: output, shape index: {}]
  %s3 = sld [smem:[#allocation0]]
  $region41: #{_lambda_.18} parent=0
    _
  %s5 = ssub.s32 1, %s3
  %s6 = scalar_select 0, %s5, %s3
  loop: start=0, step=1, limit=10
  $region2: #{_lambda_.18} parent=0 // loop_pre_header
    _
  $region3: #{_lambda_.18} parent=0 // loop_header
    %s8 = sphi 0, %s12
    %p9 = scmp.ge.s32.totalorder %s8, 10
    %s15 = sphi 0, %s27
    %s16 = sphi 0, %s23
    %s17 = sphi 0, %s15
    %s18 = sphi 0, %s16
    %s19 = sphi 0, %s17
    %s20 = sphi 0, %s18
    %s30 = sphi 0, %s32
    %s33 = sphi 0, %s30
    %s34 = sphi 0, %s33
    %s50 = sphi 0, %s34
    %s56 = sphi 0, %s58
    %s59 = sphi 0, %s56
    %s60 = sphi 0, %s59
    %s76 = sphi 0, %s60
    %s84 = sphi 0, %s86
    %s87 = sphi 0, %s84
    %s88 = sphi 0, %s87
    %s104 = sphi 0, %s88
  $region4: #{_lambda_.18} parent=0 // loop_header_branch
    %11 = sbr.rel (%p9) target = $region8
  $region5: #{_lambda_.18} parent=0 // loop_body
    %s13 = ssub.s32 %s8, 1
    %s14 = ssub.s32 %s8, 2
    %s21 = sadd.s32 1, %s16
    %p22 = scmp.ge.s32.totalorder %s21, 1
    %s23 = scalar_select %p22, 0, %s21
    %s24 = sadd.s32 1, %s15
    %s25 = scalar_select %p22, %s24, %s15
    %p26 = scmp.ge.s32.totalorder %s25, 8
    %s27 = scalar_select %p26, 0, %s25
    %s28 = ssub.s32 %s15, %s27
    %p29 = scmp.eq.s32.totalorder %s28, 0
    %s31 = sadd.s32 %s30, 1
    %s32 = scalar_select %p29, %s30, %s31
    %p35 = pneg %p29
    %p36 = scmp.eq.s32.totalorder %s8, 7
    %p37 = por %p35, %p36
    %p38 = scmp.ne.s32.totalorder %s30, %s33
    %p39 = scmp.eq.s32.totalorder %s8, 0
    %p40 = por %p38, %p39
    %p41 = scmp.ne.s32.totalorder %s30, %s33
    %p42 = scmp.eq.s32.totalorder %s13, 7
    %p43 = por %p41, %p42
    %p44 = scmp.ne.s32.totalorder %s33, %s34
    %p45 = scmp.eq.s32.totalorder %s13, 0
    %p46 = por %p44, %p45
    %p47 = scmp.ne.s32.totalorder %s33, %s34
    %p48 = scmp.eq.s32.totalorder %s14, 7
    %p49 = por %p47, %p48
    %p51 = scmp.ne.s32.totalorder %s34, %s50
    %p52 = scmp.eq.s32.totalorder %s14, 0
    %p53 = por %p51, %p52
    %s54 = ssub.s32 %s16, %s23
    %p55 = scmp.eq.s32.totalorder %s54, 0
    %s57 = sadd.s32 %s56, 1
    %s58 = scalar_select %p55, %s56, %s57
    %p61 = pneg %p55
    %p62 = scmp.eq.s32.totalorder %s8, 7
    %p63 = por %p61, %p62
    %p64 = scmp.ne.s32.totalorder %s56, %s59
    %p65 = scmp.eq.s32.totalorder %s8, 0
    %p66 = por %p64, %p65
    %p67 = scmp.ne.s32.totalorder %s56, %s59
    %p68 = scmp.eq.s32.totalorder %s13, 7
    %p69 = por %p67, %p68
    %p70 = scmp.ne.s32.totalorder %s59, %s60
    %p71 = scmp.eq.s32.totalorder %s13, 0
    %p72 = por %p70, %p71
    %p73 = scmp.ne.s32.totalorder %s59, %s60
    %p74 = scmp.eq.s32.totalorder %s14, 7
    %p75 = por %p73, %p74
    %p77 = scmp.ne.s32.totalorder %s60, %s76
    %p78 = scmp.eq.s32.totalorder %s14, 0
    %p79 = por %p77, %p78
    %s80 = ssub.s32 %s15, %s27
    %s81 = ssub.s32 %s16, %s23
    %s82 = sor.u32 %s80, %s81
    %p83 = scmp.eq.s32.totalorder %s82, 0
    %s85 = sadd.s32 %s84, 1
    %s86 = scalar_select %p83, %s84, %s85
    %p89 = pneg %p83
    %p90 = scmp.eq.s32.totalorder %s8, 7
    %p91 = por %p89, %p90
    %p92 = scmp.ne.s32.totalorder %s84, %s87
    %p93 = scmp.eq.s32.totalorder %s8, 0
    %p94 = por %p92, %p93
    %p95 = scmp.ne.s32.totalorder %s84, %s87
    %p96 = scmp.eq.s32.totalorder %s13, 7
    %p97 = por %p95, %p96
    %p98 = scmp.ne.s32.totalorder %s87, %s88
    %p99 = scmp.eq.s32.totalorder %s13, 0
    %p100 = por %p98, %p99
    %p101 = scmp.ne.s32.totalorder %s87, %s88
    %p102 = scmp.eq.s32.totalorder %s14, 7
    %p103 = por %p101, %p102
    %p105 = scmp.ne.s32.totalorder %s88, %s104
    %p106 = scmp.eq.s32.totalorder %s14, 0
    %p107 = por %p105, %p106
    %p108 = scmp.le.s32.totalorder 1, %s8
    %p109 = scmp.lt.s32.totalorder %s8, 9
    %p110 = pnand %p108, %p109
    %p111 = pneg %p110
    // Predicated region
    $region9: #{_lambda_.18} parent=5 // pred_check
      _
    $region10: #{_lambda_.18} parent=5 // pred_check_branch
      %113 = sbr.rel (%p110) target = $region12
    $region11: #{_lambda_.18} parent=5 // pred_region
      %s114 = ssub.s32 %s8, 1
      // Predicated region
      $region13: #{_lambda_.18} parent=11 // pred_check
        %p115 = pneg %p72
      $region14: #{_lambda_.18} parent=11 // pred_check_branch
        %117 = sbr.rel (%p115) target = $region16
      $region15: #{_lambda_.18} parent=11 // pred_region
        %p118 = scmp.lt.s32.totalorder %s18, 0
        %s119 = scalar_select %p118, %s18, 0
        %s120 = smul.addr %s119, 4
        %s121 = scalar_lea.vmem %s1, %s120
      $region16: #{_lambda_.18} parent=11 // pred_fallthru
        _
    $region12: #{_lambda_.18} parent=5 // pred_fallthru
      _
    %p122 = scmp.lt.s32.totalorder %s8, 8
    // Predicated region
    $region17: #{_lambda_.18} parent=5 // pred_check
      %p123 = pneg %p122
    $region18: #{_lambda_.18} parent=5 // pred_check_branch
      %125 = sbr.rel (%p123) target = $region20
    $region19: #{_lambda_.18} parent=5 // pred_region
      // Predicated region
      $region21: #{_lambda_.18} parent=19 // pred_check
        %p126 = pneg %p40
      $region22: #{_lambda_.18} parent=19 // pred_check_branch
        %128 = sbr.rel (%p126) target = $region24
      $region23: #{_lambda_.18} parent=19 // pred_region
        %s129 = smul.u32 32, %s15
        %p130 = scmp.lt.s32.totalorder %s129, 255
        %s131 = scalar_select %p130, %s129, 255
        %s132 = smul.addr %s131, 4
        %s133 = scalar_lea.vmem %s0, %s132
        %s134 = smul.u32 32, %s15
      $region24: #{_lambda_.18} parent=19 // pred_fallthru
        _
    $region20: #{_lambda_.18} parent=5 // pred_fallthru
      _
    %p135 = scmp.le.s32.totalorder 1, %s8
    %p136 = scmp.lt.s32.totalorder %s8, 9
    %p137 = pnand %p135, %p136
    %p138 = pneg %p137
    // Predicated region
    $region25: #{_lambda_.18} parent=5 // pred_check
      _
    $region26: #{_lambda_.18} parent=5 // pred_check_branch
      %140 = sbr.rel (%p137) target = $region28
    $region27: #{_lambda_.18} parent=5 // pred_region
      %s141 = ssub.s32 %s8, 1
      %s142 = smul.u32 32, %s17
      %p143 = scmp.lt.s32.totalorder %s142, 255
      %s144 = scalar_select %p143, %s142, 255
      %s145 = smul.addr %s144, 4
      %s146 = scalar_lea.vmem %s0, %s145
      %p147 = pneg %p46
      %p148 = pneg %p43
      %p149 = scmp.lt.s32.totalorder %s18, 0
      %s150 = scalar_select %p149, %s18, 0
      %s151 = smul.addr %s150, 4
      %s152 = scalar_lea.vmem %s1, %s151
      %p153 = pneg %p72
      %p154 = pneg %p69
      %p155 = pneg %p100
      %p156 = pneg %p97
      %s157 = smul.u32 32, %s17
      %p158 = scmp.lt.s32.totalorder %s157, 255
      %s159 = scalar_select %p158, %s157, 255
      %p160 = scmp.lt.s32.totalorder %s18, 0
      %s161 = scalar_select %p160, %s18, 0
      %s162 = sadd.s32 %s161, %s159
      %s163 = smul.addr %s162, 8
      %s164 = scalar_lea.vmem %s2, %s163
      %s165 = smul.u32 32, %s17
      %p166 = scmp.lt.s32.totalorder %s165, 255
      %s167 = scalar_select %p166, %s165, 255
      %s168 = smul.addr %s167, 4
      %s169 = scalar_lea.vmem %s0, %s168
      %s170 = smul.u32 32, %s17
      %p171 = scmp.lt.s32.totalorder %s18, 0
      %s172 = scalar_select %p171, %s18, 0
      %s173 = smul.addr %s172, 4
      %s174 = scalar_lea.vmem %s1, %s173
      %s175 = smul.u32 32, %s17
      %p176 = scmp.lt.s32.totalorder %s175, 255
      %s177 = scalar_select %p176, %s175, 255
      %p178 = scmp.lt.s32.totalorder %s18, 0
      %s179 = scalar_select %p178, %s18, 0
      %s180 = sadd.s32 %s179, %s177
      %s181 = smul.addr %s180, 8
      %s182 = scalar_lea.vmem %s2, %s181
      %s183 = smul.u32 32, %s17
      %v185 = vld [vmem:[%s169] sm:$0xf]
      %v186 = vld [vmem:[%s169 + $0x4] sm:$0xf]
      %v187 = vld [vmem:[%s169 + $0x8] sm:$0xf]
      %v188 = vld [vmem:[%s169 + $0xc] sm:$0xf]
      %v189 = vld [vmem:[%s169 + $0x10] sm:$0xf]
      %v190 = vld [vmem:[%s169 + $0x14] sm:$0xf]
      %v191 = vld [vmem:[%s169 + $0x18] sm:$0xf]
      %v192 = vld [vmem:[%s169 + $0x1c] sm:$0xf]
      %v193 = vld [vmem:[%s169 + $0x20] sm:$0xf]
      %v194 = vld [vmem:[%s169 + $0x24] sm:$0xf]
      %v195 = vld [vmem:[%s169 + $0x28] sm:$0xf]
      %v196 = vld [vmem:[%s169 + $0x2c] sm:$0xf]
      %v197 = vld [vmem:[%s169 + $0x30] sm:$0xf]
      %v198 = vld [vmem:[%s169 + $0x34] sm:$0xf]
      %v199 = vld [vmem:[%s169 + $0x38] sm:$0xf]
      %v200 = vld [vmem:[%s169 + $0x3c] sm:$0xf]
      %v201 = vld [vmem:[%s169 + $0x40] sm:$0xf]
      %v202 = vld [vmem:[%s169 + $0x44] sm:$0xf]
      %v203 = vld [vmem:[%s169 + $0x48] sm:$0xf]
      %v204 = vld [vmem:[%s169 + $0x4c] sm:$0xf]
      %v205 = vld [vmem:[%s169 + $0x50] sm:$0xf]
      %v206 = vld [vmem:[%s169 + $0x54] sm:$0xf]
      %v207 = vld [vmem:[%s169 + $0x58] sm:$0xf]
      %v208 = vld [vmem:[%s169 + $0x5c] sm:$0xf]
      %v209 = vld [vmem:[%s169 + $0x60] sm:$0xf]
      %v210 = vld [vmem:[%s169 + $0x64] sm:$0xf]
      %v211 = vld [vmem:[%s169 + $0x68] sm:$0xf]
      %v212 = vld [vmem:[%s169 + $0x6c] sm:$0xf]
      %v213 = vld [vmem:[%s169 + $0x70] sm:$0xf]
      %v214 = vld [vmem:[%s169 + $0x74] sm:$0xf]
      %v215 = vld [vmem:[%s169 + $0x78] sm:$0xf]
      %v216 = vld [vmem:[%s169 + $0x7c] sm:$0xf]
      %v217 = vld [vmem:[%s174] sm:$0xf]
      %v218 = vld [vmem:[%s174 + $0x4] sm:$0xf]
      %v219 = vld [vmem:[%s174 + $0x8] sm:$0xf]
      %v220 = vld [vmem:[%s174 + $0xc] sm:$0xf]
      %v221 = vld [vmem:[%s174 + $0x10] sm:$0xf]
      %v222 = vld [vmem:[%s174 + $0x14] sm:$0xf]
      %v223 = vld [vmem:[%s174 + $0x18] sm:$0xf]
      %v224 = vld [vmem:[%s174 + $0x1c] sm:$0xf]
      %v257 = vunpack.c.l.b16 %v185
      %v258 = vunpack.c.l.b16 %v186
      %v259 = vunpack.c.l.b16 %v187
      %v260 = vunpack.c.l.b16 %v188
      %v261 = vunpack.c.l.b16 %v189
      %v262 = vunpack.c.l.b16 %v190
      %v263 = vunpack.c.l.b16 %v191
      %v264 = vunpack.c.l.b16 %v192
      %v265 = vunpack.c.l.b16 %v193
      %v266 = vunpack.c.l.b16 %v194
      %v267 = vunpack.c.l.b16 %v195
      %v268 = vunpack.c.l.b16 %v196
      %v269 = vunpack.c.l.b16 %v197
      %v270 = vunpack.c.l.b16 %v198
      %v271 = vunpack.c.l.b16 %v199
      %v272 = vunpack.c.l.b16 %v200
      %v273 = vunpack.c.l.b16 %v201
      %v274 = vunpack.c.l.b16 %v202
      %v275 = vunpack.c.l.b16 %v203
      %v276 = vunpack.c.l.b16 %v204
      %v277 = vunpack.c.l.b16 %v205
      %v278 = vunpack.c.l.b16 %v206
      %v279 = vunpack.c.l.b16 %v207
      %v280 = vunpack.c.l.b16 %v208
      %v281 = vunpack.c.l.b16 %v209
      %v282 = vunpack.c.l.b16 %v210
      %v283 = vunpack.c.l.b16 %v211
      %v284 = vunpack.c.l.b16 %v212
      %v285 = vunpack.c.l.b16 %v213
      %v286 = vunpack.c.l.b16 %v214
      %v287 = vunpack.c.l.b16 %v215
      %v288 = vunpack.c.l.b16 %v216
      %v289 = vpack.c.b16 %v258, %v257
      %v290 = vpack.c.b16 %v260, %v259
      %v291 = vpack.c.b16 %v262, %v261
      %v292 = vpack.c.b16 %v264, %v263
      %v293 = vpack.c.b16 %v266, %v265
      %v294 = vpack.c.b16 %v268, %v267
      %v295 = vpack.c.b16 %v270, %v269
      %v296 = vpack.c.b16 %v272, %v271
      %v297 = vpack.c.b16 %v274, %v273
      %v298 = vpack.c.b16 %v276, %v275
      %v299 = vpack.c.b16 %v278, %v277
      %v300 = vpack.c.b16 %v280, %v279
      %v301 = vpack.c.b16 %v282, %v281
      %v302 = vpack.c.b16 %v284, %v283
      %v303 = vpack.c.b16 %v286, %v285
      %v304 = vpack.c.b16 %v288, %v287
      %v313 = vunpack.c.l.b16 %v217
      %v314 = vunpack.c.l.b16 %v218
      %v315 = vunpack.c.l.b16 %v219
      %v316 = vunpack.c.l.b16 %v220
      %v317 = vunpack.c.l.b16 %v221
      %v318 = vunpack.c.l.b16 %v222
      %v319 = vunpack.c.l.b16 %v223
      %v320 = vunpack.c.l.b16 %v224
      %v321 = vpack.c.b16 %v314, %v313
      %v322 = vpack.c.b16 %v316, %v315
      %v323 = vpack.c.b16 %v318, %v317
      %v324 = vpack.c.b16 %v320, %v319
      %vm329 = vcmask 523264
      %v331 = vsel %vm329, %v289, 0
      %v334 = vsel %vm329, %v290, 0
      %v337 = vsel %vm329, %v291, 0
      %v340 = vsel %vm329, %v292, 0
      %v343 = vsel %vm329, %v293, 0
      %v346 = vsel %vm329, %v294, 0
      %v349 = vsel %vm329, %v295, 0
      %v352 = vsel %vm329, %v296, 0
      %v355 = vsel %vm329, %v297, 0
      %v358 = vsel %vm329, %v298, 0
      %v361 = vsel %vm329, %v299, 0
      %v364 = vsel %vm329, %v300, 0
      %v367 = vsel %vm329, %v301, 0
      %v370 = vsel %vm329, %v302, 0
      %v373 = vsel %vm329, %v303, 0
      %v376 = vsel %vm329, %v304, 0
      %378 = vmatpush.bf16.msra.mxu0 0
      %379 = vmatpush.bf16.msra.mxu0 0
      %380 = vmatpush.bf16.msra.mxu0 0
      %381 = vmatpush.bf16.msra.mxu0 0
      %382 = vmatpush.bf16.msra.mxu0 %v324
      %383 = vmatpush.bf16.msra.mxu0 %v323
      %384 = vmatpush.bf16.msra.mxu0 %v322
      %385 = vmatpush.bf16.msra.mxu0 %v321
      %386 = vmatmul.bf16.gmra.mxu0 %v331
      %v387 = vpop.f32.mrf.mxu0
      %v388 = vadd.f32 0.0, %v387
      %v389 = vpop.f32.mrf.mxu0
      %v390 = vadd.f32 0.0, %v389
      %391 = vmatmul.bf16.gmra.mxu0 %v334
      %v392 = vpop.f32.mrf.mxu0
      %v393 = vadd.f32 0.0, %v392
      %v394 = vpop.f32.mrf.mxu0
      %v395 = vadd.f32 0.0, %v394
      %396 = vmatmul.bf16.gmra.mxu0 %v337
      %v397 = vpop.f32.mrf.mxu0
      %v398 = vadd.f32 0.0, %v397
      %v399 = vpop.f32.mrf.mxu0
      %v400 = vadd.f32 0.0, %v399
      %401 = vmatmul.bf16.gmra.mxu0 %v340
      %v402 = vpop.f32.mrf.mxu0
      %v403 = vadd.f32 0.0, %v402
      %v404 = vpop.f32.mrf.mxu0
      %v405 = vadd.f32 0.0, %v404
      %406 = vmatmul.bf16.gmra.mxu0 %v343
      %v407 = vpop.f32.mrf.mxu0
      %v408 = vadd.f32 0.0, %v407
      %v409 = vpop.f32.mrf.mxu0
      %v410 = vadd.f32 0.0, %v409
      %411 = vmatmul.bf16.gmra.mxu0 %v346
      %v412 = vpop.f32.mrf.mxu0
      %v413 = vadd.f32 0.0, %v412
      %v414 = vpop.f32.mrf.mxu0
      %v415 = vadd.f32 0.0, %v414
      %416 = vmatmul.bf16.gmra.mxu0 %v349
      %v417 = vpop.f32.mrf.mxu0
      %v418 = vadd.f32 0.0, %v417
      %v419 = vpop.f32.mrf.mxu0
      %v420 = vadd.f32 0.0, %v419
      %421 = vmatmul.bf16.gmra.mxu0 %v352
      %v422 = vpop.f32.mrf.mxu0
      %v423 = vadd.f32 0.0, %v422
      %v424 = vpop.f32.mrf.mxu0
      %v425 = vadd.f32 0.0, %v424
      %426 = vmatmul.bf16.gmra.mxu0 %v355
      %v427 = vpop.f32.mrf.mxu0
      %v428 = vadd.f32 0.0, %v427
      %v429 = vpop.f32.mrf.mxu0
      %v430 = vadd.f32 0.0, %v429
      %431 = vmatmul.bf16.gmra.mxu0 %v358
      %v432 = vpop.f32.mrf.mxu0
      %v433 = vadd.f32 0.0, %v432
      %v434 = vpop.f32.mrf.mxu0
      %v435 = vadd.f32 0.0, %v434
      %436 = vmatmul.bf16.gmra.mxu0 %v361
      %v437 = vpop.f32.mrf.mxu0
      %v438 = vadd.f32 0.0, %v437
      %v439 = vpop.f32.mrf.mxu0
      %v440 = vadd.f32 0.0, %v439
      %441 = vmatmul.bf16.gmra.mxu0 %v364
      %v442 = vpop.f32.mrf.mxu0
      %v443 = vadd.f32 0.0, %v442
      %v444 = vpop.f32.mrf.mxu0
      %v445 = vadd.f32 0.0, %v444
      %446 = vmatmul.bf16.gmra.mxu0 %v367
      %v447 = vpop.f32.mrf.mxu0
      %v448 = vadd.f32 0.0, %v447
      %v449 = vpop.f32.mrf.mxu0
      %v450 = vadd.f32 0.0, %v449
      %451 = vmatmul.bf16.gmra.mxu0 %v370
      %v452 = vpop.f32.mrf.mxu0
      %v453 = vadd.f32 0.0, %v452
      %v454 = vpop.f32.mrf.mxu0
      %v455 = vadd.f32 0.0, %v454
      %456 = vmatmul.bf16.gmra.mxu0 %v373
      %v457 = vpop.f32.mrf.mxu0
      %v458 = vadd.f32 0.0, %v457
      %v459 = vpop.f32.mrf.mxu0
      %v460 = vadd.f32 0.0, %v459
      %461 = vmatmul.bf16.gmra.mxu0 %v376
      %v462 = vpop.f32.mrf.mxu0
      %v463 = vadd.f32 0.0, %v462
      %v464 = vpop.f32.mrf.mxu0
      %v465 = vadd.f32 0.0, %v464
      %466 = vdwg.mxu0
      %467 = vst [vmem:[%s182] sm:$0xff] %v388
      %468 = vst [vmem:[%s182 + $0x8] sm:$0xff] %v390
      %469 = vst [vmem:[%s182 + $0x10] sm:$0xff] %v393
      %470 = vst [vmem:[%s182 + $0x18] sm:$0xff] %v395
      %471 = vst [vmem:[%s182 + $0x20] sm:$0xff] %v398
      %472 = vst [vmem:[%s182 + $0x28] sm:$0xff] %v400
      %473 = vst [vmem:[%s182 + $0x30] sm:$0xff] %v403
      %474 = vst [vmem:[%s182 + $0x38] sm:$0xff] %v405
      %475 = vst [vmem:[%s182 + $0x40] sm:$0xff] %v408
      %476 = vst [vmem:[%s182 + $0x48] sm:$0xff] %v410
      %477 = vst [vmem:[%s182 + $0x50] sm:$0xff] %v413
      %478 = vst [vmem:[%s182 + $0x58] sm:$0xff] %v415
      %479 = vst [vmem:[%s182 + $0x60] sm:$0xff] %v418
      %480 = vst [vmem:[%s182 + $0x68] sm:$0xff] %v420
      %481 = vst [vmem:[%s182 + $0x70] sm:$0xff] %v423
      %482 = vst [vmem:[%s182 + $0x78] sm:$0xff] %v425
      %483 = vst [vmem:[%s182 + $0x80] sm:$0xff] %v428
      %484 = vst [vmem:[%s182 + $0x88] sm:$0xff] %v430
      %485 = vst [vmem:[%s182 + $0x90] sm:$0xff] %v433
      %486 = vst [vmem:[%s182 + $0x98] sm:$0xff] %v435
      %487 = vst [vmem:[%s182 + $0xa0] sm:$0xff] %v438
      %488 = vst [vmem:[%s182 + $0xa8] sm:$0xff] %v440
      %489 = vst [vmem:[%s182 + $0xb0] sm:$0xff] %v443
      %490 = vst [vmem:[%s182 + $0xb8] sm:$0xff] %v445
      %491 = vst [vmem:[%s182 + $0xc0] sm:$0xff] %v448
      %492 = vst [vmem:[%s182 + $0xc8] sm:$0xff] %v450
      %493 = vst [vmem:[%s182 + $0xd0] sm:$0xff] %v453
      %494 = vst [vmem:[%s182 + $0xd8] sm:$0xff] %v455
      %495 = vst [vmem:[%s182 + $0xe0] sm:$0xff] %v458
      %496 = vst [vmem:[%s182 + $0xe8] sm:$0xff] %v460
      %497 = vst [vmem:[%s182 + $0xf0] sm:$0xff] %v463
      %498 = vst [vmem:[%s182 + $0xf8] sm:$0xff] %v465
      %s499 = smul.u32 32, %s17
      %p500 = scmp.lt.s32.totalorder %s499, 255
      %s501 = scalar_select %p500, %s499, 255
      %p502 = scmp.lt.s32.totalorder %s18, 0
      %s503 = scalar_select %p502, %s18, 0
      %s504 = sadd.s32 %s503, %s501
      %s505 = smul.addr %s504, 8
      %s506 = scalar_lea.vmem %s2, %s505
      // Predicated region
      $region29: #{_lambda_.18} parent=27 // pred_check
        %p507 = pneg %p97
      $region30: #{_lambda_.18} parent=27 // pred_check_branch
        %509 = sbr.rel (%p507) target = $region32
      $region31: #{_lambda_.18} parent=27 // pred_region
        %s510 = smul.u32 32, %s17
      $region32: #{_lambda_.18} parent=27 // pred_fallthru
        _
    $region28: #{_lambda_.18} parent=5 // pred_fallthru
      _
    %p511 = scmp.le.s32.totalorder 2, %s8
    // Predicated region
    $region33: #{_lambda_.18} parent=5 // pred_check
      %p512 = pneg %p511
    $region34: #{_lambda_.18} parent=5 // pred_check_branch
      %514 = sbr.rel (%p512) target = $region36
    $region35: #{_lambda_.18} parent=5 // pred_region
      %s515 = ssub.s32 %s8, 2
      // Predicated region
      $region37: #{_lambda_.18} parent=35 // pred_check
        %p516 = pneg %p103
      $region38: #{_lambda_.18} parent=35 // pred_check_branch
        %518 = sbr.rel (%p516) target = $region40
      $region39: #{_lambda_.18} parent=35 // pred_region
        %s519 = smul.u32 32, %s19
        %p520 = scmp.lt.s32.totalorder %s519, 255
        %s521 = scalar_select %p520, %s519, 255
        %p522 = scmp.lt.s32.totalorder %s20, 0
        %s523 = scalar_select %p522, %s20, 0
        %s524 = sadd.s32 %s523, %s521
        %s525 = smul.addr %s524, 8
        %s526 = scalar_lea.vmem %s2, %s525
      $region40: #{_lambda_.18} parent=35 // pred_fallthru
        _
    $region36: #{_lambda_.18} parent=5 // pred_fallthru
      _
  $region6: #{_lambda_.18} parent=0 // loop_footer
    %s12 = sadd.s32 1, %s8
  $region7: #{_lambda_.18} parent=0 // loop_footer_branch
    %7 = sbr.rel target = $region3
  $region8: #{_lambda_.18} parent=0 // loop_exit
    _

// kernel: _lambda_.19
$region0: #{_lambda_.19}
  #allocation0 [shape = 'u32[]', space=smem, size = 0x4, offset = 0x4, fixed_abs, tag = 'smem constant byte address 0x4 - core index']
  #allocation1 [shape = 'u32[72,128]{1,0:T(1,128)}', space=vmem, size = 0x9000, scoped, tag = 'internal scratch']
  %s0 = inlined_call_operand.vmem [shape: f32[192,128], index: 0, kind: input, shape index: {}]
  %s1 = inlined_call_operand.vmem [shape: f32[192,128], index: 1, kind: output, shape index: {}]
  %s2 = sld [smem:[#allocation0]]
  $region37: #{_lambda_.19} parent=0
    _
  %s4 = ssub.s32 1, %s2
  %s5 = scalar_select 0, %s4, %s2
  loop: start=0, step=1, limit=4
  $region2: #{_lambda_.19} parent=0 // loop_pre_header
    _
  $region3: #{_lambda_.19} parent=0 // loop_header
    %s7 = sphi 0, %s11
    %p8 = scmp.ge.s32.totalorder %s7, 4
    %s17 = sphi 0, %s19
    %s20 = sphi 0, %s17
    %s21 = sphi 0, %s20
    %s37 = sphi 0, %s21
    %s43 = sphi 0, %s45
    %s46 = sphi 0, %s43
    %s47 = sphi 0, %s46
    %s63 = sphi 0, %s47
  $region4: #{_lambda_.19} parent=0 // loop_header_branch
    %10 = sbr.rel (%p8) target = $region8
  $region5: #{_lambda_.19} parent=0 // loop_body
    %s12 = ssub.s32 %s7, 1
    %s13 = ssub.s32 %s7, 2
    %s14 = sadd.s32 %s7, 1
    %s15 = ssub.s32 %s7, %s14
    %p16 = scmp.eq.s32.totalorder %s15, 0
    %s18 = sadd.s32 %s17, 1
    %s19 = scalar_select %p16, %s17, %s18
    %p22 = pneg %p16
    %p23 = scmp.eq.s32.totalorder %s7, 1
    %p24 = por %p22, %p23
    %p25 = scmp.ne.s32.totalorder %s17, %s20
    %p26 = scmp.eq.s32.totalorder %s7, 0
    %p27 = por %p25, %p26
    %p28 = scmp.ne.s32.totalorder %s17, %s20
    %p29 = scmp.eq.s32.totalorder %s12, 1
    %p30 = por %p28, %p29
    %p31 = scmp.ne.s32.totalorder %s20, %s21
    %p32 = scmp.eq.s32.totalorder %s12, 0
    %p33 = por %p31, %p32
    %p34 = scmp.ne.s32.totalorder %s20, %s21
    %p35 = scmp.eq.s32.totalorder %s13, 1
    %p36 = por %p34, %p35
    %p38 = scmp.ne.s32.totalorder %s21, %s37
    %p39 = scmp.eq.s32.totalorder %s13, 0
    %p40 = por %p38, %p39
    %s41 = ssub.s32 %s7, %s14
    %p42 = scmp.eq.s32.totalorder %s41, 0
    %s44 = sadd.s32 %s43, 1
    %s45 = scalar_select %p42, %s43, %s44
    %p48 = pneg %p42
    %p49 = scmp.eq.s32.totalorder %s7, 1
    %p50 = por %p48, %p49
    %p51 = scmp.ne.s32.totalorder %s43, %s46
    %p52 = scmp.eq.s32.totalorder %s7, 0
    %p53 = por %p51, %p52
    %p54 = scmp.ne.s32.totalorder %s43, %s46
    %p55 = scmp.eq.s32.totalorder %s12, 1
    %p56 = por %p54, %p55
    %p57 = scmp.ne.s32.totalorder %s46, %s47
    %p58 = scmp.eq.s32.totalorder %s12, 0
    %p59 = por %p57, %p58
    %p60 = scmp.ne.s32.totalorder %s46, %s47
    %p61 = scmp.eq.s32.totalorder %s13, 1
    %p62 = por %p60, %p61
    %p64 = scmp.ne.s32.totalorder %s47, %s63
    %p65 = scmp.eq.s32.totalorder %s13, 0
    %p66 = por %p64, %p65
    %p67 = scmp.le.s32.totalorder 1, %s7
    %p68 = scmp.lt.s32.totalorder %s7, 3
    %p69 = pnand %p67, %p68
    %p70 = pneg %p69
    // Predicated region
    $region9: #{_lambda_.19} parent=5 // pred_check
      _
    $region10: #{_lambda_.19} parent=5 // pred_check_branch
      %72 = sbr.rel (%p69) target = $region12
    $region11: #{_lambda_.19} parent=5 // pred_region
      %s73 = ssub.s32 %s7, 1
    $region12: #{_lambda_.19} parent=5 // pred_fallthru
      _
    %p74 = scmp.lt.s32.totalorder %s7, 2
    // Predicated region
    $region13: #{_lambda_.19} parent=5 // pred_check
      %p75 = pneg %p74
    $region14: #{_lambda_.19} parent=5 // pred_check_branch
      %77 = sbr.rel (%p75) target = $region16
    $region15: #{_lambda_.19} parent=5 // pred_region
      // Predicated region
      $region17: #{_lambda_.19} parent=15 // pred_check
        %p78 = pneg %p27
      $region18: #{_lambda_.19} parent=15 // pred_check_branch
        %80 = sbr.rel (%p78) target = $region20
      $region19: #{_lambda_.19} parent=15 // pred_region
        %s81 = smul.u32 12, %s7
        %p82 = scmp.lt.s32.totalorder %s81, 23
        %s83 = scalar_select %p82, %s81, 23
        %s84 = smul.addr %s83, 8
        %s85 = scalar_lea.vmem %s0, %s84
        %s86 = smul.u32 12, %s7
      $region20: #{_lambda_.19} parent=15 // pred_fallthru
        _
    $region16: #{_lambda_.19} parent=5 // pred_fallthru
      _
    %p87 = scmp.le.s32.totalorder 1, %s7
    %p88 = scmp.lt.s32.totalorder %s7, 3
    %p89 = pnand %p87, %p88
    %p90 = pneg %p89
    // Predicated region
    $region21: #{_lambda_.19} parent=5 // pred_check
      _
    $region22: #{_lambda_.19} parent=5 // pred_check_branch
      %92 = sbr.rel (%p89) target = $region24
    $region23: #{_lambda_.19} parent=5 // pred_region
      %s93 = ssub.s32 %s7, 1
      %s94 = smul.u32 12, %s12
      %p95 = scmp.lt.s32.totalorder %s94, 23
      %s96 = scalar_select %p95, %s94, 23
      %s97 = smul.addr %s96, 8
      %s98 = scalar_lea.vmem %s0, %s97
      %p99 = pneg %p33
      %p100 = pneg %p30
      %p101 = pneg %p59
      %p102 = pneg %p56
      %s103 = smul.u32 12, %s12
      %p104 = scmp.lt.s32.totalorder %s103, 23
      %s105 = scalar_select %p104, %s103, 23
      %s106 = smul.addr %s105, 8
      %s107 = scalar_lea.vmem %s1, %s106
      %s108 = smul.u32 12, %s12
      %p109 = scmp.lt.s32.totalorder %s108, 23
      %s110 = scalar_select %p109, %s108, 23
      %s111 = smul.addr %s110, 8
      %s112 = scalar_lea.vmem %s0, %s111
      %s113 = smul.u32 12, %s12
      %s114 = smul.u32 12, %s12
      %p115 = scmp.lt.s32.totalorder %s114, 23
      %s116 = scalar_select %p115, %s114, 23
      %s117 = smul.addr %s116, 8
      %s118 = scalar_lea.vmem %s1, %s117
      %s119 = smul.u32 12, %s12
      %v120 = vld [vmem:[%s112] sm:$0xff]
      %v121 = vld [vmem:[%s112 + $0x8] sm:$0xff]
      %v122 = vld [vmem:[%s112 + $0x10] sm:$0xff]
      %v123 = vld [vmem:[%s112 + $0x18] sm:$0xff]
      %v124 = vld [vmem:[%s112 + $0x20] sm:$0xff]
      %v125 = vld [vmem:[%s112 + $0x28] sm:$0xff]
      %v126 = vld [vmem:[%s112 + $0x30] sm:$0xff]
      %v127 = vld [vmem:[%s112 + $0x38] sm:$0xff]
      %v128 = vld [vmem:[%s112 + $0x40] sm:$0xff]
      %v129 = vld [vmem:[%s112 + $0x48] sm:$0xff]
      %v130 = vld [vmem:[%s112 + $0x50] sm:$0xff]
      %v131 = vld [vmem:[%s112 + $0x58] sm:$0xff]
      %v132 = vtanh.pop %v120
      %v133 = vtanh.pop %v121
      %v134 = vtanh.pop %v122
      %v135 = vtanh.pop %v123
      %v136 = vtanh.pop %v124
      %v137 = vtanh.pop %v125
      %v138 = vtanh.pop %v126
      %v139 = vtanh.pop %v127
      %v140 = vtanh.pop %v128
      %v141 = vtanh.pop %v129
      %v142 = vtanh.pop %v130
      %v143 = vtanh.pop %v131
      %144 = vst [vmem:[%s118] sm:$0xff] %v132
      %145 = vst [vmem:[%s118 + $0x8] sm:$0xff] %v133
      %146 = vst [vmem:[%s118 + $0x10] sm:$0xff] %v134
      %147 = vst [vmem:[%s118 + $0x18] sm:$0xff] %v135
      %148 = vst [vmem:[%s118 + $0x20] sm:$0xff] %v136
      %149 = vst [vmem:[%s118 + $0x28] sm:$0xff] %v137
      %150 = vst [vmem:[%s118 + $0x30] sm:$0xff] %v138
      %151 = vst [vmem:[%s118 + $0x38] sm:$0xff] %v139
      %152 = vst [vmem:[%s118 + $0x40] sm:$0xff] %v140
      %153 = vst [vmem:[%s118 + $0x48] sm:$0xff] %v141
      %154 = vst [vmem:[%s118 + $0x50] sm:$0xff] %v142
      %155 = vst [vmem:[%s118 + $0x58] sm:$0xff] %v143
      %s156 = smul.u32 12, %s12
      %p157 = scmp.lt.s32.totalorder %s156, 23
      %s158 = scalar_select %p157, %s156, 23
      %s159 = smul.addr %s158, 8
      %s160 = scalar_lea.vmem %s1, %s159
      // Predicated region
      $region25: #{_lambda_.19} parent=23 // pred_check
        %p161 = pneg %p56
      $region26: #{_lambda_.19} parent=23 // pred_check_branch
        %163 = sbr.rel (%p161) target = $region28
      $region27: #{_lambda_.19} parent=23 // pred_region
        %s164 = smul.u32 12, %s12
      $region28: #{_lambda_.19} parent=23 // pred_fallthru
        _
    $region24: #{_lambda_.19} parent=5 // pred_fallthru
      _
    %p165 = scmp.le.s32.totalorder 2, %s7
    // Predicated region
    $region29: #{_lambda_.19} parent=5 // pred_check
      %p166 = pneg %p165
    $region30: #{_lambda_.19} parent=5 // pred_check_branch
      %168 = sbr.rel (%p166) target = $region32
    $region31: #{_lambda_.19} parent=5 // pred_region
      %s169 = ssub.s32 %s7, 2
      // Predicated region
      $region33: #{_lambda_.19} parent=31 // pred_check
        %p170 = pneg %p62
      $region34: #{_lambda_.19} parent=31 // pred_check_branch
        %172 = sbr.rel (%p170) target = $region36
      $region35: #{_lambda_.19} parent=31 // pred_region
        %s173 = smul.u32 12, %s13
        %p174 = scmp.lt.s32.totalorder %s173, 23
        %s175 = scalar_select %p174, %s173, 23
        %s176 = smul.addr %s175, 8
        %s177 = scalar_lea.vmem %s1, %s176
      $region36: #{_lambda_.19} parent=31 // pred_fallthru
        _
    $region32: #{_lambda_.19} parent=5 // pred_fallthru
      _
  $region6: #{_lambda_.19} parent=0 // loop_footer
    %s11 = sadd.s32 1, %s7
  $region7: #{_lambda_.19} parent=0 // loop_footer_branch
    %6 = sbr.rel target = $region3
  $region8: #{_lambda_.19} parent=0 // loop_exit
    _

</llo_original>
